<compile_context>
chip_gen: v7x
topology: tpu7x:2x2x1
jax: 0.10.0
libtpu: 0.0.40
codegen_flags: <defaults>
</compile_context>

<pallas_src>
import jax
import jax.numpy as jnp
from jax import lax
from jax.experimental import pallas as pl
from jax.experimental.pallas import tpu as pltpu


# ----------------------------- Pallas kernels -----------------------------

def _conv1_kernel(p_ref, w_ref, b_ref, o_ref):
    """conv1 (patch matmul) + bias + relu + H-direction 2x1 max-pool.

    p_ref: (1, 576, 32) bf16   im2col patches of one image, rows=(oh,ow)
    w_ref: (32, 128)    bf16   cols = 20 real + 108 zero-pad channels
    b_ref: (1, 128)     f32
    o_ref: (1, 12, 24, 128) bf16   [oh//2, ow, c] = max over oh parity
    """
    acc = jnp.dot(p_ref[0], w_ref[...], preferred_element_type=jnp.float32)
    z = jnp.maximum(acc + b_ref[...], 0.0)          # (576, 128)
    z = z.reshape(12, 2, 24, 128)                   # layout-preserving split
    o_ref[0] = jnp.maximum(z[:, 0], z[:, 1]).astype(o_ref.dtype)


def _conv2_kernel(ye_ref, yo_ref, w_ref, b_ref, o_ref, x_scr):
    """W-pool of conv1 + conv2 (fused im2col: 25 shifted matmuls) + bias +
    relu + H-direction 2x1 max-pool.  One image per grid step.

    ye_ref / yo_ref: (1, 12, 12, 128) bf16  even / odd W columns of conv1's
                     H-pooled output (their max completes the 2x2 pool).
    w_ref: (25, 128, 128) bf16   [kh*5+kw, cin_pad, cout_pad]
    b_ref: (1, 128) f32
    o_ref: (1, 4, 8, 128) bf16   [oh//2, ow, c]
    x_scr: (12, 12, 128) f32 VMEM scratch holding the pooled conv1 tile
    """
    x_scr[...] = jnp.maximum(ye_ref[0], yo_ref[0]).astype(jnp.float32)
    acc = jnp.zeros((64, 128), jnp.float32)
    for kh in range(5):
        for kw in range(5):
            xs = x_scr[kh:kh + 8, kw:kw + 8, :]                 # (8, 8, 128)
            xs = xs.reshape(64, 128).astype(jnp.bfloat16)
            acc = acc + jnp.dot(xs, w_ref[kh * 5 + kw],
                                preferred_element_type=jnp.float32)
    z = jnp.maximum(acc + b_ref[...], 0.0)          # (64, 128), rows=(oh,ow)
    z = z.reshape(4, 2, 8, 128)
    o_ref[0] = jnp.maximum(z[:, 0], z[:, 1]).astype(o_ref.dtype)


def _fc_kernel(ye_ref, yo_ref, w1_ref, b1_ref, w2_ref, b2_ref, o_ref):
    """W-pool of conv2 + fc1 + relu + fc2 + log_softmax, fully fused.

    ye_ref / yo_ref: (TM, 2048) bf16  even/odd-W flattened conv2 activations.
    w1_ref: (2048, 512) bf16, b1_ref: (1, 512) f32
    w2_ref: (512, 128)  bf16, b2_ref: (1, 128) f32 (pad logits biased -1e30)
    o_ref:  (TM, 128) f32  log-probs (columns >= 10 are masked pads)
    """
    x = jnp.maximum(ye_ref[...], yo_ref[...])                   # completes pool2
    h = jnp.dot(x, w1_ref[...], preferred_element_type=jnp.float32) + b1_ref[...]
    h = jnp.maximum(h, 0.0).astype(jnp.bfloat16)                # (TM, 512)
    z = jnp.dot(h, w2_ref[...], preferred_element_type=jnp.float32) + b2_ref[...]
    m = jnp.max(z, axis=-1, keepdims=True)
    s = z - m
    lse = jnp.log(jnp.sum(jnp.exp(s), axis=-1, keepdims=True))
    o_ref[...] = s - lse


# ----------------------------- pallas_call wrappers -------------------------

_COMPILER_PARAMS = pltpu.CompilerParams(
    dimension_semantics=("parallel",),          # megacore-shardable on v7x
    vmem_limit_bytes=32 * 1024 * 1024,          # bounded, fits v7x's 64 MiB
)


def conv1_block(patches, w1, b1):
    n = patches.shape[0]
    return pl.pallas_call(
        _conv1_kernel,
        out_shape=jax.ShapeDtypeStruct((n, 12, 24, 128), jnp.bfloat16),
        grid_spec=pltpu.PrefetchScalarGridSpec(
            num_scalar_prefetch=0,
            grid=(n,),
            in_specs=[
                pl.BlockSpec((1, 576, 32), lambda i: (i, 0, 0)),
                pl.BlockSpec((32, 128), lambda i: (0, 0)),
                pl.BlockSpec((1, 128), lambda i: (0, 0)),
            ],
            out_specs=pl.BlockSpec((1, 12, 24, 128), lambda i: (i, 0, 0, 0)),
        ),
        compiler_params=_COMPILER_PARAMS,
    )(patches, w1, b1)


def conv2_block(y1e, y1o, w2, b2):
    n = y1e.shape[0]
    return pl.pallas_call(
        _conv2_kernel,
        out_shape=jax.ShapeDtypeStruct((n, 4, 8, 128), jnp.bfloat16),
        grid_spec=pltpu.PrefetchScalarGridSpec(
            num_scalar_prefetch=0,
            grid=(n,),
            in_specs=[
                pl.BlockSpec((1, 12, 12, 128), lambda i: (i, 0, 0, 0)),
                pl.BlockSpec((1, 12, 12, 128), lambda i: (i, 0, 0, 0)),
                pl.BlockSpec((25, 128, 128), lambda i: (0, 0, 0)),
                pl.BlockSpec((1, 128), lambda i: (0, 0)),
            ],
            out_specs=pl.BlockSpec((1, 4, 8, 128), lambda i: (i, 0, 0, 0)),
            scratch_shapes=[pltpu.VMEM((12, 12, 128), jnp.float32)],
        ),
        compiler_params=_COMPILER_PARAMS,
    )(y1e, y1o, w2, b2)


def fc_block(y2e, y2o, w1, b1, w2, b2):
    n = y2e.shape[0]
    tm = n if n <= 128 else 128
    assert n % tm == 0, "batch must be a multiple of the row tile"
    return pl.pallas_call(
        _fc_kernel,
        out_shape=jax.ShapeDtypeStruct((n, 128), jnp.float32),
        grid_spec=pltpu.PrefetchScalarGridSpec(
            num_scalar_prefetch=0,
            grid=(n // tm,),
            in_specs=[
                pl.BlockSpec((tm, 2048), lambda i: (i, 0)),
                pl.BlockSpec((tm, 2048), lambda i: (i, 0)),
                pl.BlockSpec((2048, 512), lambda i: (0, 0)),
                pl.BlockSpec((1, 512), lambda i: (0, 0)),
                pl.BlockSpec((512, 128), lambda i: (0, 0)),
                pl.BlockSpec((1, 128), lambda i: (0, 0)),
            ],
            out_specs=pl.BlockSpec((tm, 128), lambda i: (i, 0)),
        ),
        compiler_params=_COMPILER_PARAMS,
    )(y2e, y2o, w1, b1, w2, b2)


# ----------------------------- JAX glue --------------------------------------

def _im2col_conv1(x):
    """(N, 1, 28, 28) f32 -> (N, 576, 32) bf16 patches (K padded 25->32).
    Kept in XLA: with C=1 the amplification is only ~72 KB/image in bf16."""
    xs = x[:, 0]
    cols = [xs[:, kh:kh + 24, kw:kw + 24] for kh in range(5) for kw in range(5)]
    p = jnp.stack(cols, axis=-1).reshape(x.shape[0], 576, 25)
    return jnp.pad(p, ((0, 0), (0, 0), (0, 7))).astype(jnp.bfloat16)


def prepare_params(p):
    """Pad / permute the PyTorch-layout parameters once into the lane-dense,
    channels-last bf16 forms the kernels consume."""
    f32, bf16 = jnp.float32, jnp.bfloat16

    # conv1: (20, 1, 5, 5) -> (K=32, Cout=128), feature order (kh, kw).
    w1 = jnp.pad(p["conv1_w"].reshape(20, 25).T, ((0, 7), (0, 108))).astype(bf16)
    b1 = jnp.pad(p["conv1_b"], (0, 108)).reshape(1, 128).astype(f32)

    # conv2: (50, 20, 5, 5) -> (25, Cin=128, Cout=128).
    w2 = jnp.transpose(p["conv2_w"], (2, 3, 1, 0)).reshape(25, 20, 50)
    w2 = jnp.pad(w2, ((0, 0), (0, 108), (0, 78))).astype(bf16)
    b2 = jnp.pad(p["conv2_b"], (0, 78)).reshape(1, 128).astype(f32)

    # fc1: (500, 800) with PyTorch input order (c, h, w) -> (2048, 512) with
    # input order (h, w, c_pad128) to match the channels-last flatten.
    wf1 = p["fc1_w"].T.reshape(50, 4, 4, 500)          # [c, h, w, j]
    wf1 = jnp.transpose(wf1, (1, 2, 0, 3))             # [h, w, c, j]
    wf1 = jnp.pad(wf1, ((0, 0), (0, 0), (0, 78), (0, 12)))
    wf1 = wf1.reshape(2048, 512).astype(bf16)
    bf1 = jnp.pad(p["fc1_b"], (0, 12)).reshape(1, 512).astype(f32)

    # fc2: (10, 500) -> (512, 128); pad logit columns masked via -1e30 bias so
    # log_softmax over the 128 lanes ignores them.
    wf2 = jnp.pad(p["fc2_w"].T, ((0, 12), (0, 118))).astype(bf16)
    bf2 = jnp.concatenate([p["fc2_b"].astype(f32),
                           jnp.full((118,), -1e30, f32)]).reshape(1, 128)

    return dict(w1=w1, b1=b1, w2=w2, b2=b2, wf1=wf1, bf1=bf1, wf2=wf2, bf2=bf2)


def net_forward(x, pp):
    """x: (N, 1, 28, 28) f32 -> log-probs (N, 10) f32."""
    n = x.shape[0]
    patches = _im2col_conv1(x)
    y1 = conv1_block(patches, pp["w1"], pp["b1"])            # (N, 12, 24, 128)

    # TODO(synk): the stride-2 W-parity split has no reliable in-kernel
    # lowering (strided sublane select); it stays as a cheap XLA slice and the
    # pooling max itself is fused into the consumer kernel's prologue.
    y1e, y1o = y1[:, :, 0::2, :], y1[:, :, 1::2, :]
    y2 = conv2_block(y1e, y1o, pp["w2"], pp["b2"])           # (N, 4, 8, 128)

    y2e = y2[:, :, 0::2, :].reshape(n, 2048)
    y2o = y2[:, :, 1::2, :].reshape(n, 2048)
    logits = fc_block(y2e, y2o, pp["wf1"], pp["bf1"], pp["wf2"], pp["bf2"])
    return logits[:, :10]


# ----------------------------- reference & params ----------------------------

def init_params(key):
    """Deterministic PyTorch-default-style init: U(-1/sqrt(fan_in), +)."""
    ks = jax.random.split(key, 8)

    def unif(k, shape, fan_in):
        bound = 1.0 / jnp.sqrt(fan_in)
        return jax.random.uniform(k, shape, jnp.float32, -bound, bound)

    return dict(
        conv1_w=unif(ks[0], (20, 1, 5, 5), 1 * 5 * 5),
        conv1_b=unif(ks[1], (20,), 1 * 5 * 5),
        conv2_w=unif(ks[2], (50, 20, 5, 5), 20 * 5 * 5),
        conv2_b=unif(ks[3], (50,), 20 * 5 * 5),
        fc1_w=unif(ks[4], (500, 800), 800),
        fc1_b=unif(ks[5], (500,), 800),
        fc2_w=unif(ks[6], (10, 500), 500),
        fc2_b=unif(ks[7], (10,), 500),
    )


def ref_forward(x, p):
    """Pure-XLA f32 reference with PyTorch semantics."""
    dn = ("NCHW", "OIHW", "NCHW")
    y = lax.conv_general_dilated(x, p["conv1_w"], (1, 1), "VALID",
                                 dimension_numbers=dn)
    y = jnp.maximum(y + p["conv1_b"][None, :, None, None], 0.0)
    y = lax.reduce_window(y, -jnp.inf, lax.max, (1, 1, 2, 2), (1, 1, 2, 2), "VALID")
    y = lax.conv_general_dilated(y, p["conv2_w"], (1, 1), "VALID",
                                 dimension_numbers=dn)
    y = jnp.maximum(y + p["conv2_b"][None, :, None, None], 0.0)
    y = lax.reduce_window(y, -jnp.inf, lax.max, (1, 1, 2, 2), (1, 1, 2, 2), "VALID")
    y = y.reshape(x.shape[0], 800)
    y = jnp.maximum(y @ p["fc1_w"].T + p["fc1_b"], 0.0)
    y = y @ p["fc2_w"].T + p["fc2_b"]
    return jax.nn.log_softmax(y, axis=1)


# ----------------------------- main -------------------------------------------

if __name__ == "__main__":
    key = jax.random.PRNGKey(0)
    k_x, k_p = jax.random.split(key)

    # MNIST-shaped input (the module's fc1 = 4*4*50 implies 28x28), batch 2.
    x = jax.random.normal(k_x, (2, 1, 28, 28), jnp.float32)
    params = init_params(k_p)
    prepared = prepare_params(params)

    out = jax.block_until_ready(jax.jit(net_forward)(x, prepared))

    assert out.shape == (2, 10)
    assert bool(jnp.all(jnp.isfinite(out)))
    assert bool(jnp.allclose(jnp.sum(jnp.exp(out), axis=1), 1.0, atol=1e-3))

    ref = ref_forward(x, params)
    assert bool(jnp.allclose(out, ref, atol=5e-2, rtol=5e-2)), \
        f"max abs diff {float(jnp.max(jnp.abs(out - ref)))}"

    print("KERNEL_OK")
</pallas_src>

<mosaic_0001>
module attributes {stable_mosaic.version = 11 : i64} {
  func.func @_conv1_kernel(%arg0: i32, %arg1: memref<1x576x32xbf16, #tpu.memory_space<vmem>>, %arg2: memref<32x128xbf16, #tpu.memory_space<vmem>>, %arg3: memref<1x128xf32, #tpu.memory_space<vmem>>, %arg4: memref<1x12x24x128xbf16, #tpu.memory_space<vmem>>) attributes {dimension_semantics = [#tpu.dimension_semantics<parallel>], iteration_bounds = array<i64: 2>, scalar_prefetch = 0 : i64, scratch_operands = 0 : i64, tpu.core_type = #tpu.core_type<tc>, window_params = [{transform_indices = @transform_0, window_bounds = array<i64: 1, 576, 32>}, {pipeline_mode = #tpu.pipeline_mode<synchronous>, transform_indices = @transform_1, window_bounds = array<i64: 32, 128>}, {pipeline_mode = #tpu.pipeline_mode<synchronous>, transform_indices = @transform_2, window_bounds = array<i64: 1, 128>}, {transform_indices = @transform_3, window_bounds = array<i64: 1, 12, 24, 128>}]} {
    %c0 = arith.constant 0 : index
    %c0_0 = arith.constant 0 : index
    %c0_1 = arith.constant 0 : index
    %0 = vector.load %arg1[%c0, %c0_0, %c0_1] : memref<1x576x32xbf16, #tpu.memory_space<vmem>>, vector<1x576x32xbf16>
    %1 = vector.shape_cast %0 : vector<1x576x32xbf16> to vector<576x32xbf16>
    %c0_2 = arith.constant 0 : index
    %c0_3 = arith.constant 0 : index
    %2 = vector.load %arg2[%c0_2, %c0_3] : memref<32x128xbf16, #tpu.memory_space<vmem>>, vector<32x128xbf16>
    %cst = arith.constant dense<0.000000e+00> : vector<576x128xf32>
    %3 = tpu.matmul %1, %2, %cst {dimension_numbers = #tpu.dot_dimension_numbers<[1], [0], [0], [1], [0, 0, 1, 1], [], []>} : vector<576x32xbf16>, vector<32x128xbf16>, vector<576x128xf32> -> vector<576x128xf32>
    %c0_4 = arith.constant 0 : index
    %c0_5 = arith.constant 0 : index
    %4 = vector.load %arg3[%c0_4, %c0_5] : memref<1x128xf32, #tpu.memory_space<vmem>>, vector<1x128xf32>
    %5 = vector.broadcast %4 : vector<1x128xf32> to vector<576x128xf32>
    %6 = arith.addf %3, %5 : vector<576x128xf32>
    %cst_6 = arith.constant 0.000000e+00 : f32
    %7 = vector.broadcast %cst_6 : f32 to vector<576x128xf32>
    %8 = arith.maximumf %6, %7 : vector<576x128xf32>
    %9 = vector.shape_cast %8 : vector<576x128xf32> to vector<12x2x24x128xf32>
    %10 = vector.extract_strided_slice %9 {offsets = [0, 0, 0, 0], sizes = [12, 1, 24, 128], strides = [1, 1, 1, 1]} : vector<12x2x24x128xf32> to vector<12x1x24x128xf32>
    %11 = vector.shape_cast %10 : vector<12x1x24x128xf32> to vector<12x24x128xf32>
    %12 = vector.extract_strided_slice %9 {offsets = [0, 1, 0, 0], sizes = [12, 1, 24, 128], strides = [1, 1, 1, 1]} : vector<12x2x24x128xf32> to vector<12x1x24x128xf32>
    %13 = vector.shape_cast %12 : vector<12x1x24x128xf32> to vector<12x24x128xf32>
    %14 = arith.maximumf %11, %13 : vector<12x24x128xf32>
    %15 = arith.truncf %14 : vector<12x24x128xf32> to vector<12x24x128xbf16>
    %c0_7 = arith.constant 0 : index
    %c0_8 = arith.constant 0 : index
    %c0_9 = arith.constant 0 : index
    %c0_10 = arith.constant 0 : index
    %16 = vector.load %arg4[%c0_7, %c0_8, %c0_9, %c0_10] : memref<1x12x24x128xbf16, #tpu.memory_space<vmem>>, vector<1x12x24x128xbf16>
    %17 = vector.shape_cast %16 : vector<1x12x24x128xbf16> to vector<12x24x128xbf16>
    %18 = vector.shape_cast %15 : vector<12x24x128xbf16> to vector<1x12x24x128xbf16>
    tpu.vector_store %arg4[%c0_7, %c0_8, %c0_9, %c0_10], %18 {strides = array<i32>} : memref<1x12x24x128xbf16, #tpu.memory_space<vmem>>, vector<1x12x24x128xbf16>,
    return
  }
  func.func @transform_0(%arg0: i32) -> (i32, i32, i32) {
    %c0_i32 = arith.constant 0 : i32
    %c0_i32_0 = arith.constant 0 : i32
    %c0_i32_1 = arith.constant 0 : i32
    return %arg0, %c0_i32, %c0_i32_0 : i32, i32, i32
  }
  func.func @transform_1(%arg0: i32) -> (i32, i32) {
    %c0_i32 = arith.constant 0 : i32
    %c0_i32_0 = arith.constant 0 : i32
    %c0_i32_1 = arith.constant 0 : i32
    return %c0_i32, %c0_i32_0 : i32, i32
  }
  func.func @transform_2(%arg0: i32) -> (i32, i32) {
    %c0_i32 = arith.constant 0 : i32
    %c0_i32_0 = arith.constant 0 : i32
    %c0_i32_1 = arith.constant 0 : i32
    return %c0_i32, %c0_i32_0 : i32, i32
  }
  func.func @transform_3(%arg0: i32) -> (i32, i32, i32, i32) {
    %c0_i32 = arith.constant 0 : i32
    %c0_i32_0 = arith.constant 0 : i32
    %c0_i32_1 = arith.constant 0 : i32
    %c0_i32_2 = arith.constant 0 : i32
    return %arg0, %c0_i32, %c0_i32_0, %c0_i32_1 : i32, i32, i32, i32
  }
}

module attributes {stable_mosaic.version = 11 : i64} {
  func.func @_conv2_kernel(%arg0: i32, %arg1: memref<1x12x12x128xbf16, #tpu.memory_space<vmem>>, %arg2: memref<1x12x12x128xbf16, #tpu.memory_space<vmem>>, %arg3: memref<25x128x128xbf16, #tpu.memory_space<vmem>>, %arg4: memref<1x128xf32, #tpu.memory_space<vmem>>, %arg5: memref<1x4x8x128xbf16, #tpu.memory_space<vmem>>, %arg6: memref<12x12x128xf32, #tpu.memory_space<vmem>>) attributes {dimension_semantics = [#tpu.dimension_semantics<parallel>], iteration_bounds = array<i64: 2>, scalar_prefetch = 0 : i64, scratch_operands = 1 : i64, tpu.core_type = #tpu.core_type<tc>, window_params = [{transform_indices = @transform_0, window_bounds = array<i64: 1, 12, 12, 128>}, {transform_indices = @transform_1, window_bounds = array<i64: 1, 12, 12, 128>}, {pipeline_mode = #tpu.pipeline_mode<synchronous>, transform_indices = @transform_2, window_bounds = array<i64: 25, 128, 128>}, {pipeline_mode = #tpu.pipeline_mode<synchronous>, transform_indices = @transform_3, window_bounds = array<i64: 1, 128>}, {transform_indices = @transform_4, window_bounds = array<i64: 1, 4, 8, 128>}]} {
    %c0 = arith.constant 0 : index
    %c0_0 = arith.constant 0 : index
    %c0_1 = arith.constant 0 : index
    %c0_2 = arith.constant 0 : index
    %0 = vector.load %arg1[%c0, %c0_0, %c0_1, %c0_2] : memref<1x12x12x128xbf16, #tpu.memory_space<vmem>>, vector<1x12x12x128xbf16>
    %1 = vector.shape_cast %0 : vector<1x12x12x128xbf16> to vector<12x12x128xbf16>
    %c0_3 = arith.constant 0 : index
    %c0_4 = arith.constant 0 : index
    %c0_5 = arith.constant 0 : index
    %c0_6 = arith.constant 0 : index
    %2 = vector.load %arg2[%c0_3, %c0_4, %c0_5, %c0_6] : memref<1x12x12x128xbf16, #tpu.memory_space<vmem>>, vector<1x12x12x128xbf16>
    %3 = vector.shape_cast %2 : vector<1x12x12x128xbf16> to vector<12x12x128xbf16>
    %4 = arith.maximumf %1, %3 : vector<12x12x128xbf16>
    %5 = arith.extf %4 : vector<12x12x128xbf16> to vector<12x12x128xf32>
    %c0_7 = arith.constant 0 : index
    %c0_8 = arith.constant 0 : index
    %c0_9 = arith.constant 0 : index
    %6 = vector.load %arg6[%c0_7, %c0_8, %c0_9] : memref<12x12x128xf32, #tpu.memory_space<vmem>>, vector<12x12x128xf32>
    tpu.vector_store %arg6[%c0_7, %c0_8, %c0_9], %5 {strides = array<i32>} : memref<12x12x128xf32, #tpu.memory_space<vmem>>, vector<12x12x128xf32>,
    %cst = arith.constant 0.000000e+00 : f32
    %7 = vector.broadcast %cst : f32 to vector<64x128xf32>
    %c0_10 = arith.constant 0 : index
    %c0_11 = arith.constant 0 : index
    %c0_12 = arith.constant 0 : index
    %8 = vector.load %arg6[%c0_10, %c0_11, %c0_12] : memref<12x12x128xf32, #tpu.memory_space<vmem>>, vector<8x8x128xf32>
    %9 = vector.shape_cast %8 : vector<8x8x128xf32> to vector<64x128xf32>
    %10 = arith.truncf %9 : vector<64x128xf32> to vector<64x128xbf16>
    %c0_13 = arith.constant 0 : index
    %c0_14 = arith.constant 0 : index
    %c0_15 = arith.constant 0 : index
    %11 = vector.load %arg3[%c0_13, %c0_14, %c0_15] : memref<25x128x128xbf16, #tpu.memory_space<vmem>>, vector<1x128x128xbf16>
    %12 = vector.shape_cast %11 : vector<1x128x128xbf16> to vector<128x128xbf16>
    %cst_16 = arith.constant dense<0.000000e+00> : vector<64x128xf32>
    %13 = tpu.matmul %10, %12, %cst_16 {dimension_numbers = #tpu.dot_dimension_numbers<[1], [0], [0], [1], [0, 0, 1, 1], [], []>} : vector<64x128xbf16>, vector<128x128xbf16>, vector<64x128xf32> -> vector<64x128xf32>
    %14 = arith.addf %7, %13 : vector<64x128xf32>
    %c0_17 = arith.constant 0 : index
    %c1 = arith.constant 1 : index
    %c0_18 = arith.constant 0 : index
    %15 = vector.load %arg6[%c0_17, %c1, %c0_18] : memref<12x12x128xf32, #tpu.memory_space<vmem>>, vector<8x8x128xf32>
    %16 = vector.shape_cast %15 : vector<8x8x128xf32> to vector<64x128xf32>
    %17 = arith.truncf %16 : vector<64x128xf32> to vector<64x128xbf16>
    %c1_19 = arith.constant 1 : index
    %c0_20 = arith.constant 0 : index
    %c0_21 = arith.constant 0 : index
    %18 = vector.load %arg3[%c1_19, %c0_20, %c0_21] : memref<25x128x128xbf16, #tpu.memory_space<vmem>>, vector<1x128x128xbf16>
    %19 = vector.shape_cast %18 : vector<1x128x128xbf16> to vector<128x128xbf16>
    %cst_22 = arith.constant dense<0.000000e+00> : vector<64x128xf32>
    %20 = tpu.matmul %17, %19, %cst_22 {dimension_numbers = #tpu.dot_dimension_numbers<[1], [0], [0], [1], [0, 0, 1, 1], [], []>} : vector<64x128xbf16>, vector<128x128xbf16>, vector<64x128xf32> -> vector<64x128xf32>
    %21 = arith.addf %14, %20 : vector<64x128xf32>
    %c0_23 = arith.constant 0 : index
    %c2 = arith.constant 2 : index
    %c0_24 = arith.constant 0 : index
    %22 = vector.load %arg6[%c0_23, %c2, %c0_24] : memref<12x12x128xf32, #tpu.memory_space<vmem>>, vector<8x8x128xf32>
    %23 = vector.shape_cast %22 : vector<8x8x128xf32> to vector<64x128xf32>
    %24 = arith.truncf %23 : vector<64x128xf32> to vector<64x128xbf16>
    %c2_25 = arith.constant 2 : index
    %c0_26 = arith.constant 0 : index
    %c0_27 = arith.constant 0 : index
    %25 = vector.load %arg3[%c2_25, %c0_26, %c0_27] : memref<25x128x128xbf16, #tpu.memory_space<vmem>>, vector<1x128x128xbf16>
    %26 = vector.shape_cast %25 : vector<1x128x128xbf16> to vector<128x128xbf16>
    %cst_28 = arith.constant dense<0.000000e+00> : vector<64x128xf32>
    %27 = tpu.matmul %24, %26, %cst_28 {dimension_numbers = #tpu.dot_dimension_numbers<[1], [0], [0], [1], [0, 0, 1, 1], [], []>} : vector<64x128xbf16>, vector<128x128xbf16>, vector<64x128xf32> -> vector<64x128xf32>
    %28 = arith.addf %21, %27 : vector<64x128xf32>
    %c0_29 = arith.constant 0 : index
    %c3 = arith.constant 3 : index
    %c0_30 = arith.constant 0 : index
    %29 = vector.load %arg6[%c0_29, %c3, %c0_30] : memref<12x12x128xf32, #tpu.memory_space<vmem>>, vector<8x8x128xf32>
    %30 = vector.shape_cast %29 : vector<8x8x128xf32> to vector<64x128xf32>
    %31 = arith.truncf %30 : vector<64x128xf32> to vector<64x128xbf16>
    %c3_31 = arith.constant 3 : index
    %c0_32 = arith.constant 0 : index
    %c0_33 = arith.constant 0 : index
    %32 = vector.load %arg3[%c3_31, %c0_32, %c0_33] : memref<25x128x128xbf16, #tpu.memory_space<vmem>>, vector<1x128x128xbf16>
    %33 = vector.shape_cast %32 : vector<1x128x128xbf16> to vector<128x128xbf16>
    %cst_34 = arith.constant dense<0.000000e+00> : vector<64x128xf32>
    %34 = tpu.matmul %31, %33, %cst_34 {dimension_numbers = #tpu.dot_dimension_numbers<[1], [0], [0], [1], [0, 0, 1, 1], [], []>} : vector<64x128xbf16>, vector<128x128xbf16>, vector<64x128xf32> -> vector<64x128xf32>
    %35 = arith.addf %28, %34 : vector<64x128xf32>
    %c0_35 = arith.constant 0 : index
    %c4 = arith.constant 4 : index
    %c0_36 = arith.constant 0 : index
    %36 = vector.load %arg6[%c0_35, %c4, %c0_36] : memref<12x12x128xf32, #tpu.memory_space<vmem>>, vector<8x8x128xf32>
    %37 = vector.shape_cast %36 : vector<8x8x128xf32> to vector<64x128xf32>
    %38 = arith.truncf %37 : vector<64x128xf32> to vector<64x128xbf16>
    %c4_37 = arith.constant 4 : index
    %c0_38 = arith.constant 0 : index
    %c0_39 = arith.constant 0 : index
    %39 = vector.load %arg3[%c4_37, %c0_38, %c0_39] : memref<25x128x128xbf16, #tpu.memory_space<vmem>>, vector<1x128x128xbf16>
    %40 = vector.shape_cast %39 : vector<1x128x128xbf16> to vector<128x128xbf16>
    %cst_40 = arith.constant dense<0.000000e+00> : vector<64x128xf32>
    %41 = tpu.matmul %38, %40, %cst_40 {dimension_numbers = #tpu.dot_dimension_numbers<[1], [0], [0], [1], [0, 0, 1, 1], [], []>} : vector<64x128xbf16>, vector<128x128xbf16>, vector<64x128xf32> -> vector<64x128xf32>
    %42 = arith.addf %35, %41 : vector<64x128xf32>
    %c1_41 = arith.constant 1 : index
    %c0_42 = arith.constant 0 : index
    %c0_43 = arith.constant 0 : index
    %43 = vector.load %arg6[%c1_41, %c0_42, %c0_43] : memref<12x12x128xf32, #tpu.memory_space<vmem>>, vector<8x8x128xf32>
    %44 = vector.shape_cast %43 : vector<8x8x128xf32> to vector<64x128xf32>
    %45 = arith.truncf %44 : vector<64x128xf32> to vector<64x128xbf16>
    %c5 = arith.constant 5 : index
    %c0_44 = arith.constant 0 : index
    %c0_45 = arith.constant 0 : index
    %46 = vector.load %arg3[%c5, %c0_44, %c0_45] : memref<25x128x128xbf16, #tpu.memory_space<vmem>>, vector<1x128x128xbf16>
    %47 = vector.shape_cast %46 : vector<1x128x128xbf16> to vector<128x128xbf16>
    %cst_46 = arith.constant dense<0.000000e+00> : vector<64x128xf32>
    %48 = tpu.matmul %45, %47, %cst_46 {dimension_numbers = #tpu.dot_dimension_numbers<[1], [0], [0], [1], [0, 0, 1, 1], [], []>} : vector<64x128xbf16>, vector<128x128xbf16>, vector<64x128xf32> -> vector<64x128xf32>
    %49 = arith.addf %42, %48 : vector<64x128xf32>
    %c1_47 = arith.constant 1 : index
    %c1_48 = arith.constant 1 : index
    %c0_49 = arith.constant 0 : index
    %50 = vector.load %arg6[%c1_47, %c1_48, %c0_49] : memref<12x12x128xf32, #tpu.memory_space<vmem>>, vector<8x8x128xf32>
    %51 = vector.shape_cast %50 : vector<8x8x128xf32> to vector<64x128xf32>
    %52 = arith.truncf %51 : vector<64x128xf32> to vector<64x128xbf16>
    %c6 = arith.constant 6 : index
    %c0_50 = arith.constant 0 : index
    %c0_51 = arith.constant 0 : index
    %53 = vector.load %arg3[%c6, %c0_50, %c0_51] : memref<25x128x128xbf16, #tpu.memory_space<vmem>>, vector<1x128x128xbf16>
    %54 = vector.shape_cast %53 : vector<1x128x128xbf16> to vector<128x128xbf16>
    %cst_52 = arith.constant dense<0.000000e+00> : vector<64x128xf32>
    %55 = tpu.matmul %52, %54, %cst_52 {dimension_numbers = #tpu.dot_dimension_numbers<[1], [0], [0], [1], [0, 0, 1, 1], [], []>} : vector<64x128xbf16>, vector<128x128xbf16>, vector<64x128xf32> -> vector<64x128xf32>
    %56 = arith.addf %49, %55 : vector<64x128xf32>
    %c1_53 = arith.constant 1 : index
    %c2_54 = arith.constant 2 : index
    %c0_55 = arith.constant 0 : index
    %57 = vector.load %arg6[%c1_53, %c2_54, %c0_55] : memref<12x12x128xf32, #tpu.memory_space<vmem>>, vector<8x8x128xf32>
    %58 = vector.shape_cast %57 : vector<8x8x128xf32> to vector<64x128xf32>
    %59 = arith.truncf %58 : vector<64x128xf32> to vector<64x128xbf16>
    %c7 = arith.constant 7 : index
    %c0_56 = arith.constant 0 : index
    %c0_57 = arith.constant 0 : index
    %60 = vector.load %arg3[%c7, %c0_56, %c0_57] : memref<25x128x128xbf16, #tpu.memory_space<vmem>>, vector<1x128x128xbf16>
    %61 = vector.shape_cast %60 : vector<1x128x128xbf16> to vector<128x128xbf16>
    %cst_58 = arith.constant dense<0.000000e+00> : vector<64x128xf32>
    %62 = tpu.matmul %59, %61, %cst_58 {dimension_numbers = #tpu.dot_dimension_numbers<[1], [0], [0], [1], [0, 0, 1, 1], [], []>} : vector<64x128xbf16>, vector<128x128xbf16>, vector<64x128xf32> -> vector<64x128xf32>
    %63 = arith.addf %56, %62 : vector<64x128xf32>
    %c1_59 = arith.constant 1 : index
    %c3_60 = arith.constant 3 : index
    %c0_61 = arith.constant 0 : index
    %64 = vector.load %arg6[%c1_59, %c3_60, %c0_61] : memref<12x12x128xf32, #tpu.memory_space<vmem>>, vector<8x8x128xf32>
    %65 = vector.shape_cast %64 : vector<8x8x128xf32> to vector<64x128xf32>
    %66 = arith.truncf %65 : vector<64x128xf32> to vector<64x128xbf16>
    %c8 = arith.constant 8 : index
    %c0_62 = arith.constant 0 : index
    %c0_63 = arith.constant 0 : index
    %67 = vector.load %arg3[%c8, %c0_62, %c0_63] : memref<25x128x128xbf16, #tpu.memory_space<vmem>>, vector<1x128x128xbf16>
    %68 = vector.shape_cast %67 : vector<1x128x128xbf16> to vector<128x128xbf16>
    %cst_64 = arith.constant dense<0.000000e+00> : vector<64x128xf32>
    %69 = tpu.matmul %66, %68, %cst_64 {dimension_numbers = #tpu.dot_dimension_numbers<[1], [0], [0], [1], [0, 0, 1, 1], [], []>} : vector<64x128xbf16>, vector<128x128xbf16>, vector<64x128xf32> -> vector<64x128xf32>
    %70 = arith.addf %63, %69 : vector<64x128xf32>
    %c1_65 = arith.constant 1 : index
    %c4_66 = arith.constant 4 : index
    %c0_67 = arith.constant 0 : index
    %71 = vector.load %arg6[%c1_65, %c4_66, %c0_67] : memref<12x12x128xf32, #tpu.memory_space<vmem>>, vector<8x8x128xf32>
    %72 = vector.shape_cast %71 : vector<8x8x128xf32> to vector<64x128xf32>
    %73 = arith.truncf %72 : vector<64x128xf32> to vector<64x128xbf16>
    %c9 = arith.constant 9 : index
    %c0_68 = arith.constant 0 : index
    %c0_69 = arith.constant 0 : index
    %74 = vector.load %arg3[%c9, %c0_68, %c0_69] : memref<25x128x128xbf16, #tpu.memory_space<vmem>>, vector<1x128x128xbf16>
    %75 = vector.shape_cast %74 : vector<1x128x128xbf16> to vector<128x128xbf16>
    %cst_70 = arith.constant dense<0.000000e+00> : vector<64x128xf32>
    %76 = tpu.matmul %73, %75, %cst_70 {dimension_numbers = #tpu.dot_dimension_numbers<[1], [0], [0], [1], [0, 0, 1, 1], [], []>} : vector<64x128xbf16>, vector<128x128xbf16>, vector<64x128xf32> -> vector<64x128xf32>
    %77 = arith.addf %70, %76 : vector<64x128xf32>
    %c2_71 = arith.constant 2 : index
    %c0_72 = arith.constant 0 : index
    %c0_73 = arith.constant 0 : index
    %78 = vector.load %arg6[%c2_71, %c0_72, %c0_73] : memref<12x12x128xf32, #tpu.memory_space<vmem>>, vector<8x8x128xf32>
    %79 = vector.shape_cast %78 : vector<8x8x128xf32> to vector<64x128xf32>
    %80 = arith.truncf %79 : vector<64x128xf32> to vector<64x128xbf16>
    %c10 = arith.constant 10 : index
    %c0_74 = arith.constant 0 : index
    %c0_75 = arith.constant 0 : index
    %81 = vector.load %arg3[%c10, %c0_74, %c0_75] : memref<25x128x128xbf16, #tpu.memory_space<vmem>>, vector<1x128x128xbf16>
    %82 = vector.shape_cast %81 : vector<1x128x128xbf16> to vector<128x128xbf16>
    %cst_76 = arith.constant dense<0.000000e+00> : vector<64x128xf32>
    %83 = tpu.matmul %80, %82, %cst_76 {dimension_numbers = #tpu.dot_dimension_numbers<[1], [0], [0], [1], [0, 0, 1, 1], [], []>} : vector<64x128xbf16>, vector<128x128xbf16>, vector<64x128xf32> -> vector<64x128xf32>
    %84 = arith.addf %77, %83 : vector<64x128xf32>
    %c2_77 = arith.constant 2 : index
    %c1_78 = arith.constant 1 : index
    %c0_79 = arith.constant 0 : index
    %85 = vector.load %arg6[%c2_77, %c1_78, %c0_79] : memref<12x12x128xf32, #tpu.memory_space<vmem>>, vector<8x8x128xf32>
    %86 = vector.shape_cast %85 : vector<8x8x128xf32> to vector<64x128xf32>
    %87 = arith.truncf %86 : vector<64x128xf32> to vector<64x128xbf16>
    %c11 = arith.constant 11 : index
    %c0_80 = arith.constant 0 : index
    %c0_81 = arith.constant 0 : index
    %88 = vector.load %arg3[%c11, %c0_80, %c0_81] : memref<25x128x128xbf16, #tpu.memory_space<vmem>>, vector<1x128x128xbf16>
    %89 = vector.shape_cast %88 : vector<1x128x128xbf16> to vector<128x128xbf16>
    %cst_82 = arith.constant dense<0.000000e+00> : vector<64x128xf32>
    %90 = tpu.matmul %87, %89, %cst_82 {dimension_numbers = #tpu.dot_dimension_numbers<[1], [0], [0], [1], [0, 0, 1, 1], [], []>} : vector<64x128xbf16>, vector<128x128xbf16>, vector<64x128xf32> -> vector<64x128xf32>
    %91 = arith.addf %84, %90 : vector<64x128xf32>
    %c2_83 = arith.constant 2 : index
    %c2_84 = arith.constant 2 : index
    %c0_85 = arith.constant 0 : index
    %92 = vector.load %arg6[%c2_83, %c2_84, %c0_85] : memref<12x12x128xf32, #tpu.memory_space<vmem>>, vector<8x8x128xf32>
    %93 = vector.shape_cast %92 : vector<8x8x128xf32> to vector<64x128xf32>
    %94 = arith.truncf %93 : vector<64x128xf32> to vector<64x128xbf16>
    %c12 = arith.constant 12 : index
    %c0_86 = arith.constant 0 : index
    %c0_87 = arith.constant 0 : index
    %95 = vector.load %arg3[%c12, %c0_86, %c0_87] : memref<25x128x128xbf16, #tpu.memory_space<vmem>>, vector<1x128x128xbf16>
    %96 = vector.shape_cast %95 : vector<1x128x128xbf16> to vector<128x128xbf16>
    %cst_88 = arith.constant dense<0.000000e+00> : vector<64x128xf32>
    %97 = tpu.matmul %94, %96, %cst_88 {dimension_numbers = #tpu.dot_dimension_numbers<[1], [0], [0], [1], [0, 0, 1, 1], [], []>} : vector<64x128xbf16>, vector<128x128xbf16>, vector<64x128xf32> -> vector<64x128xf32>
    %98 = arith.addf %91, %97 : vector<64x128xf32>
    %c2_89 = arith.constant 2 : index
    %c3_90 = arith.constant 3 : index
    %c0_91 = arith.constant 0 : index
    %99 = vector.load %arg6[%c2_89, %c3_90, %c0_91] : memref<12x12x128xf32, #tpu.memory_space<vmem>>, vector<8x8x128xf32>
    %100 = vector.shape_cast %99 : vector<8x8x128xf32> to vector<64x128xf32>
    %101 = arith.truncf %100 : vector<64x128xf32> to vector<64x128xbf16>
    %c13 = arith.constant 13 : index
    %c0_92 = arith.constant 0 : index
    %c0_93 = arith.constant 0 : index
    %102 = vector.load %arg3[%c13, %c0_92, %c0_93] : memref<25x128x128xbf16, #tpu.memory_space<vmem>>, vector<1x128x128xbf16>
    %103 = vector.shape_cast %102 : vector<1x128x128xbf16> to vector<128x128xbf16>
    %cst_94 = arith.constant dense<0.000000e+00> : vector<64x128xf32>
    %104 = tpu.matmul %101, %103, %cst_94 {dimension_numbers = #tpu.dot_dimension_numbers<[1], [0], [0], [1], [0, 0, 1, 1], [], []>} : vector<64x128xbf16>, vector<128x128xbf16>, vector<64x128xf32> -> vector<64x128xf32>
    %105 = arith.addf %98, %104 : vector<64x128xf32>
    %c2_95 = arith.constant 2 : index
    %c4_96 = arith.constant 4 : index
    %c0_97 = arith.constant 0 : index
    %106 = vector.load %arg6[%c2_95, %c4_96, %c0_97] : memref<12x12x128xf32, #tpu.memory_space<vmem>>, vector<8x8x128xf32>
    %107 = vector.shape_cast %106 : vector<8x8x128xf32> to vector<64x128xf32>
    %108 = arith.truncf %107 : vector<64x128xf32> to vector<64x128xbf16>
    %c14 = arith.constant 14 : index
    %c0_98 = arith.constant 0 : index
    %c0_99 = arith.constant 0 : index
    %109 = vector.load %arg3[%c14, %c0_98, %c0_99] : memref<25x128x128xbf16, #tpu.memory_space<vmem>>, vector<1x128x128xbf16>
    %110 = vector.shape_cast %109 : vector<1x128x128xbf16> to vector<128x128xbf16>
    %cst_100 = arith.constant dense<0.000000e+00> : vector<64x128xf32>
    %111 = tpu.matmul %108, %110, %cst_100 {dimension_numbers = #tpu.dot_dimension_numbers<[1], [0], [0], [1], [0, 0, 1, 1], [], []>} : vector<64x128xbf16>, vector<128x128xbf16>, vector<64x128xf32> -> vector<64x128xf32>
    %112 = arith.addf %105, %111 : vector<64x128xf32>
    %c3_101 = arith.constant 3 : index
    %c0_102 = arith.constant 0 : index
    %c0_103 = arith.constant 0 : index
    %113 = vector.load %arg6[%c3_101, %c0_102, %c0_103] : memref<12x12x128xf32, #tpu.memory_space<vmem>>, vector<8x8x128xf32>
    %114 = vector.shape_cast %113 : vector<8x8x128xf32> to vector<64x128xf32>
    %115 = arith.truncf %114 : vector<64x128xf32> to vector<64x128xbf16>
    %c15 = arith.constant 15 : index
    %c0_104 = arith.constant 0 : index
    %c0_105 = arith.constant 0 : index
    %116 = vector.load %arg3[%c15, %c0_104, %c0_105] : memref<25x128x128xbf16, #tpu.memory_space<vmem>>, vector<1x128x128xbf16>
    %117 = vector.shape_cast %116 : vector<1x128x128xbf16> to vector<128x128xbf16>
    %cst_106 = arith.constant dense<0.000000e+00> : vector<64x128xf32>
    %118 = tpu.matmul %115, %117, %cst_106 {dimension_numbers = #tpu.dot_dimension_numbers<[1], [0], [0], [1], [0, 0, 1, 1], [], []>} : vector<64x128xbf16>, vector<128x128xbf16>, vector<64x128xf32> -> vector<64x128xf32>
    %119 = arith.addf %112, %118 : vector<64x128xf32>
    %c3_107 = arith.constant 3 : index
    %c1_108 = arith.constant 1 : index
    %c0_109 = arith.constant 0 : index
    %120 = vector.load %arg6[%c3_107, %c1_108, %c0_109] : memref<12x12x128xf32, #tpu.memory_space<vmem>>, vector<8x8x128xf32>
    %121 = vector.shape_cast %120 : vector<8x8x128xf32> to vector<64x128xf32>
    %122 = arith.truncf %121 : vector<64x128xf32> to vector<64x128xbf16>
    %c16 = arith.constant 16 : index
    %c0_110 = arith.constant 0 : index
    %c0_111 = arith.constant 0 : index
    %123 = vector.load %arg3[%c16, %c0_110, %c0_111] : memref<25x128x128xbf16, #tpu.memory_space<vmem>>, vector<1x128x128xbf16>
    %124 = vector.shape_cast %123 : vector<1x128x128xbf16> to vector<128x128xbf16>
    %cst_112 = arith.constant dense<0.000000e+00> : vector<64x128xf32>
    %125 = tpu.matmul %122, %124, %cst_112 {dimension_numbers = #tpu.dot_dimension_numbers<[1], [0], [0], [1], [0, 0, 1, 1], [], []>} : vector<64x128xbf16>, vector<128x128xbf16>, vector<64x128xf32> -> vector<64x128xf32>
    %126 = arith.addf %119, %125 : vector<64x128xf32>
    %c3_113 = arith.constant 3 : index
    %c2_114 = arith.constant 2 : index
    %c0_115 = arith.constant 0 : index
    %127 = vector.load %arg6[%c3_113, %c2_114, %c0_115] : memref<12x12x128xf32, #tpu.memory_space<vmem>>, vector<8x8x128xf32>
    %128 = vector.shape_cast %127 : vector<8x8x128xf32> to vector<64x128xf32>
    %129 = arith.truncf %128 : vector<64x128xf32> to vector<64x128xbf16>
    %c17 = arith.constant 17 : index
    %c0_116 = arith.constant 0 : index
    %c0_117 = arith.constant 0 : index
    %130 = vector.load %arg3[%c17, %c0_116, %c0_117] : memref<25x128x128xbf16, #tpu.memory_space<vmem>>, vector<1x128x128xbf16>
    %131 = vector.shape_cast %130 : vector<1x128x128xbf16> to vector<128x128xbf16>
    %cst_118 = arith.constant dense<0.000000e+00> : vector<64x128xf32>
    %132 = tpu.matmul %129, %131, %cst_118 {dimension_numbers = #tpu.dot_dimension_numbers<[1], [0], [0], [1], [0, 0, 1, 1], [], []>} : vector<64x128xbf16>, vector<128x128xbf16>, vector<64x128xf32> -> vector<64x128xf32>
    %133 = arith.addf %126, %132 : vector<64x128xf32>
    %c3_119 = arith.constant 3 : index
    %c3_120 = arith.constant 3 : index
    %c0_121 = arith.constant 0 : index
    %134 = vector.load %arg6[%c3_119, %c3_120, %c0_121] : memref<12x12x128xf32, #tpu.memory_space<vmem>>, vector<8x8x128xf32>
    %135 = vector.shape_cast %134 : vector<8x8x128xf32> to vector<64x128xf32>
    %136 = arith.truncf %135 : vector<64x128xf32> to vector<64x128xbf16>
    %c18 = arith.constant 18 : index
    %c0_122 = arith.constant 0 : index
    %c0_123 = arith.constant 0 : index
    %137 = vector.load %arg3[%c18, %c0_122, %c0_123] : memref<25x128x128xbf16, #tpu.memory_space<vmem>>, vector<1x128x128xbf16>
    %138 = vector.shape_cast %137 : vector<1x128x128xbf16> to vector<128x128xbf16>
    %cst_124 = arith.constant dense<0.000000e+00> : vector<64x128xf32>
    %139 = tpu.matmul %136, %138, %cst_124 {dimension_numbers = #tpu.dot_dimension_numbers<[1], [0], [0], [1], [0, 0, 1, 1], [], []>} : vector<64x128xbf16>, vector<128x128xbf16>, vector<64x128xf32> -> vector<64x128xf32>
    %140 = arith.addf %133, %139 : vector<64x128xf32>
    %c3_125 = arith.constant 3 : index
    %c4_126 = arith.constant 4 : index
    %c0_127 = arith.constant 0 : index
    %141 = vector.load %arg6[%c3_125, %c4_126, %c0_127] : memref<12x12x128xf32, #tpu.memory_space<vmem>>, vector<8x8x128xf32>
    %142 = vector.shape_cast %141 : vector<8x8x128xf32> to vector<64x128xf32>
    %143 = arith.truncf %142 : vector<64x128xf32> to vector<64x128xbf16>
    %c19 = arith.constant 19 : index
    %c0_128 = arith.constant 0 : index
    %c0_129 = arith.constant 0 : index
    %144 = vector.load %arg3[%c19, %c0_128, %c0_129] : memref<25x128x128xbf16, #tpu.memory_space<vmem>>, vector<1x128x128xbf16>
    %145 = vector.shape_cast %144 : vector<1x128x128xbf16> to vector<128x128xbf16>
    %cst_130 = arith.constant dense<0.000000e+00> : vector<64x128xf32>
    %146 = tpu.matmul %143, %145, %cst_130 {dimension_numbers = #tpu.dot_dimension_numbers<[1], [0], [0], [1], [0, 0, 1, 1], [], []>} : vector<64x128xbf16>, vector<128x128xbf16>, vector<64x128xf32> -> vector<64x128xf32>
    %147 = arith.addf %140, %146 : vector<64x128xf32>
    %c4_131 = arith.constant 4 : index
    %c0_132 = arith.constant 0 : index
    %c0_133 = arith.constant 0 : index
    %148 = vector.load %arg6[%c4_131, %c0_132, %c0_133] : memref<12x12x128xf32, #tpu.memory_space<vmem>>, vector<8x8x128xf32>
    %149 = vector.shape_cast %148 : vector<8x8x128xf32> to vector<64x128xf32>
    %150 = arith.truncf %149 : vector<64x128xf32> to vector<64x128xbf16>
    %c20 = arith.constant 20 : index
    %c0_134 = arith.constant 0 : index
    %c0_135 = arith.constant 0 : index
    %151 = vector.load %arg3[%c20, %c0_134, %c0_135] : memref<25x128x128xbf16, #tpu.memory_space<vmem>>, vector<1x128x128xbf16>
    %152 = vector.shape_cast %151 : vector<1x128x128xbf16> to vector<128x128xbf16>
    %cst_136 = arith.constant dense<0.000000e+00> : vector<64x128xf32>
    %153 = tpu.matmul %150, %152, %cst_136 {dimension_numbers = #tpu.dot_dimension_numbers<[1], [0], [0], [1], [0, 0, 1, 1], [], []>} : vector<64x128xbf16>, vector<128x128xbf16>, vector<64x128xf32> -> vector<64x128xf32>
    %154 = arith.addf %147, %153 : vector<64x128xf32>
    %c4_137 = arith.constant 4 : index
    %c1_138 = arith.constant 1 : index
    %c0_139 = arith.constant 0 : index
    %155 = vector.load %arg6[%c4_137, %c1_138, %c0_139] : memref<12x12x128xf32, #tpu.memory_space<vmem>>, vector<8x8x128xf32>
    %156 = vector.shape_cast %155 : vector<8x8x128xf32> to vector<64x128xf32>
    %157 = arith.truncf %156 : vector<64x128xf32> to vector<64x128xbf16>
    %c21 = arith.constant 21 : index
    %c0_140 = arith.constant 0 : index
    %c0_141 = arith.constant 0 : index
    %158 = vector.load %arg3[%c21, %c0_140, %c0_141] : memref<25x128x128xbf16, #tpu.memory_space<vmem>>, vector<1x128x128xbf16>
    %159 = vector.shape_cast %158 : vector<1x128x128xbf16> to vector<128x128xbf16>
    %cst_142 = arith.constant dense<0.000000e+00> : vector<64x128xf32>
    %160 = tpu.matmul %157, %159, %cst_142 {dimension_numbers = #tpu.dot_dimension_numbers<[1], [0], [0], [1], [0, 0, 1, 1], [], []>} : vector<64x128xbf16>, vector<128x128xbf16>, vector<64x128xf32> -> vector<64x128xf32>
    %161 = arith.addf %154, %160 : vector<64x128xf32>
    %c4_143 = arith.constant 4 : index
    %c2_144 = arith.constant 2 : index
    %c0_145 = arith.constant 0 : index
    %162 = vector.load %arg6[%c4_143, %c2_144, %c0_145] : memref<12x12x128xf32, #tpu.memory_space<vmem>>, vector<8x8x128xf32>
    %163 = vector.shape_cast %162 : vector<8x8x128xf32> to vector<64x128xf32>
    %164 = arith.truncf %163 : vector<64x128xf32> to vector<64x128xbf16>
    %c22 = arith.constant 22 : index
    %c0_146 = arith.constant 0 : index
    %c0_147 = arith.constant 0 : index
    %165 = vector.load %arg3[%c22, %c0_146, %c0_147] : memref<25x128x128xbf16, #tpu.memory_space<vmem>>, vector<1x128x128xbf16>
    %166 = vector.shape_cast %165 : vector<1x128x128xbf16> to vector<128x128xbf16>
    %cst_148 = arith.constant dense<0.000000e+00> : vector<64x128xf32>
    %167 = tpu.matmul %164, %166, %cst_148 {dimension_numbers = #tpu.dot_dimension_numbers<[1], [0], [0], [1], [0, 0, 1, 1], [], []>} : vector<64x128xbf16>, vector<128x128xbf16>, vector<64x128xf32> -> vector<64x128xf32>
    %168 = arith.addf %161, %167 : vector<64x128xf32>
    %c4_149 = arith.constant 4 : index
    %c3_150 = arith.constant 3 : index
    %c0_151 = arith.constant 0 : index
    %169 = vector.load %arg6[%c4_149, %c3_150, %c0_151] : memref<12x12x128xf32, #tpu.memory_space<vmem>>, vector<8x8x128xf32>
    %170 = vector.shape_cast %169 : vector<8x8x128xf32> to vector<64x128xf32>
    %171 = arith.truncf %170 : vector<64x128xf32> to vector<64x128xbf16>
    %c23 = arith.constant 23 : index
    %c0_152 = arith.constant 0 : index
    %c0_153 = arith.constant 0 : index
    %172 = vector.load %arg3[%c23, %c0_152, %c0_153] : memref<25x128x128xbf16, #tpu.memory_space<vmem>>, vector<1x128x128xbf16>
    %173 = vector.shape_cast %172 : vector<1x128x128xbf16> to vector<128x128xbf16>
    %cst_154 = arith.constant dense<0.000000e+00> : vector<64x128xf32>
    %174 = tpu.matmul %171, %173, %cst_154 {dimension_numbers = #tpu.dot_dimension_numbers<[1], [0], [0], [1], [0, 0, 1, 1], [], []>} : vector<64x128xbf16>, vector<128x128xbf16>, vector<64x128xf32> -> vector<64x128xf32>
    %175 = arith.addf %168, %174 : vector<64x128xf32>
    %c4_155 = arith.constant 4 : index
    %c4_156 = arith.constant 4 : index
    %c0_157 = arith.constant 0 : index
    %176 = vector.load %arg6[%c4_155, %c4_156, %c0_157] : memref<12x12x128xf32, #tpu.memory_space<vmem>>, vector<8x8x128xf32>
    %177 = vector.shape_cast %176 : vector<8x8x128xf32> to vector<64x128xf32>
    %178 = arith.truncf %177 : vector<64x128xf32> to vector<64x128xbf16>
    %c24 = arith.constant 24 : index
    %c0_158 = arith.constant 0 : index
    %c0_159 = arith.constant 0 : index
    %179 = vector.load %arg3[%c24, %c0_158, %c0_159] : memref<25x128x128xbf16, #tpu.memory_space<vmem>>, vector<1x128x128xbf16>
    %180 = vector.shape_cast %179 : vector<1x128x128xbf16> to vector<128x128xbf16>
    %cst_160 = arith.constant dense<0.000000e+00> : vector<64x128xf32>
    %181 = tpu.matmul %178, %180, %cst_160 {dimension_numbers = #tpu.dot_dimension_numbers<[1], [0], [0], [1], [0, 0, 1, 1], [], []>} : vector<64x128xbf16>, vector<128x128xbf16>, vector<64x128xf32> -> vector<64x128xf32>
    %182 = arith.addf %175, %181 : vector<64x128xf32>
    %c0_161 = arith.constant 0 : index
    %c0_162 = arith.constant 0 : index
    %183 = vector.load %arg4[%c0_161, %c0_162] : memref<1x128xf32, #tpu.memory_space<vmem>>, vector<1x128xf32>
    %184 = vector.broadcast %183 : vector<1x128xf32> to vector<64x128xf32>
    %185 = arith.addf %182, %184 : vector<64x128xf32>
    %cst_163 = arith.constant 0.000000e+00 : f32
    %186 = vector.broadcast %cst_163 : f32 to vector<64x128xf32>
    %187 = arith.maximumf %185, %186 : vector<64x128xf32>
    %188 = vector.shape_cast %187 : vector<64x128xf32> to vector<4x2x8x128xf32>
    %189 = vector.extract_strided_slice %188 {offsets = [0, 0, 0, 0], sizes = [4, 1, 8, 128], strides = [1, 1, 1, 1]} : vector<4x2x8x128xf32> to vector<4x1x8x128xf32>
    %190 = vector.shape_cast %189 : vector<4x1x8x128xf32> to vector<4x8x128xf32>
    %191 = vector.extract_strided_slice %188 {offsets = [0, 1, 0, 0], sizes = [4, 1, 8, 128], strides = [1, 1, 1, 1]} : vector<4x2x8x128xf32> to vector<4x1x8x128xf32>
    %192 = vector.shape_cast %191 : vector<4x1x8x128xf32> to vector<4x8x128xf32>
    %193 = arith.maximumf %190, %192 : vector<4x8x128xf32>
    %194 = arith.truncf %193 : vector<4x8x128xf32> to vector<4x8x128xbf16>
    %c0_164 = arith.constant 0 : index
    %c0_165 = arith.constant 0 : index
    %c0_166 = arith.constant 0 : index
    %c0_167 = arith.constant 0 : index
    %195 = vector.load %arg5[%c0_164, %c0_165, %c0_166, %c0_167] : memref<1x4x8x128xbf16, #tpu.memory_space<vmem>>, vector<1x4x8x128xbf16>
    %196 = vector.shape_cast %195 : vector<1x4x8x128xbf16> to vector<4x8x128xbf16>
    %197 = vector.shape_cast %194 : vector<4x8x128xbf16> to vector<1x4x8x128xbf16>
    tpu.vector_store %arg5[%c0_164, %c0_165, %c0_166, %c0_167], %197 {strides = array<i32>} : memref<1x4x8x128xbf16, #tpu.memory_space<vmem>>, vector<1x4x8x128xbf16>,
    return
  }
  func.func @transform_0(%arg0: i32) -> (i32, i32, i32, i32) {
    %c0_i32 = arith.constant 0 : i32
    %c0_i32_0 = arith.constant 0 : i32
    %c0_i32_1 = arith.constant 0 : i32
    %c0_i32_2 = arith.constant 0 : i32
    return %arg0, %c0_i32, %c0_i32_0, %c0_i32_1 : i32, i32, i32, i32
  }
  func.func @transform_1(%arg0: i32) -> (i32, i32, i32, i32) {
    %c0_i32 = arith.constant 0 : i32
    %c0_i32_0 = arith.constant 0 : i32
    %c0_i32_1 = arith.constant 0 : i32
    %c0_i32_2 = arith.constant 0 : i32
    return %arg0, %c0_i32, %c0_i32_0, %c0_i32_1 : i32, i32, i32, i32
  }
  func.func @transform_2(%arg0: i32) -> (i32, i32, i32) {
    %c0_i32 = arith.constant 0 : i32
    %c0_i32_0 = arith.constant 0 : i32
    %c0_i32_1 = arith.constant 0 : i32
    %c0_i32_2 = arith.constant 0 : i32
    return %c0_i32, %c0_i32_0, %c0_i32_1 : i32, i32, i32
  }
  func.func @transform_3(%arg0: i32) -> (i32, i32) {
    %c0_i32 = arith.constant 0 : i32
    %c0_i32_0 = arith.constant 0 : i32
    %c0_i32_1 = arith.constant 0 : i32
    return %c0_i32, %c0_i32_0 : i32, i32
  }
  func.func @transform_4(%arg0: i32) -> (i32, i32, i32, i32) {
    %c0_i32 = arith.constant 0 : i32
    %c0_i32_0 = arith.constant 0 : i32
    %c0_i32_1 = arith.constant 0 : i32
    %c0_i32_2 = arith.constant 0 : i32
    return %arg0, %c0_i32, %c0_i32_0, %c0_i32_1 : i32, i32, i32, i32
  }
}

module attributes {stable_mosaic.version = 11 : i64} {
  func.func @_fc_kernel(%arg0: i32, %arg1: memref<2x2048xbf16, #tpu.memory_space<vmem>>, %arg2: memref<2x2048xbf16, #tpu.memory_space<vmem>>, %arg3: memref<2048x512xbf16, #tpu.memory_space<vmem>>, %arg4: memref<1x512xf32, #tpu.memory_space<vmem>>, %arg5: memref<512x128xbf16, #tpu.memory_space<vmem>>, %arg6: memref<1x128xf32, #tpu.memory_space<vmem>>, %arg7: memref<2x128xf32, #tpu.memory_space<vmem>>) attributes {dimension_semantics = [#tpu.dimension_semantics<parallel>], iteration_bounds = array<i64: 1>, scalar_prefetch = 0 : i64, scratch_operands = 0 : i64, tpu.core_type = #tpu.core_type<tc>, window_params = [{transform_indices = @transform_0, window_bounds = array<i64: 2, 2048>}, {transform_indices = @transform_1, window_bounds = array<i64: 2, 2048>}, {pipeline_mode = #tpu.pipeline_mode<synchronous>, transform_indices = @transform_2, window_bounds = array<i64: 2048, 512>}, {pipeline_mode = #tpu.pipeline_mode<synchronous>, transform_indices = @transform_3, window_bounds = array<i64: 1, 512>}, {pipeline_mode = #tpu.pipeline_mode<synchronous>, transform_indices = @transform_4, window_bounds = array<i64: 512, 128>}, {pipeline_mode = #tpu.pipeline_mode<synchronous>, transform_indices = @transform_5, window_bounds = array<i64: 1, 128>}, {transform_indices = @transform_6, window_bounds = array<i64: 2, 128>}]} {
    %c0 = arith.constant 0 : index
    %c0_0 = arith.constant 0 : index
    %0 = vector.load %arg1[%c0, %c0_0] : memref<2x2048xbf16, #tpu.memory_space<vmem>>, vector<2x2048xbf16>
    %c0_1 = arith.constant 0 : index
    %c0_2 = arith.constant 0 : index
    %1 = vector.load %arg2[%c0_1, %c0_2] : memref<2x2048xbf16, #tpu.memory_space<vmem>>, vector<2x2048xbf16>
    %2 = arith.maximumf %0, %1 : vector<2x2048xbf16>
    %c0_3 = arith.constant 0 : index
    %c0_4 = arith.constant 0 : index
    %3 = vector.load %arg3[%c0_3, %c0_4] : memref<2048x512xbf16, #tpu.memory_space<vmem>>, vector<2048x512xbf16>
    %cst = arith.constant dense<0.000000e+00> : vector<2x512xf32>
    %4 = tpu.matmul %2, %3, %cst {dimension_numbers = #tpu.dot_dimension_numbers<[1], [0], [0], [1], [0, 0, 1, 1], [], []>} : vector<2x2048xbf16>, vector<2048x512xbf16>, vector<2x512xf32> -> vector<2x512xf32>
    %c0_5 = arith.constant 0 : index
    %c0_6 = arith.constant 0 : index
    %5 = vector.load %arg4[%c0_5, %c0_6] : memref<1x512xf32, #tpu.memory_space<vmem>>, vector<1x512xf32>
    %6 = vector.broadcast %5 : vector<1x512xf32> to vector<2x512xf32>
    %7 = arith.addf %4, %6 : vector<2x512xf32>
    %cst_7 = arith.constant 0.000000e+00 : f32
    %8 = vector.broadcast %cst_7 : f32 to vector<2x512xf32>
    %9 = arith.maximumf %7, %8 : vector<2x512xf32>
    %10 = arith.truncf %9 : vector<2x512xf32> to vector<2x512xbf16>
    %c0_8 = arith.constant 0 : index
    %c0_9 = arith.constant 0 : index
    %11 = vector.load %arg5[%c0_8, %c0_9] : memref<512x128xbf16, #tpu.memory_space<vmem>>, vector<512x128xbf16>
    %cst_10 = arith.constant dense<0.000000e+00> : vector<2x128xf32>
    %12 = tpu.matmul %10, %11, %cst_10 {dimension_numbers = #tpu.dot_dimension_numbers<[1], [0], [0], [1], [0, 0, 1, 1], [], []>} : vector<2x512xbf16>, vector<512x128xbf16>, vector<2x128xf32> -> vector<2x128xf32>
    %c0_11 = arith.constant 0 : index
    %c0_12 = arith.constant 0 : index
    %13 = vector.load %arg6[%c0_11, %c0_12] : memref<1x128xf32, #tpu.memory_space<vmem>>, vector<1x128xf32>
    %14 = vector.broadcast %13 : vector<1x128xf32> to vector<2x128xf32>
    %15 = arith.addf %12, %14 : vector<2x128xf32>
    %cst_13 = arith.constant dense<0xFF800000> : vector<2xf32>
    %16 = vector.multi_reduction <maximumf>, %15, %cst_13 [1] : vector<2x128xf32> to vector<2xf32>
    %17 = vector.shape_cast %16 : vector<2xf32> to vector<2x1xf32>
    %18 = vector.broadcast %17 : vector<2x1xf32> to vector<2x128xf32>
    %19 = arith.subf %15, %18 : vector<2x128xf32>
    %20 = math.exp %19 : vector<2x128xf32>
    %cst_14 = arith.constant dense<0.000000e+00> : vector<2xf32>
    %21 = vector.multi_reduction <add>, %20, %cst_14 [1] : vector<2x128xf32> to vector<2xf32>
    %22 = vector.shape_cast %21 : vector<2xf32> to vector<2x1xf32>
    %23 = math.log %22 : vector<2x1xf32>
    %24 = vector.broadcast %23 : vector<2x1xf32> to vector<2x128xf32>
    %25 = arith.subf %19, %24 : vector<2x128xf32>
    %c0_15 = arith.constant 0 : index
    %c0_16 = arith.constant 0 : index
    %26 = vector.load %arg7[%c0_15, %c0_16] : memref<2x128xf32, #tpu.memory_space<vmem>>, vector<2x128xf32>
    tpu.vector_store %arg7[%c0_15, %c0_16], %25 {strides = array<i32>} : memref<2x128xf32, #tpu.memory_space<vmem>>, vector<2x128xf32>,
    return
  }
  func.func @transform_0(%arg0: i32) -> (i32, i32) {
    %c0_i32 = arith.constant 0 : i32
    %c0_i32_0 = arith.constant 0 : i32
    return %arg0, %c0_i32 : i32, i32
  }
  func.func @transform_1(%arg0: i32) -> (i32, i32) {
    %c0_i32 = arith.constant 0 : i32
    %c0_i32_0 = arith.constant 0 : i32
    return %arg0, %c0_i32 : i32, i32
  }
  func.func @transform_2(%arg0: i32) -> (i32, i32) {
    %c0_i32 = arith.constant 0 : i32
    %c0_i32_0 = arith.constant 0 : i32
    %c0_i32_1 = arith.constant 0 : i32
    return %c0_i32, %c0_i32_0 : i32, i32
  }
  func.func @transform_3(%arg0: i32) -> (i32, i32) {
    %c0_i32 = arith.constant 0 : i32
    %c0_i32_0 = arith.constant 0 : i32
    %c0_i32_1 = arith.constant 0 : i32
    return %c0_i32, %c0_i32_0 : i32, i32
  }
  func.func @transform_4(%arg0: i32) -> (i32, i32) {
    %c0_i32 = arith.constant 0 : i32
    %c0_i32_0 = arith.constant 0 : i32
    %c0_i32_1 = arith.constant 0 : i32
    return %c0_i32, %c0_i32_0 : i32, i32
  }
  func.func @transform_5(%arg0: i32) -> (i32, i32) {
    %c0_i32 = arith.constant 0 : i32
    %c0_i32_0 = arith.constant 0 : i32
    %c0_i32_1 = arith.constant 0 : i32
    return %c0_i32, %c0_i32_0 : i32, i32
  }
  func.func @transform_6(%arg0: i32) -> (i32, i32) {
    %c0_i32 = arith.constant 0 : i32
    %c0_i32_0 = arith.constant 0 : i32
    return %arg0, %c0_i32 : i32, i32
  }
}

</mosaic_0001>

<llo_original>
// kernel: net_forward.3
$region0: #{net_forward.3}
  #allocation0 [shape = 'u32[]', space=smem, size = 0x4, offset = 0x4, fixed_abs, tag = 'smem constant byte address 0x4 - core index']
  #allocation1 [shape = 'u32[144,128]{1,0:T(1,128)}', space=vmem, size = 0x12000, scoped, tag = 'internal scratch']
  %s0 = inlined_call_operand.vmem [shape: bf16[2,576,32], index: 0, kind: input, shape index: {}]
  %s1 = inlined_call_operand.vmem [shape: bf16[32,128], index: 1, kind: input, shape index: {}]
  %s2 = inlined_call_operand.vmem [shape: f32[1,128], index: 2, kind: input, shape index: {}]
  %s3 = inlined_call_operand.vmem [shape: bf16[2,12,24,128], index: 3, kind: output, shape index: {}]
  %s4 = sld [smem:[#allocation0]]
  $region45: #{net_forward.3} parent=0
    _
  %s6 = ssub.s32 1, %s4
  %s7 = scalar_select 0, %s6, %s4
  loop: start=0, step=1, limit=4
  $region2: #{net_forward.3} parent=0 // loop_pre_header
    _
  $region3: #{net_forward.3} parent=0 // loop_header
    %s9 = sphi 0, %s13
    %p10 = scmp.ge.s32.totalorder %s9, 4
    %s19 = sphi 0, %s21
    %s22 = sphi 0, %s19
    %s23 = sphi 0, %s22
    %s39 = sphi 0, %s23
    %s43 = sphi 0, %s43
    %s45 = sphi 0, %s43
    %s46 = sphi 0, %s45
    %s60 = sphi 0, %s46
    %s64 = sphi 0, %s64
    %s66 = sphi 0, %s64
    %s67 = sphi 0, %s66
    %s81 = sphi 0, %s67
    %s87 = sphi 0, %s89
    %s90 = sphi 0, %s87
    %s91 = sphi 0, %s90
    %s107 = sphi 0, %s91
  $region4: #{net_forward.3} parent=0 // loop_header_branch
    %12 = sbr.rel (%p10) target = $region8
  $region5: #{net_forward.3} parent=0 // loop_body
    %s14 = ssub.s32 %s9, 1
    %s15 = ssub.s32 %s9, 2
    %s16 = sadd.s32 %s9, 1
    %s17 = ssub.s32 %s9, %s16
    %p18 = scmp.eq.s32.totalorder %s17, 0
    %s20 = sadd.s32 %s19, 1
    %s21 = scalar_select %p18, %s19, %s20
    %p24 = pneg %p18
    %p25 = scmp.eq.s32.totalorder %s9, 1
    %p26 = por %p24, %p25
    %p27 = scmp.ne.s32.totalorder %s19, %s22
    %p28 = scmp.eq.s32.totalorder %s9, 0
    %p29 = por %p27, %p28
    %p30 = scmp.ne.s32.totalorder %s19, %s22
    %p31 = scmp.eq.s32.totalorder %s14, 1
    %p32 = por %p30, %p31
    %p33 = scmp.ne.s32.totalorder %s22, %s23
    %p34 = scmp.eq.s32.totalorder %s14, 0
    %p35 = por %p33, %p34
    %p36 = scmp.ne.s32.totalorder %s22, %s23
    %p37 = scmp.eq.s32.totalorder %s15, 1
    %p38 = por %p36, %p37
    %p40 = scmp.ne.s32.totalorder %s23, %s39
    %p41 = scmp.eq.s32.totalorder %s15, 0
    %p42 = por %p40, %p41
    %s44 = sadd.s32 %s43, 1
    %p47 = scmp.eq.s32.totalorder %s9, 1
    %p48 = scmp.ne.s32.totalorder %s43, %s45
    %p49 = scmp.eq.s32.totalorder %s9, 0
    %p50 = por %p48, %p49
    %p51 = scmp.ne.s32.totalorder %s43, %s45
    %p52 = scmp.eq.s32.totalorder %s14, 1
    %p53 = por %p51, %p52
    %p54 = scmp.ne.s32.totalorder %s45, %s46
    %p55 = scmp.eq.s32.totalorder %s14, 0
    %p56 = por %p54, %p55
    %p57 = scmp.ne.s32.totalorder %s45, %s46
    %p58 = scmp.eq.s32.totalorder %s15, 1
    %p59 = por %p57, %p58
    %p61 = scmp.ne.s32.totalorder %s46, %s60
    %p62 = scmp.eq.s32.totalorder %s15, 0
    %p63 = por %p61, %p62
    %s65 = sadd.s32 %s64, 1
    %p68 = scmp.eq.s32.totalorder %s9, 1
    %p69 = scmp.ne.s32.totalorder %s64, %s66
    %p70 = scmp.eq.s32.totalorder %s9, 0
    %p71 = por %p69, %p70
    %p72 = scmp.ne.s32.totalorder %s64, %s66
    %p73 = scmp.eq.s32.totalorder %s14, 1
    %p74 = por %p72, %p73
    %p75 = scmp.ne.s32.totalorder %s66, %s67
    %p76 = scmp.eq.s32.totalorder %s14, 0
    %p77 = por %p75, %p76
    %p78 = scmp.ne.s32.totalorder %s66, %s67
    %p79 = scmp.eq.s32.totalorder %s15, 1
    %p80 = por %p78, %p79
    %p82 = scmp.ne.s32.totalorder %s67, %s81
    %p83 = scmp.eq.s32.totalorder %s15, 0
    %p84 = por %p82, %p83
    %s85 = ssub.s32 %s9, %s16
    %p86 = scmp.eq.s32.totalorder %s85, 0
    %s88 = sadd.s32 %s87, 1
    %s89 = scalar_select %p86, %s87, %s88
    %p92 = pneg %p86
    %p93 = scmp.eq.s32.totalorder %s9, 1
    %p94 = por %p92, %p93
    %p95 = scmp.ne.s32.totalorder %s87, %s90
    %p96 = scmp.eq.s32.totalorder %s9, 0
    %p97 = por %p95, %p96
    %p98 = scmp.ne.s32.totalorder %s87, %s90
    %p99 = scmp.eq.s32.totalorder %s14, 1
    %p100 = por %p98, %p99
    %p101 = scmp.ne.s32.totalorder %s90, %s91
    %p102 = scmp.eq.s32.totalorder %s14, 0
    %p103 = por %p101, %p102
    %p104 = scmp.ne.s32.totalorder %s90, %s91
    %p105 = scmp.eq.s32.totalorder %s15, 1
    %p106 = por %p104, %p105
    %p108 = scmp.ne.s32.totalorder %s91, %s107
    %p109 = scmp.eq.s32.totalorder %s15, 0
    %p110 = por %p108, %p109
    %p111 = scmp.le.s32.totalorder 1, %s9
    %p112 = scmp.lt.s32.totalorder %s9, 3
    %p113 = pnand %p111, %p112
    %p114 = pneg %p113
    // Predicated region
    $region9: #{net_forward.3} parent=5 // pred_check
      _
    $region10: #{net_forward.3} parent=5 // pred_check_branch
      %116 = sbr.rel (%p113) target = $region12
    $region11: #{net_forward.3} parent=5 // pred_region
      %s117 = ssub.s32 %s9, 1
      // Predicated region
      $region13: #{net_forward.3} parent=11 // pred_check
        %p118 = pneg %p56
      $region14: #{net_forward.3} parent=11 // pred_check_branch
        %120 = sbr.rel (%p118) target = $region16
      $region15: #{net_forward.3} parent=11 // pred_region
        _
      $region16: #{net_forward.3} parent=11 // pred_fallthru
        _
      // Predicated region
      $region17: #{net_forward.3} parent=11 // pred_check
        %p121 = pneg %p77
      $region18: #{net_forward.3} parent=11 // pred_check_branch
        %123 = sbr.rel (%p121) target = $region20
      $region19: #{net_forward.3} parent=11 // pred_region
        _
      $region20: #{net_forward.3} parent=11 // pred_fallthru
        _
    $region12: #{net_forward.3} parent=5 // pred_fallthru
      _
    %p124 = scmp.lt.s32.totalorder %s9, 2
    // Predicated region
    $region21: #{net_forward.3} parent=5 // pred_check
      %p125 = pneg %p124
    $region22: #{net_forward.3} parent=5 // pred_check_branch
      %127 = sbr.rel (%p125) target = $region24
    $region23: #{net_forward.3} parent=5 // pred_region
      // Predicated region
      $region25: #{net_forward.3} parent=23 // pred_check
        %p128 = pneg %p29
      $region26: #{net_forward.3} parent=23 // pred_check_branch
        %130 = sbr.rel (%p128) target = $region28
      $region27: #{net_forward.3} parent=23 // pred_region
        %p131 = scmp.lt.s32.totalorder %s9, 1
        %s132 = scalar_select %p131, %s9, 1
        %s133 = smul.addr %s132, 72
        %s134 = smul.addr %s133, 4
        %s135 = scalar_lea.vmem %s0, %s134
      $region28: #{net_forward.3} parent=23 // pred_fallthru
        _
    $region24: #{net_forward.3} parent=5 // pred_fallthru
      _
    %p136 = scmp.le.s32.totalorder 1, %s9
    %p137 = scmp.lt.s32.totalorder %s9, 3
    %p138 = pnand %p136, %p137
    %p139 = pneg %p138
    // Predicated region
    $region29: #{net_forward.3} parent=5 // pred_check
      _
    $region30: #{net_forward.3} parent=5 // pred_check_branch
      %141 = sbr.rel (%p138) target = $region32
    $region31: #{net_forward.3} parent=5 // pred_region
      %s142 = ssub.s32 %s9, 1
      %p143 = scmp.lt.s32.totalorder %s14, 1
      %s144 = scalar_select %p143, %s14, 1
      %s145 = smul.addr %s144, 72
      %s146 = smul.addr %s145, 4
      %s147 = scalar_lea.vmem %s0, %s146
      %p148 = pneg %p35
      %p149 = pneg %p32
      %p150 = pneg %p56
      %p151 = pneg %p53
      %p152 = pneg %p77
      %p153 = pneg %p74
      %p154 = pneg %p103
      %p155 = pneg %p100
      %p156 = scmp.lt.s32.totalorder %s14, 1
      %s157 = scalar_select %p156, %s14, 1
      %s158 = smul.addr %s157, 36
      %s159 = smul.addr %s158, 4
      %s160 = scalar_lea.vmem %s3, %s159
      %p161 = scmp.lt.s32.totalorder %s14, 1
      %s162 = scalar_select %p161, %s14, 1
      %s163 = smul.addr %s162, 72
      %s164 = smul.addr %s163, 4
      %s165 = scalar_lea.vmem %s0, %s164
      %p166 = scmp.lt.s32.totalorder %s14, 1
      %s167 = scalar_select %p166, %s14, 1
      %s168 = smul.addr %s167, 36
      %s169 = smul.addr %s168, 4
      %s170 = scalar_lea.vmem %s3, %s169
      %v172 = vld [vmem:[%s165] sm:$0xf]
      %v173 = vld [vmem:[%s165 + $0x4] sm:$0xf]
      %v174 = vld [vmem:[%s165 + $0x8] sm:$0xf]
      %v175 = vld [vmem:[%s165 + $0xc] sm:$0xf]
      %v176 = vld [vmem:[%s165 + $0x10] sm:$0xf]
      %v177 = vld [vmem:[%s165 + $0x14] sm:$0xf]
      %v178 = vld [vmem:[%s165 + $0x18] sm:$0xf]
      %v179 = vld [vmem:[%s165 + $0x1c] sm:$0xf]
      %v180 = vld [vmem:[%s165 + $0x20] sm:$0xf]
      %v181 = vld [vmem:[%s165 + $0x24] sm:$0xf]
      %v182 = vld [vmem:[%s165 + $0x28] sm:$0xf]
      %v183 = vld [vmem:[%s165 + $0x2c] sm:$0xf]
      %v184 = vld [vmem:[%s165 + $0x30] sm:$0xf]
      %v185 = vld [vmem:[%s165 + $0x34] sm:$0xf]
      %v186 = vld [vmem:[%s165 + $0x38] sm:$0xf]
      %v187 = vld [vmem:[%s165 + $0x3c] sm:$0xf]
      %v188 = vld [vmem:[%s165 + $0x40] sm:$0xf]
      %v189 = vld [vmem:[%s165 + $0x44] sm:$0xf]
      %v190 = vld [vmem:[%s165 + $0x48] sm:$0xf]
      %v191 = vld [vmem:[%s165 + $0x4c] sm:$0xf]
      %v192 = vld [vmem:[%s165 + $0x50] sm:$0xf]
      %v193 = vld [vmem:[%s165 + $0x54] sm:$0xf]
      %v194 = vld [vmem:[%s165 + $0x58] sm:$0xf]
      %v195 = vld [vmem:[%s165 + $0x5c] sm:$0xf]
      %v196 = vld [vmem:[%s165 + $0x60] sm:$0xf]
      %v197 = vld [vmem:[%s165 + $0x64] sm:$0xf]
      %v198 = vld [vmem:[%s165 + $0x68] sm:$0xf]
      %v199 = vld [vmem:[%s165 + $0x6c] sm:$0xf]
      %v200 = vld [vmem:[%s165 + $0x70] sm:$0xf]
      %v201 = vld [vmem:[%s165 + $0x74] sm:$0xf]
      %v202 = vld [vmem:[%s165 + $0x78] sm:$0xf]
      %v203 = vld [vmem:[%s165 + $0x7c] sm:$0xf]
      %v204 = vld [vmem:[%s165 + $0x80] sm:$0xf]
      %v205 = vld [vmem:[%s165 + $0x84] sm:$0xf]
      %v206 = vld [vmem:[%s165 + $0x88] sm:$0xf]
      %v207 = vld [vmem:[%s165 + $0x8c] sm:$0xf]
      %v208 = vld [vmem:[%s165 + $0x90] sm:$0xf]
      %v209 = vld [vmem:[%s165 + $0x94] sm:$0xf]
      %v210 = vld [vmem:[%s165 + $0x98] sm:$0xf]
      %v211 = vld [vmem:[%s165 + $0x9c] sm:$0xf]
      %v212 = vld [vmem:[%s165 + $0xa0] sm:$0xf]
      %v213 = vld [vmem:[%s165 + $0xa4] sm:$0xf]
      %v214 = vld [vmem:[%s165 + $0xa8] sm:$0xf]
      %v215 = vld [vmem:[%s165 + $0xac] sm:$0xf]
      %v216 = vld [vmem:[%s165 + $0xb0] sm:$0xf]
      %v217 = vld [vmem:[%s165 + $0xb4] sm:$0xf]
      %v218 = vld [vmem:[%s165 + $0xb8] sm:$0xf]
      %v219 = vld [vmem:[%s165 + $0xbc] sm:$0xf]
      %v220 = vld [vmem:[%s165 + $0xc0] sm:$0xf]
      %v221 = vld [vmem:[%s165 + $0xc4] sm:$0xf]
      %v222 = vld [vmem:[%s165 + $0xc8] sm:$0xf]
      %v223 = vld [vmem:[%s165 + $0xcc] sm:$0xf]
      %v224 = vld [vmem:[%s165 + $0xd0] sm:$0xf]
      %v225 = vld [vmem:[%s165 + $0xd4] sm:$0xf]
      %v226 = vld [vmem:[%s165 + $0xd8] sm:$0xf]
      %v227 = vld [vmem:[%s165 + $0xdc] sm:$0xf]
      %v228 = vld [vmem:[%s165 + $0xe0] sm:$0xf]
      %v229 = vld [vmem:[%s165 + $0xe4] sm:$0xf]
      %v230 = vld [vmem:[%s165 + $0xe8] sm:$0xf]
      %v231 = vld [vmem:[%s165 + $0xec] sm:$0xf]
      %v232 = vld [vmem:[%s165 + $0xf0] sm:$0xf]
      %v233 = vld [vmem:[%s165 + $0xf4] sm:$0xf]
      %v234 = vld [vmem:[%s165 + $0xf8] sm:$0xf]
      %v235 = vld [vmem:[%s165 + $0xfc] sm:$0xf]
      %v236 = vld [vmem:[%s165 + $0x100] sm:$0xf]
      %v237 = vld [vmem:[%s165 + $0x104] sm:$0xf]
      %v238 = vld [vmem:[%s165 + $0x108] sm:$0xf]
      %v239 = vld [vmem:[%s165 + $0x10c] sm:$0xf]
      %v240 = vld [vmem:[%s165 + $0x110] sm:$0xf]
      %v241 = vld [vmem:[%s165 + $0x114] sm:$0xf]
      %v242 = vld [vmem:[%s165 + $0x118] sm:$0xf]
      %v243 = vld [vmem:[%s165 + $0x11c] sm:$0xf]
      %v244 = vld [vmem:[%s1] sm:$0xf]
      %v245 = vld [vmem:[%s1 + $0x4] sm:$0xf]
      %v246 = vld [vmem:[%s1 + $0x8] sm:$0xf]
      %v247 = vld [vmem:[%s1 + $0xc] sm:$0xf]
      %v248 = vld [vmem:[%s2] sm:$0x1]
      %v250 = vlaneseq
      %v251 = vshrl.u32 %v250, 7
      %v252 = vsub.s32 0, %v251
      %v253 = vrot.slane %v248, %v252
      %v327 = vunpack.c.l.b16 %v172
      %v328 = vunpack.c.l.b16 %v173
      %v329 = vunpack.c.l.b16 %v174
      %v330 = vunpack.c.l.b16 %v175
      %v331 = vunpack.c.l.b16 %v176
      %v332 = vunpack.c.l.b16 %v177
      %v333 = vunpack.c.l.b16 %v178
      %v334 = vunpack.c.l.b16 %v179
      %v335 = vunpack.c.l.b16 %v180
      %v336 = vunpack.c.l.b16 %v181
      %v337 = vunpack.c.l.b16 %v182
      %v338 = vunpack.c.l.b16 %v183
      %v339 = vunpack.c.l.b16 %v184
      %v340 = vunpack.c.l.b16 %v185
      %v341 = vunpack.c.l.b16 %v186
      %v342 = vunpack.c.l.b16 %v187
      %v343 = vunpack.c.l.b16 %v188
      %v344 = vunpack.c.l.b16 %v189
      %v345 = vunpack.c.l.b16 %v190
      %v346 = vunpack.c.l.b16 %v191
      %v347 = vunpack.c.l.b16 %v192
      %v348 = vunpack.c.l.b16 %v193
      %v349 = vunpack.c.l.b16 %v194
      %v350 = vunpack.c.l.b16 %v195
      %v351 = vunpack.c.l.b16 %v196
      %v352 = vunpack.c.l.b16 %v197
      %v353 = vunpack.c.l.b16 %v198
      %v354 = vunpack.c.l.b16 %v199
      %v355 = vunpack.c.l.b16 %v200
      %v356 = vunpack.c.l.b16 %v201
      %v357 = vunpack.c.l.b16 %v202
      %v358 = vunpack.c.l.b16 %v203
      %v359 = vunpack.c.l.b16 %v204
      %v360 = vunpack.c.l.b16 %v205
      %v361 = vunpack.c.l.b16 %v206
      %v362 = vunpack.c.l.b16 %v207
      %v363 = vunpack.c.l.b16 %v208
      %v364 = vunpack.c.l.b16 %v209
      %v365 = vunpack.c.l.b16 %v210
      %v366 = vunpack.c.l.b16 %v211
      %v367 = vunpack.c.l.b16 %v212
      %v368 = vunpack.c.l.b16 %v213
      %v369 = vunpack.c.l.b16 %v214
      %v370 = vunpack.c.l.b16 %v215
      %v371 = vunpack.c.l.b16 %v216
      %v372 = vunpack.c.l.b16 %v217
      %v373 = vunpack.c.l.b16 %v218
      %v374 = vunpack.c.l.b16 %v219
      %v375 = vunpack.c.l.b16 %v220
      %v376 = vunpack.c.l.b16 %v221
      %v377 = vunpack.c.l.b16 %v222
      %v378 = vunpack.c.l.b16 %v223
      %v379 = vunpack.c.l.b16 %v224
      %v380 = vunpack.c.l.b16 %v225
      %v381 = vunpack.c.l.b16 %v226
      %v382 = vunpack.c.l.b16 %v227
      %v383 = vunpack.c.l.b16 %v228
      %v384 = vunpack.c.l.b16 %v229
      %v385 = vunpack.c.l.b16 %v230
      %v386 = vunpack.c.l.b16 %v231
      %v387 = vunpack.c.l.b16 %v232
      %v388 = vunpack.c.l.b16 %v233
      %v389 = vunpack.c.l.b16 %v234
      %v390 = vunpack.c.l.b16 %v235
      %v391 = vunpack.c.l.b16 %v236
      %v392 = vunpack.c.l.b16 %v237
      %v393 = vunpack.c.l.b16 %v238
      %v394 = vunpack.c.l.b16 %v239
      %v395 = vunpack.c.l.b16 %v240
      %v396 = vunpack.c.l.b16 %v241
      %v397 = vunpack.c.l.b16 %v242
      %v398 = vunpack.c.l.b16 %v243
      %v399 = vpack.c.b16 %v328, %v327
      %v400 = vpack.c.b16 %v330, %v329
      %v401 = vpack.c.b16 %v332, %v331
      %v402 = vpack.c.b16 %v334, %v333
      %v403 = vpack.c.b16 %v336, %v335
      %v404 = vpack.c.b16 %v338, %v337
      %v405 = vpack.c.b16 %v340, %v339
      %v406 = vpack.c.b16 %v342, %v341
      %v407 = vpack.c.b16 %v344, %v343
      %v408 = vpack.c.b16 %v346, %v345
      %v409 = vpack.c.b16 %v348, %v347
      %v410 = vpack.c.b16 %v350, %v349
      %v411 = vpack.c.b16 %v352, %v351
      %v412 = vpack.c.b16 %v354, %v353
      %v413 = vpack.c.b16 %v356, %v355
      %v414 = vpack.c.b16 %v358, %v357
      %v415 = vpack.c.b16 %v360, %v359
      %v416 = vpack.c.b16 %v362, %v361
      %v417 = vpack.c.b16 %v364, %v363
      %v418 = vpack.c.b16 %v366, %v365
      %v419 = vpack.c.b16 %v368, %v367
      %v420 = vpack.c.b16 %v370, %v369
      %v421 = vpack.c.b16 %v372, %v371
      %v422 = vpack.c.b16 %v374, %v373
      %v423 = vpack.c.b16 %v376, %v375
      %v424 = vpack.c.b16 %v378, %v377
      %v425 = vpack.c.b16 %v380, %v379
      %v426 = vpack.c.b16 %v382, %v381
      %v427 = vpack.c.b16 %v384, %v383
      %v428 = vpack.c.b16 %v386, %v385
      %v429 = vpack.c.b16 %v388, %v387
      %v430 = vpack.c.b16 %v390, %v389
      %v431 = vpack.c.b16 %v392, %v391
      %v432 = vpack.c.b16 %v394, %v393
      %v433 = vpack.c.b16 %v396, %v395
      %v434 = vpack.c.b16 %v398, %v397
      %v439 = vunpack.c.l.b16 %v244
      %v440 = vunpack.c.l.b16 %v245
      %v441 = vunpack.c.l.b16 %v246
      %v442 = vunpack.c.l.b16 %v247
      %v443 = vpack.c.b16 %v440, %v439
      %v444 = vpack.c.b16 %v442, %v441
      %vm447 = vcmask 261120
      %v449 = vsel %vm447, %v399, 0
      %v452 = vsel %vm447, %v400, 0
      %v455 = vsel %vm447, %v401, 0
      %v458 = vsel %vm447, %v402, 0
      %v461 = vsel %vm447, %v403, 0
      %v464 = vsel %vm447, %v404, 0
      %v467 = vsel %vm447, %v405, 0
      %v470 = vsel %vm447, %v406, 0
      %v473 = vsel %vm447, %v407, 0
      %v476 = vsel %vm447, %v408, 0
      %v479 = vsel %vm447, %v409, 0
      %v482 = vsel %vm447, %v410, 0
      %v485 = vsel %vm447, %v411, 0
      %v488 = vsel %vm447, %v412, 0
      %v491 = vsel %vm447, %v413, 0
      %v494 = vsel %vm447, %v414, 0
      %v497 = vsel %vm447, %v415, 0
      %v500 = vsel %vm447, %v416, 0
      %v503 = vsel %vm447, %v417, 0
      %v506 = vsel %vm447, %v418, 0
      %v509 = vsel %vm447, %v419, 0
      %v512 = vsel %vm447, %v420, 0
      %v515 = vsel %vm447, %v421, 0
      %v518 = vsel %vm447, %v422, 0
      %v521 = vsel %vm447, %v423, 0
      %v524 = vsel %vm447, %v424, 0
      %v527 = vsel %vm447, %v425, 0
      %v530 = vsel %vm447, %v426, 0
      %v533 = vsel %vm447, %v427, 0
      %v536 = vsel %vm447, %v428, 0
      %v539 = vsel %vm447, %v429, 0
      %v542 = vsel %vm447, %v430, 0
      %v545 = vsel %vm447, %v431, 0
      %v548 = vsel %vm447, %v432, 0
      %v551 = vsel %vm447, %v433, 0
      %v554 = vsel %vm447, %v434, 0
      %556 = vmatprep.subr.bf16.mxu0 0
      %557 = vmatpush1.bf16.msra.mxu0 %v443
      %558 = vmatprep.subr.bf16.mxu0 0
      %559 = vmatpush1.bf16.msra.mxu0 %v444
      %560 = vmatprep.subr.bf16.mxu0 0
      %561 = vmatpush1.bf16.msra.mxu0 0
      %562 = vmatprep.subr.bf16.mxu0 0
      %563 = vmatpush1.bf16.msra.mxu0 0
      %564 = vmatprep.subr.bf16.mxu0 0
      %565 = vmatpush1.bf16.msra.mxu0 0
      %566 = vmatprep.subr.bf16.mxu0 0
      %567 = vmatpush1.bf16.msra.mxu0 0
      %568 = vmatprep.subr.bf16.mxu0 0
      %569 = vmatpush1.bf16.msra.mxu0 0
      %570 = vmatprep.subr.bf16.mxu0 0
      %571 = vmatpush1.bf16.msra.mxu0 0
      %572 = vmatprep.subr.bf16.mxu0 0
      %573 = vmatpush1.bf16.msra.mxu0 0
      %574 = vmatprep.subr.bf16.mxu0 0
      %575 = vmatpush1.bf16.msra.mxu0 0
      %576 = vmatprep.subr.bf16.mxu0 0
      %577 = vmatpush1.bf16.msra.mxu0 0
      %578 = vmatprep.subr.bf16.mxu0 0
      %579 = vmatpush1.bf16.msra.mxu0 0
      %580 = vmatprep.subr.bf16.mxu0 0
      %581 = vmatpush1.bf16.msra.mxu0 0
      %582 = vmatprep.subr.bf16.mxu0 0
      %583 = vmatpush1.bf16.msra.mxu0 0
      %584 = vmatprep.subr.bf16.mxu0 0
      %585 = vmatpush1.bf16.msra.mxu0 0
      %586 = vmatprep.subr.bf16.mxu0 0
      %587 = vmatpush1.bf16.msra.mxu0 0
      %588 = vmatprep.mubr.bf16.mxu0 0
      %589 = vmatmul.mubr.bf16.gmra.mrb[0].mxu0 %v449
      %v590 = vpop.f32.mrb[0].mxu0
      %v591 = vadd.f32 %v253, %v590
      %v592 = vpop.f32.mrb[0].mxu0
      %v593 = vpop.f32.mrb[0].mxu0
      %v594 = vadd.f32 %v253, %v593
      %v595 = vpop.f32.mrb[0].mxu0
      %596 = vmatprep.mubr.bf16.mxu0 0
      %597 = vmatmul.mubr.bf16.gmra.mrb[0].mxu0 %v452
      %v598 = vpop.f32.mrb[0].mxu0
      %v599 = vadd.f32 %v253, %v598
      %v600 = vpop.f32.mrb[0].mxu0
      %v601 = vpop.f32.mrb[0].mxu0
      %v602 = vadd.f32 %v253, %v601
      %v603 = vpop.f32.mrb[0].mxu0
      %604 = vmatprep.mubr.bf16.mxu0 0
      %605 = vmatmul.mubr.bf16.gmra.mrb[0].mxu0 %v455
      %v606 = vpop.f32.mrb[0].mxu0
      %v607 = vadd.f32 %v253, %v606
      %v608 = vpop.f32.mrb[0].mxu0
      %v609 = vpop.f32.mrb[0].mxu0
      %v610 = vadd.f32 %v253, %v609
      %v611 = vpop.f32.mrb[0].mxu0
      %612 = vmatprep.mubr.bf16.mxu0 0
      %613 = vmatmul.mubr.bf16.gmra.mrb[0].mxu0 %v458
      %v614 = vpop.f32.mrb[0].mxu0
      %v615 = vadd.f32 %v253, %v614
      %v616 = vpop.f32.mrb[0].mxu0
      %v617 = vpop.f32.mrb[0].mxu0
      %v618 = vadd.f32 %v253, %v617
      %v619 = vpop.f32.mrb[0].mxu0
      %620 = vmatprep.mubr.bf16.mxu0 0
      %621 = vmatmul.mubr.bf16.gmra.mrb[0].mxu0 %v461
      %v622 = vpop.f32.mrb[0].mxu0
      %v623 = vadd.f32 %v253, %v622
      %v624 = vpop.f32.mrb[0].mxu0
      %v625 = vpop.f32.mrb[0].mxu0
      %v626 = vadd.f32 %v253, %v625
      %v627 = vpop.f32.mrb[0].mxu0
      %628 = vmatprep.mubr.bf16.mxu0 0
      %629 = vmatmul.mubr.bf16.gmra.mrb[0].mxu0 %v464
      %v630 = vpop.f32.mrb[0].mxu0
      %v631 = vadd.f32 %v253, %v630
      %v632 = vpop.f32.mrb[0].mxu0
      %v633 = vpop.f32.mrb[0].mxu0
      %v634 = vadd.f32 %v253, %v633
      %v635 = vpop.f32.mrb[0].mxu0
      %636 = vmatprep.mubr.bf16.mxu0 0
      %637 = vmatmul.mubr.bf16.gmra.mrb[0].mxu0 %v467
      %v638 = vpop.f32.mrb[0].mxu0
      %v639 = vadd.f32 %v253, %v638
      %v640 = vpop.f32.mrb[0].mxu0
      %v641 = vpop.f32.mrb[0].mxu0
      %v642 = vadd.f32 %v253, %v641
      %v643 = vpop.f32.mrb[0].mxu0
      %644 = vmatprep.mubr.bf16.mxu0 0
      %645 = vmatmul.mubr.bf16.gmra.mrb[0].mxu0 %v470
      %v646 = vpop.f32.mrb[0].mxu0
      %v647 = vadd.f32 %v253, %v646
      %v648 = vpop.f32.mrb[0].mxu0
      %v649 = vpop.f32.mrb[0].mxu0
      %v650 = vadd.f32 %v253, %v649
      %v651 = vpop.f32.mrb[0].mxu0
      %652 = vmatprep.mubr.bf16.mxu0 0
      %653 = vmatmul.mubr.bf16.gmra.mrb[0].mxu0 %v473
      %v654 = vpop.f32.mrb[0].mxu0
      %v655 = vadd.f32 %v253, %v654
      %v656 = vpop.f32.mrb[0].mxu0
      %v657 = vpop.f32.mrb[0].mxu0
      %v658 = vadd.f32 %v253, %v657
      %v659 = vpop.f32.mrb[0].mxu0
      %660 = vmatprep.mubr.bf16.mxu0 0
      %661 = vmatmul.mubr.bf16.gmra.mrb[0].mxu0 %v476
      %v662 = vpop.f32.mrb[0].mxu0
      %v663 = vadd.f32 %v253, %v662
      %v664 = vpop.f32.mrb[0].mxu0
      %v665 = vpop.f32.mrb[0].mxu0
      %v666 = vadd.f32 %v253, %v665
      %v667 = vpop.f32.mrb[0].mxu0
      %668 = vmatprep.mubr.bf16.mxu0 0
      %669 = vmatmul.mubr.bf16.gmra.mrb[0].mxu0 %v479
      %v670 = vpop.f32.mrb[0].mxu0
      %v671 = vadd.f32 %v253, %v670
      %v672 = vpop.f32.mrb[0].mxu0
      %v673 = vpop.f32.mrb[0].mxu0
      %v674 = vadd.f32 %v253, %v673
      %v675 = vpop.f32.mrb[0].mxu0
      %676 = vmatprep.mubr.bf16.mxu0 0
      %677 = vmatmul.mubr.bf16.gmra.mrb[0].mxu0 %v482
      %v678 = vpop.f32.mrb[0].mxu0
      %v679 = vadd.f32 %v253, %v678
      %v680 = vpop.f32.mrb[0].mxu0
      %v681 = vpop.f32.mrb[0].mxu0
      %v682 = vadd.f32 %v253, %v681
      %v683 = vpop.f32.mrb[0].mxu0
      %684 = vmatprep.mubr.bf16.mxu0 0
      %685 = vmatmul.mubr.bf16.gmra.mrb[0].mxu0 %v485
      %v686 = vpop.f32.mrb[0].mxu0
      %v687 = vadd.f32 %v253, %v686
      %v688 = vpop.f32.mrb[0].mxu0
      %v689 = vpop.f32.mrb[0].mxu0
      %v690 = vadd.f32 %v253, %v689
      %v691 = vpop.f32.mrb[0].mxu0
      %692 = vmatprep.mubr.bf16.mxu0 0
      %693 = vmatmul.mubr.bf16.gmra.mrb[0].mxu0 %v488
      %v694 = vpop.f32.mrb[0].mxu0
      %v695 = vadd.f32 %v253, %v694
      %v696 = vpop.f32.mrb[0].mxu0
      %v697 = vpop.f32.mrb[0].mxu0
      %v698 = vadd.f32 %v253, %v697
      %v699 = vpop.f32.mrb[0].mxu0
      %700 = vmatprep.mubr.bf16.mxu0 0
      %701 = vmatmul.mubr.bf16.gmra.mrb[0].mxu0 %v491
      %v702 = vpop.f32.mrb[0].mxu0
      %v703 = vadd.f32 %v253, %v702
      %v704 = vpop.f32.mrb[0].mxu0
      %v705 = vpop.f32.mrb[0].mxu0
      %v706 = vadd.f32 %v253, %v705
      %v707 = vpop.f32.mrb[0].mxu0
      %708 = vmatprep.mubr.bf16.mxu0 0
      %709 = vmatmul.mubr.bf16.gmra.mrb[0].mxu0 %v494
      %v710 = vpop.f32.mrb[0].mxu0
      %v711 = vadd.f32 %v253, %v710
      %v712 = vpop.f32.mrb[0].mxu0
      %v713 = vpop.f32.mrb[0].mxu0
      %v714 = vadd.f32 %v253, %v713
      %v715 = vpop.f32.mrb[0].mxu0
      %716 = vmatprep.mubr.bf16.mxu0 0
      %717 = vmatmul.mubr.bf16.gmra.mrb[0].mxu0 %v497
      %v718 = vpop.f32.mrb[0].mxu0
      %v719 = vadd.f32 %v253, %v718
      %v720 = vpop.f32.mrb[0].mxu0
      %v721 = vpop.f32.mrb[0].mxu0
      %v722 = vadd.f32 %v253, %v721
      %v723 = vpop.f32.mrb[0].mxu0
      %724 = vmatprep.mubr.bf16.mxu0 0
      %725 = vmatmul.mubr.bf16.gmra.mrb[0].mxu0 %v500
      %v726 = vpop.f32.mrb[0].mxu0
      %v727 = vadd.f32 %v253, %v726
      %v728 = vpop.f32.mrb[0].mxu0
      %v729 = vpop.f32.mrb[0].mxu0
      %v730 = vadd.f32 %v253, %v729
      %v731 = vpop.f32.mrb[0].mxu0
      %732 = vmatprep.mubr.bf16.mxu0 0
      %733 = vmatmul.mubr.bf16.gmra.mrb[0].mxu0 %v503
      %v734 = vpop.f32.mrb[0].mxu0
      %v735 = vadd.f32 %v253, %v734
      %v736 = vpop.f32.mrb[0].mxu0
      %v737 = vpop.f32.mrb[0].mxu0
      %v738 = vadd.f32 %v253, %v737
      %v739 = vpop.f32.mrb[0].mxu0
      %740 = vmatprep.mubr.bf16.mxu0 0
      %741 = vmatmul.mubr.bf16.gmra.mrb[0].mxu0 %v506
      %v742 = vpop.f32.mrb[0].mxu0
      %v743 = vadd.f32 %v253, %v742
      %v744 = vpop.f32.mrb[0].mxu0
      %v745 = vpop.f32.mrb[0].mxu0
      %v746 = vadd.f32 %v253, %v745
      %v747 = vpop.f32.mrb[0].mxu0
      %748 = vmatprep.mubr.bf16.mxu0 0
      %749 = vmatmul.mubr.bf16.gmra.mrb[0].mxu0 %v509
      %v750 = vpop.f32.mrb[0].mxu0
      %v751 = vadd.f32 %v253, %v750
      %v752 = vpop.f32.mrb[0].mxu0
      %v753 = vpop.f32.mrb[0].mxu0
      %v754 = vadd.f32 %v253, %v753
      %v755 = vpop.f32.mrb[0].mxu0
      %756 = vmatprep.mubr.bf16.mxu0 0
      %757 = vmatmul.mubr.bf16.gmra.mrb[0].mxu0 %v512
      %v758 = vpop.f32.mrb[0].mxu0
      %v759 = vadd.f32 %v253, %v758
      %v760 = vpop.f32.mrb[0].mxu0
      %v761 = vpop.f32.mrb[0].mxu0
      %v762 = vadd.f32 %v253, %v761
      %v763 = vpop.f32.mrb[0].mxu0
      %764 = vmatprep.mubr.bf16.mxu0 0
      %765 = vmatmul.mubr.bf16.gmra.mrb[0].mxu0 %v515
      %v766 = vpop.f32.mrb[0].mxu0
      %v767 = vadd.f32 %v253, %v766
      %v768 = vpop.f32.mrb[0].mxu0
      %v769 = vpop.f32.mrb[0].mxu0
      %v770 = vadd.f32 %v253, %v769
      %v771 = vpop.f32.mrb[0].mxu0
      %772 = vmatprep.mubr.bf16.mxu0 0
      %773 = vmatmul.mubr.bf16.gmra.mrb[0].mxu0 %v518
      %v774 = vpop.f32.mrb[0].mxu0
      %v775 = vadd.f32 %v253, %v774
      %v776 = vpop.f32.mrb[0].mxu0
      %v777 = vpop.f32.mrb[0].mxu0
      %v778 = vadd.f32 %v253, %v777
      %v779 = vpop.f32.mrb[0].mxu0
      %780 = vmatprep.mubr.bf16.mxu0 0
      %781 = vmatmul.mubr.bf16.gmra.mrb[0].mxu0 %v521
      %v782 = vpop.f32.mrb[0].mxu0
      %v783 = vadd.f32 %v253, %v782
      %v784 = vpop.f32.mrb[0].mxu0
      %v785 = vpop.f32.mrb[0].mxu0
      %v786 = vadd.f32 %v253, %v785
      %v787 = vpop.f32.mrb[0].mxu0
      %788 = vmatprep.mubr.bf16.mxu0 0
      %789 = vmatmul.mubr.bf16.gmra.mrb[0].mxu0 %v524
      %v790 = vpop.f32.mrb[0].mxu0
      %v791 = vadd.f32 %v253, %v790
      %v792 = vpop.f32.mrb[0].mxu0
      %v793 = vpop.f32.mrb[0].mxu0
      %v794 = vadd.f32 %v253, %v793
      %v795 = vpop.f32.mrb[0].mxu0
      %796 = vmatprep.mubr.bf16.mxu0 0
      %797 = vmatmul.mubr.bf16.gmra.mrb[0].mxu0 %v527
      %v798 = vpop.f32.mrb[0].mxu0
      %v799 = vadd.f32 %v253, %v798
      %v800 = vpop.f32.mrb[0].mxu0
      %v801 = vpop.f32.mrb[0].mxu0
      %v802 = vadd.f32 %v253, %v801
      %v803 = vpop.f32.mrb[0].mxu0
      %804 = vmatprep.mubr.bf16.mxu0 0
      %805 = vmatmul.mubr.bf16.gmra.mrb[0].mxu0 %v530
      %v806 = vpop.f32.mrb[0].mxu0
      %v807 = vadd.f32 %v253, %v806
      %v808 = vpop.f32.mrb[0].mxu0
      %v809 = vpop.f32.mrb[0].mxu0
      %v810 = vadd.f32 %v253, %v809
      %v811 = vpop.f32.mrb[0].mxu0
      %812 = vmatprep.mubr.bf16.mxu0 0
      %813 = vmatmul.mubr.bf16.gmra.mrb[0].mxu0 %v533
      %v814 = vpop.f32.mrb[0].mxu0
      %v815 = vadd.f32 %v253, %v814
      %v816 = vpop.f32.mrb[0].mxu0
      %v817 = vpop.f32.mrb[0].mxu0
      %v818 = vadd.f32 %v253, %v817
      %v819 = vpop.f32.mrb[0].mxu0
      %820 = vmatprep.mubr.bf16.mxu0 0
      %821 = vmatmul.mubr.bf16.gmra.mrb[0].mxu0 %v536
      %v822 = vpop.f32.mrb[0].mxu0
      %v823 = vadd.f32 %v253, %v822
      %v824 = vpop.f32.mrb[0].mxu0
      %v825 = vpop.f32.mrb[0].mxu0
      %v826 = vadd.f32 %v253, %v825
      %v827 = vpop.f32.mrb[0].mxu0
      %828 = vmatprep.mubr.bf16.mxu0 0
      %829 = vmatmul.mubr.bf16.gmra.mrb[0].mxu0 %v539
      %v830 = vpop.f32.mrb[0].mxu0
      %v831 = vadd.f32 %v253, %v830
      %v832 = vpop.f32.mrb[0].mxu0
      %v833 = vpop.f32.mrb[0].mxu0
      %v834 = vadd.f32 %v253, %v833
      %v835 = vpop.f32.mrb[0].mxu0
      %836 = vmatprep.mubr.bf16.mxu0 0
      %837 = vmatmul.mubr.bf16.gmra.mrb[0].mxu0 %v542
      %v838 = vpop.f32.mrb[0].mxu0
      %v839 = vadd.f32 %v253, %v838
      %v840 = vpop.f32.mrb[0].mxu0
      %v841 = vpop.f32.mrb[0].mxu0
      %v842 = vadd.f32 %v253, %v841
      %v843 = vpop.f32.mrb[0].mxu0
      %844 = vmatprep.mubr.bf16.mxu0 0
      %845 = vmatmul.mubr.bf16.gmra.mrb[0].mxu0 %v545
      %v846 = vpop.f32.mrb[0].mxu0
      %v847 = vadd.f32 %v253, %v846
      %v848 = vpop.f32.mrb[0].mxu0
      %v849 = vpop.f32.mrb[0].mxu0
      %v850 = vadd.f32 %v253, %v849
      %v851 = vpop.f32.mrb[0].mxu0
      %852 = vmatprep.mubr.bf16.mxu0 0
      %853 = vmatmul.mubr.bf16.gmra.mrb[0].mxu0 %v548
      %v854 = vpop.f32.mrb[0].mxu0
      %v855 = vadd.f32 %v253, %v854
      %v856 = vpop.f32.mrb[0].mxu0
      %v857 = vpop.f32.mrb[0].mxu0
      %v858 = vadd.f32 %v253, %v857
      %v859 = vpop.f32.mrb[0].mxu0
      %860 = vmatprep.mubr.bf16.mxu0 0
      %861 = vmatmul.mubr.bf16.gmra.mrb[0].mxu0 %v551
      %v862 = vpop.f32.mrb[0].mxu0
      %v863 = vadd.f32 %v253, %v862
      %v864 = vpop.f32.mrb[0].mxu0
      %v865 = vpop.f32.mrb[0].mxu0
      %v866 = vadd.f32 %v253, %v865
      %v867 = vpop.f32.mrb[0].mxu0
      %868 = vmatprep.mubr.bf16.mxu0 0
      %869 = vmatmul.mubr.bf16.gmra.mrb[0].mxu0 %v554
      %v870 = vpop.f32.mrb[0].mxu0
      %v871 = vadd.f32 %v253, %v870
      %v872 = vpop.f32.mrb[0].mxu0
      %v873 = vpop.f32.mrb[0].mxu0
      %v874 = vadd.f32 %v253, %v873
      %v875 = vpop.f32.mrb[0].mxu0
      %876 = vdwg.mxu0
      %v877 = vmax.f32 %v591, 0.0
      %v878 = vmax.f32 %v594, 0.0
      %v879 = vmax.f32 %v599, 0.0
      %v880 = vmax.f32 %v602, 0.0
      %v881 = vmax.f32 %v607, 0.0
      %v882 = vmax.f32 %v610, 0.0
      %v883 = vmax.f32 %v615, 0.0
      %v884 = vmax.f32 %v618, 0.0
      %v885 = vmax.f32 %v623, 0.0
      %v886 = vmax.f32 %v626, 0.0
      %v887 = vmax.f32 %v631, 0.0
      %v888 = vmax.f32 %v634, 0.0
      %v889 = vmax.f32 %v639, 0.0
      %v890 = vmax.f32 %v642, 0.0
      %v891 = vmax.f32 %v647, 0.0
      %v892 = vmax.f32 %v650, 0.0
      %v893 = vmax.f32 %v655, 0.0
      %v894 = vmax.f32 %v658, 0.0
      %v895 = vmax.f32 %v663, 0.0
      %v896 = vmax.f32 %v666, 0.0
      %v897 = vmax.f32 %v671, 0.0
      %v898 = vmax.f32 %v674, 0.0
      %v899 = vmax.f32 %v679, 0.0
      %v900 = vmax.f32 %v682, 0.0
      %v901 = vmax.f32 %v687, 0.0
      %v902 = vmax.f32 %v690, 0.0
      %v903 = vmax.f32 %v695, 0.0
      %v904 = vmax.f32 %v698, 0.0
      %v905 = vmax.f32 %v703, 0.0
      %v906 = vmax.f32 %v706, 0.0
      %v907 = vmax.f32 %v711, 0.0
      %v908 = vmax.f32 %v714, 0.0
      %v909 = vmax.f32 %v719, 0.0
      %v910 = vmax.f32 %v722, 0.0
      %v911 = vmax.f32 %v727, 0.0
      %v912 = vmax.f32 %v730, 0.0
      %v913 = vmax.f32 %v735, 0.0
      %v914 = vmax.f32 %v738, 0.0
      %v915 = vmax.f32 %v743, 0.0
      %v916 = vmax.f32 %v746, 0.0
      %v917 = vmax.f32 %v751, 0.0
      %v918 = vmax.f32 %v754, 0.0
      %v919 = vmax.f32 %v759, 0.0
      %v920 = vmax.f32 %v762, 0.0
      %v921 = vmax.f32 %v767, 0.0
      %v922 = vmax.f32 %v770, 0.0
      %v923 = vmax.f32 %v775, 0.0
      %v924 = vmax.f32 %v778, 0.0
      %v925 = vmax.f32 %v783, 0.0
      %v926 = vmax.f32 %v786, 0.0
      %v927 = vmax.f32 %v791, 0.0
      %v928 = vmax.f32 %v794, 0.0
      %v929 = vmax.f32 %v799, 0.0
      %v930 = vmax.f32 %v802, 0.0
      %v931 = vmax.f32 %v807, 0.0
      %v932 = vmax.f32 %v810, 0.0
      %v933 = vmax.f32 %v815, 0.0
      %v934 = vmax.f32 %v818, 0.0
      %v935 = vmax.f32 %v823, 0.0
      %v936 = vmax.f32 %v826, 0.0
      %v937 = vmax.f32 %v831, 0.0
      %v938 = vmax.f32 %v834, 0.0
      %v939 = vmax.f32 %v839, 0.0
      %v940 = vmax.f32 %v842, 0.0
      %v941 = vmax.f32 %v847, 0.0
      %v942 = vmax.f32 %v850, 0.0
      %v943 = vmax.f32 %v855, 0.0
      %v944 = vmax.f32 %v858, 0.0
      %v945 = vmax.f32 %v863, 0.0
      %v946 = vmax.f32 %v866, 0.0
      %v947 = vmax.f32 %v871, 0.0
      %v948 = vmax.f32 %v874, 0.0
      %v949 = vmax.f32 %v877, %v880
      %v950 = vmax.f32 %v878, %v881
      %v951 = vmax.f32 %v879, %v882
      %v952 = vmax.f32 %v883, %v886
      %v953 = vmax.f32 %v884, %v887
      %v954 = vmax.f32 %v885, %v888
      %v955 = vmax.f32 %v889, %v892
      %v956 = vmax.f32 %v890, %v893
      %v957 = vmax.f32 %v891, %v894
      %v958 = vmax.f32 %v895, %v898
      %v959 = vmax.f32 %v896, %v899
      %v960 = vmax.f32 %v897, %v900
      %v961 = vmax.f32 %v901, %v904
      %v962 = vmax.f32 %v902, %v905
      %v963 = vmax.f32 %v903, %v906
      %v964 = vmax.f32 %v907, %v910
      %v965 = vmax.f32 %v908, %v911
      %v966 = vmax.f32 %v909, %v912
      %v967 = vmax.f32 %v913, %v916
      %v968 = vmax.f32 %v914, %v917
      %v969 = vmax.f32 %v915, %v918
      %v970 = vmax.f32 %v919, %v922
      %v971 = vmax.f32 %v920, %v923
      %v972 = vmax.f32 %v921, %v924
      %v973 = vmax.f32 %v925, %v928
      %v974 = vmax.f32 %v926, %v929
      %v975 = vmax.f32 %v927, %v930
      %v976 = vmax.f32 %v931, %v934
      %v977 = vmax.f32 %v932, %v935
      %v978 = vmax.f32 %v933, %v936
      %v979 = vmax.f32 %v937, %v940
      %v980 = vmax.f32 %v938, %v941
      %v981 = vmax.f32 %v939, %v942
      %v982 = vmax.f32 %v943, %v946
      %v983 = vmax.f32 %v944, %v947
      %v984 = vmax.f32 %v945, %v948
      %v985 = vpack.c.bf16 %v950, %v949
      %v986 = vpack.c.bf16 %v951, %v951
      %v987 = vpack.c.bf16 %v953, %v952
      %v988 = vpack.c.bf16 %v954, %v954
      %v989 = vpack.c.bf16 %v956, %v955
      %v990 = vpack.c.bf16 %v957, %v957
      %v991 = vpack.c.bf16 %v959, %v958
      %v992 = vpack.c.bf16 %v960, %v960
      %v993 = vpack.c.bf16 %v962, %v961
      %v994 = vpack.c.bf16 %v963, %v963
      %v995 = vpack.c.bf16 %v965, %v964
      %v996 = vpack.c.bf16 %v966, %v966
      %v997 = vpack.c.bf16 %v968, %v967
      %v998 = vpack.c.bf16 %v969, %v969
      %v999 = vpack.c.bf16 %v971, %v970
      %v1000 = vpack.c.bf16 %v972, %v972
      %v1001 = vpack.c.bf16 %v974, %v973
      %v1002 = vpack.c.bf16 %v975, %v975
      %v1003 = vpack.c.bf16 %v977, %v976
      %v1004 = vpack.c.bf16 %v978, %v978
      %v1005 = vpack.c.bf16 %v980, %v979
      %v1006 = vpack.c.bf16 %v981, %v981
      %v1007 = vpack.c.bf16 %v983, %v982
      %v1008 = vpack.c.bf16 %v984, %v984
      %v1033 = vunpack.c.l.b16 %v985
      %v1034 = vunpack.c.h.b16 %v985
      %v1035 = vunpack.c.l.b16 %v986
      %v1036 = vunpack.c.l.b16 %v987
      %v1037 = vunpack.c.h.b16 %v987
      %v1038 = vunpack.c.l.b16 %v988
      %v1039 = vunpack.c.l.b16 %v989
      %v1040 = vunpack.c.h.b16 %v989
      %v1041 = vunpack.c.l.b16 %v990
      %v1042 = vunpack.c.l.b16 %v991
      %v1043 = vunpack.c.h.b16 %v991
      %v1044 = vunpack.c.l.b16 %v992
      %v1045 = vunpack.c.l.b16 %v993
      %v1046 = vunpack.c.h.b16 %v993
      %v1047 = vunpack.c.l.b16 %v994
      %v1048 = vunpack.c.l.b16 %v995
      %v1049 = vunpack.c.h.b16 %v995
      %v1050 = vunpack.c.l.b16 %v996
      %v1051 = vunpack.c.l.b16 %v997
      %v1052 = vunpack.c.h.b16 %v997
      %v1053 = vunpack.c.l.b16 %v998
      %v1054 = vunpack.c.l.b16 %v999
      %v1055 = vunpack.c.h.b16 %v999
      %v1056 = vunpack.c.l.b16 %v1000
      %v1057 = vunpack.c.l.b16 %v1001
      %v1058 = vunpack.c.h.b16 %v1001
      %v1059 = vunpack.c.l.b16 %v1002
      %v1060 = vunpack.c.l.b16 %v1003
      %v1061 = vunpack.c.h.b16 %v1003
      %v1062 = vunpack.c.l.b16 %v1004
      %v1063 = vunpack.c.l.b16 %v1005
      %v1064 = vunpack.c.h.b16 %v1005
      %v1065 = vunpack.c.l.b16 %v1006
      %v1066 = vunpack.c.l.b16 %v1007
      %v1067 = vunpack.c.h.b16 %v1007
      %v1068 = vunpack.c.l.b16 %v1008
      %v1069 = vpack.c.b16 %v1033, %v1033
      %v1070 = vpack.c.b16 %v1034, %v1034
      %v1071 = vpack.c.b16 %v1035, %v1035
      %v1072 = vpack.c.b16 %v1036, %v1036
      %v1073 = vpack.c.b16 %v1037, %v1037
      %v1074 = vpack.c.b16 %v1038, %v1038
      %v1075 = vpack.c.b16 %v1039, %v1039
      %v1076 = vpack.c.b16 %v1040, %v1040
      %v1077 = vpack.c.b16 %v1041, %v1041
      %v1078 = vpack.c.b16 %v1042, %v1042
      %v1079 = vpack.c.b16 %v1043, %v1043
      %v1080 = vpack.c.b16 %v1044, %v1044
      %v1081 = vpack.c.b16 %v1045, %v1045
      %v1082 = vpack.c.b16 %v1046, %v1046
      %v1083 = vpack.c.b16 %v1047, %v1047
      %v1084 = vpack.c.b16 %v1048, %v1048
      %v1085 = vpack.c.b16 %v1049, %v1049
      %v1086 = vpack.c.b16 %v1050, %v1050
      %v1087 = vpack.c.b16 %v1051, %v1051
      %v1088 = vpack.c.b16 %v1052, %v1052
      %v1089 = vpack.c.b16 %v1053, %v1053
      %v1090 = vpack.c.b16 %v1054, %v1054
      %v1091 = vpack.c.b16 %v1055, %v1055
      %v1092 = vpack.c.b16 %v1056, %v1056
      %v1093 = vpack.c.b16 %v1057, %v1057
      %v1094 = vpack.c.b16 %v1058, %v1058
      %v1095 = vpack.c.b16 %v1059, %v1059
      %v1096 = vpack.c.b16 %v1060, %v1060
      %v1097 = vpack.c.b16 %v1061, %v1061
      %v1098 = vpack.c.b16 %v1062, %v1062
      %v1099 = vpack.c.b16 %v1063, %v1063
      %v1100 = vpack.c.b16 %v1064, %v1064
      %v1101 = vpack.c.b16 %v1065, %v1065
      %v1102 = vpack.c.b16 %v1066, %v1066
      %v1103 = vpack.c.b16 %v1067, %v1067
      %v1104 = vpack.c.b16 %v1068, %v1068
      %1141 = vst [vmem:[%s170] sm:$0xf] %v1069
      %1142 = vst [vmem:[%s170 + $0x4] sm:$0xf] %v1070
      %1143 = vst [vmem:[%s170 + $0x8] sm:$0xf] %v1071
      %1144 = vst [vmem:[%s170 + $0xc] sm:$0xf] %v1072
      %1145 = vst [vmem:[%s170 + $0x10] sm:$0xf] %v1073
      %1146 = vst [vmem:[%s170 + $0x14] sm:$0xf] %v1074
      %1147 = vst [vmem:[%s170 + $0x18] sm:$0xf] %v1075
      %1148 = vst [vmem:[%s170 + $0x1c] sm:$0xf] %v1076
      %1149 = vst [vmem:[%s170 + $0x20] sm:$0xf] %v1077
      %1150 = vst [vmem:[%s170 + $0x24] sm:$0xf] %v1078
      %1151 = vst [vmem:[%s170 + $0x28] sm:$0xf] %v1079
      %1152 = vst [vmem:[%s170 + $0x2c] sm:$0xf] %v1080
      %1153 = vst [vmem:[%s170 + $0x30] sm:$0xf] %v1081
      %1154 = vst [vmem:[%s170 + $0x34] sm:$0xf] %v1082
      %1155 = vst [vmem:[%s170 + $0x38] sm:$0xf] %v1083
      %1156 = vst [vmem:[%s170 + $0x3c] sm:$0xf] %v1084
      %1157 = vst [vmem:[%s170 + $0x40] sm:$0xf] %v1085
      %1158 = vst [vmem:[%s170 + $0x44] sm:$0xf] %v1086
      %1159 = vst [vmem:[%s170 + $0x48] sm:$0xf] %v1087
      %1160 = vst [vmem:[%s170 + $0x4c] sm:$0xf] %v1088
      %1161 = vst [vmem:[%s170 + $0x50] sm:$0xf] %v1089
      %1162 = vst [vmem:[%s170 + $0x54] sm:$0xf] %v1090
      %1163 = vst [vmem:[%s170 + $0x58] sm:$0xf] %v1091
      %1164 = vst [vmem:[%s170 + $0x5c] sm:$0xf] %v1092
      %1165 = vst [vmem:[%s170 + $0x60] sm:$0xf] %v1093
      %1166 = vst [vmem:[%s170 + $0x64] sm:$0xf] %v1094
      %1167 = vst [vmem:[%s170 + $0x68] sm:$0xf] %v1095
      %1168 = vst [vmem:[%s170 + $0x6c] sm:$0xf] %v1096
      %1169 = vst [vmem:[%s170 + $0x70] sm:$0xf] %v1097
      %1170 = vst [vmem:[%s170 + $0x74] sm:$0xf] %v1098
      %1171 = vst [vmem:[%s170 + $0x78] sm:$0xf] %v1099
      %1172 = vst [vmem:[%s170 + $0x7c] sm:$0xf] %v1100
      %1173 = vst [vmem:[%s170 + $0x80] sm:$0xf] %v1101
      %1174 = vst [vmem:[%s170 + $0x84] sm:$0xf] %v1102
      %1175 = vst [vmem:[%s170 + $0x88] sm:$0xf] %v1103
      %1176 = vst [vmem:[%s170 + $0x8c] sm:$0xf] %v1104
      %p1177 = scmp.lt.s32.totalorder %s14, 1
      %s1178 = scalar_select %p1177, %s14, 1
      %s1179 = smul.addr %s1178, 36
      %s1180 = smul.addr %s1179, 4
      %s1181 = scalar_lea.vmem %s3, %s1180
      // Predicated region
      $region33: #{net_forward.3} parent=31 // pred_check
        %p1182 = pneg %p100
      $region34: #{net_forward.3} parent=31 // pred_check_branch
        %1184 = sbr.rel (%p1182) target = $region36
      $region35: #{net_forward.3} parent=31 // pred_region
        _
      $region36: #{net_forward.3} parent=31 // pred_fallthru
        _
    $region32: #{net_forward.3} parent=5 // pred_fallthru
      _
    %p1185 = scmp.le.s32.totalorder 2, %s9
    // Predicated region
    $region37: #{net_forward.3} parent=5 // pred_check
      %p1186 = pneg %p1185
    $region38: #{net_forward.3} parent=5 // pred_check_branch
      %1188 = sbr.rel (%p1186) target = $region40
    $region39: #{net_forward.3} parent=5 // pred_region
      %s1189 = ssub.s32 %s9, 2
      // Predicated region
      $region41: #{net_forward.3} parent=39 // pred_check
        %p1190 = pneg %p106
      $region42: #{net_forward.3} parent=39 // pred_check_branch
        %1192 = sbr.rel (%p1190) target = $region44
      $region43: #{net_forward.3} parent=39 // pred_region
        %p1193 = scmp.lt.s32.totalorder %s15, 1
        %s1194 = scalar_select %p1193, %s15, 1
        %s1195 = smul.addr %s1194, 36
        %s1196 = smul.addr %s1195, 4
        %s1197 = scalar_lea.vmem %s3, %s1196
      $region44: #{net_forward.3} parent=39 // pred_fallthru
        _
    $region40: #{net_forward.3} parent=5 // pred_fallthru
      _
  $region6: #{net_forward.3} parent=0 // loop_footer
    %s13 = sadd.s32 1, %s9
  $region7: #{net_forward.3} parent=0 // loop_footer_branch
    %8 = sbr.rel target = $region3
  $region8: #{net_forward.3} parent=0 // loop_exit
    _

// kernel: net_forward.4
$region0: #{net_forward.4}
  #allocation0 [shape = 'u32[]', space=smem, size = 0x4, offset = 0x4, fixed_abs, tag = 'smem constant byte address 0x4 - core index']
  #allocation1 [shape = 'u32[144,128]{1,0:T(1,128)}', space=vmem, size = 0x12000, scoped, tag = 'internal scratch']
  #allocation2 [shape = 'f32[12,12,128]{2,1,0:T(8,128)}', space=vmem, size = 0x18000, scoped, tag = 'scratch operand']
  %s0 = inlined_call_operand.vmem [shape: bf16[2,12,12,128], index: 0, kind: input, shape index: {}]
  %s1 = inlined_call_operand.vmem [shape: bf16[2,12,12,128], index: 1, kind: input, shape index: {}]
  %s2 = inlined_call_operand.vmem [shape: bf16[25,128,128], index: 2, kind: input, shape index: {}]
  %s3 = inlined_call_operand.vmem [shape: f32[1,128], index: 3, kind: input, shape index: {}]
  %s4 = inlined_call_operand.vmem [shape: bf16[2,4,8,128], index: 4, kind: output, shape index: {}]
  %s5 = sld [smem:[#allocation0]]
  $region49: #{net_forward.4} parent=0
    _
  %s7 = ssub.s32 1, %s5
  %s8 = scalar_select 0, %s7, %s5
  loop: start=0, step=1, limit=4
  $region2: #{net_forward.4} parent=0 // loop_pre_header
    _
  $region3: #{net_forward.4} parent=0 // loop_header
    %s10 = sphi 0, %s14
    %p11 = scmp.ge.s32.totalorder %s10, 4
    %s20 = sphi 0, %s22
    %s23 = sphi 0, %s20
    %s24 = sphi 0, %s23
    %s40 = sphi 0, %s24
    %s46 = sphi 0, %s48
    %s49 = sphi 0, %s46
    %s50 = sphi 0, %s49
    %s66 = sphi 0, %s50
    %s70 = sphi 0, %s70
    %s72 = sphi 0, %s70
    %s73 = sphi 0, %s72
    %s87 = sphi 0, %s73
    %s91 = sphi 0, %s91
    %s93 = sphi 0, %s91
    %s94 = sphi 0, %s93
    %s108 = sphi 0, %s94
    %s114 = sphi 0, %s116
    %s117 = sphi 0, %s114
    %s118 = sphi 0, %s117
    %s134 = sphi 0, %s118
  $region4: #{net_forward.4} parent=0 // loop_header_branch
    %13 = sbr.rel (%p11) target = $region8
  $region5: #{net_forward.4} parent=0 // loop_body
    %s15 = ssub.s32 %s10, 1
    %s16 = ssub.s32 %s10, 2
    %s17 = sadd.s32 %s10, 1
    %s18 = ssub.s32 %s10, %s17
    %p19 = scmp.eq.s32.totalorder %s18, 0
    %s21 = sadd.s32 %s20, 1
    %s22 = scalar_select %p19, %s20, %s21
    %p25 = pneg %p19
    %p26 = scmp.eq.s32.totalorder %s10, 1
    %p27 = por %p25, %p26
    %p28 = scmp.ne.s32.totalorder %s20, %s23
    %p29 = scmp.eq.s32.totalorder %s10, 0
    %p30 = por %p28, %p29
    %p31 = scmp.ne.s32.totalorder %s20, %s23
    %p32 = scmp.eq.s32.totalorder %s15, 1
    %p33 = por %p31, %p32
    %p34 = scmp.ne.s32.totalorder %s23, %s24
    %p35 = scmp.eq.s32.totalorder %s15, 0
    %p36 = por %p34, %p35
    %p37 = scmp.ne.s32.totalorder %s23, %s24
    %p38 = scmp.eq.s32.totalorder %s16, 1
    %p39 = por %p37, %p38
    %p41 = scmp.ne.s32.totalorder %s24, %s40
    %p42 = scmp.eq.s32.totalorder %s16, 0
    %p43 = por %p41, %p42
    %s44 = ssub.s32 %s10, %s17
    %p45 = scmp.eq.s32.totalorder %s44, 0
    %s47 = sadd.s32 %s46, 1
    %s48 = scalar_select %p45, %s46, %s47
    %p51 = pneg %p45
    %p52 = scmp.eq.s32.totalorder %s10, 1
    %p53 = por %p51, %p52
    %p54 = scmp.ne.s32.totalorder %s46, %s49
    %p55 = scmp.eq.s32.totalorder %s10, 0
    %p56 = por %p54, %p55
    %p57 = scmp.ne.s32.totalorder %s46, %s49
    %p58 = scmp.eq.s32.totalorder %s15, 1
    %p59 = por %p57, %p58
    %p60 = scmp.ne.s32.totalorder %s49, %s50
    %p61 = scmp.eq.s32.totalorder %s15, 0
    %p62 = por %p60, %p61
    %p63 = scmp.ne.s32.totalorder %s49, %s50
    %p64 = scmp.eq.s32.totalorder %s16, 1
    %p65 = por %p63, %p64
    %p67 = scmp.ne.s32.totalorder %s50, %s66
    %p68 = scmp.eq.s32.totalorder %s16, 0
    %p69 = por %p67, %p68
    %s71 = sadd.s32 %s70, 1
    %p74 = scmp.eq.s32.totalorder %s10, 1
    %p75 = scmp.ne.s32.totalorder %s70, %s72
    %p76 = scmp.eq.s32.totalorder %s10, 0
    %p77 = por %p75, %p76
    %p78 = scmp.ne.s32.totalorder %s70, %s72
    %p79 = scmp.eq.s32.totalorder %s15, 1
    %p80 = por %p78, %p79
    %p81 = scmp.ne.s32.totalorder %s72, %s73
    %p82 = scmp.eq.s32.totalorder %s15, 0
    %p83 = por %p81, %p82
    %p84 = scmp.ne.s32.totalorder %s72, %s73
    %p85 = scmp.eq.s32.totalorder %s16, 1
    %p86 = por %p84, %p85
    %p88 = scmp.ne.s32.totalorder %s73, %s87
    %p89 = scmp.eq.s32.totalorder %s16, 0
    %p90 = por %p88, %p89
    %s92 = sadd.s32 %s91, 1
    %p95 = scmp.eq.s32.totalorder %s10, 1
    %p96 = scmp.ne.s32.totalorder %s91, %s93
    %p97 = scmp.eq.s32.totalorder %s10, 0
    %p98 = por %p96, %p97
    %p99 = scmp.ne.s32.totalorder %s91, %s93
    %p100 = scmp.eq.s32.totalorder %s15, 1
    %p101 = por %p99, %p100
    %p102 = scmp.ne.s32.totalorder %s93, %s94
    %p103 = scmp.eq.s32.totalorder %s15, 0
    %p104 = por %p102, %p103
    %p105 = scmp.ne.s32.totalorder %s93, %s94
    %p106 = scmp.eq.s32.totalorder %s16, 1
    %p107 = por %p105, %p106
    %p109 = scmp.ne.s32.totalorder %s94, %s108
    %p110 = scmp.eq.s32.totalorder %s16, 0
    %p111 = por %p109, %p110
    %s112 = ssub.s32 %s10, %s17
    %p113 = scmp.eq.s32.totalorder %s112, 0
    %s115 = sadd.s32 %s114, 1
    %s116 = scalar_select %p113, %s114, %s115
    %p119 = pneg %p113
    %p120 = scmp.eq.s32.totalorder %s10, 1
    %p121 = por %p119, %p120
    %p122 = scmp.ne.s32.totalorder %s114, %s117
    %p123 = scmp.eq.s32.totalorder %s10, 0
    %p124 = por %p122, %p123
    %p125 = scmp.ne.s32.totalorder %s114, %s117
    %p126 = scmp.eq.s32.totalorder %s15, 1
    %p127 = por %p125, %p126
    %p128 = scmp.ne.s32.totalorder %s117, %s118
    %p129 = scmp.eq.s32.totalorder %s15, 0
    %p130 = por %p128, %p129
    %p131 = scmp.ne.s32.totalorder %s117, %s118
    %p132 = scmp.eq.s32.totalorder %s16, 1
    %p133 = por %p131, %p132
    %p135 = scmp.ne.s32.totalorder %s118, %s134
    %p136 = scmp.eq.s32.totalorder %s16, 0
    %p137 = por %p135, %p136
    %p138 = scmp.le.s32.totalorder 1, %s10
    %p139 = scmp.lt.s32.totalorder %s10, 3
    %p140 = pnand %p138, %p139
    %p141 = pneg %p140
    // Predicated region
    $region9: #{net_forward.4} parent=5 // pred_check
      _
    $region10: #{net_forward.4} parent=5 // pred_check_branch
      %143 = sbr.rel (%p140) target = $region12
    $region11: #{net_forward.4} parent=5 // pred_region
      %s144 = ssub.s32 %s10, 1
      // Predicated region
      $region13: #{net_forward.4} parent=11 // pred_check
        %p145 = pneg %p83
      $region14: #{net_forward.4} parent=11 // pred_check_branch
        %147 = sbr.rel (%p145) target = $region16
      $region15: #{net_forward.4} parent=11 // pred_region
        _
      $region16: #{net_forward.4} parent=11 // pred_fallthru
        _
      // Predicated region
      $region17: #{net_forward.4} parent=11 // pred_check
        %p148 = pneg %p104
      $region18: #{net_forward.4} parent=11 // pred_check_branch
        %150 = sbr.rel (%p148) target = $region20
      $region19: #{net_forward.4} parent=11 // pred_region
        _
      $region20: #{net_forward.4} parent=11 // pred_fallthru
        _
    $region12: #{net_forward.4} parent=5 // pred_fallthru
      _
    %p151 = scmp.lt.s32.totalorder %s10, 2
    // Predicated region
    $region21: #{net_forward.4} parent=5 // pred_check
      %p152 = pneg %p151
    $region22: #{net_forward.4} parent=5 // pred_check_branch
      %154 = sbr.rel (%p152) target = $region24
    $region23: #{net_forward.4} parent=5 // pred_region
      // Predicated region
      $region25: #{net_forward.4} parent=23 // pred_check
        %p155 = pneg %p30
      $region26: #{net_forward.4} parent=23 // pred_check_branch
        %157 = sbr.rel (%p155) target = $region28
      $region27: #{net_forward.4} parent=23 // pred_region
        %p158 = scmp.lt.s32.totalorder %s10, 1
        %s159 = scalar_select %p158, %s10, 1
        %s160 = smul.addr %s159, 24
        %s161 = smul.addr %s160, 4
        %s162 = scalar_lea.vmem %s0, %s161
      $region28: #{net_forward.4} parent=23 // pred_fallthru
        _
      // Predicated region
      $region29: #{net_forward.4} parent=23 // pred_check
        %p163 = pneg %p56
      $region30: #{net_forward.4} parent=23 // pred_check_branch
        %165 = sbr.rel (%p163) target = $region32
      $region31: #{net_forward.4} parent=23 // pred_region
        %p166 = scmp.lt.s32.totalorder %s10, 1
        %s167 = scalar_select %p166, %s10, 1
        %s168 = smul.addr %s167, 24
        %s169 = smul.addr %s168, 4
        %s170 = scalar_lea.vmem %s1, %s169
      $region32: #{net_forward.4} parent=23 // pred_fallthru
        _
    $region24: #{net_forward.4} parent=5 // pred_fallthru
      _
    %p171 = scmp.le.s32.totalorder 1, %s10
    %p172 = scmp.lt.s32.totalorder %s10, 3
    %p173 = pnand %p171, %p172
    %p174 = pneg %p173
    // Predicated region
    $region33: #{net_forward.4} parent=5 // pred_check
      _
    $region34: #{net_forward.4} parent=5 // pred_check_branch
      %176 = sbr.rel (%p173) target = $region36
    $region35: #{net_forward.4} parent=5 // pred_region
      %s177 = ssub.s32 %s10, 1
      %p178 = scmp.lt.s32.totalorder %s15, 1
      %s179 = scalar_select %p178, %s15, 1
      %s180 = smul.addr %s179, 24
      %s181 = smul.addr %s180, 4
      %s182 = scalar_lea.vmem %s0, %s181
      %p183 = pneg %p36
      %p184 = pneg %p33
      %p185 = scmp.lt.s32.totalorder %s15, 1
      %s186 = scalar_select %p185, %s15, 1
      %s187 = smul.addr %s186, 24
      %s188 = smul.addr %s187, 4
      %s189 = scalar_lea.vmem %s1, %s188
      %p190 = pneg %p62
      %p191 = pneg %p59
      %p192 = pneg %p83
      %p193 = pneg %p80
      %p194 = pneg %p104
      %p195 = pneg %p101
      %p196 = pneg %p130
      %p197 = pneg %p127
      %p198 = scmp.lt.s32.totalorder %s15, 1
      %s199 = scalar_select %p198, %s15, 1
      %s200 = smul.addr %s199, 4
      %s201 = smul.addr %s200, 4
      %s202 = scalar_lea.vmem %s4, %s201
      %p203 = scmp.lt.s32.totalorder %s15, 1
      %s204 = scalar_select %p203, %s15, 1
      %s205 = smul.addr %s204, 24
      %s206 = smul.addr %s205, 4
      %s207 = scalar_lea.vmem %s0, %s206
      %p208 = scmp.lt.s32.totalorder %s15, 1
      %s209 = scalar_select %p208, %s15, 1
      %s210 = smul.addr %s209, 24
      %s211 = smul.addr %s210, 4
      %s212 = scalar_lea.vmem %s1, %s211
      %p213 = scmp.lt.s32.totalorder %s15, 1
      %s214 = scalar_select %p213, %s15, 1
      %s215 = smul.addr %s214, 4
      %s216 = smul.addr %s215, 4
      %s217 = scalar_lea.vmem %s4, %s216
      %v219 = vld [vmem:[%s207] sm:$0xf]
      %v220 = vld [vmem:[%s207 + $0x4] sm:$0x3]
      %v221 = vld [vmem:[%s207 + $0x8] sm:$0xf]
      %v222 = vld [vmem:[%s207 + $0xc] sm:$0x3]
      %v223 = vld [vmem:[%s207 + $0x10] sm:$0xf]
      %v224 = vld [vmem:[%s207 + $0x14] sm:$0x3]
      %v225 = vld [vmem:[%s207 + $0x18] sm:$0xf]
      %v226 = vld [vmem:[%s207 + $0x1c] sm:$0x3]
      %v227 = vld [vmem:[%s207 + $0x20] sm:$0xf]
      %v228 = vld [vmem:[%s207 + $0x24] sm:$0x3]
      %v229 = vld [vmem:[%s207 + $0x28] sm:$0xf]
      %v230 = vld [vmem:[%s207 + $0x2c] sm:$0x3]
      %v231 = vld [vmem:[%s207 + $0x30] sm:$0xf]
      %v232 = vld [vmem:[%s207 + $0x34] sm:$0x3]
      %v233 = vld [vmem:[%s207 + $0x38] sm:$0xf]
      %v234 = vld [vmem:[%s207 + $0x3c] sm:$0x3]
      %v235 = vld [vmem:[%s207 + $0x40] sm:$0xf]
      %v236 = vld [vmem:[%s207 + $0x44] sm:$0x3]
      %v237 = vld [vmem:[%s207 + $0x48] sm:$0xf]
      %v238 = vld [vmem:[%s207 + $0x4c] sm:$0x3]
      %v239 = vld [vmem:[%s207 + $0x50] sm:$0xf]
      %v240 = vld [vmem:[%s207 + $0x54] sm:$0x3]
      %v241 = vld [vmem:[%s207 + $0x58] sm:$0xf]
      %v242 = vld [vmem:[%s207 + $0x5c] sm:$0x3]
      %v243 = vld [vmem:[%s212] sm:$0xf]
      %v244 = vld [vmem:[%s212 + $0x4] sm:$0x3]
      %v245 = vld [vmem:[%s212 + $0x8] sm:$0xf]
      %v246 = vld [vmem:[%s212 + $0xc] sm:$0x3]
      %v247 = vld [vmem:[%s212 + $0x10] sm:$0xf]
      %v248 = vld [vmem:[%s212 + $0x14] sm:$0x3]
      %v249 = vld [vmem:[%s212 + $0x18] sm:$0xf]
      %v250 = vld [vmem:[%s212 + $0x1c] sm:$0x3]
      %v251 = vld [vmem:[%s212 + $0x20] sm:$0xf]
      %v252 = vld [vmem:[%s212 + $0x24] sm:$0x3]
      %v253 = vld [vmem:[%s212 + $0x28] sm:$0xf]
      %v254 = vld [vmem:[%s212 + $0x2c] sm:$0x3]
      %v255 = vld [vmem:[%s212 + $0x30] sm:$0xf]
      %v256 = vld [vmem:[%s212 + $0x34] sm:$0x3]
      %v257 = vld [vmem:[%s212 + $0x38] sm:$0xf]
      %v258 = vld [vmem:[%s212 + $0x3c] sm:$0x3]
      %v259 = vld [vmem:[%s212 + $0x40] sm:$0xf]
      %v260 = vld [vmem:[%s212 + $0x44] sm:$0x3]
      %v261 = vld [vmem:[%s212 + $0x48] sm:$0xf]
      %v262 = vld [vmem:[%s212 + $0x4c] sm:$0x3]
      %v263 = vld [vmem:[%s212 + $0x50] sm:$0xf]
      %v264 = vld [vmem:[%s212 + $0x54] sm:$0x3]
      %v265 = vld [vmem:[%s212 + $0x58] sm:$0xf]
      %v266 = vld [vmem:[%s212 + $0x5c] sm:$0x3]
      %v267 = vmax.bf16 %v219, %v243
      %v268 = vmax.bf16 %v220, %v244
      %v269 = vmax.bf16 %v221, %v245
      %v270 = vmax.bf16 %v222, %v246
      %v271 = vmax.bf16 %v223, %v247
      %v272 = vmax.bf16 %v224, %v248
      %v273 = vmax.bf16 %v225, %v249
      %v274 = vmax.bf16 %v226, %v250
      %v275 = vmax.bf16 %v227, %v251
      %v276 = vmax.bf16 %v228, %v252
      %v277 = vmax.bf16 %v229, %v253
      %v278 = vmax.bf16 %v230, %v254
      %v279 = vmax.bf16 %v231, %v255
      %v280 = vmax.bf16 %v232, %v256
      %v281 = vmax.bf16 %v233, %v257
      %v282 = vmax.bf16 %v234, %v258
      %v283 = vmax.bf16 %v235, %v259
      %v284 = vmax.bf16 %v236, %v260
      %v285 = vmax.bf16 %v237, %v261
      %v286 = vmax.bf16 %v238, %v262
      %v287 = vmax.bf16 %v239, %v263
      %v288 = vmax.bf16 %v240, %v264
      %v289 = vmax.bf16 %v241, %v265
      %v290 = vmax.bf16 %v242, %v266
      %v291 = vunpack.c.l.bf16 %v267
      %v292 = vunpack.c.l.bf16 %v268
      %v293 = vunpack.c.l.bf16 %v269
      %v294 = vunpack.c.l.bf16 %v270
      %v295 = vunpack.c.l.bf16 %v271
      %v296 = vunpack.c.l.bf16 %v272
      %v297 = vunpack.c.l.bf16 %v273
      %v298 = vunpack.c.l.bf16 %v274
      %v299 = vunpack.c.l.bf16 %v275
      %v300 = vunpack.c.l.bf16 %v276
      %v301 = vunpack.c.l.bf16 %v277
      %v302 = vunpack.c.l.bf16 %v278
      %v303 = vunpack.c.l.bf16 %v279
      %v304 = vunpack.c.l.bf16 %v280
      %v305 = vunpack.c.l.bf16 %v281
      %v306 = vunpack.c.l.bf16 %v282
      %v307 = vunpack.c.l.bf16 %v283
      %v308 = vunpack.c.l.bf16 %v284
      %v309 = vunpack.c.l.bf16 %v285
      %v310 = vunpack.c.l.bf16 %v286
      %v311 = vunpack.c.l.bf16 %v287
      %v312 = vunpack.c.l.bf16 %v288
      %v313 = vunpack.c.l.bf16 %v289
      %v314 = vunpack.c.l.bf16 %v290
      %315 = vst [vmem:[#allocation2] sm:$0xff] %v291
      %316 = vst [vmem:[#allocation2 + $0x8] sm:$0xf] %v292
      %317 = vst [vmem:[#allocation2 + $0x10] sm:$0xff] %v293
      %318 = vst [vmem:[#allocation2 + $0x18] sm:$0xf] %v294
      %319 = vst [vmem:[#allocation2 + $0x20] sm:$0xff] %v295
      %320 = vst [vmem:[#allocation2 + $0x28] sm:$0xf] %v296
      %321 = vst [vmem:[#allocation2 + $0x30] sm:$0xff] %v297
      %322 = vst [vmem:[#allocation2 + $0x38] sm:$0xf] %v298
      %323 = vst [vmem:[#allocation2 + $0x40] sm:$0xff] %v299
      %324 = vst [vmem:[#allocation2 + $0x48] sm:$0xf] %v300
      %325 = vst [vmem:[#allocation2 + $0x50] sm:$0xff] %v301
      %326 = vst [vmem:[#allocation2 + $0x58] sm:$0xf] %v302
      %327 = vst [vmem:[#allocation2 + $0x60] sm:$0xff] %v303
      %328 = vst [vmem:[#allocation2 + $0x68] sm:$0xf] %v304
      %329 = vst [vmem:[#allocation2 + $0x70] sm:$0xff] %v305
      %330 = vst [vmem:[#allocation2 + $0x78] sm:$0xf] %v306
      %331 = vst [vmem:[#allocation2 + $0x80] sm:$0xff] %v307
      %332 = vst [vmem:[#allocation2 + $0x88] sm:$0xf] %v308
      %333 = vst [vmem:[#allocation2 + $0x90] sm:$0xff] %v309
      %334 = vst [vmem:[#allocation2 + $0x98] sm:$0xf] %v310
      %335 = vst [vmem:[#allocation2 + $0xa0] sm:$0xff] %v311
      %336 = vst [vmem:[#allocation2 + $0xa8] sm:$0xf] %v312
      %337 = vst [vmem:[#allocation2 + $0xb0] sm:$0xff] %v313
      %338 = vst [vmem:[#allocation2 + $0xb8] sm:$0xf] %v314
      %v339 = vld [vmem:[#allocation2] sm:$0xff]
      %v340 = vld [vmem:[#allocation2 + $0x10] sm:$0xff]
      %v341 = vld [vmem:[#allocation2 + $0x20] sm:$0xff]
      %v342 = vld [vmem:[#allocation2 + $0x30] sm:$0xff]
      %v343 = vld [vmem:[#allocation2 + $0x40] sm:$0xff]
      %v344 = vld [vmem:[#allocation2 + $0x50] sm:$0xff]
      %v345 = vld [vmem:[#allocation2 + $0x60] sm:$0xff]
      %v346 = vld [vmem:[#allocation2 + $0x70] sm:$0xff]
      %v347 = vpack.c.bf16 %v340, %v339
      %v348 = vpack.c.bf16 %v342, %v341
      %v349 = vpack.c.bf16 %v344, %v343
      %v350 = vpack.c.bf16 %v346, %v345
      %v351 = vld [vmem:[%s2] sm:$0xf]
      %v352 = vld [vmem:[%s2 + $0x4] sm:$0xf]
      %v353 = vld [vmem:[%s2 + $0x8] sm:$0xf]
      %v354 = vld [vmem:[%s2 + $0xc] sm:$0xf]
      %v355 = vld [vmem:[%s2 + $0x10] sm:$0xf]
      %v356 = vld [vmem:[%s2 + $0x14] sm:$0xf]
      %v357 = vld [vmem:[%s2 + $0x18] sm:$0xf]
      %v358 = vld [vmem:[%s2 + $0x1c] sm:$0xf]
      %v359 = vld [vmem:[%s2 + $0x20] sm:$0xf]
      %v360 = vld [vmem:[%s2 + $0x24] sm:$0xf]
      %v361 = vld [vmem:[%s2 + $0x28] sm:$0xf]
      %v362 = vld [vmem:[%s2 + $0x2c] sm:$0xf]
      %v363 = vld [vmem:[%s2 + $0x30] sm:$0xf]
      %v364 = vld [vmem:[%s2 + $0x34] sm:$0xf]
      %v365 = vld [vmem:[%s2 + $0x38] sm:$0xf]
      %v366 = vld [vmem:[%s2 + $0x3c] sm:$0xf]
      %v367 = vld [vmem:[#allocation2 + $0x1] sm:$0xff]
      %v368 = vld [vmem:[#allocation2 + $0x11] sm:$0xff]
      %v369 = vld [vmem:[#allocation2 + $0x21] sm:$0xff]
      %v370 = vld [vmem:[#allocation2 + $0x31] sm:$0xff]
      %v371 = vld [vmem:[#allocation2 + $0x41] sm:$0xff]
      %v372 = vld [vmem:[#allocation2 + $0x51] sm:$0xff]
      %v373 = vld [vmem:[#allocation2 + $0x61] sm:$0xff]
      %v374 = vld [vmem:[#allocation2 + $0x71] sm:$0xff]
      %v375 = vpack.c.bf16 %v368, %v367
      %v376 = vpack.c.bf16 %v370, %v369
      %v377 = vpack.c.bf16 %v372, %v371
      %v378 = vpack.c.bf16 %v374, %v373
      %s379 = scalar_lea.vmem %s2, 64
      %v380 = vld [vmem:[%s379] sm:$0xf]
      %v381 = vld [vmem:[%s379 + $0x4] sm:$0xf]
      %v382 = vld [vmem:[%s379 + $0x8] sm:$0xf]
      %v383 = vld [vmem:[%s379 + $0xc] sm:$0xf]
      %v384 = vld [vmem:[%s379 + $0x10] sm:$0xf]
      %v385 = vld [vmem:[%s379 + $0x14] sm:$0xf]
      %v386 = vld [vmem:[%s379 + $0x18] sm:$0xf]
      %v387 = vld [vmem:[%s379 + $0x1c] sm:$0xf]
      %v388 = vld [vmem:[%s379 + $0x20] sm:$0xf]
      %v389 = vld [vmem:[%s379 + $0x24] sm:$0xf]
      %v390 = vld [vmem:[%s379 + $0x28] sm:$0xf]
      %v391 = vld [vmem:[%s379 + $0x2c] sm:$0xf]
      %v392 = vld [vmem:[%s379 + $0x30] sm:$0xf]
      %v393 = vld [vmem:[%s379 + $0x34] sm:$0xf]
      %v394 = vld [vmem:[%s379 + $0x38] sm:$0xf]
      %v395 = vld [vmem:[%s379 + $0x3c] sm:$0xf]
      %v412 = vunpack.c.l.b16 %v380
      %v413 = vunpack.c.l.b16 %v381
      %v414 = vunpack.c.l.b16 %v382
      %v415 = vunpack.c.l.b16 %v383
      %v416 = vunpack.c.l.b16 %v384
      %v417 = vunpack.c.l.b16 %v385
      %v418 = vunpack.c.l.b16 %v386
      %v419 = vunpack.c.l.b16 %v387
      %v420 = vunpack.c.l.b16 %v388
      %v421 = vunpack.c.l.b16 %v389
      %v422 = vunpack.c.l.b16 %v390
      %v423 = vunpack.c.l.b16 %v391
      %v424 = vunpack.c.l.b16 %v392
      %v425 = vunpack.c.l.b16 %v393
      %v426 = vunpack.c.l.b16 %v394
      %v427 = vunpack.c.l.b16 %v395
      %v428 = vpack.c.b16 %v413, %v412
      %v429 = vpack.c.b16 %v415, %v414
      %v430 = vpack.c.b16 %v417, %v416
      %v431 = vpack.c.b16 %v419, %v418
      %v432 = vpack.c.b16 %v421, %v420
      %v433 = vpack.c.b16 %v423, %v422
      %v434 = vpack.c.b16 %v425, %v424
      %v435 = vpack.c.b16 %v427, %v426
      %444 = vmatprep.subr.bf16.mxu0 0
      %445 = vmatpush1.bf16.msra.mxu0 %v428
      %446 = vmatprep.subr.bf16.mxu0 0
      %447 = vmatpush1.bf16.msra.mxu0 %v429
      %448 = vmatprep.subr.bf16.mxu0 0
      %449 = vmatpush1.bf16.msra.mxu0 %v430
      %450 = vmatprep.subr.bf16.mxu0 0
      %451 = vmatpush1.bf16.msra.mxu0 %v431
      %452 = vmatprep.subr.bf16.mxu0 0
      %453 = vmatpush1.bf16.msra.mxu0 %v432
      %454 = vmatprep.subr.bf16.mxu0 0
      %455 = vmatpush1.bf16.msra.mxu0 %v433
      %456 = vmatprep.subr.bf16.mxu0 0
      %457 = vmatpush1.bf16.msra.mxu0 %v434
      %458 = vmatprep.subr.bf16.mxu0 0
      %459 = vmatpush1.bf16.msra.mxu0 %v435
      %460 = vmatprep.subr.bf16.mxu0 0
      %461 = vmatpush1.bf16.msra.mxu0 0
      %462 = vmatprep.subr.bf16.mxu0 0
      %463 = vmatpush1.bf16.msra.mxu0 0
      %464 = vmatprep.subr.bf16.mxu0 0
      %465 = vmatpush1.bf16.msra.mxu0 0
      %466 = vmatprep.subr.bf16.mxu0 0
      %467 = vmatpush1.bf16.msra.mxu0 0
      %468 = vmatprep.subr.bf16.mxu0 0
      %469 = vmatpush1.bf16.msra.mxu0 0
      %470 = vmatprep.subr.bf16.mxu0 0
      %471 = vmatpush1.bf16.msra.mxu0 0
      %472 = vmatprep.subr.bf16.mxu0 0
      %473 = vmatpush1.bf16.msra.mxu0 0
      %474 = vmatprep.subr.bf16.mxu0 0
      %475 = vmatpush1.bf16.msra.mxu0 0
      %476 = vmatprep.mubr.bf16.mxu0 0
      %477 = vmatmul.mubr.bf16.gmra.mrb[0].mxu0 %v375
      %v478 = vpop.f32.mrb[0].mxu0
      %v479 = vadd.f32 0.0, %v478
      %v480 = vpop.f32.mrb[0].mxu0
      %v481 = vpop.f32.mrb[0].mxu0
      %v482 = vadd.f32 0.0, %v481
      %v483 = vpop.f32.mrb[0].mxu0
      %484 = vmatprep.mubr.bf16.mxu0 0
      %485 = vmatmul.mubr.bf16.gmra.mrb[0].mxu0 %v376
      %v486 = vpop.f32.mrb[0].mxu0
      %v487 = vadd.f32 0.0, %v486
      %v488 = vpop.f32.mrb[0].mxu0
      %v489 = vpop.f32.mrb[0].mxu0
      %v490 = vadd.f32 0.0, %v489
      %v491 = vpop.f32.mrb[0].mxu0
      %492 = vmatprep.mubr.bf16.mxu0 0
      %493 = vmatmul.mubr.bf16.gmra.mrb[0].mxu0 %v377
      %v494 = vpop.f32.mrb[0].mxu0
      %v495 = vadd.f32 0.0, %v494
      %v496 = vpop.f32.mrb[0].mxu0
      %v497 = vpop.f32.mrb[0].mxu0
      %v498 = vadd.f32 0.0, %v497
      %v499 = vpop.f32.mrb[0].mxu0
      %500 = vmatprep.mubr.bf16.mxu0 0
      %501 = vmatmul.mubr.bf16.gmra.mrb[0].mxu0 %v378
      %v502 = vpop.f32.mrb[0].mxu0
      %v503 = vadd.f32 0.0, %v502
      %v504 = vpop.f32.mrb[0].mxu0
      %v505 = vpop.f32.mrb[0].mxu0
      %v506 = vadd.f32 0.0, %v505
      %v507 = vpop.f32.mrb[0].mxu0
      %508 = vdwg.mxu0
      %v525 = vunpack.c.l.b16 %v351
      %v526 = vunpack.c.l.b16 %v352
      %v527 = vunpack.c.l.b16 %v353
      %v528 = vunpack.c.l.b16 %v354
      %v529 = vunpack.c.l.b16 %v355
      %v530 = vunpack.c.l.b16 %v356
      %v531 = vunpack.c.l.b16 %v357
      %v532 = vunpack.c.l.b16 %v358
      %v533 = vunpack.c.l.b16 %v359
      %v534 = vunpack.c.l.b16 %v360
      %v535 = vunpack.c.l.b16 %v361
      %v536 = vunpack.c.l.b16 %v362
      %v537 = vunpack.c.l.b16 %v363
      %v538 = vunpack.c.l.b16 %v364
      %v539 = vunpack.c.l.b16 %v365
      %v540 = vunpack.c.l.b16 %v366
      %v541 = vpack.c.b16 %v526, %v525
      %v542 = vpack.c.b16 %v528, %v527
      %v543 = vpack.c.b16 %v530, %v529
      %v544 = vpack.c.b16 %v532, %v531
      %v545 = vpack.c.b16 %v534, %v533
      %v546 = vpack.c.b16 %v536, %v535
      %v547 = vpack.c.b16 %v538, %v537
      %v548 = vpack.c.b16 %v540, %v539
      %557 = vmatprep.subr.bf16.mxu0 0
      %558 = vmatpush1.bf16.msra.mxu0 %v541
      %559 = vmatprep.subr.bf16.mxu0 0
      %560 = vmatpush1.bf16.msra.mxu0 %v542
      %561 = vmatprep.subr.bf16.mxu0 0
      %562 = vmatpush1.bf16.msra.mxu0 %v543
      %563 = vmatprep.subr.bf16.mxu0 0
      %564 = vmatpush1.bf16.msra.mxu0 %v544
      %565 = vmatprep.subr.bf16.mxu0 0
      %566 = vmatpush1.bf16.msra.mxu0 %v545
      %567 = vmatprep.subr.bf16.mxu0 0
      %568 = vmatpush1.bf16.msra.mxu0 %v546
      %569 = vmatprep.subr.bf16.mxu0 0
      %570 = vmatpush1.bf16.msra.mxu0 %v547
      %571 = vmatprep.subr.bf16.mxu0 0
      %572 = vmatpush1.bf16.msra.mxu0 %v548
      %573 = vmatprep.subr.bf16.mxu0 0
      %574 = vmatpush1.bf16.msra.mxu0 0
      %575 = vmatprep.subr.bf16.mxu0 0
      %576 = vmatpush1.bf16.msra.mxu0 0
      %577 = vmatprep.subr.bf16.mxu0 0
      %578 = vmatpush1.bf16.msra.mxu0 0
      %579 = vmatprep.subr.bf16.mxu0 0
      %580 = vmatpush1.bf16.msra.mxu0 0
      %581 = vmatprep.subr.bf16.mxu0 0
      %582 = vmatpush1.bf16.msra.mxu0 0
      %583 = vmatprep.subr.bf16.mxu0 0
      %584 = vmatpush1.bf16.msra.mxu0 0
      %585 = vmatprep.subr.bf16.mxu0 0
      %586 = vmatpush1.bf16.msra.mxu0 0
      %587 = vmatprep.subr.bf16.mxu0 0
      %588 = vmatpush1.bf16.msra.mxu0 0
      %589 = vmatprep.mubr.bf16.mxu0 0
      %590 = vmatmul.mubr.bf16.gmra.mrb[0].mxu0 %v347
      %v591 = vpop.f32.mrb[0].mxu0
      %v592 = vadd.f32 %v479, %v591
      %v593 = vpop.f32.mrb[0].mxu0
      %v594 = vpop.f32.mrb[0].mxu0
      %v595 = vadd.f32 %v482, %v594
      %v596 = vpop.f32.mrb[0].mxu0
      %597 = vmatprep.mubr.bf16.mxu0 0
      %598 = vmatmul.mubr.bf16.gmra.mrb[0].mxu0 %v348
      %v599 = vpop.f32.mrb[0].mxu0
      %v600 = vadd.f32 %v487, %v599
      %v601 = vpop.f32.mrb[0].mxu0
      %v602 = vpop.f32.mrb[0].mxu0
      %v603 = vadd.f32 %v490, %v602
      %v604 = vpop.f32.mrb[0].mxu0
      %605 = vmatprep.mubr.bf16.mxu0 0
      %606 = vmatmul.mubr.bf16.gmra.mrb[0].mxu0 %v349
      %v607 = vpop.f32.mrb[0].mxu0
      %v608 = vadd.f32 %v495, %v607
      %v609 = vpop.f32.mrb[0].mxu0
      %v610 = vpop.f32.mrb[0].mxu0
      %v611 = vadd.f32 %v498, %v610
      %v612 = vpop.f32.mrb[0].mxu0
      %613 = vmatprep.mubr.bf16.mxu0 0
      %614 = vmatmul.mubr.bf16.gmra.mrb[0].mxu0 %v350
      %v615 = vpop.f32.mrb[0].mxu0
      %v616 = vadd.f32 %v503, %v615
      %v617 = vpop.f32.mrb[0].mxu0
      %v618 = vpop.f32.mrb[0].mxu0
      %v619 = vadd.f32 %v506, %v618
      %v620 = vpop.f32.mrb[0].mxu0
      %621 = vdwg.mxu0
      %v622 = vld [vmem:[#allocation2 + $0x2] sm:$0xff]
      %v623 = vld [vmem:[#allocation2 + $0x12] sm:$0xff]
      %v624 = vld [vmem:[#allocation2 + $0x22] sm:$0xff]
      %v625 = vld [vmem:[#allocation2 + $0x32] sm:$0xff]
      %v626 = vld [vmem:[#allocation2 + $0x42] sm:$0xff]
      %v627 = vld [vmem:[#allocation2 + $0x52] sm:$0xff]
      %v628 = vld [vmem:[#allocation2 + $0x62] sm:$0xff]
      %v629 = vld [vmem:[#allocation2 + $0x72] sm:$0xff]
      %v630 = vpack.c.bf16 %v623, %v622
      %v631 = vpack.c.bf16 %v625, %v624
      %v632 = vpack.c.bf16 %v627, %v626
      %v633 = vpack.c.bf16 %v629, %v628
      %s634 = scalar_lea.vmem %s2, 128
      %v635 = vld [vmem:[%s634] sm:$0xf]
      %v636 = vld [vmem:[%s634 + $0x4] sm:$0xf]
      %v637 = vld [vmem:[%s634 + $0x8] sm:$0xf]
      %v638 = vld [vmem:[%s634 + $0xc] sm:$0xf]
      %v639 = vld [vmem:[%s634 + $0x10] sm:$0xf]
      %v640 = vld [vmem:[%s634 + $0x14] sm:$0xf]
      %v641 = vld [vmem:[%s634 + $0x18] sm:$0xf]
      %v642 = vld [vmem:[%s634 + $0x1c] sm:$0xf]
      %v643 = vld [vmem:[%s634 + $0x20] sm:$0xf]
      %v644 = vld [vmem:[%s634 + $0x24] sm:$0xf]
      %v645 = vld [vmem:[%s634 + $0x28] sm:$0xf]
      %v646 = vld [vmem:[%s634 + $0x2c] sm:$0xf]
      %v647 = vld [vmem:[%s634 + $0x30] sm:$0xf]
      %v648 = vld [vmem:[%s634 + $0x34] sm:$0xf]
      %v649 = vld [vmem:[%s634 + $0x38] sm:$0xf]
      %v650 = vld [vmem:[%s634 + $0x3c] sm:$0xf]
      %v667 = vunpack.c.l.b16 %v635
      %v668 = vunpack.c.l.b16 %v636
      %v669 = vunpack.c.l.b16 %v637
      %v670 = vunpack.c.l.b16 %v638
      %v671 = vunpack.c.l.b16 %v639
      %v672 = vunpack.c.l.b16 %v640
      %v673 = vunpack.c.l.b16 %v641
      %v674 = vunpack.c.l.b16 %v642
      %v675 = vunpack.c.l.b16 %v643
      %v676 = vunpack.c.l.b16 %v644
      %v677 = vunpack.c.l.b16 %v645
      %v678 = vunpack.c.l.b16 %v646
      %v679 = vunpack.c.l.b16 %v647
      %v680 = vunpack.c.l.b16 %v648
      %v681 = vunpack.c.l.b16 %v649
      %v682 = vunpack.c.l.b16 %v650
      %v683 = vpack.c.b16 %v668, %v667
      %v684 = vpack.c.b16 %v670, %v669
      %v685 = vpack.c.b16 %v672, %v671
      %v686 = vpack.c.b16 %v674, %v673
      %v687 = vpack.c.b16 %v676, %v675
      %v688 = vpack.c.b16 %v678, %v677
      %v689 = vpack.c.b16 %v680, %v679
      %v690 = vpack.c.b16 %v682, %v681
      %699 = vmatprep.subr.bf16.mxu0 0
      %700 = vmatpush1.bf16.msra.mxu0 %v683
      %701 = vmatprep.subr.bf16.mxu0 0
      %702 = vmatpush1.bf16.msra.mxu0 %v684
      %703 = vmatprep.subr.bf16.mxu0 0
      %704 = vmatpush1.bf16.msra.mxu0 %v685
      %705 = vmatprep.subr.bf16.mxu0 0
      %706 = vmatpush1.bf16.msra.mxu0 %v686
      %707 = vmatprep.subr.bf16.mxu0 0
      %708 = vmatpush1.bf16.msra.mxu0 %v687
      %709 = vmatprep.subr.bf16.mxu0 0
      %710 = vmatpush1.bf16.msra.mxu0 %v688
      %711 = vmatprep.subr.bf16.mxu0 0
      %712 = vmatpush1.bf16.msra.mxu0 %v689
      %713 = vmatprep.subr.bf16.mxu0 0
      %714 = vmatpush1.bf16.msra.mxu0 %v690
      %715 = vmatprep.subr.bf16.mxu0 0
      %716 = vmatpush1.bf16.msra.mxu0 0
      %717 = vmatprep.subr.bf16.mxu0 0
      %718 = vmatpush1.bf16.msra.mxu0 0
      %719 = vmatprep.subr.bf16.mxu0 0
      %720 = vmatpush1.bf16.msra.mxu0 0
      %721 = vmatprep.subr.bf16.mxu0 0
      %722 = vmatpush1.bf16.msra.mxu0 0
      %723 = vmatprep.subr.bf16.mxu0 0
      %724 = vmatpush1.bf16.msra.mxu0 0
      %725 = vmatprep.subr.bf16.mxu0 0
      %726 = vmatpush1.bf16.msra.mxu0 0
      %727 = vmatprep.subr.bf16.mxu0 0
      %728 = vmatpush1.bf16.msra.mxu0 0
      %729 = vmatprep.subr.bf16.mxu0 0
      %730 = vmatpush1.bf16.msra.mxu0 0
      %731 = vmatprep.mubr.bf16.mxu0 0
      %732 = vmatmul.mubr.bf16.gmra.mrb[0].mxu0 %v630
      %v733 = vpop.f32.mrb[0].mxu0
      %v734 = vadd.f32 0.0, %v733
      %v735 = vpop.f32.mrb[0].mxu0
      %v736 = vpop.f32.mrb[0].mxu0
      %v737 = vadd.f32 0.0, %v736
      %v738 = vpop.f32.mrb[0].mxu0
      %739 = vmatprep.mubr.bf16.mxu0 0
      %740 = vmatmul.mubr.bf16.gmra.mrb[0].mxu0 %v631
      %v741 = vpop.f32.mrb[0].mxu0
      %v742 = vadd.f32 0.0, %v741
      %v743 = vpop.f32.mrb[0].mxu0
      %v744 = vpop.f32.mrb[0].mxu0
      %v745 = vadd.f32 0.0, %v744
      %v746 = vpop.f32.mrb[0].mxu0
      %747 = vmatprep.mubr.bf16.mxu0 0
      %748 = vmatmul.mubr.bf16.gmra.mrb[0].mxu0 %v632
      %v749 = vpop.f32.mrb[0].mxu0
      %v750 = vadd.f32 0.0, %v749
      %v751 = vpop.f32.mrb[0].mxu0
      %v752 = vpop.f32.mrb[0].mxu0
      %v753 = vadd.f32 0.0, %v752
      %v754 = vpop.f32.mrb[0].mxu0
      %755 = vmatprep.mubr.bf16.mxu0 0
      %756 = vmatmul.mubr.bf16.gmra.mrb[0].mxu0 %v633
      %v757 = vpop.f32.mrb[0].mxu0
      %v758 = vadd.f32 0.0, %v757
      %v759 = vpop.f32.mrb[0].mxu0
      %v760 = vpop.f32.mrb[0].mxu0
      %v761 = vadd.f32 0.0, %v760
      %v762 = vpop.f32.mrb[0].mxu0
      %763 = vdwg.mxu0
      %v764 = vadd.f32 %v592, %v734
      %v765 = vadd.f32 %v595, %v737
      %v766 = vadd.f32 %v600, %v742
      %v767 = vadd.f32 %v603, %v745
      %v768 = vadd.f32 %v608, %v750
      %v769 = vadd.f32 %v611, %v753
      %v770 = vadd.f32 %v616, %v758
      %v771 = vadd.f32 %v619, %v761
      %v772 = vld [vmem:[#allocation2 + $0x3] sm:$0xff]
      %v773 = vld [vmem:[#allocation2 + $0x13] sm:$0xff]
      %v774 = vld [vmem:[#allocation2 + $0x23] sm:$0xff]
      %v775 = vld [vmem:[#allocation2 + $0x33] sm:$0xff]
      %v776 = vld [vmem:[#allocation2 + $0x43] sm:$0xff]
      %v777 = vld [vmem:[#allocation2 + $0x53] sm:$0xff]
      %v778 = vld [vmem:[#allocation2 + $0x63] sm:$0xff]
      %v779 = vld [vmem:[#allocation2 + $0x73] sm:$0xff]
      %v780 = vpack.c.bf16 %v773, %v772
      %v781 = vpack.c.bf16 %v775, %v774
      %v782 = vpack.c.bf16 %v777, %v776
      %v783 = vpack.c.bf16 %v779, %v778
      %s784 = scalar_lea.vmem %s2, 192
      %v785 = vld [vmem:[%s784] sm:$0xf]
      %v786 = vld [vmem:[%s784 + $0x4] sm:$0xf]
      %v787 = vld [vmem:[%s784 + $0x8] sm:$0xf]
      %v788 = vld [vmem:[%s784 + $0xc] sm:$0xf]
      %v789 = vld [vmem:[%s784 + $0x10] sm:$0xf]
      %v790 = vld [vmem:[%s784 + $0x14] sm:$0xf]
      %v791 = vld [vmem:[%s784 + $0x18] sm:$0xf]
      %v792 = vld [vmem:[%s784 + $0x1c] sm:$0xf]
      %v793 = vld [vmem:[%s784 + $0x20] sm:$0xf]
      %v794 = vld [vmem:[%s784 + $0x24] sm:$0xf]
      %v795 = vld [vmem:[%s784 + $0x28] sm:$0xf]
      %v796 = vld [vmem:[%s784 + $0x2c] sm:$0xf]
      %v797 = vld [vmem:[%s784 + $0x30] sm:$0xf]
      %v798 = vld [vmem:[%s784 + $0x34] sm:$0xf]
      %v799 = vld [vmem:[%s784 + $0x38] sm:$0xf]
      %v800 = vld [vmem:[%s784 + $0x3c] sm:$0xf]
      %v817 = vunpack.c.l.b16 %v785
      %v818 = vunpack.c.l.b16 %v786
      %v819 = vunpack.c.l.b16 %v787
      %v820 = vunpack.c.l.b16 %v788
      %v821 = vunpack.c.l.b16 %v789
      %v822 = vunpack.c.l.b16 %v790
      %v823 = vunpack.c.l.b16 %v791
      %v824 = vunpack.c.l.b16 %v792
      %v825 = vunpack.c.l.b16 %v793
      %v826 = vunpack.c.l.b16 %v794
      %v827 = vunpack.c.l.b16 %v795
      %v828 = vunpack.c.l.b16 %v796
      %v829 = vunpack.c.l.b16 %v797
      %v830 = vunpack.c.l.b16 %v798
      %v831 = vunpack.c.l.b16 %v799
      %v832 = vunpack.c.l.b16 %v800
      %v833 = vpack.c.b16 %v818, %v817
      %v834 = vpack.c.b16 %v820, %v819
      %v835 = vpack.c.b16 %v822, %v821
      %v836 = vpack.c.b16 %v824, %v823
      %v837 = vpack.c.b16 %v826, %v825
      %v838 = vpack.c.b16 %v828, %v827
      %v839 = vpack.c.b16 %v830, %v829
      %v840 = vpack.c.b16 %v832, %v831
      %849 = vmatprep.subr.bf16.mxu0 0
      %850 = vmatpush1.bf16.msra.mxu0 %v833
      %851 = vmatprep.subr.bf16.mxu0 0
      %852 = vmatpush1.bf16.msra.mxu0 %v834
      %853 = vmatprep.subr.bf16.mxu0 0
      %854 = vmatpush1.bf16.msra.mxu0 %v835
      %855 = vmatprep.subr.bf16.mxu0 0
      %856 = vmatpush1.bf16.msra.mxu0 %v836
      %857 = vmatprep.subr.bf16.mxu0 0
      %858 = vmatpush1.bf16.msra.mxu0 %v837
      %859 = vmatprep.subr.bf16.mxu0 0
      %860 = vmatpush1.bf16.msra.mxu0 %v838
      %861 = vmatprep.subr.bf16.mxu0 0
      %862 = vmatpush1.bf16.msra.mxu0 %v839
      %863 = vmatprep.subr.bf16.mxu0 0
      %864 = vmatpush1.bf16.msra.mxu0 %v840
      %865 = vmatprep.subr.bf16.mxu0 0
      %866 = vmatpush1.bf16.msra.mxu0 0
      %867 = vmatprep.subr.bf16.mxu0 0
      %868 = vmatpush1.bf16.msra.mxu0 0
      %869 = vmatprep.subr.bf16.mxu0 0
      %870 = vmatpush1.bf16.msra.mxu0 0
      %871 = vmatprep.subr.bf16.mxu0 0
      %872 = vmatpush1.bf16.msra.mxu0 0
      %873 = vmatprep.subr.bf16.mxu0 0
      %874 = vmatpush1.bf16.msra.mxu0 0
      %875 = vmatprep.subr.bf16.mxu0 0
      %876 = vmatpush1.bf16.msra.mxu0 0
      %877 = vmatprep.subr.bf16.mxu0 0
      %878 = vmatpush1.bf16.msra.mxu0 0
      %879 = vmatprep.subr.bf16.mxu0 0
      %880 = vmatpush1.bf16.msra.mxu0 0
      %881 = vmatprep.mubr.bf16.mxu0 0
      %882 = vmatmul.mubr.bf16.gmra.mrb[0].mxu0 %v780
      %v883 = vpop.f32.mrb[0].mxu0
      %v884 = vadd.f32 0.0, %v883
      %v885 = vpop.f32.mrb[0].mxu0
      %v886 = vpop.f32.mrb[0].mxu0
      %v887 = vadd.f32 0.0, %v886
      %v888 = vpop.f32.mrb[0].mxu0
      %889 = vmatprep.mubr.bf16.mxu0 0
      %890 = vmatmul.mubr.bf16.gmra.mrb[0].mxu0 %v781
      %v891 = vpop.f32.mrb[0].mxu0
      %v892 = vadd.f32 0.0, %v891
      %v893 = vpop.f32.mrb[0].mxu0
      %v894 = vpop.f32.mrb[0].mxu0
      %v895 = vadd.f32 0.0, %v894
      %v896 = vpop.f32.mrb[0].mxu0
      %897 = vmatprep.mubr.bf16.mxu0 0
      %898 = vmatmul.mubr.bf16.gmra.mrb[0].mxu0 %v782
      %v899 = vpop.f32.mrb[0].mxu0
      %v900 = vadd.f32 0.0, %v899
      %v901 = vpop.f32.mrb[0].mxu0
      %v902 = vpop.f32.mrb[0].mxu0
      %v903 = vadd.f32 0.0, %v902
      %v904 = vpop.f32.mrb[0].mxu0
      %905 = vmatprep.mubr.bf16.mxu0 0
      %906 = vmatmul.mubr.bf16.gmra.mrb[0].mxu0 %v783
      %v907 = vpop.f32.mrb[0].mxu0
      %v908 = vadd.f32 0.0, %v907
      %v909 = vpop.f32.mrb[0].mxu0
      %v910 = vpop.f32.mrb[0].mxu0
      %v911 = vadd.f32 0.0, %v910
      %v912 = vpop.f32.mrb[0].mxu0
      %913 = vdwg.mxu0
      %v914 = vadd.f32 %v764, %v884
      %v915 = vadd.f32 %v765, %v887
      %v916 = vadd.f32 %v766, %v892
      %v917 = vadd.f32 %v767, %v895
      %v918 = vadd.f32 %v768, %v900
      %v919 = vadd.f32 %v769, %v903
      %v920 = vadd.f32 %v770, %v908
      %v921 = vadd.f32 %v771, %v911
      %v922 = vld [vmem:[#allocation2 + $0x4] sm:$0xff]
      %v923 = vld [vmem:[#allocation2 + $0x14] sm:$0xff]
      %v924 = vld [vmem:[#allocation2 + $0x24] sm:$0xff]
      %v925 = vld [vmem:[#allocation2 + $0x34] sm:$0xff]
      %v926 = vld [vmem:[#allocation2 + $0x44] sm:$0xff]
      %v927 = vld [vmem:[#allocation2 + $0x54] sm:$0xff]
      %v928 = vld [vmem:[#allocation2 + $0x64] sm:$0xff]
      %v929 = vld [vmem:[#allocation2 + $0x74] sm:$0xff]
      %v930 = vpack.c.bf16 %v923, %v922
      %v931 = vpack.c.bf16 %v925, %v924
      %v932 = vpack.c.bf16 %v927, %v926
      %v933 = vpack.c.bf16 %v929, %v928
      %s934 = scalar_lea.vmem %s2, 256
      %v935 = vld [vmem:[%s934] sm:$0xf]
      %v936 = vld [vmem:[%s934 + $0x4] sm:$0xf]
      %v937 = vld [vmem:[%s934 + $0x8] sm:$0xf]
      %v938 = vld [vmem:[%s934 + $0xc] sm:$0xf]
      %v939 = vld [vmem:[%s934 + $0x10] sm:$0xf]
      %v940 = vld [vmem:[%s934 + $0x14] sm:$0xf]
      %v941 = vld [vmem:[%s934 + $0x18] sm:$0xf]
      %v942 = vld [vmem:[%s934 + $0x1c] sm:$0xf]
      %v943 = vld [vmem:[%s934 + $0x20] sm:$0xf]
      %v944 = vld [vmem:[%s934 + $0x24] sm:$0xf]
      %v945 = vld [vmem:[%s934 + $0x28] sm:$0xf]
      %v946 = vld [vmem:[%s934 + $0x2c] sm:$0xf]
      %v947 = vld [vmem:[%s934 + $0x30] sm:$0xf]
      %v948 = vld [vmem:[%s934 + $0x34] sm:$0xf]
      %v949 = vld [vmem:[%s934 + $0x38] sm:$0xf]
      %v950 = vld [vmem:[%s934 + $0x3c] sm:$0xf]
      %v967 = vunpack.c.l.b16 %v935
      %v968 = vunpack.c.l.b16 %v936
      %v969 = vunpack.c.l.b16 %v937
      %v970 = vunpack.c.l.b16 %v938
      %v971 = vunpack.c.l.b16 %v939
      %v972 = vunpack.c.l.b16 %v940
      %v973 = vunpack.c.l.b16 %v941
      %v974 = vunpack.c.l.b16 %v942
      %v975 = vunpack.c.l.b16 %v943
      %v976 = vunpack.c.l.b16 %v944
      %v977 = vunpack.c.l.b16 %v945
      %v978 = vunpack.c.l.b16 %v946
      %v979 = vunpack.c.l.b16 %v947
      %v980 = vunpack.c.l.b16 %v948
      %v981 = vunpack.c.l.b16 %v949
      %v982 = vunpack.c.l.b16 %v950
      %v983 = vpack.c.b16 %v968, %v967
      %v984 = vpack.c.b16 %v970, %v969
      %v985 = vpack.c.b16 %v972, %v971
      %v986 = vpack.c.b16 %v974, %v973
      %v987 = vpack.c.b16 %v976, %v975
      %v988 = vpack.c.b16 %v978, %v977
      %v989 = vpack.c.b16 %v980, %v979
      %v990 = vpack.c.b16 %v982, %v981
      %999 = vmatprep.subr.bf16.mxu0 0
      %1000 = vmatpush1.bf16.msra.mxu0 %v983
      %1001 = vmatprep.subr.bf16.mxu0 0
      %1002 = vmatpush1.bf16.msra.mxu0 %v984
      %1003 = vmatprep.subr.bf16.mxu0 0
      %1004 = vmatpush1.bf16.msra.mxu0 %v985
      %1005 = vmatprep.subr.bf16.mxu0 0
      %1006 = vmatpush1.bf16.msra.mxu0 %v986
      %1007 = vmatprep.subr.bf16.mxu0 0
      %1008 = vmatpush1.bf16.msra.mxu0 %v987
      %1009 = vmatprep.subr.bf16.mxu0 0
      %1010 = vmatpush1.bf16.msra.mxu0 %v988
      %1011 = vmatprep.subr.bf16.mxu0 0
      %1012 = vmatpush1.bf16.msra.mxu0 %v989
      %1013 = vmatprep.subr.bf16.mxu0 0
      %1014 = vmatpush1.bf16.msra.mxu0 %v990
      %1015 = vmatprep.subr.bf16.mxu0 0
      %1016 = vmatpush1.bf16.msra.mxu0 0
      %1017 = vmatprep.subr.bf16.mxu0 0
      %1018 = vmatpush1.bf16.msra.mxu0 0
      %1019 = vmatprep.subr.bf16.mxu0 0
      %1020 = vmatpush1.bf16.msra.mxu0 0
      %1021 = vmatprep.subr.bf16.mxu0 0
      %1022 = vmatpush1.bf16.msra.mxu0 0
      %1023 = vmatprep.subr.bf16.mxu0 0
      %1024 = vmatpush1.bf16.msra.mxu0 0
      %1025 = vmatprep.subr.bf16.mxu0 0
      %1026 = vmatpush1.bf16.msra.mxu0 0
      %1027 = vmatprep.subr.bf16.mxu0 0
      %1028 = vmatpush1.bf16.msra.mxu0 0
      %1029 = vmatprep.subr.bf16.mxu0 0
      %1030 = vmatpush1.bf16.msra.mxu0 0
      %1031 = vmatprep.mubr.bf16.mxu0 0
      %1032 = vmatmul.mubr.bf16.gmra.mrb[0].mxu0 %v930
      %v1033 = vpop.f32.mrb[0].mxu0
      %v1034 = vadd.f32 0.0, %v1033
      %v1035 = vpop.f32.mrb[0].mxu0
      %v1036 = vpop.f32.mrb[0].mxu0
      %v1037 = vadd.f32 0.0, %v1036
      %v1038 = vpop.f32.mrb[0].mxu0
      %1039 = vmatprep.mubr.bf16.mxu0 0
      %1040 = vmatmul.mubr.bf16.gmra.mrb[0].mxu0 %v931
      %v1041 = vpop.f32.mrb[0].mxu0
      %v1042 = vadd.f32 0.0, %v1041
      %v1043 = vpop.f32.mrb[0].mxu0
      %v1044 = vpop.f32.mrb[0].mxu0
      %v1045 = vadd.f32 0.0, %v1044
      %v1046 = vpop.f32.mrb[0].mxu0
      %1047 = vmatprep.mubr.bf16.mxu0 0
      %1048 = vmatmul.mubr.bf16.gmra.mrb[0].mxu0 %v932
      %v1049 = vpop.f32.mrb[0].mxu0
      %v1050 = vadd.f32 0.0, %v1049
      %v1051 = vpop.f32.mrb[0].mxu0
      %v1052 = vpop.f32.mrb[0].mxu0
      %v1053 = vadd.f32 0.0, %v1052
      %v1054 = vpop.f32.mrb[0].mxu0
      %1055 = vmatprep.mubr.bf16.mxu0 0
      %1056 = vmatmul.mubr.bf16.gmra.mrb[0].mxu0 %v933
      %v1057 = vpop.f32.mrb[0].mxu0
      %v1058 = vadd.f32 0.0, %v1057
      %v1059 = vpop.f32.mrb[0].mxu0
      %v1060 = vpop.f32.mrb[0].mxu0
      %v1061 = vadd.f32 0.0, %v1060
      %v1062 = vpop.f32.mrb[0].mxu0
      %1063 = vdwg.mxu0
      %v1064 = vadd.f32 %v914, %v1034
      %v1065 = vadd.f32 %v915, %v1037
      %v1066 = vadd.f32 %v916, %v1042
      %v1067 = vadd.f32 %v917, %v1045
      %v1068 = vadd.f32 %v918, %v1050
      %v1069 = vadd.f32 %v919, %v1053
      %v1070 = vadd.f32 %v920, %v1058
      %v1071 = vadd.f32 %v921, %v1061
      %s1072 = scalar_lea.vmem [#allocation2], 16
      %v1073 = vld [vmem:[%s1072] sm:$0xff]
      %v1074 = vld [vmem:[%s1072 + $0x10] sm:$0xff]
      %v1075 = vld [vmem:[%s1072 + $0x20] sm:$0xff]
      %v1076 = vld [vmem:[%s1072 + $0x30] sm:$0xff]
      %v1077 = vld [vmem:[%s1072 + $0x40] sm:$0xff]
      %v1078 = vld [vmem:[%s1072 + $0x50] sm:$0xff]
      %v1079 = vld [vmem:[%s1072 + $0x60] sm:$0xff]
      %v1080 = vld [vmem:[%s1072 + $0x70] sm:$0xff]
      %v1081 = vpack.c.bf16 %v1074, %v1073
      %v1082 = vpack.c.bf16 %v1076, %v1075
      %v1083 = vpack.c.bf16 %v1078, %v1077
      %v1084 = vpack.c.bf16 %v1080, %v1079
      %s1085 = scalar_lea.vmem %s2, 320
      %v1086 = vld [vmem:[%s1085] sm:$0xf]
      %v1087 = vld [vmem:[%s1085 + $0x4] sm:$0xf]
      %v1088 = vld [vmem:[%s1085 + $0x8] sm:$0xf]
      %v1089 = vld [vmem:[%s1085 + $0xc] sm:$0xf]
      %v1090 = vld [vmem:[%s1085 + $0x10] sm:$0xf]
      %v1091 = vld [vmem:[%s1085 + $0x14] sm:$0xf]
      %v1092 = vld [vmem:[%s1085 + $0x18] sm:$0xf]
      %v1093 = vld [vmem:[%s1085 + $0x1c] sm:$0xf]
      %v1094 = vld [vmem:[%s1085 + $0x20] sm:$0xf]
      %v1095 = vld [vmem:[%s1085 + $0x24] sm:$0xf]
      %v1096 = vld [vmem:[%s1085 + $0x28] sm:$0xf]
      %v1097 = vld [vmem:[%s1085 + $0x2c] sm:$0xf]
      %v1098 = vld [vmem:[%s1085 + $0x30] sm:$0xf]
      %v1099 = vld [vmem:[%s1085 + $0x34] sm:$0xf]
      %v1100 = vld [vmem:[%s1085 + $0x38] sm:$0xf]
      %v1101 = vld [vmem:[%s1085 + $0x3c] sm:$0xf]
      %v1118 = vunpack.c.l.b16 %v1086
      %v1119 = vunpack.c.l.b16 %v1087
      %v1120 = vunpack.c.l.b16 %v1088
      %v1121 = vunpack.c.l.b16 %v1089
      %v1122 = vunpack.c.l.b16 %v1090
      %v1123 = vunpack.c.l.b16 %v1091
      %v1124 = vunpack.c.l.b16 %v1092
      %v1125 = vunpack.c.l.b16 %v1093
      %v1126 = vunpack.c.l.b16 %v1094
      %v1127 = vunpack.c.l.b16 %v1095
      %v1128 = vunpack.c.l.b16 %v1096
      %v1129 = vunpack.c.l.b16 %v1097
      %v1130 = vunpack.c.l.b16 %v1098
      %v1131 = vunpack.c.l.b16 %v1099
      %v1132 = vunpack.c.l.b16 %v1100
      %v1133 = vunpack.c.l.b16 %v1101
      %v1134 = vpack.c.b16 %v1119, %v1118
      %v1135 = vpack.c.b16 %v1121, %v1120
      %v1136 = vpack.c.b16 %v1123, %v1122
      %v1137 = vpack.c.b16 %v1125, %v1124
      %v1138 = vpack.c.b16 %v1127, %v1126
      %v1139 = vpack.c.b16 %v1129, %v1128
      %v1140 = vpack.c.b16 %v1131, %v1130
      %v1141 = vpack.c.b16 %v1133, %v1132
      %1150 = vmatprep.subr.bf16.mxu0 0
      %1151 = vmatpush1.bf16.msra.mxu0 %v1134
      %1152 = vmatprep.subr.bf16.mxu0 0
      %1153 = vmatpush1.bf16.msra.mxu0 %v1135
      %1154 = vmatprep.subr.bf16.mxu0 0
      %1155 = vmatpush1.bf16.msra.mxu0 %v1136
      %1156 = vmatprep.subr.bf16.mxu0 0
      %1157 = vmatpush1.bf16.msra.mxu0 %v1137
      %1158 = vmatprep.subr.bf16.mxu0 0
      %1159 = vmatpush1.bf16.msra.mxu0 %v1138
      %1160 = vmatprep.subr.bf16.mxu0 0
      %1161 = vmatpush1.bf16.msra.mxu0 %v1139
      %1162 = vmatprep.subr.bf16.mxu0 0
      %1163 = vmatpush1.bf16.msra.mxu0 %v1140
      %1164 = vmatprep.subr.bf16.mxu0 0
      %1165 = vmatpush1.bf16.msra.mxu0 %v1141
      %1166 = vmatprep.subr.bf16.mxu0 0
      %1167 = vmatpush1.bf16.msra.mxu0 0
      %1168 = vmatprep.subr.bf16.mxu0 0
      %1169 = vmatpush1.bf16.msra.mxu0 0
      %1170 = vmatprep.subr.bf16.mxu0 0
      %1171 = vmatpush1.bf16.msra.mxu0 0
      %1172 = vmatprep.subr.bf16.mxu0 0
      %1173 = vmatpush1.bf16.msra.mxu0 0
      %1174 = vmatprep.subr.bf16.mxu0 0
      %1175 = vmatpush1.bf16.msra.mxu0 0
      %1176 = vmatprep.subr.bf16.mxu0 0
      %1177 = vmatpush1.bf16.msra.mxu0 0
      %1178 = vmatprep.subr.bf16.mxu0 0
      %1179 = vmatpush1.bf16.msra.mxu0 0
      %1180 = vmatprep.subr.bf16.mxu0 0
      %1181 = vmatpush1.bf16.msra.mxu0 0
      %1182 = vmatprep.mubr.bf16.mxu0 0
      %1183 = vmatmul.mubr.bf16.gmra.mrb[0].mxu0 %v1081
      %v1184 = vpop.f32.mrb[0].mxu0
      %v1185 = vadd.f32 0.0, %v1184
      %v1186 = vpop.f32.mrb[0].mxu0
      %v1187 = vpop.f32.mrb[0].mxu0
      %v1188 = vadd.f32 0.0, %v1187
      %v1189 = vpop.f32.mrb[0].mxu0
      %1190 = vmatprep.mubr.bf16.mxu0 0
      %1191 = vmatmul.mubr.bf16.gmra.mrb[0].mxu0 %v1082
      %v1192 = vpop.f32.mrb[0].mxu0
      %v1193 = vadd.f32 0.0, %v1192
      %v1194 = vpop.f32.mrb[0].mxu0
      %v1195 = vpop.f32.mrb[0].mxu0
      %v1196 = vadd.f32 0.0, %v1195
      %v1197 = vpop.f32.mrb[0].mxu0
      %1198 = vmatprep.mubr.bf16.mxu0 0
      %1199 = vmatmul.mubr.bf16.gmra.mrb[0].mxu0 %v1083
      %v1200 = vpop.f32.mrb[0].mxu0
      %v1201 = vadd.f32 0.0, %v1200
      %v1202 = vpop.f32.mrb[0].mxu0
      %v1203 = vpop.f32.mrb[0].mxu0
      %v1204 = vadd.f32 0.0, %v1203
      %v1205 = vpop.f32.mrb[0].mxu0
      %1206 = vmatprep.mubr.bf16.mxu0 0
      %1207 = vmatmul.mubr.bf16.gmra.mrb[0].mxu0 %v1084
      %v1208 = vpop.f32.mrb[0].mxu0
      %v1209 = vadd.f32 0.0, %v1208
      %v1210 = vpop.f32.mrb[0].mxu0
      %v1211 = vpop.f32.mrb[0].mxu0
      %v1212 = vadd.f32 0.0, %v1211
      %v1213 = vpop.f32.mrb[0].mxu0
      %1214 = vdwg.mxu0
      %v1215 = vadd.f32 %v1064, %v1185
      %v1216 = vadd.f32 %v1065, %v1188
      %v1217 = vadd.f32 %v1066, %v1193
      %v1218 = vadd.f32 %v1067, %v1196
      %v1219 = vadd.f32 %v1068, %v1201
      %v1220 = vadd.f32 %v1069, %v1204
      %v1221 = vadd.f32 %v1070, %v1209
      %v1222 = vadd.f32 %v1071, %v1212
      %v1223 = vld [vmem:[%s1072 + $0x1] sm:$0xff]
      %v1224 = vld [vmem:[%s1072 + $0x11] sm:$0xff]
      %v1225 = vld [vmem:[%s1072 + $0x21] sm:$0xff]
      %v1226 = vld [vmem:[%s1072 + $0x31] sm:$0xff]
      %v1227 = vld [vmem:[%s1072 + $0x41] sm:$0xff]
      %v1228 = vld [vmem:[%s1072 + $0x51] sm:$0xff]
      %v1229 = vld [vmem:[%s1072 + $0x61] sm:$0xff]
      %v1230 = vld [vmem:[%s1072 + $0x71] sm:$0xff]
      %v1231 = vpack.c.bf16 %v1224, %v1223
      %v1232 = vpack.c.bf16 %v1226, %v1225
      %v1233 = vpack.c.bf16 %v1228, %v1227
      %v1234 = vpack.c.bf16 %v1230, %v1229
      %s1235 = scalar_lea.vmem %s2, 384
      %v1236 = vld [vmem:[%s1235] sm:$0xf]
      %v1237 = vld [vmem:[%s1235 + $0x4] sm:$0xf]
      %v1238 = vld [vmem:[%s1235 + $0x8] sm:$0xf]
      %v1239 = vld [vmem:[%s1235 + $0xc] sm:$0xf]
      %v1240 = vld [vmem:[%s1235 + $0x10] sm:$0xf]
      %v1241 = vld [vmem:[%s1235 + $0x14] sm:$0xf]
      %v1242 = vld [vmem:[%s1235 + $0x18] sm:$0xf]
      %v1243 = vld [vmem:[%s1235 + $0x1c] sm:$0xf]
      %v1244 = vld [vmem:[%s1235 + $0x20] sm:$0xf]
      %v1245 = vld [vmem:[%s1235 + $0x24] sm:$0xf]
      %v1246 = vld [vmem:[%s1235 + $0x28] sm:$0xf]
      %v1247 = vld [vmem:[%s1235 + $0x2c] sm:$0xf]
      %v1248 = vld [vmem:[%s1235 + $0x30] sm:$0xf]
      %v1249 = vld [vmem:[%s1235 + $0x34] sm:$0xf]
      %v1250 = vld [vmem:[%s1235 + $0x38] sm:$0xf]
      %v1251 = vld [vmem:[%s1235 + $0x3c] sm:$0xf]
      %v1268 = vunpack.c.l.b16 %v1236
      %v1269 = vunpack.c.l.b16 %v1237
      %v1270 = vunpack.c.l.b16 %v1238
      %v1271 = vunpack.c.l.b16 %v1239
      %v1272 = vunpack.c.l.b16 %v1240
      %v1273 = vunpack.c.l.b16 %v1241
      %v1274 = vunpack.c.l.b16 %v1242
      %v1275 = vunpack.c.l.b16 %v1243
      %v1276 = vunpack.c.l.b16 %v1244
      %v1277 = vunpack.c.l.b16 %v1245
      %v1278 = vunpack.c.l.b16 %v1246
      %v1279 = vunpack.c.l.b16 %v1247
      %v1280 = vunpack.c.l.b16 %v1248
      %v1281 = vunpack.c.l.b16 %v1249
      %v1282 = vunpack.c.l.b16 %v1250
      %v1283 = vunpack.c.l.b16 %v1251
      %v1284 = vpack.c.b16 %v1269, %v1268
      %v1285 = vpack.c.b16 %v1271, %v1270
      %v1286 = vpack.c.b16 %v1273, %v1272
      %v1287 = vpack.c.b16 %v1275, %v1274
      %v1288 = vpack.c.b16 %v1277, %v1276
      %v1289 = vpack.c.b16 %v1279, %v1278
      %v1290 = vpack.c.b16 %v1281, %v1280
      %v1291 = vpack.c.b16 %v1283, %v1282
      %1300 = vmatprep.subr.bf16.mxu0 0
      %1301 = vmatpush1.bf16.msra.mxu0 %v1284
      %1302 = vmatprep.subr.bf16.mxu0 0
      %1303 = vmatpush1.bf16.msra.mxu0 %v1285
      %1304 = vmatprep.subr.bf16.mxu0 0
      %1305 = vmatpush1.bf16.msra.mxu0 %v1286
      %1306 = vmatprep.subr.bf16.mxu0 0
      %1307 = vmatpush1.bf16.msra.mxu0 %v1287
      %1308 = vmatprep.subr.bf16.mxu0 0
      %1309 = vmatpush1.bf16.msra.mxu0 %v1288
      %1310 = vmatprep.subr.bf16.mxu0 0
      %1311 = vmatpush1.bf16.msra.mxu0 %v1289
      %1312 = vmatprep.subr.bf16.mxu0 0
      %1313 = vmatpush1.bf16.msra.mxu0 %v1290
      %1314 = vmatprep.subr.bf16.mxu0 0
      %1315 = vmatpush1.bf16.msra.mxu0 %v1291
      %1316 = vmatprep.subr.bf16.mxu0 0
      %1317 = vmatpush1.bf16.msra.mxu0 0
      %1318 = vmatprep.subr.bf16.mxu0 0
      %1319 = vmatpush1.bf16.msra.mxu0 0
      %1320 = vmatprep.subr.bf16.mxu0 0
      %1321 = vmatpush1.bf16.msra.mxu0 0
      %1322 = vmatprep.subr.bf16.mxu0 0
      %1323 = vmatpush1.bf16.msra.mxu0 0
      %1324 = vmatprep.subr.bf16.mxu0 0
      %1325 = vmatpush1.bf16.msra.mxu0 0
      %1326 = vmatprep.subr.bf16.mxu0 0
      %1327 = vmatpush1.bf16.msra.mxu0 0
      %1328 = vmatprep.subr.bf16.mxu0 0
      %1329 = vmatpush1.bf16.msra.mxu0 0
      %1330 = vmatprep.subr.bf16.mxu0 0
      %1331 = vmatpush1.bf16.msra.mxu0 0
      %1332 = vmatprep.mubr.bf16.mxu0 0
      %1333 = vmatmul.mubr.bf16.gmra.mrb[0].mxu0 %v1231
      %v1334 = vpop.f32.mrb[0].mxu0
      %v1335 = vadd.f32 0.0, %v1334
      %v1336 = vpop.f32.mrb[0].mxu0
      %v1337 = vpop.f32.mrb[0].mxu0
      %v1338 = vadd.f32 0.0, %v1337
      %v1339 = vpop.f32.mrb[0].mxu0
      %1340 = vmatprep.mubr.bf16.mxu0 0
      %1341 = vmatmul.mubr.bf16.gmra.mrb[0].mxu0 %v1232
      %v1342 = vpop.f32.mrb[0].mxu0
      %v1343 = vadd.f32 0.0, %v1342
      %v1344 = vpop.f32.mrb[0].mxu0
      %v1345 = vpop.f32.mrb[0].mxu0
      %v1346 = vadd.f32 0.0, %v1345
      %v1347 = vpop.f32.mrb[0].mxu0
      %1348 = vmatprep.mubr.bf16.mxu0 0
      %1349 = vmatmul.mubr.bf16.gmra.mrb[0].mxu0 %v1233
      %v1350 = vpop.f32.mrb[0].mxu0
      %v1351 = vadd.f32 0.0, %v1350
      %v1352 = vpop.f32.mrb[0].mxu0
      %v1353 = vpop.f32.mrb[0].mxu0
      %v1354 = vadd.f32 0.0, %v1353
      %v1355 = vpop.f32.mrb[0].mxu0
      %1356 = vmatprep.mubr.bf16.mxu0 0
      %1357 = vmatmul.mubr.bf16.gmra.mrb[0].mxu0 %v1234
      %v1358 = vpop.f32.mrb[0].mxu0
      %v1359 = vadd.f32 0.0, %v1358
      %v1360 = vpop.f32.mrb[0].mxu0
      %v1361 = vpop.f32.mrb[0].mxu0
      %v1362 = vadd.f32 0.0, %v1361
      %v1363 = vpop.f32.mrb[0].mxu0
      %1364 = vdwg.mxu0
      %v1365 = vadd.f32 %v1215, %v1335
      %v1366 = vadd.f32 %v1216, %v1338
      %v1367 = vadd.f32 %v1217, %v1343
      %v1368 = vadd.f32 %v1218, %v1346
      %v1369 = vadd.f32 %v1219, %v1351
      %v1370 = vadd.f32 %v1220, %v1354
      %v1371 = vadd.f32 %v1221, %v1359
      %v1372 = vadd.f32 %v1222, %v1362
      %v1373 = vld [vmem:[%s1072 + $0x2] sm:$0xff]
      %v1374 = vld [vmem:[%s1072 + $0x12] sm:$0xff]
      %v1375 = vld [vmem:[%s1072 + $0x22] sm:$0xff]
      %v1376 = vld [vmem:[%s1072 + $0x32] sm:$0xff]
      %v1377 = vld [vmem:[%s1072 + $0x42] sm:$0xff]
      %v1378 = vld [vmem:[%s1072 + $0x52] sm:$0xff]
      %v1379 = vld [vmem:[%s1072 + $0x62] sm:$0xff]
      %v1380 = vld [vmem:[%s1072 + $0x72] sm:$0xff]
      %v1381 = vpack.c.bf16 %v1374, %v1373
      %v1382 = vpack.c.bf16 %v1376, %v1375
      %v1383 = vpack.c.bf16 %v1378, %v1377
      %v1384 = vpack.c.bf16 %v1380, %v1379
      %s1385 = scalar_lea.vmem %s2, 448
      %v1386 = vld [vmem:[%s1385] sm:$0xf]
      %v1387 = vld [vmem:[%s1385 + $0x4] sm:$0xf]
      %v1388 = vld [vmem:[%s1385 + $0x8] sm:$0xf]
      %v1389 = vld [vmem:[%s1385 + $0xc] sm:$0xf]
      %v1390 = vld [vmem:[%s1385 + $0x10] sm:$0xf]
      %v1391 = vld [vmem:[%s1385 + $0x14] sm:$0xf]
      %v1392 = vld [vmem:[%s1385 + $0x18] sm:$0xf]
      %v1393 = vld [vmem:[%s1385 + $0x1c] sm:$0xf]
      %v1394 = vld [vmem:[%s1385 + $0x20] sm:$0xf]
      %v1395 = vld [vmem:[%s1385 + $0x24] sm:$0xf]
      %v1396 = vld [vmem:[%s1385 + $0x28] sm:$0xf]
      %v1397 = vld [vmem:[%s1385 + $0x2c] sm:$0xf]
      %v1398 = vld [vmem:[%s1385 + $0x30] sm:$0xf]
      %v1399 = vld [vmem:[%s1385 + $0x34] sm:$0xf]
      %v1400 = vld [vmem:[%s1385 + $0x38] sm:$0xf]
      %v1401 = vld [vmem:[%s1385 + $0x3c] sm:$0xf]
      %v1418 = vunpack.c.l.b16 %v1386
      %v1419 = vunpack.c.l.b16 %v1387
      %v1420 = vunpack.c.l.b16 %v1388
      %v1421 = vunpack.c.l.b16 %v1389
      %v1422 = vunpack.c.l.b16 %v1390
      %v1423 = vunpack.c.l.b16 %v1391
      %v1424 = vunpack.c.l.b16 %v1392
      %v1425 = vunpack.c.l.b16 %v1393
      %v1426 = vunpack.c.l.b16 %v1394
      %v1427 = vunpack.c.l.b16 %v1395
      %v1428 = vunpack.c.l.b16 %v1396
      %v1429 = vunpack.c.l.b16 %v1397
      %v1430 = vunpack.c.l.b16 %v1398
      %v1431 = vunpack.c.l.b16 %v1399
      %v1432 = vunpack.c.l.b16 %v1400
      %v1433 = vunpack.c.l.b16 %v1401
      %v1434 = vpack.c.b16 %v1419, %v1418
      %v1435 = vpack.c.b16 %v1421, %v1420
      %v1436 = vpack.c.b16 %v1423, %v1422
      %v1437 = vpack.c.b16 %v1425, %v1424
      %v1438 = vpack.c.b16 %v1427, %v1426
      %v1439 = vpack.c.b16 %v1429, %v1428
      %v1440 = vpack.c.b16 %v1431, %v1430
      %v1441 = vpack.c.b16 %v1433, %v1432
      %1450 = vmatprep.subr.bf16.mxu0 0
      %1451 = vmatpush1.bf16.msra.mxu0 %v1434
      %1452 = vmatprep.subr.bf16.mxu0 0
      %1453 = vmatpush1.bf16.msra.mxu0 %v1435
      %1454 = vmatprep.subr.bf16.mxu0 0
      %1455 = vmatpush1.bf16.msra.mxu0 %v1436
      %1456 = vmatprep.subr.bf16.mxu0 0
      %1457 = vmatpush1.bf16.msra.mxu0 %v1437
      %1458 = vmatprep.subr.bf16.mxu0 0
      %1459 = vmatpush1.bf16.msra.mxu0 %v1438
      %1460 = vmatprep.subr.bf16.mxu0 0
      %1461 = vmatpush1.bf16.msra.mxu0 %v1439
      %1462 = vmatprep.subr.bf16.mxu0 0
      %1463 = vmatpush1.bf16.msra.mxu0 %v1440
      %1464 = vmatprep.subr.bf16.mxu0 0
      %1465 = vmatpush1.bf16.msra.mxu0 %v1441
      %1466 = vmatprep.subr.bf16.mxu0 0
      %1467 = vmatpush1.bf16.msra.mxu0 0
      %1468 = vmatprep.subr.bf16.mxu0 0
      %1469 = vmatpush1.bf16.msra.mxu0 0
      %1470 = vmatprep.subr.bf16.mxu0 0
      %1471 = vmatpush1.bf16.msra.mxu0 0
      %1472 = vmatprep.subr.bf16.mxu0 0
      %1473 = vmatpush1.bf16.msra.mxu0 0
      %1474 = vmatprep.subr.bf16.mxu0 0
      %1475 = vmatpush1.bf16.msra.mxu0 0
      %1476 = vmatprep.subr.bf16.mxu0 0
      %1477 = vmatpush1.bf16.msra.mxu0 0
      %1478 = vmatprep.subr.bf16.mxu0 0
      %1479 = vmatpush1.bf16.msra.mxu0 0
      %1480 = vmatprep.subr.bf16.mxu0 0
      %1481 = vmatpush1.bf16.msra.mxu0 0
      %1482 = vmatprep.mubr.bf16.mxu0 0
      %1483 = vmatmul.mubr.bf16.gmra.mrb[0].mxu0 %v1381
      %v1484 = vpop.f32.mrb[0].mxu0
      %v1485 = vadd.f32 0.0, %v1484
      %v1486 = vpop.f32.mrb[0].mxu0
      %v1487 = vpop.f32.mrb[0].mxu0
      %v1488 = vadd.f32 0.0, %v1487
      %v1489 = vpop.f32.mrb[0].mxu0
      %1490 = vmatprep.mubr.bf16.mxu0 0
      %1491 = vmatmul.mubr.bf16.gmra.mrb[0].mxu0 %v1382
      %v1492 = vpop.f32.mrb[0].mxu0
      %v1493 = vadd.f32 0.0, %v1492
      %v1494 = vpop.f32.mrb[0].mxu0
      %v1495 = vpop.f32.mrb[0].mxu0
      %v1496 = vadd.f32 0.0, %v1495
      %v1497 = vpop.f32.mrb[0].mxu0
      %1498 = vmatprep.mubr.bf16.mxu0 0
      %1499 = vmatmul.mubr.bf16.gmra.mrb[0].mxu0 %v1383
      %v1500 = vpop.f32.mrb[0].mxu0
      %v1501 = vadd.f32 0.0, %v1500
      %v1502 = vpop.f32.mrb[0].mxu0
      %v1503 = vpop.f32.mrb[0].mxu0
      %v1504 = vadd.f32 0.0, %v1503
      %v1505 = vpop.f32.mrb[0].mxu0
      %1506 = vmatprep.mubr.bf16.mxu0 0
      %1507 = vmatmul.mubr.bf16.gmra.mrb[0].mxu0 %v1384
      %v1508 = vpop.f32.mrb[0].mxu0
      %v1509 = vadd.f32 0.0, %v1508
      %v1510 = vpop.f32.mrb[0].mxu0
      %v1511 = vpop.f32.mrb[0].mxu0
      %v1512 = vadd.f32 0.0, %v1511
      %v1513 = vpop.f32.mrb[0].mxu0
      %1514 = vdwg.mxu0
      %v1515 = vadd.f32 %v1365, %v1485
      %v1516 = vadd.f32 %v1366, %v1488
      %v1517 = vadd.f32 %v1367, %v1493
      %v1518 = vadd.f32 %v1368, %v1496
      %v1519 = vadd.f32 %v1369, %v1501
      %v1520 = vadd.f32 %v1370, %v1504
      %v1521 = vadd.f32 %v1371, %v1509
      %v1522 = vadd.f32 %v1372, %v1512
      %v1523 = vld [vmem:[%s1072 + $0x3] sm:$0xff]
      %v1524 = vld [vmem:[%s1072 + $0x13] sm:$0xff]
      %v1525 = vld [vmem:[%s1072 + $0x23] sm:$0xff]
      %v1526 = vld [vmem:[%s1072 + $0x33] sm:$0xff]
      %v1527 = vld [vmem:[%s1072 + $0x43] sm:$0xff]
      %v1528 = vld [vmem:[%s1072 + $0x53] sm:$0xff]
      %v1529 = vld [vmem:[%s1072 + $0x63] sm:$0xff]
      %v1530 = vld [vmem:[%s1072 + $0x73] sm:$0xff]
      %v1531 = vpack.c.bf16 %v1524, %v1523
      %v1532 = vpack.c.bf16 %v1526, %v1525
      %v1533 = vpack.c.bf16 %v1528, %v1527
      %v1534 = vpack.c.bf16 %v1530, %v1529
      %s1535 = scalar_lea.vmem %s2, 512
      %v1536 = vld [vmem:[%s1535] sm:$0xf]
      %v1537 = vld [vmem:[%s1535 + $0x4] sm:$0xf]
      %v1538 = vld [vmem:[%s1535 + $0x8] sm:$0xf]
      %v1539 = vld [vmem:[%s1535 + $0xc] sm:$0xf]
      %v1540 = vld [vmem:[%s1535 + $0x10] sm:$0xf]
      %v1541 = vld [vmem:[%s1535 + $0x14] sm:$0xf]
      %v1542 = vld [vmem:[%s1535 + $0x18] sm:$0xf]
      %v1543 = vld [vmem:[%s1535 + $0x1c] sm:$0xf]
      %v1544 = vld [vmem:[%s1535 + $0x20] sm:$0xf]
      %v1545 = vld [vmem:[%s1535 + $0x24] sm:$0xf]
      %v1546 = vld [vmem:[%s1535 + $0x28] sm:$0xf]
      %v1547 = vld [vmem:[%s1535 + $0x2c] sm:$0xf]
      %v1548 = vld [vmem:[%s1535 + $0x30] sm:$0xf]
      %v1549 = vld [vmem:[%s1535 + $0x34] sm:$0xf]
      %v1550 = vld [vmem:[%s1535 + $0x38] sm:$0xf]
      %v1551 = vld [vmem:[%s1535 + $0x3c] sm:$0xf]
      %v1568 = vunpack.c.l.b16 %v1536
      %v1569 = vunpack.c.l.b16 %v1537
      %v1570 = vunpack.c.l.b16 %v1538
      %v1571 = vunpack.c.l.b16 %v1539
      %v1572 = vunpack.c.l.b16 %v1540
      %v1573 = vunpack.c.l.b16 %v1541
      %v1574 = vunpack.c.l.b16 %v1542
      %v1575 = vunpack.c.l.b16 %v1543
      %v1576 = vunpack.c.l.b16 %v1544
      %v1577 = vunpack.c.l.b16 %v1545
      %v1578 = vunpack.c.l.b16 %v1546
      %v1579 = vunpack.c.l.b16 %v1547
      %v1580 = vunpack.c.l.b16 %v1548
      %v1581 = vunpack.c.l.b16 %v1549
      %v1582 = vunpack.c.l.b16 %v1550
      %v1583 = vunpack.c.l.b16 %v1551
      %v1584 = vpack.c.b16 %v1569, %v1568
      %v1585 = vpack.c.b16 %v1571, %v1570
      %v1586 = vpack.c.b16 %v1573, %v1572
      %v1587 = vpack.c.b16 %v1575, %v1574
      %v1588 = vpack.c.b16 %v1577, %v1576
      %v1589 = vpack.c.b16 %v1579, %v1578
      %v1590 = vpack.c.b16 %v1581, %v1580
      %v1591 = vpack.c.b16 %v1583, %v1582
      %1600 = vmatprep.subr.bf16.mxu0 0
      %1601 = vmatpush1.bf16.msra.mxu0 %v1584
      %1602 = vmatprep.subr.bf16.mxu0 0
      %1603 = vmatpush1.bf16.msra.mxu0 %v1585
      %1604 = vmatprep.subr.bf16.mxu0 0
      %1605 = vmatpush1.bf16.msra.mxu0 %v1586
      %1606 = vmatprep.subr.bf16.mxu0 0
      %1607 = vmatpush1.bf16.msra.mxu0 %v1587
      %1608 = vmatprep.subr.bf16.mxu0 0
      %1609 = vmatpush1.bf16.msra.mxu0 %v1588
      %1610 = vmatprep.subr.bf16.mxu0 0
      %1611 = vmatpush1.bf16.msra.mxu0 %v1589
      %1612 = vmatprep.subr.bf16.mxu0 0
      %1613 = vmatpush1.bf16.msra.mxu0 %v1590
      %1614 = vmatprep.subr.bf16.mxu0 0
      %1615 = vmatpush1.bf16.msra.mxu0 %v1591
      %1616 = vmatprep.subr.bf16.mxu0 0
      %1617 = vmatpush1.bf16.msra.mxu0 0
      %1618 = vmatprep.subr.bf16.mxu0 0
      %1619 = vmatpush1.bf16.msra.mxu0 0
      %1620 = vmatprep.subr.bf16.mxu0 0
      %1621 = vmatpush1.bf16.msra.mxu0 0
      %1622 = vmatprep.subr.bf16.mxu0 0
      %1623 = vmatpush1.bf16.msra.mxu0 0
      %1624 = vmatprep.subr.bf16.mxu0 0
      %1625 = vmatpush1.bf16.msra.mxu0 0
      %1626 = vmatprep.subr.bf16.mxu0 0
      %1627 = vmatpush1.bf16.msra.mxu0 0
      %1628 = vmatprep.subr.bf16.mxu0 0
      %1629 = vmatpush1.bf16.msra.mxu0 0
      %1630 = vmatprep.subr.bf16.mxu0 0
      %1631 = vmatpush1.bf16.msra.mxu0 0
      %1632 = vmatprep.mubr.bf16.mxu0 0
      %1633 = vmatmul.mubr.bf16.gmra.mrb[0].mxu0 %v1531
      %v1634 = vpop.f32.mrb[0].mxu0
      %v1635 = vadd.f32 0.0, %v1634
      %v1636 = vpop.f32.mrb[0].mxu0
      %v1637 = vpop.f32.mrb[0].mxu0
      %v1638 = vadd.f32 0.0, %v1637
      %v1639 = vpop.f32.mrb[0].mxu0
      %1640 = vmatprep.mubr.bf16.mxu0 0
      %1641 = vmatmul.mubr.bf16.gmra.mrb[0].mxu0 %v1532
      %v1642 = vpop.f32.mrb[0].mxu0
      %v1643 = vadd.f32 0.0, %v1642
      %v1644 = vpop.f32.mrb[0].mxu0
      %v1645 = vpop.f32.mrb[0].mxu0
      %v1646 = vadd.f32 0.0, %v1645
      %v1647 = vpop.f32.mrb[0].mxu0
      %1648 = vmatprep.mubr.bf16.mxu0 0
      %1649 = vmatmul.mubr.bf16.gmra.mrb[0].mxu0 %v1533
      %v1650 = vpop.f32.mrb[0].mxu0
      %v1651 = vadd.f32 0.0, %v1650
      %v1652 = vpop.f32.mrb[0].mxu0
      %v1653 = vpop.f32.mrb[0].mxu0
      %v1654 = vadd.f32 0.0, %v1653
      %v1655 = vpop.f32.mrb[0].mxu0
      %1656 = vmatprep.mubr.bf16.mxu0 0
      %1657 = vmatmul.mubr.bf16.gmra.mrb[0].mxu0 %v1534
      %v1658 = vpop.f32.mrb[0].mxu0
      %v1659 = vadd.f32 0.0, %v1658
      %v1660 = vpop.f32.mrb[0].mxu0
      %v1661 = vpop.f32.mrb[0].mxu0
      %v1662 = vadd.f32 0.0, %v1661
      %v1663 = vpop.f32.mrb[0].mxu0
      %1664 = vdwg.mxu0
      %v1665 = vadd.f32 %v1515, %v1635
      %v1666 = vadd.f32 %v1516, %v1638
      %v1667 = vadd.f32 %v1517, %v1643
      %v1668 = vadd.f32 %v1518, %v1646
      %v1669 = vadd.f32 %v1519, %v1651
      %v1670 = vadd.f32 %v1520, %v1654
      %v1671 = vadd.f32 %v1521, %v1659
      %v1672 = vadd.f32 %v1522, %v1662
      %v1673 = vld [vmem:[%s1072 + $0x4] sm:$0xff]
      %v1674 = vld [vmem:[%s1072 + $0x14] sm:$0xff]
      %v1675 = vld [vmem:[%s1072 + $0x24] sm:$0xff]
      %v1676 = vld [vmem:[%s1072 + $0x34] sm:$0xff]
      %v1677 = vld [vmem:[%s1072 + $0x44] sm:$0xff]
      %v1678 = vld [vmem:[%s1072 + $0x54] sm:$0xff]
      %v1679 = vld [vmem:[%s1072 + $0x64] sm:$0xff]
      %v1680 = vld [vmem:[%s1072 + $0x74] sm:$0xff]
      %v1681 = vpack.c.bf16 %v1674, %v1673
      %v1682 = vpack.c.bf16 %v1676, %v1675
      %v1683 = vpack.c.bf16 %v1678, %v1677
      %v1684 = vpack.c.bf16 %v1680, %v1679
      %s1685 = scalar_lea.vmem %s2, 576
      %v1686 = vld [vmem:[%s1685] sm:$0xf]
      %v1687 = vld [vmem:[%s1685 + $0x4] sm:$0xf]
      %v1688 = vld [vmem:[%s1685 + $0x8] sm:$0xf]
      %v1689 = vld [vmem:[%s1685 + $0xc] sm:$0xf]
      %v1690 = vld [vmem:[%s1685 + $0x10] sm:$0xf]
      %v1691 = vld [vmem:[%s1685 + $0x14] sm:$0xf]
      %v1692 = vld [vmem:[%s1685 + $0x18] sm:$0xf]
      %v1693 = vld [vmem:[%s1685 + $0x1c] sm:$0xf]
      %v1694 = vld [vmem:[%s1685 + $0x20] sm:$0xf]
      %v1695 = vld [vmem:[%s1685 + $0x24] sm:$0xf]
      %v1696 = vld [vmem:[%s1685 + $0x28] sm:$0xf]
      %v1697 = vld [vmem:[%s1685 + $0x2c] sm:$0xf]
      %v1698 = vld [vmem:[%s1685 + $0x30] sm:$0xf]
      %v1699 = vld [vmem:[%s1685 + $0x34] sm:$0xf]
      %v1700 = vld [vmem:[%s1685 + $0x38] sm:$0xf]
      %v1701 = vld [vmem:[%s1685 + $0x3c] sm:$0xf]
      %v1718 = vunpack.c.l.b16 %v1686
      %v1719 = vunpack.c.l.b16 %v1687
      %v1720 = vunpack.c.l.b16 %v1688
      %v1721 = vunpack.c.l.b16 %v1689
      %v1722 = vunpack.c.l.b16 %v1690
      %v1723 = vunpack.c.l.b16 %v1691
      %v1724 = vunpack.c.l.b16 %v1692
      %v1725 = vunpack.c.l.b16 %v1693
      %v1726 = vunpack.c.l.b16 %v1694
      %v1727 = vunpack.c.l.b16 %v1695
      %v1728 = vunpack.c.l.b16 %v1696
      %v1729 = vunpack.c.l.b16 %v1697
      %v1730 = vunpack.c.l.b16 %v1698
      %v1731 = vunpack.c.l.b16 %v1699
      %v1732 = vunpack.c.l.b16 %v1700
      %v1733 = vunpack.c.l.b16 %v1701
      %v1734 = vpack.c.b16 %v1719, %v1718
      %v1735 = vpack.c.b16 %v1721, %v1720
      %v1736 = vpack.c.b16 %v1723, %v1722
      %v1737 = vpack.c.b16 %v1725, %v1724
      %v1738 = vpack.c.b16 %v1727, %v1726
      %v1739 = vpack.c.b16 %v1729, %v1728
      %v1740 = vpack.c.b16 %v1731, %v1730
      %v1741 = vpack.c.b16 %v1733, %v1732
      %1750 = vmatprep.subr.bf16.mxu0 0
      %1751 = vmatpush1.bf16.msra.mxu0 %v1734
      %1752 = vmatprep.subr.bf16.mxu0 0
      %1753 = vmatpush1.bf16.msra.mxu0 %v1735
      %1754 = vmatprep.subr.bf16.mxu0 0
      %1755 = vmatpush1.bf16.msra.mxu0 %v1736
      %1756 = vmatprep.subr.bf16.mxu0 0
      %1757 = vmatpush1.bf16.msra.mxu0 %v1737
      %1758 = vmatprep.subr.bf16.mxu0 0
      %1759 = vmatpush1.bf16.msra.mxu0 %v1738
      %1760 = vmatprep.subr.bf16.mxu0 0
      %1761 = vmatpush1.bf16.msra.mxu0 %v1739
      %1762 = vmatprep.subr.bf16.mxu0 0
      %1763 = vmatpush1.bf16.msra.mxu0 %v1740
      %1764 = vmatprep.subr.bf16.mxu0 0
      %1765 = vmatpush1.bf16.msra.mxu0 %v1741
      %1766 = vmatprep.subr.bf16.mxu0 0
      %1767 = vmatpush1.bf16.msra.mxu0 0
      %1768 = vmatprep.subr.bf16.mxu0 0
      %1769 = vmatpush1.bf16.msra.mxu0 0
      %1770 = vmatprep.subr.bf16.mxu0 0
      %1771 = vmatpush1.bf16.msra.mxu0 0
      %1772 = vmatprep.subr.bf16.mxu0 0
      %1773 = vmatpush1.bf16.msra.mxu0 0
      %1774 = vmatprep.subr.bf16.mxu0 0
      %1775 = vmatpush1.bf16.msra.mxu0 0
      %1776 = vmatprep.subr.bf16.mxu0 0
      %1777 = vmatpush1.bf16.msra.mxu0 0
      %1778 = vmatprep.subr.bf16.mxu0 0
      %1779 = vmatpush1.bf16.msra.mxu0 0
      %1780 = vmatprep.subr.bf16.mxu0 0
      %1781 = vmatpush1.bf16.msra.mxu0 0
      %1782 = vmatprep.mubr.bf16.mxu0 0
      %1783 = vmatmul.mubr.bf16.gmra.mrb[0].mxu0 %v1681
      %v1784 = vpop.f32.mrb[0].mxu0
      %v1785 = vadd.f32 0.0, %v1784
      %v1786 = vpop.f32.mrb[0].mxu0
      %v1787 = vpop.f32.mrb[0].mxu0
      %v1788 = vadd.f32 0.0, %v1787
      %v1789 = vpop.f32.mrb[0].mxu0
      %1790 = vmatprep.mubr.bf16.mxu0 0
      %1791 = vmatmul.mubr.bf16.gmra.mrb[0].mxu0 %v1682
      %v1792 = vpop.f32.mrb[0].mxu0
      %v1793 = vadd.f32 0.0, %v1792
      %v1794 = vpop.f32.mrb[0].mxu0
      %v1795 = vpop.f32.mrb[0].mxu0
      %v1796 = vadd.f32 0.0, %v1795
      %v1797 = vpop.f32.mrb[0].mxu0
      %1798 = vmatprep.mubr.bf16.mxu0 0
      %1799 = vmatmul.mubr.bf16.gmra.mrb[0].mxu0 %v1683
      %v1800 = vpop.f32.mrb[0].mxu0
      %v1801 = vadd.f32 0.0, %v1800
      %v1802 = vpop.f32.mrb[0].mxu0
      %v1803 = vpop.f32.mrb[0].mxu0
      %v1804 = vadd.f32 0.0, %v1803
      %v1805 = vpop.f32.mrb[0].mxu0
      %1806 = vmatprep.mubr.bf16.mxu0 0
      %1807 = vmatmul.mubr.bf16.gmra.mrb[0].mxu0 %v1684
      %v1808 = vpop.f32.mrb[0].mxu0
      %v1809 = vadd.f32 0.0, %v1808
      %v1810 = vpop.f32.mrb[0].mxu0
      %v1811 = vpop.f32.mrb[0].mxu0
      %v1812 = vadd.f32 0.0, %v1811
      %v1813 = vpop.f32.mrb[0].mxu0
      %1814 = vdwg.mxu0
      %v1815 = vadd.f32 %v1665, %v1785
      %v1816 = vadd.f32 %v1666, %v1788
      %v1817 = vadd.f32 %v1667, %v1793
      %v1818 = vadd.f32 %v1668, %v1796
      %v1819 = vadd.f32 %v1669, %v1801
      %v1820 = vadd.f32 %v1670, %v1804
      %v1821 = vadd.f32 %v1671, %v1809
      %v1822 = vadd.f32 %v1672, %v1812
      %s1823 = scalar_lea.vmem [#allocation2], 32
      %v1824 = vld [vmem:[%s1823] sm:$0xff]
      %v1825 = vld [vmem:[%s1823 + $0x10] sm:$0xff]
      %v1826 = vld [vmem:[%s1823 + $0x20] sm:$0xff]
      %v1827 = vld [vmem:[%s1823 + $0x30] sm:$0xff]
      %v1828 = vld [vmem:[%s1823 + $0x40] sm:$0xff]
      %v1829 = vld [vmem:[%s1823 + $0x50] sm:$0xff]
      %v1830 = vld [vmem:[%s1823 + $0x60] sm:$0xff]
      %v1831 = vld [vmem:[%s1823 + $0x70] sm:$0xff]
      %v1832 = vpack.c.bf16 %v1825, %v1824
      %v1833 = vpack.c.bf16 %v1827, %v1826
      %v1834 = vpack.c.bf16 %v1829, %v1828
      %v1835 = vpack.c.bf16 %v1831, %v1830
      %s1836 = scalar_lea.vmem %s2, 640
      %v1837 = vld [vmem:[%s1836] sm:$0xf]
      %v1838 = vld [vmem:[%s1836 + $0x4] sm:$0xf]
      %v1839 = vld [vmem:[%s1836 + $0x8] sm:$0xf]
      %v1840 = vld [vmem:[%s1836 + $0xc] sm:$0xf]
      %v1841 = vld [vmem:[%s1836 + $0x10] sm:$0xf]
      %v1842 = vld [vmem:[%s1836 + $0x14] sm:$0xf]
      %v1843 = vld [vmem:[%s1836 + $0x18] sm:$0xf]
      %v1844 = vld [vmem:[%s1836 + $0x1c] sm:$0xf]
      %v1845 = vld [vmem:[%s1836 + $0x20] sm:$0xf]
      %v1846 = vld [vmem:[%s1836 + $0x24] sm:$0xf]
      %v1847 = vld [vmem:[%s1836 + $0x28] sm:$0xf]
      %v1848 = vld [vmem:[%s1836 + $0x2c] sm:$0xf]
      %v1849 = vld [vmem:[%s1836 + $0x30] sm:$0xf]
      %v1850 = vld [vmem:[%s1836 + $0x34] sm:$0xf]
      %v1851 = vld [vmem:[%s1836 + $0x38] sm:$0xf]
      %v1852 = vld [vmem:[%s1836 + $0x3c] sm:$0xf]
      %v1869 = vunpack.c.l.b16 %v1837
      %v1870 = vunpack.c.l.b16 %v1838
      %v1871 = vunpack.c.l.b16 %v1839
      %v1872 = vunpack.c.l.b16 %v1840
      %v1873 = vunpack.c.l.b16 %v1841
      %v1874 = vunpack.c.l.b16 %v1842
      %v1875 = vunpack.c.l.b16 %v1843
      %v1876 = vunpack.c.l.b16 %v1844
      %v1877 = vunpack.c.l.b16 %v1845
      %v1878 = vunpack.c.l.b16 %v1846
      %v1879 = vunpack.c.l.b16 %v1847
      %v1880 = vunpack.c.l.b16 %v1848
      %v1881 = vunpack.c.l.b16 %v1849
      %v1882 = vunpack.c.l.b16 %v1850
      %v1883 = vunpack.c.l.b16 %v1851
      %v1884 = vunpack.c.l.b16 %v1852
      %v1885 = vpack.c.b16 %v1870, %v1869
      %v1886 = vpack.c.b16 %v1872, %v1871
      %v1887 = vpack.c.b16 %v1874, %v1873
      %v1888 = vpack.c.b16 %v1876, %v1875
      %v1889 = vpack.c.b16 %v1878, %v1877
      %v1890 = vpack.c.b16 %v1880, %v1879
      %v1891 = vpack.c.b16 %v1882, %v1881
      %v1892 = vpack.c.b16 %v1884, %v1883
      %1901 = vmatprep.subr.bf16.mxu0 0
      %1902 = vmatpush1.bf16.msra.mxu0 %v1885
      %1903 = vmatprep.subr.bf16.mxu0 0
      %1904 = vmatpush1.bf16.msra.mxu0 %v1886
      %1905 = vmatprep.subr.bf16.mxu0 0
      %1906 = vmatpush1.bf16.msra.mxu0 %v1887
      %1907 = vmatprep.subr.bf16.mxu0 0
      %1908 = vmatpush1.bf16.msra.mxu0 %v1888
      %1909 = vmatprep.subr.bf16.mxu0 0
      %1910 = vmatpush1.bf16.msra.mxu0 %v1889
      %1911 = vmatprep.subr.bf16.mxu0 0
      %1912 = vmatpush1.bf16.msra.mxu0 %v1890
      %1913 = vmatprep.subr.bf16.mxu0 0
      %1914 = vmatpush1.bf16.msra.mxu0 %v1891
      %1915 = vmatprep.subr.bf16.mxu0 0
      %1916 = vmatpush1.bf16.msra.mxu0 %v1892
      %1917 = vmatprep.subr.bf16.mxu0 0
      %1918 = vmatpush1.bf16.msra.mxu0 0
      %1919 = vmatprep.subr.bf16.mxu0 0
      %1920 = vmatpush1.bf16.msra.mxu0 0
      %1921 = vmatprep.subr.bf16.mxu0 0
      %1922 = vmatpush1.bf16.msra.mxu0 0
      %1923 = vmatprep.subr.bf16.mxu0 0
      %1924 = vmatpush1.bf16.msra.mxu0 0
      %1925 = vmatprep.subr.bf16.mxu0 0
      %1926 = vmatpush1.bf16.msra.mxu0 0
      %1927 = vmatprep.subr.bf16.mxu0 0
      %1928 = vmatpush1.bf16.msra.mxu0 0
      %1929 = vmatprep.subr.bf16.mxu0 0
      %1930 = vmatpush1.bf16.msra.mxu0 0
      %1931 = vmatprep.subr.bf16.mxu0 0
      %1932 = vmatpush1.bf16.msra.mxu0 0
      %1933 = vmatprep.mubr.bf16.mxu0 0
      %1934 = vmatmul.mubr.bf16.gmra.mrb[0].mxu0 %v1832
      %v1935 = vpop.f32.mrb[0].mxu0
      %v1936 = vadd.f32 0.0, %v1935
      %v1937 = vpop.f32.mrb[0].mxu0
      %v1938 = vpop.f32.mrb[0].mxu0
      %v1939 = vadd.f32 0.0, %v1938
      %v1940 = vpop.f32.mrb[0].mxu0
      %1941 = vmatprep.mubr.bf16.mxu0 0
      %1942 = vmatmul.mubr.bf16.gmra.mrb[0].mxu0 %v1833
      %v1943 = vpop.f32.mrb[0].mxu0
      %v1944 = vadd.f32 0.0, %v1943
      %v1945 = vpop.f32.mrb[0].mxu0
      %v1946 = vpop.f32.mrb[0].mxu0
      %v1947 = vadd.f32 0.0, %v1946
      %v1948 = vpop.f32.mrb[0].mxu0
      %1949 = vmatprep.mubr.bf16.mxu0 0
      %1950 = vmatmul.mubr.bf16.gmra.mrb[0].mxu0 %v1834
      %v1951 = vpop.f32.mrb[0].mxu0
      %v1952 = vadd.f32 0.0, %v1951
      %v1953 = vpop.f32.mrb[0].mxu0
      %v1954 = vpop.f32.mrb[0].mxu0
      %v1955 = vadd.f32 0.0, %v1954
      %v1956 = vpop.f32.mrb[0].mxu0
      %1957 = vmatprep.mubr.bf16.mxu0 0
      %1958 = vmatmul.mubr.bf16.gmra.mrb[0].mxu0 %v1835
      %v1959 = vpop.f32.mrb[0].mxu0
      %v1960 = vadd.f32 0.0, %v1959
      %v1961 = vpop.f32.mrb[0].mxu0
      %v1962 = vpop.f32.mrb[0].mxu0
      %v1963 = vadd.f32 0.0, %v1962
      %v1964 = vpop.f32.mrb[0].mxu0
      %1965 = vdwg.mxu0
      %v1966 = vadd.f32 %v1815, %v1936
      %v1967 = vadd.f32 %v1816, %v1939
      %v1968 = vadd.f32 %v1817, %v1944
      %v1969 = vadd.f32 %v1818, %v1947
      %v1970 = vadd.f32 %v1819, %v1952
      %v1971 = vadd.f32 %v1820, %v1955
      %v1972 = vadd.f32 %v1821, %v1960
      %v1973 = vadd.f32 %v1822, %v1963
      %v1974 = vld [vmem:[%s1823 + $0x1] sm:$0xff]
      %v1975 = vld [vmem:[%s1823 + $0x11] sm:$0xff]
      %v1976 = vld [vmem:[%s1823 + $0x21] sm:$0xff]
      %v1977 = vld [vmem:[%s1823 + $0x31] sm:$0xff]
      %v1978 = vld [vmem:[%s1823 + $0x41] sm:$0xff]
      %v1979 = vld [vmem:[%s1823 + $0x51] sm:$0xff]
      %v1980 = vld [vmem:[%s1823 + $0x61] sm:$0xff]
      %v1981 = vld [vmem:[%s1823 + $0x71] sm:$0xff]
      %v1982 = vpack.c.bf16 %v1975, %v1974
      %v1983 = vpack.c.bf16 %v1977, %v1976
      %v1984 = vpack.c.bf16 %v1979, %v1978
      %v1985 = vpack.c.bf16 %v1981, %v1980
      %s1986 = scalar_lea.vmem %s2, 704
      %v1987 = vld [vmem:[%s1986] sm:$0xf]
      %v1988 = vld [vmem:[%s1986 + $0x4] sm:$0xf]
      %v1989 = vld [vmem:[%s1986 + $0x8] sm:$0xf]
      %v1990 = vld [vmem:[%s1986 + $0xc] sm:$0xf]
      %v1991 = vld [vmem:[%s1986 + $0x10] sm:$0xf]
      %v1992 = vld [vmem:[%s1986 + $0x14] sm:$0xf]
      %v1993 = vld [vmem:[%s1986 + $0x18] sm:$0xf]
      %v1994 = vld [vmem:[%s1986 + $0x1c] sm:$0xf]
      %v1995 = vld [vmem:[%s1986 + $0x20] sm:$0xf]
      %v1996 = vld [vmem:[%s1986 + $0x24] sm:$0xf]
      %v1997 = vld [vmem:[%s1986 + $0x28] sm:$0xf]
      %v1998 = vld [vmem:[%s1986 + $0x2c] sm:$0xf]
      %v1999 = vld [vmem:[%s1986 + $0x30] sm:$0xf]
      %v2000 = vld [vmem:[%s1986 + $0x34] sm:$0xf]
      %v2001 = vld [vmem:[%s1986 + $0x38] sm:$0xf]
      %v2002 = vld [vmem:[%s1986 + $0x3c] sm:$0xf]
      %v2019 = vunpack.c.l.b16 %v1987
      %v2020 = vunpack.c.l.b16 %v1988
      %v2021 = vunpack.c.l.b16 %v1989
      %v2022 = vunpack.c.l.b16 %v1990
      %v2023 = vunpack.c.l.b16 %v1991
      %v2024 = vunpack.c.l.b16 %v1992
      %v2025 = vunpack.c.l.b16 %v1993
      %v2026 = vunpack.c.l.b16 %v1994
      %v2027 = vunpack.c.l.b16 %v1995
      %v2028 = vunpack.c.l.b16 %v1996
      %v2029 = vunpack.c.l.b16 %v1997
      %v2030 = vunpack.c.l.b16 %v1998
      %v2031 = vunpack.c.l.b16 %v1999
      %v2032 = vunpack.c.l.b16 %v2000
      %v2033 = vunpack.c.l.b16 %v2001
      %v2034 = vunpack.c.l.b16 %v2002
      %v2035 = vpack.c.b16 %v2020, %v2019
      %v2036 = vpack.c.b16 %v2022, %v2021
      %v2037 = vpack.c.b16 %v2024, %v2023
      %v2038 = vpack.c.b16 %v2026, %v2025
      %v2039 = vpack.c.b16 %v2028, %v2027
      %v2040 = vpack.c.b16 %v2030, %v2029
      %v2041 = vpack.c.b16 %v2032, %v2031
      %v2042 = vpack.c.b16 %v2034, %v2033
      %2051 = vmatprep.subr.bf16.mxu0 0
      %2052 = vmatpush1.bf16.msra.mxu0 %v2035
      %2053 = vmatprep.subr.bf16.mxu0 0
      %2054 = vmatpush1.bf16.msra.mxu0 %v2036
      %2055 = vmatprep.subr.bf16.mxu0 0
      %2056 = vmatpush1.bf16.msra.mxu0 %v2037
      %2057 = vmatprep.subr.bf16.mxu0 0
      %2058 = vmatpush1.bf16.msra.mxu0 %v2038
      %2059 = vmatprep.subr.bf16.mxu0 0
      %2060 = vmatpush1.bf16.msra.mxu0 %v2039
      %2061 = vmatprep.subr.bf16.mxu0 0
      %2062 = vmatpush1.bf16.msra.mxu0 %v2040
      %2063 = vmatprep.subr.bf16.mxu0 0
      %2064 = vmatpush1.bf16.msra.mxu0 %v2041
      %2065 = vmatprep.subr.bf16.mxu0 0
      %2066 = vmatpush1.bf16.msra.mxu0 %v2042
      %2067 = vmatprep.subr.bf16.mxu0 0
      %2068 = vmatpush1.bf16.msra.mxu0 0
      %2069 = vmatprep.subr.bf16.mxu0 0
      %2070 = vmatpush1.bf16.msra.mxu0 0
      %2071 = vmatprep.subr.bf16.mxu0 0
      %2072 = vmatpush1.bf16.msra.mxu0 0
      %2073 = vmatprep.subr.bf16.mxu0 0
      %2074 = vmatpush1.bf16.msra.mxu0 0
      %2075 = vmatprep.subr.bf16.mxu0 0
      %2076 = vmatpush1.bf16.msra.mxu0 0
      %2077 = vmatprep.subr.bf16.mxu0 0
      %2078 = vmatpush1.bf16.msra.mxu0 0
      %2079 = vmatprep.subr.bf16.mxu0 0
      %2080 = vmatpush1.bf16.msra.mxu0 0
      %2081 = vmatprep.subr.bf16.mxu0 0
      %2082 = vmatpush1.bf16.msra.mxu0 0
      %2083 = vmatprep.mubr.bf16.mxu0 0
      %2084 = vmatmul.mubr.bf16.gmra.mrb[0].mxu0 %v1982
      %v2085 = vpop.f32.mrb[0].mxu0
      %v2086 = vadd.f32 0.0, %v2085
      %v2087 = vpop.f32.mrb[0].mxu0
      %v2088 = vpop.f32.mrb[0].mxu0
      %v2089 = vadd.f32 0.0, %v2088
      %v2090 = vpop.f32.mrb[0].mxu0
      %2091 = vmatprep.mubr.bf16.mxu0 0
      %2092 = vmatmul.mubr.bf16.gmra.mrb[0].mxu0 %v1983
      %v2093 = vpop.f32.mrb[0].mxu0
      %v2094 = vadd.f32 0.0, %v2093
      %v2095 = vpop.f32.mrb[0].mxu0
      %v2096 = vpop.f32.mrb[0].mxu0
      %v2097 = vadd.f32 0.0, %v2096
      %v2098 = vpop.f32.mrb[0].mxu0
      %2099 = vmatprep.mubr.bf16.mxu0 0
      %2100 = vmatmul.mubr.bf16.gmra.mrb[0].mxu0 %v1984
      %v2101 = vpop.f32.mrb[0].mxu0
      %v2102 = vadd.f32 0.0, %v2101
      %v2103 = vpop.f32.mrb[0].mxu0
      %v2104 = vpop.f32.mrb[0].mxu0
      %v2105 = vadd.f32 0.0, %v2104
      %v2106 = vpop.f32.mrb[0].mxu0
      %2107 = vmatprep.mubr.bf16.mxu0 0
      %2108 = vmatmul.mubr.bf16.gmra.mrb[0].mxu0 %v1985
      %v2109 = vpop.f32.mrb[0].mxu0
      %v2110 = vadd.f32 0.0, %v2109
      %v2111 = vpop.f32.mrb[0].mxu0
      %v2112 = vpop.f32.mrb[0].mxu0
      %v2113 = vadd.f32 0.0, %v2112
      %v2114 = vpop.f32.mrb[0].mxu0
      %2115 = vdwg.mxu0
      %v2116 = vadd.f32 %v1966, %v2086
      %v2117 = vadd.f32 %v1967, %v2089
      %v2118 = vadd.f32 %v1968, %v2094
      %v2119 = vadd.f32 %v1969, %v2097
      %v2120 = vadd.f32 %v1970, %v2102
      %v2121 = vadd.f32 %v1971, %v2105
      %v2122 = vadd.f32 %v1972, %v2110
      %v2123 = vadd.f32 %v1973, %v2113
      %v2124 = vld [vmem:[%s1823 + $0x2] sm:$0xff]
      %v2125 = vld [vmem:[%s1823 + $0x12] sm:$0xff]
      %v2126 = vld [vmem:[%s1823 + $0x22] sm:$0xff]
      %v2127 = vld [vmem:[%s1823 + $0x32] sm:$0xff]
      %v2128 = vld [vmem:[%s1823 + $0x42] sm:$0xff]
      %v2129 = vld [vmem:[%s1823 + $0x52] sm:$0xff]
      %v2130 = vld [vmem:[%s1823 + $0x62] sm:$0xff]
      %v2131 = vld [vmem:[%s1823 + $0x72] sm:$0xff]
      %v2132 = vpack.c.bf16 %v2125, %v2124
      %v2133 = vpack.c.bf16 %v2127, %v2126
      %v2134 = vpack.c.bf16 %v2129, %v2128
      %v2135 = vpack.c.bf16 %v2131, %v2130
      %s2136 = scalar_lea.vmem %s2, 768
      %v2137 = vld [vmem:[%s2136] sm:$0xf]
      %v2138 = vld [vmem:[%s2136 + $0x4] sm:$0xf]
      %v2139 = vld [vmem:[%s2136 + $0x8] sm:$0xf]
      %v2140 = vld [vmem:[%s2136 + $0xc] sm:$0xf]
      %v2141 = vld [vmem:[%s2136 + $0x10] sm:$0xf]
      %v2142 = vld [vmem:[%s2136 + $0x14] sm:$0xf]
      %v2143 = vld [vmem:[%s2136 + $0x18] sm:$0xf]
      %v2144 = vld [vmem:[%s2136 + $0x1c] sm:$0xf]
      %v2145 = vld [vmem:[%s2136 + $0x20] sm:$0xf]
      %v2146 = vld [vmem:[%s2136 + $0x24] sm:$0xf]
      %v2147 = vld [vmem:[%s2136 + $0x28] sm:$0xf]
      %v2148 = vld [vmem:[%s2136 + $0x2c] sm:$0xf]
      %v2149 = vld [vmem:[%s2136 + $0x30] sm:$0xf]
      %v2150 = vld [vmem:[%s2136 + $0x34] sm:$0xf]
      %v2151 = vld [vmem:[%s2136 + $0x38] sm:$0xf]
      %v2152 = vld [vmem:[%s2136 + $0x3c] sm:$0xf]
      %v2169 = vunpack.c.l.b16 %v2137
      %v2170 = vunpack.c.l.b16 %v2138
      %v2171 = vunpack.c.l.b16 %v2139
      %v2172 = vunpack.c.l.b16 %v2140
      %v2173 = vunpack.c.l.b16 %v2141
      %v2174 = vunpack.c.l.b16 %v2142
      %v2175 = vunpack.c.l.b16 %v2143
      %v2176 = vunpack.c.l.b16 %v2144
      %v2177 = vunpack.c.l.b16 %v2145
      %v2178 = vunpack.c.l.b16 %v2146
      %v2179 = vunpack.c.l.b16 %v2147
      %v2180 = vunpack.c.l.b16 %v2148
      %v2181 = vunpack.c.l.b16 %v2149
      %v2182 = vunpack.c.l.b16 %v2150
      %v2183 = vunpack.c.l.b16 %v2151
      %v2184 = vunpack.c.l.b16 %v2152
      %v2185 = vpack.c.b16 %v2170, %v2169
      %v2186 = vpack.c.b16 %v2172, %v2171
      %v2187 = vpack.c.b16 %v2174, %v2173
      %v2188 = vpack.c.b16 %v2176, %v2175
      %v2189 = vpack.c.b16 %v2178, %v2177
      %v2190 = vpack.c.b16 %v2180, %v2179
      %v2191 = vpack.c.b16 %v2182, %v2181
      %v2192 = vpack.c.b16 %v2184, %v2183
      %2201 = vmatprep.subr.bf16.mxu0 0
      %2202 = vmatpush1.bf16.msra.mxu0 %v2185
      %2203 = vmatprep.subr.bf16.mxu0 0
      %2204 = vmatpush1.bf16.msra.mxu0 %v2186
      %2205 = vmatprep.subr.bf16.mxu0 0
      %2206 = vmatpush1.bf16.msra.mxu0 %v2187
      %2207 = vmatprep.subr.bf16.mxu0 0
      %2208 = vmatpush1.bf16.msra.mxu0 %v2188
      %2209 = vmatprep.subr.bf16.mxu0 0
      %2210 = vmatpush1.bf16.msra.mxu0 %v2189
      %2211 = vmatprep.subr.bf16.mxu0 0
      %2212 = vmatpush1.bf16.msra.mxu0 %v2190
      %2213 = vmatprep.subr.bf16.mxu0 0
      %2214 = vmatpush1.bf16.msra.mxu0 %v2191
      %2215 = vmatprep.subr.bf16.mxu0 0
      %2216 = vmatpush1.bf16.msra.mxu0 %v2192
      %2217 = vmatprep.subr.bf16.mxu0 0
      %2218 = vmatpush1.bf16.msra.mxu0 0
      %2219 = vmatprep.subr.bf16.mxu0 0
      %2220 = vmatpush1.bf16.msra.mxu0 0
      %2221 = vmatprep.subr.bf16.mxu0 0
      %2222 = vmatpush1.bf16.msra.mxu0 0
      %2223 = vmatprep.subr.bf16.mxu0 0
      %2224 = vmatpush1.bf16.msra.mxu0 0
      %2225 = vmatprep.subr.bf16.mxu0 0
      %2226 = vmatpush1.bf16.msra.mxu0 0
      %2227 = vmatprep.subr.bf16.mxu0 0
      %2228 = vmatpush1.bf16.msra.mxu0 0
      %2229 = vmatprep.subr.bf16.mxu0 0
      %2230 = vmatpush1.bf16.msra.mxu0 0
      %2231 = vmatprep.subr.bf16.mxu0 0
      %2232 = vmatpush1.bf16.msra.mxu0 0
      %2233 = vmatprep.mubr.bf16.mxu0 0
      %2234 = vmatmul.mubr.bf16.gmra.mrb[0].mxu0 %v2132
      %v2235 = vpop.f32.mrb[0].mxu0
      %v2236 = vadd.f32 0.0, %v2235
      %v2237 = vpop.f32.mrb[0].mxu0
      %v2238 = vpop.f32.mrb[0].mxu0
      %v2239 = vadd.f32 0.0, %v2238
      %v2240 = vpop.f32.mrb[0].mxu0
      %2241 = vmatprep.mubr.bf16.mxu0 0
      %2242 = vmatmul.mubr.bf16.gmra.mrb[0].mxu0 %v2133
      %v2243 = vpop.f32.mrb[0].mxu0
      %v2244 = vadd.f32 0.0, %v2243
      %v2245 = vpop.f32.mrb[0].mxu0
      %v2246 = vpop.f32.mrb[0].mxu0
      %v2247 = vadd.f32 0.0, %v2246
      %v2248 = vpop.f32.mrb[0].mxu0
      %2249 = vmatprep.mubr.bf16.mxu0 0
      %2250 = vmatmul.mubr.bf16.gmra.mrb[0].mxu0 %v2134
      %v2251 = vpop.f32.mrb[0].mxu0
      %v2252 = vadd.f32 0.0, %v2251
      %v2253 = vpop.f32.mrb[0].mxu0
      %v2254 = vpop.f32.mrb[0].mxu0
      %v2255 = vadd.f32 0.0, %v2254
      %v2256 = vpop.f32.mrb[0].mxu0
      %2257 = vmatprep.mubr.bf16.mxu0 0
      %2258 = vmatmul.mubr.bf16.gmra.mrb[0].mxu0 %v2135
      %v2259 = vpop.f32.mrb[0].mxu0
      %v2260 = vadd.f32 0.0, %v2259
      %v2261 = vpop.f32.mrb[0].mxu0
      %v2262 = vpop.f32.mrb[0].mxu0
      %v2263 = vadd.f32 0.0, %v2262
      %v2264 = vpop.f32.mrb[0].mxu0
      %2265 = vdwg.mxu0
      %v2266 = vadd.f32 %v2116, %v2236
      %v2267 = vadd.f32 %v2117, %v2239
      %v2268 = vadd.f32 %v2118, %v2244
      %v2269 = vadd.f32 %v2119, %v2247
      %v2270 = vadd.f32 %v2120, %v2252
      %v2271 = vadd.f32 %v2121, %v2255
      %v2272 = vadd.f32 %v2122, %v2260
      %v2273 = vadd.f32 %v2123, %v2263
      %v2274 = vld [vmem:[%s1823 + $0x3] sm:$0xff]
      %v2275 = vld [vmem:[%s1823 + $0x13] sm:$0xff]
      %v2276 = vld [vmem:[%s1823 + $0x23] sm:$0xff]
      %v2277 = vld [vmem:[%s1823 + $0x33] sm:$0xff]
      %v2278 = vld [vmem:[%s1823 + $0x43] sm:$0xff]
      %v2279 = vld [vmem:[%s1823 + $0x53] sm:$0xff]
      %v2280 = vld [vmem:[%s1823 + $0x63] sm:$0xff]
      %v2281 = vld [vmem:[%s1823 + $0x73] sm:$0xff]
      %v2282 = vpack.c.bf16 %v2275, %v2274
      %v2283 = vpack.c.bf16 %v2277, %v2276
      %v2284 = vpack.c.bf16 %v2279, %v2278
      %v2285 = vpack.c.bf16 %v2281, %v2280
      %s2286 = scalar_lea.vmem %s2, 832
      %v2287 = vld [vmem:[%s2286] sm:$0xf]
      %v2288 = vld [vmem:[%s2286 + $0x4] sm:$0xf]
      %v2289 = vld [vmem:[%s2286 + $0x8] sm:$0xf]
      %v2290 = vld [vmem:[%s2286 + $0xc] sm:$0xf]
      %v2291 = vld [vmem:[%s2286 + $0x10] sm:$0xf]
      %v2292 = vld [vmem:[%s2286 + $0x14] sm:$0xf]
      %v2293 = vld [vmem:[%s2286 + $0x18] sm:$0xf]
      %v2294 = vld [vmem:[%s2286 + $0x1c] sm:$0xf]
      %v2295 = vld [vmem:[%s2286 + $0x20] sm:$0xf]
      %v2296 = vld [vmem:[%s2286 + $0x24] sm:$0xf]
      %v2297 = vld [vmem:[%s2286 + $0x28] sm:$0xf]
      %v2298 = vld [vmem:[%s2286 + $0x2c] sm:$0xf]
      %v2299 = vld [vmem:[%s2286 + $0x30] sm:$0xf]
      %v2300 = vld [vmem:[%s2286 + $0x34] sm:$0xf]
      %v2301 = vld [vmem:[%s2286 + $0x38] sm:$0xf]
      %v2302 = vld [vmem:[%s2286 + $0x3c] sm:$0xf]
      %v2319 = vunpack.c.l.b16 %v2287
      %v2320 = vunpack.c.l.b16 %v2288
      %v2321 = vunpack.c.l.b16 %v2289
      %v2322 = vunpack.c.l.b16 %v2290
      %v2323 = vunpack.c.l.b16 %v2291
      %v2324 = vunpack.c.l.b16 %v2292
      %v2325 = vunpack.c.l.b16 %v2293
      %v2326 = vunpack.c.l.b16 %v2294
      %v2327 = vunpack.c.l.b16 %v2295
      %v2328 = vunpack.c.l.b16 %v2296
      %v2329 = vunpack.c.l.b16 %v2297
      %v2330 = vunpack.c.l.b16 %v2298
      %v2331 = vunpack.c.l.b16 %v2299
      %v2332 = vunpack.c.l.b16 %v2300
      %v2333 = vunpack.c.l.b16 %v2301
      %v2334 = vunpack.c.l.b16 %v2302
      %v2335 = vpack.c.b16 %v2320, %v2319
      %v2336 = vpack.c.b16 %v2322, %v2321
      %v2337 = vpack.c.b16 %v2324, %v2323
      %v2338 = vpack.c.b16 %v2326, %v2325
      %v2339 = vpack.c.b16 %v2328, %v2327
      %v2340 = vpack.c.b16 %v2330, %v2329
      %v2341 = vpack.c.b16 %v2332, %v2331
      %v2342 = vpack.c.b16 %v2334, %v2333
      %2351 = vmatprep.subr.bf16.mxu0 0
      %2352 = vmatpush1.bf16.msra.mxu0 %v2335
      %2353 = vmatprep.subr.bf16.mxu0 0
      %2354 = vmatpush1.bf16.msra.mxu0 %v2336
      %2355 = vmatprep.subr.bf16.mxu0 0
      %2356 = vmatpush1.bf16.msra.mxu0 %v2337
      %2357 = vmatprep.subr.bf16.mxu0 0
      %2358 = vmatpush1.bf16.msra.mxu0 %v2338
      %2359 = vmatprep.subr.bf16.mxu0 0
      %2360 = vmatpush1.bf16.msra.mxu0 %v2339
      %2361 = vmatprep.subr.bf16.mxu0 0
      %2362 = vmatpush1.bf16.msra.mxu0 %v2340
      %2363 = vmatprep.subr.bf16.mxu0 0
      %2364 = vmatpush1.bf16.msra.mxu0 %v2341
      %2365 = vmatprep.subr.bf16.mxu0 0
      %2366 = vmatpush1.bf16.msra.mxu0 %v2342
      %2367 = vmatprep.subr.bf16.mxu0 0
      %2368 = vmatpush1.bf16.msra.mxu0 0
      %2369 = vmatprep.subr.bf16.mxu0 0
      %2370 = vmatpush1.bf16.msra.mxu0 0
      %2371 = vmatprep.subr.bf16.mxu0 0
      %2372 = vmatpush1.bf16.msra.mxu0 0
      %2373 = vmatprep.subr.bf16.mxu0 0
      %2374 = vmatpush1.bf16.msra.mxu0 0
      %2375 = vmatprep.subr.bf16.mxu0 0
      %2376 = vmatpush1.bf16.msra.mxu0 0
      %2377 = vmatprep.subr.bf16.mxu0 0
      %2378 = vmatpush1.bf16.msra.mxu0 0
      %2379 = vmatprep.subr.bf16.mxu0 0
      %2380 = vmatpush1.bf16.msra.mxu0 0
      %2381 = vmatprep.subr.bf16.mxu0 0
      %2382 = vmatpush1.bf16.msra.mxu0 0
      %2383 = vmatprep.mubr.bf16.mxu0 0
      %2384 = vmatmul.mubr.bf16.gmra.mrb[0].mxu0 %v2282
      %v2385 = vpop.f32.mrb[0].mxu0
      %v2386 = vadd.f32 0.0, %v2385
      %v2387 = vpop.f32.mrb[0].mxu0
      %v2388 = vpop.f32.mrb[0].mxu0
      %v2389 = vadd.f32 0.0, %v2388
      %v2390 = vpop.f32.mrb[0].mxu0
      %2391 = vmatprep.mubr.bf16.mxu0 0
      %2392 = vmatmul.mubr.bf16.gmra.mrb[0].mxu0 %v2283
      %v2393 = vpop.f32.mrb[0].mxu0
      %v2394 = vadd.f32 0.0, %v2393
      %v2395 = vpop.f32.mrb[0].mxu0
      %v2396 = vpop.f32.mrb[0].mxu0
      %v2397 = vadd.f32 0.0, %v2396
      %v2398 = vpop.f32.mrb[0].mxu0
      %2399 = vmatprep.mubr.bf16.mxu0 0
      %2400 = vmatmul.mubr.bf16.gmra.mrb[0].mxu0 %v2284
      %v2401 = vpop.f32.mrb[0].mxu0
      %v2402 = vadd.f32 0.0, %v2401
      %v2403 = vpop.f32.mrb[0].mxu0
      %v2404 = vpop.f32.mrb[0].mxu0
      %v2405 = vadd.f32 0.0, %v2404
      %v2406 = vpop.f32.mrb[0].mxu0
      %2407 = vmatprep.mubr.bf16.mxu0 0
      %2408 = vmatmul.mubr.bf16.gmra.mrb[0].mxu0 %v2285
      %v2409 = vpop.f32.mrb[0].mxu0
      %v2410 = vadd.f32 0.0, %v2409
      %v2411 = vpop.f32.mrb[0].mxu0
      %v2412 = vpop.f32.mrb[0].mxu0
      %v2413 = vadd.f32 0.0, %v2412
      %v2414 = vpop.f32.mrb[0].mxu0
      %2415 = vdwg.mxu0
      %v2416 = vadd.f32 %v2266, %v2386
      %v2417 = vadd.f32 %v2267, %v2389
      %v2418 = vadd.f32 %v2268, %v2394
      %v2419 = vadd.f32 %v2269, %v2397
      %v2420 = vadd.f32 %v2270, %v2402
      %v2421 = vadd.f32 %v2271, %v2405
      %v2422 = vadd.f32 %v2272, %v2410
      %v2423 = vadd.f32 %v2273, %v2413
      %v2424 = vld [vmem:[%s1823 + $0x4] sm:$0xff]
      %v2425 = vld [vmem:[%s1823 + $0x14] sm:$0xff]
      %v2426 = vld [vmem:[%s1823 + $0x24] sm:$0xff]
      %v2427 = vld [vmem:[%s1823 + $0x34] sm:$0xff]
      %v2428 = vld [vmem:[%s1823 + $0x44] sm:$0xff]
      %v2429 = vld [vmem:[%s1823 + $0x54] sm:$0xff]
      %v2430 = vld [vmem:[%s1823 + $0x64] sm:$0xff]
      %v2431 = vld [vmem:[%s1823 + $0x74] sm:$0xff]
      %v2432 = vpack.c.bf16 %v2425, %v2424
      %v2433 = vpack.c.bf16 %v2427, %v2426
      %v2434 = vpack.c.bf16 %v2429, %v2428
      %v2435 = vpack.c.bf16 %v2431, %v2430
      %s2436 = scalar_lea.vmem %s2, 896
      %v2437 = vld [vmem:[%s2436] sm:$0xf]
      %v2438 = vld [vmem:[%s2436 + $0x4] sm:$0xf]
      %v2439 = vld [vmem:[%s2436 + $0x8] sm:$0xf]
      %v2440 = vld [vmem:[%s2436 + $0xc] sm:$0xf]
      %v2441 = vld [vmem:[%s2436 + $0x10] sm:$0xf]
      %v2442 = vld [vmem:[%s2436 + $0x14] sm:$0xf]
      %v2443 = vld [vmem:[%s2436 + $0x18] sm:$0xf]
      %v2444 = vld [vmem:[%s2436 + $0x1c] sm:$0xf]
      %v2445 = vld [vmem:[%s2436 + $0x20] sm:$0xf]
      %v2446 = vld [vmem:[%s2436 + $0x24] sm:$0xf]
      %v2447 = vld [vmem:[%s2436 + $0x28] sm:$0xf]
      %v2448 = vld [vmem:[%s2436 + $0x2c] sm:$0xf]
      %v2449 = vld [vmem:[%s2436 + $0x30] sm:$0xf]
      %v2450 = vld [vmem:[%s2436 + $0x34] sm:$0xf]
      %v2451 = vld [vmem:[%s2436 + $0x38] sm:$0xf]
      %v2452 = vld [vmem:[%s2436 + $0x3c] sm:$0xf]
      %v2469 = vunpack.c.l.b16 %v2437
      %v2470 = vunpack.c.l.b16 %v2438
      %v2471 = vunpack.c.l.b16 %v2439
      %v2472 = vunpack.c.l.b16 %v2440
      %v2473 = vunpack.c.l.b16 %v2441
      %v2474 = vunpack.c.l.b16 %v2442
      %v2475 = vunpack.c.l.b16 %v2443
      %v2476 = vunpack.c.l.b16 %v2444
      %v2477 = vunpack.c.l.b16 %v2445
      %v2478 = vunpack.c.l.b16 %v2446
      %v2479 = vunpack.c.l.b16 %v2447
      %v2480 = vunpack.c.l.b16 %v2448
      %v2481 = vunpack.c.l.b16 %v2449
      %v2482 = vunpack.c.l.b16 %v2450
      %v2483 = vunpack.c.l.b16 %v2451
      %v2484 = vunpack.c.l.b16 %v2452
      %v2485 = vpack.c.b16 %v2470, %v2469
      %v2486 = vpack.c.b16 %v2472, %v2471
      %v2487 = vpack.c.b16 %v2474, %v2473
      %v2488 = vpack.c.b16 %v2476, %v2475
      %v2489 = vpack.c.b16 %v2478, %v2477
      %v2490 = vpack.c.b16 %v2480, %v2479
      %v2491 = vpack.c.b16 %v2482, %v2481
      %v2492 = vpack.c.b16 %v2484, %v2483
      %2501 = vmatprep.subr.bf16.mxu0 0
      %2502 = vmatpush1.bf16.msra.mxu0 %v2485
      %2503 = vmatprep.subr.bf16.mxu0 0
      %2504 = vmatpush1.bf16.msra.mxu0 %v2486
      %2505 = vmatprep.subr.bf16.mxu0 0
      %2506 = vmatpush1.bf16.msra.mxu0 %v2487
      %2507 = vmatprep.subr.bf16.mxu0 0
      %2508 = vmatpush1.bf16.msra.mxu0 %v2488
      %2509 = vmatprep.subr.bf16.mxu0 0
      %2510 = vmatpush1.bf16.msra.mxu0 %v2489
      %2511 = vmatprep.subr.bf16.mxu0 0
      %2512 = vmatpush1.bf16.msra.mxu0 %v2490
      %2513 = vmatprep.subr.bf16.mxu0 0
      %2514 = vmatpush1.bf16.msra.mxu0 %v2491
      %2515 = vmatprep.subr.bf16.mxu0 0
      %2516 = vmatpush1.bf16.msra.mxu0 %v2492
      %2517 = vmatprep.subr.bf16.mxu0 0
      %2518 = vmatpush1.bf16.msra.mxu0 0
      %2519 = vmatprep.subr.bf16.mxu0 0
      %2520 = vmatpush1.bf16.msra.mxu0 0
      %2521 = vmatprep.subr.bf16.mxu0 0
      %2522 = vmatpush1.bf16.msra.mxu0 0
      %2523 = vmatprep.subr.bf16.mxu0 0
      %2524 = vmatpush1.bf16.msra.mxu0 0
      %2525 = vmatprep.subr.bf16.mxu0 0
      %2526 = vmatpush1.bf16.msra.mxu0 0
      %2527 = vmatprep.subr.bf16.mxu0 0
      %2528 = vmatpush1.bf16.msra.mxu0 0
      %2529 = vmatprep.subr.bf16.mxu0 0
      %2530 = vmatpush1.bf16.msra.mxu0 0
      %2531 = vmatprep.subr.bf16.mxu0 0
      %2532 = vmatpush1.bf16.msra.mxu0 0
      %2533 = vmatprep.mubr.bf16.mxu0 0
      %2534 = vmatmul.mubr.bf16.gmra.mrb[0].mxu0 %v2432
      %v2535 = vpop.f32.mrb[0].mxu0
      %v2536 = vadd.f32 0.0, %v2535
      %v2537 = vpop.f32.mrb[0].mxu0
      %v2538 = vpop.f32.mrb[0].mxu0
      %v2539 = vadd.f32 0.0, %v2538
      %v2540 = vpop.f32.mrb[0].mxu0
      %2541 = vmatprep.mubr.bf16.mxu0 0
      %2542 = vmatmul.mubr.bf16.gmra.mrb[0].mxu0 %v2433
      %v2543 = vpop.f32.mrb[0].mxu0
      %v2544 = vadd.f32 0.0, %v2543
      %v2545 = vpop.f32.mrb[0].mxu0
      %v2546 = vpop.f32.mrb[0].mxu0
      %v2547 = vadd.f32 0.0, %v2546
      %v2548 = vpop.f32.mrb[0].mxu0
      %2549 = vmatprep.mubr.bf16.mxu0 0
      %2550 = vmatmul.mubr.bf16.gmra.mrb[0].mxu0 %v2434
      %v2551 = vpop.f32.mrb[0].mxu0
      %v2552 = vadd.f32 0.0, %v2551
      %v2553 = vpop.f32.mrb[0].mxu0
      %v2554 = vpop.f32.mrb[0].mxu0
      %v2555 = vadd.f32 0.0, %v2554
      %v2556 = vpop.f32.mrb[0].mxu0
      %2557 = vmatprep.mubr.bf16.mxu0 0
      %2558 = vmatmul.mubr.bf16.gmra.mrb[0].mxu0 %v2435
      %v2559 = vpop.f32.mrb[0].mxu0
      %v2560 = vadd.f32 0.0, %v2559
      %v2561 = vpop.f32.mrb[0].mxu0
      %v2562 = vpop.f32.mrb[0].mxu0
      %v2563 = vadd.f32 0.0, %v2562
      %v2564 = vpop.f32.mrb[0].mxu0
      %2565 = vdwg.mxu0
      %v2566 = vadd.f32 %v2416, %v2536
      %v2567 = vadd.f32 %v2417, %v2539
      %v2568 = vadd.f32 %v2418, %v2544
      %v2569 = vadd.f32 %v2419, %v2547
      %v2570 = vadd.f32 %v2420, %v2552
      %v2571 = vadd.f32 %v2421, %v2555
      %v2572 = vadd.f32 %v2422, %v2560
      %v2573 = vadd.f32 %v2423, %v2563
      %s2574 = scalar_lea.vmem [#allocation2], 48
      %v2575 = vld [vmem:[%s2574] sm:$0xff]
      %v2576 = vld [vmem:[%s2574 + $0x10] sm:$0xff]
      %v2577 = vld [vmem:[%s2574 + $0x20] sm:$0xff]
      %v2578 = vld [vmem:[%s2574 + $0x30] sm:$0xff]
      %v2579 = vld [vmem:[%s2574 + $0x40] sm:$0xff]
      %v2580 = vld [vmem:[%s2574 + $0x50] sm:$0xff]
      %v2581 = vld [vmem:[%s2574 + $0x60] sm:$0xff]
      %v2582 = vld [vmem:[%s2574 + $0x70] sm:$0xff]
      %v2583 = vpack.c.bf16 %v2576, %v2575
      %v2584 = vpack.c.bf16 %v2578, %v2577
      %v2585 = vpack.c.bf16 %v2580, %v2579
      %v2586 = vpack.c.bf16 %v2582, %v2581
      %s2587 = scalar_lea.vmem %s2, 960
      %v2588 = vld [vmem:[%s2587] sm:$0xf]
      %v2589 = vld [vmem:[%s2587 + $0x4] sm:$0xf]
      %v2590 = vld [vmem:[%s2587 + $0x8] sm:$0xf]
      %v2591 = vld [vmem:[%s2587 + $0xc] sm:$0xf]
      %v2592 = vld [vmem:[%s2587 + $0x10] sm:$0xf]
      %v2593 = vld [vmem:[%s2587 + $0x14] sm:$0xf]
      %v2594 = vld [vmem:[%s2587 + $0x18] sm:$0xf]
      %v2595 = vld [vmem:[%s2587 + $0x1c] sm:$0xf]
      %v2596 = vld [vmem:[%s2587 + $0x20] sm:$0xf]
      %v2597 = vld [vmem:[%s2587 + $0x24] sm:$0xf]
      %v2598 = vld [vmem:[%s2587 + $0x28] sm:$0xf]
      %v2599 = vld [vmem:[%s2587 + $0x2c] sm:$0xf]
      %v2600 = vld [vmem:[%s2587 + $0x30] sm:$0xf]
      %v2601 = vld [vmem:[%s2587 + $0x34] sm:$0xf]
      %v2602 = vld [vmem:[%s2587 + $0x38] sm:$0xf]
      %v2603 = vld [vmem:[%s2587 + $0x3c] sm:$0xf]
      %v2620 = vunpack.c.l.b16 %v2588
      %v2621 = vunpack.c.l.b16 %v2589
      %v2622 = vunpack.c.l.b16 %v2590
      %v2623 = vunpack.c.l.b16 %v2591
      %v2624 = vunpack.c.l.b16 %v2592
      %v2625 = vunpack.c.l.b16 %v2593
      %v2626 = vunpack.c.l.b16 %v2594
      %v2627 = vunpack.c.l.b16 %v2595
      %v2628 = vunpack.c.l.b16 %v2596
      %v2629 = vunpack.c.l.b16 %v2597
      %v2630 = vunpack.c.l.b16 %v2598
      %v2631 = vunpack.c.l.b16 %v2599
      %v2632 = vunpack.c.l.b16 %v2600
      %v2633 = vunpack.c.l.b16 %v2601
      %v2634 = vunpack.c.l.b16 %v2602
      %v2635 = vunpack.c.l.b16 %v2603
      %v2636 = vpack.c.b16 %v2621, %v2620
      %v2637 = vpack.c.b16 %v2623, %v2622
      %v2638 = vpack.c.b16 %v2625, %v2624
      %v2639 = vpack.c.b16 %v2627, %v2626
      %v2640 = vpack.c.b16 %v2629, %v2628
      %v2641 = vpack.c.b16 %v2631, %v2630
      %v2642 = vpack.c.b16 %v2633, %v2632
      %v2643 = vpack.c.b16 %v2635, %v2634
      %2652 = vmatprep.subr.bf16.mxu0 0
      %2653 = vmatpush1.bf16.msra.mxu0 %v2636
      %2654 = vmatprep.subr.bf16.mxu0 0
      %2655 = vmatpush1.bf16.msra.mxu0 %v2637
      %2656 = vmatprep.subr.bf16.mxu0 0
      %2657 = vmatpush1.bf16.msra.mxu0 %v2638
      %2658 = vmatprep.subr.bf16.mxu0 0
      %2659 = vmatpush1.bf16.msra.mxu0 %v2639
      %2660 = vmatprep.subr.bf16.mxu0 0
      %2661 = vmatpush1.bf16.msra.mxu0 %v2640
      %2662 = vmatprep.subr.bf16.mxu0 0
      %2663 = vmatpush1.bf16.msra.mxu0 %v2641
      %2664 = vmatprep.subr.bf16.mxu0 0
      %2665 = vmatpush1.bf16.msra.mxu0 %v2642
      %2666 = vmatprep.subr.bf16.mxu0 0
      %2667 = vmatpush1.bf16.msra.mxu0 %v2643
      %2668 = vmatprep.subr.bf16.mxu0 0
      %2669 = vmatpush1.bf16.msra.mxu0 0
      %2670 = vmatprep.subr.bf16.mxu0 0
      %2671 = vmatpush1.bf16.msra.mxu0 0
      %2672 = vmatprep.subr.bf16.mxu0 0
      %2673 = vmatpush1.bf16.msra.mxu0 0
      %2674 = vmatprep.subr.bf16.mxu0 0
      %2675 = vmatpush1.bf16.msra.mxu0 0
      %2676 = vmatprep.subr.bf16.mxu0 0
      %2677 = vmatpush1.bf16.msra.mxu0 0
      %2678 = vmatprep.subr.bf16.mxu0 0
      %2679 = vmatpush1.bf16.msra.mxu0 0
      %2680 = vmatprep.subr.bf16.mxu0 0
      %2681 = vmatpush1.bf16.msra.mxu0 0
      %2682 = vmatprep.subr.bf16.mxu0 0
      %2683 = vmatpush1.bf16.msra.mxu0 0
      %2684 = vmatprep.mubr.bf16.mxu0 0
      %2685 = vmatmul.mubr.bf16.gmra.mrb[0].mxu0 %v2583
      %v2686 = vpop.f32.mrb[0].mxu0
      %v2687 = vadd.f32 0.0, %v2686
      %v2688 = vpop.f32.mrb[0].mxu0
      %v2689 = vpop.f32.mrb[0].mxu0
      %v2690 = vadd.f32 0.0, %v2689
      %v2691 = vpop.f32.mrb[0].mxu0
      %2692 = vmatprep.mubr.bf16.mxu0 0
      %2693 = vmatmul.mubr.bf16.gmra.mrb[0].mxu0 %v2584
      %v2694 = vpop.f32.mrb[0].mxu0
      %v2695 = vadd.f32 0.0, %v2694
      %v2696 = vpop.f32.mrb[0].mxu0
      %v2697 = vpop.f32.mrb[0].mxu0
      %v2698 = vadd.f32 0.0, %v2697
      %v2699 = vpop.f32.mrb[0].mxu0
      %2700 = vmatprep.mubr.bf16.mxu0 0
      %2701 = vmatmul.mubr.bf16.gmra.mrb[0].mxu0 %v2585
      %v2702 = vpop.f32.mrb[0].mxu0
      %v2703 = vadd.f32 0.0, %v2702
      %v2704 = vpop.f32.mrb[0].mxu0
      %v2705 = vpop.f32.mrb[0].mxu0
      %v2706 = vadd.f32 0.0, %v2705
      %v2707 = vpop.f32.mrb[0].mxu0
      %2708 = vmatprep.mubr.bf16.mxu0 0
      %2709 = vmatmul.mubr.bf16.gmra.mrb[0].mxu0 %v2586
      %v2710 = vpop.f32.mrb[0].mxu0
      %v2711 = vadd.f32 0.0, %v2710
      %v2712 = vpop.f32.mrb[0].mxu0
      %v2713 = vpop.f32.mrb[0].mxu0
      %v2714 = vadd.f32 0.0, %v2713
      %v2715 = vpop.f32.mrb[0].mxu0
      %2716 = vdwg.mxu0
      %v2717 = vadd.f32 %v2566, %v2687
      %v2718 = vadd.f32 %v2567, %v2690
      %v2719 = vadd.f32 %v2568, %v2695
      %v2720 = vadd.f32 %v2569, %v2698
      %v2721 = vadd.f32 %v2570, %v2703
      %v2722 = vadd.f32 %v2571, %v2706
      %v2723 = vadd.f32 %v2572, %v2711
      %v2724 = vadd.f32 %v2573, %v2714
      %v2725 = vld [vmem:[%s2574 + $0x1] sm:$0xff]
      %v2726 = vld [vmem:[%s2574 + $0x11] sm:$0xff]
      %v2727 = vld [vmem:[%s2574 + $0x21] sm:$0xff]
      %v2728 = vld [vmem:[%s2574 + $0x31] sm:$0xff]
      %v2729 = vld [vmem:[%s2574 + $0x41] sm:$0xff]
      %v2730 = vld [vmem:[%s2574 + $0x51] sm:$0xff]
      %v2731 = vld [vmem:[%s2574 + $0x61] sm:$0xff]
      %v2732 = vld [vmem:[%s2574 + $0x71] sm:$0xff]
      %v2733 = vpack.c.bf16 %v2726, %v2725
      %v2734 = vpack.c.bf16 %v2728, %v2727
      %v2735 = vpack.c.bf16 %v2730, %v2729
      %v2736 = vpack.c.bf16 %v2732, %v2731
      %s2737 = scalar_lea.vmem %s2, 1024
      %v2738 = vld [vmem:[%s2737] sm:$0xf]
      %v2739 = vld [vmem:[%s2737 + $0x4] sm:$0xf]
      %v2740 = vld [vmem:[%s2737 + $0x8] sm:$0xf]
      %v2741 = vld [vmem:[%s2737 + $0xc] sm:$0xf]
      %v2742 = vld [vmem:[%s2737 + $0x10] sm:$0xf]
      %v2743 = vld [vmem:[%s2737 + $0x14] sm:$0xf]
      %v2744 = vld [vmem:[%s2737 + $0x18] sm:$0xf]
      %v2745 = vld [vmem:[%s2737 + $0x1c] sm:$0xf]
      %v2746 = vld [vmem:[%s2737 + $0x20] sm:$0xf]
      %v2747 = vld [vmem:[%s2737 + $0x24] sm:$0xf]
      %v2748 = vld [vmem:[%s2737 + $0x28] sm:$0xf]
      %v2749 = vld [vmem:[%s2737 + $0x2c] sm:$0xf]
      %v2750 = vld [vmem:[%s2737 + $0x30] sm:$0xf]
      %v2751 = vld [vmem:[%s2737 + $0x34] sm:$0xf]
      %v2752 = vld [vmem:[%s2737 + $0x38] sm:$0xf]
      %v2753 = vld [vmem:[%s2737 + $0x3c] sm:$0xf]
      %v2770 = vunpack.c.l.b16 %v2738
      %v2771 = vunpack.c.l.b16 %v2739
      %v2772 = vunpack.c.l.b16 %v2740
      %v2773 = vunpack.c.l.b16 %v2741
      %v2774 = vunpack.c.l.b16 %v2742
      %v2775 = vunpack.c.l.b16 %v2743
      %v2776 = vunpack.c.l.b16 %v2744
      %v2777 = vunpack.c.l.b16 %v2745
      %v2778 = vunpack.c.l.b16 %v2746
      %v2779 = vunpack.c.l.b16 %v2747
      %v2780 = vunpack.c.l.b16 %v2748
      %v2781 = vunpack.c.l.b16 %v2749
      %v2782 = vunpack.c.l.b16 %v2750
      %v2783 = vunpack.c.l.b16 %v2751
      %v2784 = vunpack.c.l.b16 %v2752
      %v2785 = vunpack.c.l.b16 %v2753
      %v2786 = vpack.c.b16 %v2771, %v2770
      %v2787 = vpack.c.b16 %v2773, %v2772
      %v2788 = vpack.c.b16 %v2775, %v2774
      %v2789 = vpack.c.b16 %v2777, %v2776
      %v2790 = vpack.c.b16 %v2779, %v2778
      %v2791 = vpack.c.b16 %v2781, %v2780
      %v2792 = vpack.c.b16 %v2783, %v2782
      %v2793 = vpack.c.b16 %v2785, %v2784
      %2802 = vmatprep.subr.bf16.mxu0 0
      %2803 = vmatpush1.bf16.msra.mxu0 %v2786
      %2804 = vmatprep.subr.bf16.mxu0 0
      %2805 = vmatpush1.bf16.msra.mxu0 %v2787
      %2806 = vmatprep.subr.bf16.mxu0 0
      %2807 = vmatpush1.bf16.msra.mxu0 %v2788
      %2808 = vmatprep.subr.bf16.mxu0 0
      %2809 = vmatpush1.bf16.msra.mxu0 %v2789
      %2810 = vmatprep.subr.bf16.mxu0 0
      %2811 = vmatpush1.bf16.msra.mxu0 %v2790
      %2812 = vmatprep.subr.bf16.mxu0 0
      %2813 = vmatpush1.bf16.msra.mxu0 %v2791
      %2814 = vmatprep.subr.bf16.mxu0 0
      %2815 = vmatpush1.bf16.msra.mxu0 %v2792
      %2816 = vmatprep.subr.bf16.mxu0 0
      %2817 = vmatpush1.bf16.msra.mxu0 %v2793
      %2818 = vmatprep.subr.bf16.mxu0 0
      %2819 = vmatpush1.bf16.msra.mxu0 0
      %2820 = vmatprep.subr.bf16.mxu0 0
      %2821 = vmatpush1.bf16.msra.mxu0 0
      %2822 = vmatprep.subr.bf16.mxu0 0
      %2823 = vmatpush1.bf16.msra.mxu0 0
      %2824 = vmatprep.subr.bf16.mxu0 0
      %2825 = vmatpush1.bf16.msra.mxu0 0
      %2826 = vmatprep.subr.bf16.mxu0 0
      %2827 = vmatpush1.bf16.msra.mxu0 0
      %2828 = vmatprep.subr.bf16.mxu0 0
      %2829 = vmatpush1.bf16.msra.mxu0 0
      %2830 = vmatprep.subr.bf16.mxu0 0
      %2831 = vmatpush1.bf16.msra.mxu0 0
      %2832 = vmatprep.subr.bf16.mxu0 0
      %2833 = vmatpush1.bf16.msra.mxu0 0
      %2834 = vmatprep.mubr.bf16.mxu0 0
      %2835 = vmatmul.mubr.bf16.gmra.mrb[0].mxu0 %v2733
      %v2836 = vpop.f32.mrb[0].mxu0
      %v2837 = vadd.f32 0.0, %v2836
      %v2838 = vpop.f32.mrb[0].mxu0
      %v2839 = vpop.f32.mrb[0].mxu0
      %v2840 = vadd.f32 0.0, %v2839
      %v2841 = vpop.f32.mrb[0].mxu0
      %2842 = vmatprep.mubr.bf16.mxu0 0
      %2843 = vmatmul.mubr.bf16.gmra.mrb[0].mxu0 %v2734
      %v2844 = vpop.f32.mrb[0].mxu0
      %v2845 = vadd.f32 0.0, %v2844
      %v2846 = vpop.f32.mrb[0].mxu0
      %v2847 = vpop.f32.mrb[0].mxu0
      %v2848 = vadd.f32 0.0, %v2847
      %v2849 = vpop.f32.mrb[0].mxu0
      %2850 = vmatprep.mubr.bf16.mxu0 0
      %2851 = vmatmul.mubr.bf16.gmra.mrb[0].mxu0 %v2735
      %v2852 = vpop.f32.mrb[0].mxu0
      %v2853 = vadd.f32 0.0, %v2852
      %v2854 = vpop.f32.mrb[0].mxu0
      %v2855 = vpop.f32.mrb[0].mxu0
      %v2856 = vadd.f32 0.0, %v2855
      %v2857 = vpop.f32.mrb[0].mxu0
      %2858 = vmatprep.mubr.bf16.mxu0 0
      %2859 = vmatmul.mubr.bf16.gmra.mrb[0].mxu0 %v2736
      %v2860 = vpop.f32.mrb[0].mxu0
      %v2861 = vadd.f32 0.0, %v2860
      %v2862 = vpop.f32.mrb[0].mxu0
      %v2863 = vpop.f32.mrb[0].mxu0
      %v2864 = vadd.f32 0.0, %v2863
      %v2865 = vpop.f32.mrb[0].mxu0
      %2866 = vdwg.mxu0
      %v2867 = vadd.f32 %v2717, %v2837
      %v2868 = vadd.f32 %v2718, %v2840
      %v2869 = vadd.f32 %v2719, %v2845
      %v2870 = vadd.f32 %v2720, %v2848
      %v2871 = vadd.f32 %v2721, %v2853
      %v2872 = vadd.f32 %v2722, %v2856
      %v2873 = vadd.f32 %v2723, %v2861
      %v2874 = vadd.f32 %v2724, %v2864
      %v2875 = vld [vmem:[%s2574 + $0x2] sm:$0xff]
      %v2876 = vld [vmem:[%s2574 + $0x12] sm:$0xff]
      %v2877 = vld [vmem:[%s2574 + $0x22] sm:$0xff]
      %v2878 = vld [vmem:[%s2574 + $0x32] sm:$0xff]
      %v2879 = vld [vmem:[%s2574 + $0x42] sm:$0xff]
      %v2880 = vld [vmem:[%s2574 + $0x52] sm:$0xff]
      %v2881 = vld [vmem:[%s2574 + $0x62] sm:$0xff]
      %v2882 = vld [vmem:[%s2574 + $0x72] sm:$0xff]
      %v2883 = vpack.c.bf16 %v2876, %v2875
      %v2884 = vpack.c.bf16 %v2878, %v2877
      %v2885 = vpack.c.bf16 %v2880, %v2879
      %v2886 = vpack.c.bf16 %v2882, %v2881
      %s2887 = scalar_lea.vmem %s2, 1088
      %v2888 = vld [vmem:[%s2887] sm:$0xf]
      %v2889 = vld [vmem:[%s2887 + $0x4] sm:$0xf]
      %v2890 = vld [vmem:[%s2887 + $0x8] sm:$0xf]
      %v2891 = vld [vmem:[%s2887 + $0xc] sm:$0xf]
      %v2892 = vld [vmem:[%s2887 + $0x10] sm:$0xf]
      %v2893 = vld [vmem:[%s2887 + $0x14] sm:$0xf]
      %v2894 = vld [vmem:[%s2887 + $0x18] sm:$0xf]
      %v2895 = vld [vmem:[%s2887 + $0x1c] sm:$0xf]
      %v2896 = vld [vmem:[%s2887 + $0x20] sm:$0xf]
      %v2897 = vld [vmem:[%s2887 + $0x24] sm:$0xf]
      %v2898 = vld [vmem:[%s2887 + $0x28] sm:$0xf]
      %v2899 = vld [vmem:[%s2887 + $0x2c] sm:$0xf]
      %v2900 = vld [vmem:[%s2887 + $0x30] sm:$0xf]
      %v2901 = vld [vmem:[%s2887 + $0x34] sm:$0xf]
      %v2902 = vld [vmem:[%s2887 + $0x38] sm:$0xf]
      %v2903 = vld [vmem:[%s2887 + $0x3c] sm:$0xf]
      %v2920 = vunpack.c.l.b16 %v2888
      %v2921 = vunpack.c.l.b16 %v2889
      %v2922 = vunpack.c.l.b16 %v2890
      %v2923 = vunpack.c.l.b16 %v2891
      %v2924 = vunpack.c.l.b16 %v2892
      %v2925 = vunpack.c.l.b16 %v2893
      %v2926 = vunpack.c.l.b16 %v2894
      %v2927 = vunpack.c.l.b16 %v2895
      %v2928 = vunpack.c.l.b16 %v2896
      %v2929 = vunpack.c.l.b16 %v2897
      %v2930 = vunpack.c.l.b16 %v2898
      %v2931 = vunpack.c.l.b16 %v2899
      %v2932 = vunpack.c.l.b16 %v2900
      %v2933 = vunpack.c.l.b16 %v2901
      %v2934 = vunpack.c.l.b16 %v2902
      %v2935 = vunpack.c.l.b16 %v2903
      %v2936 = vpack.c.b16 %v2921, %v2920
      %v2937 = vpack.c.b16 %v2923, %v2922
      %v2938 = vpack.c.b16 %v2925, %v2924
      %v2939 = vpack.c.b16 %v2927, %v2926
      %v2940 = vpack.c.b16 %v2929, %v2928
      %v2941 = vpack.c.b16 %v2931, %v2930
      %v2942 = vpack.c.b16 %v2933, %v2932
      %v2943 = vpack.c.b16 %v2935, %v2934
      %2952 = vmatprep.subr.bf16.mxu0 0
      %2953 = vmatpush1.bf16.msra.mxu0 %v2936
      %2954 = vmatprep.subr.bf16.mxu0 0
      %2955 = vmatpush1.bf16.msra.mxu0 %v2937
      %2956 = vmatprep.subr.bf16.mxu0 0
      %2957 = vmatpush1.bf16.msra.mxu0 %v2938
      %2958 = vmatprep.subr.bf16.mxu0 0
      %2959 = vmatpush1.bf16.msra.mxu0 %v2939
      %2960 = vmatprep.subr.bf16.mxu0 0
      %2961 = vmatpush1.bf16.msra.mxu0 %v2940
      %2962 = vmatprep.subr.bf16.mxu0 0
      %2963 = vmatpush1.bf16.msra.mxu0 %v2941
      %2964 = vmatprep.subr.bf16.mxu0 0
      %2965 = vmatpush1.bf16.msra.mxu0 %v2942
      %2966 = vmatprep.subr.bf16.mxu0 0
      %2967 = vmatpush1.bf16.msra.mxu0 %v2943
      %2968 = vmatprep.subr.bf16.mxu0 0
      %2969 = vmatpush1.bf16.msra.mxu0 0
      %2970 = vmatprep.subr.bf16.mxu0 0
      %2971 = vmatpush1.bf16.msra.mxu0 0
      %2972 = vmatprep.subr.bf16.mxu0 0
      %2973 = vmatpush1.bf16.msra.mxu0 0
      %2974 = vmatprep.subr.bf16.mxu0 0
      %2975 = vmatpush1.bf16.msra.mxu0 0
      %2976 = vmatprep.subr.bf16.mxu0 0
      %2977 = vmatpush1.bf16.msra.mxu0 0
      %2978 = vmatprep.subr.bf16.mxu0 0
      %2979 = vmatpush1.bf16.msra.mxu0 0
      %2980 = vmatprep.subr.bf16.mxu0 0
      %2981 = vmatpush1.bf16.msra.mxu0 0
      %2982 = vmatprep.subr.bf16.mxu0 0
      %2983 = vmatpush1.bf16.msra.mxu0 0
      %2984 = vmatprep.mubr.bf16.mxu0 0
      %2985 = vmatmul.mubr.bf16.gmra.mrb[0].mxu0 %v2883
      %v2986 = vpop.f32.mrb[0].mxu0
      %v2987 = vadd.f32 0.0, %v2986
      %v2988 = vpop.f32.mrb[0].mxu0
      %v2989 = vpop.f32.mrb[0].mxu0
      %v2990 = vadd.f32 0.0, %v2989
      %v2991 = vpop.f32.mrb[0].mxu0
      %2992 = vmatprep.mubr.bf16.mxu0 0
      %2993 = vmatmul.mubr.bf16.gmra.mrb[0].mxu0 %v2884
      %v2994 = vpop.f32.mrb[0].mxu0
      %v2995 = vadd.f32 0.0, %v2994
      %v2996 = vpop.f32.mrb[0].mxu0
      %v2997 = vpop.f32.mrb[0].mxu0
      %v2998 = vadd.f32 0.0, %v2997
      %v2999 = vpop.f32.mrb[0].mxu0
      %3000 = vmatprep.mubr.bf16.mxu0 0
      %3001 = vmatmul.mubr.bf16.gmra.mrb[0].mxu0 %v2885
      %v3002 = vpop.f32.mrb[0].mxu0
      %v3003 = vadd.f32 0.0, %v3002
      %v3004 = vpop.f32.mrb[0].mxu0
      %v3005 = vpop.f32.mrb[0].mxu0
      %v3006 = vadd.f32 0.0, %v3005
      %v3007 = vpop.f32.mrb[0].mxu0
      %3008 = vmatprep.mubr.bf16.mxu0 0
      %3009 = vmatmul.mubr.bf16.gmra.mrb[0].mxu0 %v2886
      %v3010 = vpop.f32.mrb[0].mxu0
      %v3011 = vadd.f32 0.0, %v3010
      %v3012 = vpop.f32.mrb[0].mxu0
      %v3013 = vpop.f32.mrb[0].mxu0
      %v3014 = vadd.f32 0.0, %v3013
      %v3015 = vpop.f32.mrb[0].mxu0
      %3016 = vdwg.mxu0
      %v3017 = vadd.f32 %v2867, %v2987
      %v3018 = vadd.f32 %v2868, %v2990
      %v3019 = vadd.f32 %v2869, %v2995
      %v3020 = vadd.f32 %v2870, %v2998
      %v3021 = vadd.f32 %v2871, %v3003
      %v3022 = vadd.f32 %v2872, %v3006
      %v3023 = vadd.f32 %v2873, %v3011
      %v3024 = vadd.f32 %v2874, %v3014
      %v3025 = vld [vmem:[%s2574 + $0x3] sm:$0xff]
      %v3026 = vld [vmem:[%s2574 + $0x13] sm:$0xff]
      %v3027 = vld [vmem:[%s2574 + $0x23] sm:$0xff]
      %v3028 = vld [vmem:[%s2574 + $0x33] sm:$0xff]
      %v3029 = vld [vmem:[%s2574 + $0x43] sm:$0xff]
      %v3030 = vld [vmem:[%s2574 + $0x53] sm:$0xff]
      %v3031 = vld [vmem:[%s2574 + $0x63] sm:$0xff]
      %v3032 = vld [vmem:[%s2574 + $0x73] sm:$0xff]
      %v3033 = vpack.c.bf16 %v3026, %v3025
      %v3034 = vpack.c.bf16 %v3028, %v3027
      %v3035 = vpack.c.bf16 %v3030, %v3029
      %v3036 = vpack.c.bf16 %v3032, %v3031
      %s3037 = scalar_lea.vmem %s2, 1152
      %v3038 = vld [vmem:[%s3037] sm:$0xf]
      %v3039 = vld [vmem:[%s3037 + $0x4] sm:$0xf]
      %v3040 = vld [vmem:[%s3037 + $0x8] sm:$0xf]
      %v3041 = vld [vmem:[%s3037 + $0xc] sm:$0xf]
      %v3042 = vld [vmem:[%s3037 + $0x10] sm:$0xf]
      %v3043 = vld [vmem:[%s3037 + $0x14] sm:$0xf]
      %v3044 = vld [vmem:[%s3037 + $0x18] sm:$0xf]
      %v3045 = vld [vmem:[%s3037 + $0x1c] sm:$0xf]
      %v3046 = vld [vmem:[%s3037 + $0x20] sm:$0xf]
      %v3047 = vld [vmem:[%s3037 + $0x24] sm:$0xf]
      %v3048 = vld [vmem:[%s3037 + $0x28] sm:$0xf]
      %v3049 = vld [vmem:[%s3037 + $0x2c] sm:$0xf]
      %v3050 = vld [vmem:[%s3037 + $0x30] sm:$0xf]
      %v3051 = vld [vmem:[%s3037 + $0x34] sm:$0xf]
      %v3052 = vld [vmem:[%s3037 + $0x38] sm:$0xf]
      %v3053 = vld [vmem:[%s3037 + $0x3c] sm:$0xf]
      %v3070 = vunpack.c.l.b16 %v3038
      %v3071 = vunpack.c.l.b16 %v3039
      %v3072 = vunpack.c.l.b16 %v3040
      %v3073 = vunpack.c.l.b16 %v3041
      %v3074 = vunpack.c.l.b16 %v3042
      %v3075 = vunpack.c.l.b16 %v3043
      %v3076 = vunpack.c.l.b16 %v3044
      %v3077 = vunpack.c.l.b16 %v3045
      %v3078 = vunpack.c.l.b16 %v3046
      %v3079 = vunpack.c.l.b16 %v3047
      %v3080 = vunpack.c.l.b16 %v3048
      %v3081 = vunpack.c.l.b16 %v3049
      %v3082 = vunpack.c.l.b16 %v3050
      %v3083 = vunpack.c.l.b16 %v3051
      %v3084 = vunpack.c.l.b16 %v3052
      %v3085 = vunpack.c.l.b16 %v3053
      %v3086 = vpack.c.b16 %v3071, %v3070
      %v3087 = vpack.c.b16 %v3073, %v3072
      %v3088 = vpack.c.b16 %v3075, %v3074
      %v3089 = vpack.c.b16 %v3077, %v3076
      %v3090 = vpack.c.b16 %v3079, %v3078
      %v3091 = vpack.c.b16 %v3081, %v3080
      %v3092 = vpack.c.b16 %v3083, %v3082
      %v3093 = vpack.c.b16 %v3085, %v3084
      %3102 = vmatprep.subr.bf16.mxu0 0
      %3103 = vmatpush1.bf16.msra.mxu0 %v3086
      %3104 = vmatprep.subr.bf16.mxu0 0
      %3105 = vmatpush1.bf16.msra.mxu0 %v3087
      %3106 = vmatprep.subr.bf16.mxu0 0
      %3107 = vmatpush1.bf16.msra.mxu0 %v3088
      %3108 = vmatprep.subr.bf16.mxu0 0
      %3109 = vmatpush1.bf16.msra.mxu0 %v3089
      %3110 = vmatprep.subr.bf16.mxu0 0
      %3111 = vmatpush1.bf16.msra.mxu0 %v3090
      %3112 = vmatprep.subr.bf16.mxu0 0
      %3113 = vmatpush1.bf16.msra.mxu0 %v3091
      %3114 = vmatprep.subr.bf16.mxu0 0
      %3115 = vmatpush1.bf16.msra.mxu0 %v3092
      %3116 = vmatprep.subr.bf16.mxu0 0
      %3117 = vmatpush1.bf16.msra.mxu0 %v3093
      %3118 = vmatprep.subr.bf16.mxu0 0
      %3119 = vmatpush1.bf16.msra.mxu0 0
      %3120 = vmatprep.subr.bf16.mxu0 0
      %3121 = vmatpush1.bf16.msra.mxu0 0
      %3122 = vmatprep.subr.bf16.mxu0 0
      %3123 = vmatpush1.bf16.msra.mxu0 0
      %3124 = vmatprep.subr.bf16.mxu0 0
      %3125 = vmatpush1.bf16.msra.mxu0 0
      %3126 = vmatprep.subr.bf16.mxu0 0
      %3127 = vmatpush1.bf16.msra.mxu0 0
      %3128 = vmatprep.subr.bf16.mxu0 0
      %3129 = vmatpush1.bf16.msra.mxu0 0
      %3130 = vmatprep.subr.bf16.mxu0 0
      %3131 = vmatpush1.bf16.msra.mxu0 0
      %3132 = vmatprep.subr.bf16.mxu0 0
      %3133 = vmatpush1.bf16.msra.mxu0 0
      %3134 = vmatprep.mubr.bf16.mxu0 0
      %3135 = vmatmul.mubr.bf16.gmra.mrb[0].mxu0 %v3033
      %v3136 = vpop.f32.mrb[0].mxu0
      %v3137 = vadd.f32 0.0, %v3136
      %v3138 = vpop.f32.mrb[0].mxu0
      %v3139 = vpop.f32.mrb[0].mxu0
      %v3140 = vadd.f32 0.0, %v3139
      %v3141 = vpop.f32.mrb[0].mxu0
      %3142 = vmatprep.mubr.bf16.mxu0 0
      %3143 = vmatmul.mubr.bf16.gmra.mrb[0].mxu0 %v3034
      %v3144 = vpop.f32.mrb[0].mxu0
      %v3145 = vadd.f32 0.0, %v3144
      %v3146 = vpop.f32.mrb[0].mxu0
      %v3147 = vpop.f32.mrb[0].mxu0
      %v3148 = vadd.f32 0.0, %v3147
      %v3149 = vpop.f32.mrb[0].mxu0
      %3150 = vmatprep.mubr.bf16.mxu0 0
      %3151 = vmatmul.mubr.bf16.gmra.mrb[0].mxu0 %v3035
      %v3152 = vpop.f32.mrb[0].mxu0
      %v3153 = vadd.f32 0.0, %v3152
      %v3154 = vpop.f32.mrb[0].mxu0
      %v3155 = vpop.f32.mrb[0].mxu0
      %v3156 = vadd.f32 0.0, %v3155
      %v3157 = vpop.f32.mrb[0].mxu0
      %3158 = vmatprep.mubr.bf16.mxu0 0
      %3159 = vmatmul.mubr.bf16.gmra.mrb[0].mxu0 %v3036
      %v3160 = vpop.f32.mrb[0].mxu0
      %v3161 = vadd.f32 0.0, %v3160
      %v3162 = vpop.f32.mrb[0].mxu0
      %v3163 = vpop.f32.mrb[0].mxu0
      %v3164 = vadd.f32 0.0, %v3163
      %v3165 = vpop.f32.mrb[0].mxu0
      %3166 = vdwg.mxu0
      %v3167 = vadd.f32 %v3017, %v3137
      %v3168 = vadd.f32 %v3018, %v3140
      %v3169 = vadd.f32 %v3019, %v3145
      %v3170 = vadd.f32 %v3020, %v3148
      %v3171 = vadd.f32 %v3021, %v3153
      %v3172 = vadd.f32 %v3022, %v3156
      %v3173 = vadd.f32 %v3023, %v3161
      %v3174 = vadd.f32 %v3024, %v3164
      %v3175 = vld [vmem:[%s2574 + $0x4] sm:$0xff]
      %v3176 = vld [vmem:[%s2574 + $0x14] sm:$0xff]
      %v3177 = vld [vmem:[%s2574 + $0x24] sm:$0xff]
      %v3178 = vld [vmem:[%s2574 + $0x34] sm:$0xff]
      %v3179 = vld [vmem:[%s2574 + $0x44] sm:$0xff]
      %v3180 = vld [vmem:[%s2574 + $0x54] sm:$0xff]
      %v3181 = vld [vmem:[%s2574 + $0x64] sm:$0xff]
      %v3182 = vld [vmem:[%s2574 + $0x74] sm:$0xff]
      %v3183 = vpack.c.bf16 %v3176, %v3175
      %v3184 = vpack.c.bf16 %v3178, %v3177
      %v3185 = vpack.c.bf16 %v3180, %v3179
      %v3186 = vpack.c.bf16 %v3182, %v3181
      %s3187 = scalar_lea.vmem %s2, 1216
      %v3188 = vld [vmem:[%s3187] sm:$0xf]
      %v3189 = vld [vmem:[%s3187 + $0x4] sm:$0xf]
      %v3190 = vld [vmem:[%s3187 + $0x8] sm:$0xf]
      %v3191 = vld [vmem:[%s3187 + $0xc] sm:$0xf]
      %v3192 = vld [vmem:[%s3187 + $0x10] sm:$0xf]
      %v3193 = vld [vmem:[%s3187 + $0x14] sm:$0xf]
      %v3194 = vld [vmem:[%s3187 + $0x18] sm:$0xf]
      %v3195 = vld [vmem:[%s3187 + $0x1c] sm:$0xf]
      %v3196 = vld [vmem:[%s3187 + $0x20] sm:$0xf]
      %v3197 = vld [vmem:[%s3187 + $0x24] sm:$0xf]
      %v3198 = vld [vmem:[%s3187 + $0x28] sm:$0xf]
      %v3199 = vld [vmem:[%s3187 + $0x2c] sm:$0xf]
      %v3200 = vld [vmem:[%s3187 + $0x30] sm:$0xf]
      %v3201 = vld [vmem:[%s3187 + $0x34] sm:$0xf]
      %v3202 = vld [vmem:[%s3187 + $0x38] sm:$0xf]
      %v3203 = vld [vmem:[%s3187 + $0x3c] sm:$0xf]
      %v3220 = vunpack.c.l.b16 %v3188
      %v3221 = vunpack.c.l.b16 %v3189
      %v3222 = vunpack.c.l.b16 %v3190
      %v3223 = vunpack.c.l.b16 %v3191
      %v3224 = vunpack.c.l.b16 %v3192
      %v3225 = vunpack.c.l.b16 %v3193
      %v3226 = vunpack.c.l.b16 %v3194
      %v3227 = vunpack.c.l.b16 %v3195
      %v3228 = vunpack.c.l.b16 %v3196
      %v3229 = vunpack.c.l.b16 %v3197
      %v3230 = vunpack.c.l.b16 %v3198
      %v3231 = vunpack.c.l.b16 %v3199
      %v3232 = vunpack.c.l.b16 %v3200
      %v3233 = vunpack.c.l.b16 %v3201
      %v3234 = vunpack.c.l.b16 %v3202
      %v3235 = vunpack.c.l.b16 %v3203
      %v3236 = vpack.c.b16 %v3221, %v3220
      %v3237 = vpack.c.b16 %v3223, %v3222
      %v3238 = vpack.c.b16 %v3225, %v3224
      %v3239 = vpack.c.b16 %v3227, %v3226
      %v3240 = vpack.c.b16 %v3229, %v3228
      %v3241 = vpack.c.b16 %v3231, %v3230
      %v3242 = vpack.c.b16 %v3233, %v3232
      %v3243 = vpack.c.b16 %v3235, %v3234
      %3252 = vmatprep.subr.bf16.mxu0 0
      %3253 = vmatpush1.bf16.msra.mxu0 %v3236
      %3254 = vmatprep.subr.bf16.mxu0 0
      %3255 = vmatpush1.bf16.msra.mxu0 %v3237
      %3256 = vmatprep.subr.bf16.mxu0 0
      %3257 = vmatpush1.bf16.msra.mxu0 %v3238
      %3258 = vmatprep.subr.bf16.mxu0 0
      %3259 = vmatpush1.bf16.msra.mxu0 %v3239
      %3260 = vmatprep.subr.bf16.mxu0 0
      %3261 = vmatpush1.bf16.msra.mxu0 %v3240
      %3262 = vmatprep.subr.bf16.mxu0 0
      %3263 = vmatpush1.bf16.msra.mxu0 %v3241
      %3264 = vmatprep.subr.bf16.mxu0 0
      %3265 = vmatpush1.bf16.msra.mxu0 %v3242
      %3266 = vmatprep.subr.bf16.mxu0 0
      %3267 = vmatpush1.bf16.msra.mxu0 %v3243
      %3268 = vmatprep.subr.bf16.mxu0 0
      %3269 = vmatpush1.bf16.msra.mxu0 0
      %3270 = vmatprep.subr.bf16.mxu0 0
      %3271 = vmatpush1.bf16.msra.mxu0 0
      %3272 = vmatprep.subr.bf16.mxu0 0
      %3273 = vmatpush1.bf16.msra.mxu0 0
      %3274 = vmatprep.subr.bf16.mxu0 0
      %3275 = vmatpush1.bf16.msra.mxu0 0
      %3276 = vmatprep.subr.bf16.mxu0 0
      %3277 = vmatpush1.bf16.msra.mxu0 0
      %3278 = vmatprep.subr.bf16.mxu0 0
      %3279 = vmatpush1.bf16.msra.mxu0 0
      %3280 = vmatprep.subr.bf16.mxu0 0
      %3281 = vmatpush1.bf16.msra.mxu0 0
      %3282 = vmatprep.subr.bf16.mxu0 0
      %3283 = vmatpush1.bf16.msra.mxu0 0
      %3284 = vmatprep.mubr.bf16.mxu0 0
      %3285 = vmatmul.mubr.bf16.gmra.mrb[0].mxu0 %v3183
      %v3286 = vpop.f32.mrb[0].mxu0
      %v3287 = vadd.f32 0.0, %v3286
      %v3288 = vpop.f32.mrb[0].mxu0
      %v3289 = vpop.f32.mrb[0].mxu0
      %v3290 = vadd.f32 0.0, %v3289
      %v3291 = vpop.f32.mrb[0].mxu0
      %3292 = vmatprep.mubr.bf16.mxu0 0
      %3293 = vmatmul.mubr.bf16.gmra.mrb[0].mxu0 %v3184
      %v3294 = vpop.f32.mrb[0].mxu0
      %v3295 = vadd.f32 0.0, %v3294
      %v3296 = vpop.f32.mrb[0].mxu0
      %v3297 = vpop.f32.mrb[0].mxu0
      %v3298 = vadd.f32 0.0, %v3297
      %v3299 = vpop.f32.mrb[0].mxu0
      %3300 = vmatprep.mubr.bf16.mxu0 0
      %3301 = vmatmul.mubr.bf16.gmra.mrb[0].mxu0 %v3185
      %v3302 = vpop.f32.mrb[0].mxu0
      %v3303 = vadd.f32 0.0, %v3302
      %v3304 = vpop.f32.mrb[0].mxu0
      %v3305 = vpop.f32.mrb[0].mxu0
      %v3306 = vadd.f32 0.0, %v3305
      %v3307 = vpop.f32.mrb[0].mxu0
      %3308 = vmatprep.mubr.bf16.mxu0 0
      %3309 = vmatmul.mubr.bf16.gmra.mrb[0].mxu0 %v3186
      %v3310 = vpop.f32.mrb[0].mxu0
      %v3311 = vadd.f32 0.0, %v3310
      %v3312 = vpop.f32.mrb[0].mxu0
      %v3313 = vpop.f32.mrb[0].mxu0
      %v3314 = vadd.f32 0.0, %v3313
      %v3315 = vpop.f32.mrb[0].mxu0
      %3316 = vdwg.mxu0
      %v3317 = vadd.f32 %v3167, %v3287
      %v3318 = vadd.f32 %v3168, %v3290
      %v3319 = vadd.f32 %v3169, %v3295
      %v3320 = vadd.f32 %v3170, %v3298
      %v3321 = vadd.f32 %v3171, %v3303
      %v3322 = vadd.f32 %v3172, %v3306
      %v3323 = vadd.f32 %v3173, %v3311
      %v3324 = vadd.f32 %v3174, %v3314
      %s3325 = scalar_lea.vmem [#allocation2], 64
      %v3326 = vld [vmem:[%s3325] sm:$0xff]
      %v3327 = vld [vmem:[%s3325 + $0x10] sm:$0xff]
      %v3328 = vld [vmem:[%s3325 + $0x20] sm:$0xff]
      %v3329 = vld [vmem:[%s3325 + $0x30] sm:$0xff]
      %v3330 = vld [vmem:[%s3325 + $0x40] sm:$0xff]
      %v3331 = vld [vmem:[%s3325 + $0x50] sm:$0xff]
      %v3332 = vld [vmem:[%s3325 + $0x60] sm:$0xff]
      %v3333 = vld [vmem:[%s3325 + $0x70] sm:$0xff]
      %v3334 = vpack.c.bf16 %v3327, %v3326
      %v3335 = vpack.c.bf16 %v3329, %v3328
      %v3336 = vpack.c.bf16 %v3331, %v3330
      %v3337 = vpack.c.bf16 %v3333, %v3332
      %s3338 = scalar_lea.vmem %s2, 1280
      %v3339 = vld [vmem:[%s3338] sm:$0xf]
      %v3340 = vld [vmem:[%s3338 + $0x4] sm:$0xf]
      %v3341 = vld [vmem:[%s3338 + $0x8] sm:$0xf]
      %v3342 = vld [vmem:[%s3338 + $0xc] sm:$0xf]
      %v3343 = vld [vmem:[%s3338 + $0x10] sm:$0xf]
      %v3344 = vld [vmem:[%s3338 + $0x14] sm:$0xf]
      %v3345 = vld [vmem:[%s3338 + $0x18] sm:$0xf]
      %v3346 = vld [vmem:[%s3338 + $0x1c] sm:$0xf]
      %v3347 = vld [vmem:[%s3338 + $0x20] sm:$0xf]
      %v3348 = vld [vmem:[%s3338 + $0x24] sm:$0xf]
      %v3349 = vld [vmem:[%s3338 + $0x28] sm:$0xf]
      %v3350 = vld [vmem:[%s3338 + $0x2c] sm:$0xf]
      %v3351 = vld [vmem:[%s3338 + $0x30] sm:$0xf]
      %v3352 = vld [vmem:[%s3338 + $0x34] sm:$0xf]
      %v3353 = vld [vmem:[%s3338 + $0x38] sm:$0xf]
      %v3354 = vld [vmem:[%s3338 + $0x3c] sm:$0xf]
      %v3371 = vunpack.c.l.b16 %v3339
      %v3372 = vunpack.c.l.b16 %v3340
      %v3373 = vunpack.c.l.b16 %v3341
      %v3374 = vunpack.c.l.b16 %v3342
      %v3375 = vunpack.c.l.b16 %v3343
      %v3376 = vunpack.c.l.b16 %v3344
      %v3377 = vunpack.c.l.b16 %v3345
      %v3378 = vunpack.c.l.b16 %v3346
      %v3379 = vunpack.c.l.b16 %v3347
      %v3380 = vunpack.c.l.b16 %v3348
      %v3381 = vunpack.c.l.b16 %v3349
      %v3382 = vunpack.c.l.b16 %v3350
      %v3383 = vunpack.c.l.b16 %v3351
      %v3384 = vunpack.c.l.b16 %v3352
      %v3385 = vunpack.c.l.b16 %v3353
      %v3386 = vunpack.c.l.b16 %v3354
      %v3387 = vpack.c.b16 %v3372, %v3371
      %v3388 = vpack.c.b16 %v3374, %v3373
      %v3389 = vpack.c.b16 %v3376, %v3375
      %v3390 = vpack.c.b16 %v3378, %v3377
      %v3391 = vpack.c.b16 %v3380, %v3379
      %v3392 = vpack.c.b16 %v3382, %v3381
      %v3393 = vpack.c.b16 %v3384, %v3383
      %v3394 = vpack.c.b16 %v3386, %v3385
      %3403 = vmatprep.subr.bf16.mxu0 0
      %3404 = vmatpush1.bf16.msra.mxu0 %v3387
      %3405 = vmatprep.subr.bf16.mxu0 0
      %3406 = vmatpush1.bf16.msra.mxu0 %v3388
      %3407 = vmatprep.subr.bf16.mxu0 0
      %3408 = vmatpush1.bf16.msra.mxu0 %v3389
      %3409 = vmatprep.subr.bf16.mxu0 0
      %3410 = vmatpush1.bf16.msra.mxu0 %v3390
      %3411 = vmatprep.subr.bf16.mxu0 0
      %3412 = vmatpush1.bf16.msra.mxu0 %v3391
      %3413 = vmatprep.subr.bf16.mxu0 0
      %3414 = vmatpush1.bf16.msra.mxu0 %v3392
      %3415 = vmatprep.subr.bf16.mxu0 0
      %3416 = vmatpush1.bf16.msra.mxu0 %v3393
      %3417 = vmatprep.subr.bf16.mxu0 0
      %3418 = vmatpush1.bf16.msra.mxu0 %v3394
      %3419 = vmatprep.subr.bf16.mxu0 0
      %3420 = vmatpush1.bf16.msra.mxu0 0
      %3421 = vmatprep.subr.bf16.mxu0 0
      %3422 = vmatpush1.bf16.msra.mxu0 0
      %3423 = vmatprep.subr.bf16.mxu0 0
      %3424 = vmatpush1.bf16.msra.mxu0 0
      %3425 = vmatprep.subr.bf16.mxu0 0
      %3426 = vmatpush1.bf16.msra.mxu0 0
      %3427 = vmatprep.subr.bf16.mxu0 0
      %3428 = vmatpush1.bf16.msra.mxu0 0
      %3429 = vmatprep.subr.bf16.mxu0 0
      %3430 = vmatpush1.bf16.msra.mxu0 0
      %3431 = vmatprep.subr.bf16.mxu0 0
      %3432 = vmatpush1.bf16.msra.mxu0 0
      %3433 = vmatprep.subr.bf16.mxu0 0
      %3434 = vmatpush1.bf16.msra.mxu0 0
      %3435 = vmatprep.mubr.bf16.mxu0 0
      %3436 = vmatmul.mubr.bf16.gmra.mrb[0].mxu0 %v3334
      %v3437 = vpop.f32.mrb[0].mxu0
      %v3438 = vadd.f32 0.0, %v3437
      %v3439 = vpop.f32.mrb[0].mxu0
      %v3440 = vpop.f32.mrb[0].mxu0
      %v3441 = vadd.f32 0.0, %v3440
      %v3442 = vpop.f32.mrb[0].mxu0
      %3443 = vmatprep.mubr.bf16.mxu0 0
      %3444 = vmatmul.mubr.bf16.gmra.mrb[0].mxu0 %v3335
      %v3445 = vpop.f32.mrb[0].mxu0
      %v3446 = vadd.f32 0.0, %v3445
      %v3447 = vpop.f32.mrb[0].mxu0
      %v3448 = vpop.f32.mrb[0].mxu0
      %v3449 = vadd.f32 0.0, %v3448
      %v3450 = vpop.f32.mrb[0].mxu0
      %3451 = vmatprep.mubr.bf16.mxu0 0
      %3452 = vmatmul.mubr.bf16.gmra.mrb[0].mxu0 %v3336
      %v3453 = vpop.f32.mrb[0].mxu0
      %v3454 = vadd.f32 0.0, %v3453
      %v3455 = vpop.f32.mrb[0].mxu0
      %v3456 = vpop.f32.mrb[0].mxu0
      %v3457 = vadd.f32 0.0, %v3456
      %v3458 = vpop.f32.mrb[0].mxu0
      %3459 = vmatprep.mubr.bf16.mxu0 0
      %3460 = vmatmul.mubr.bf16.gmra.mrb[0].mxu0 %v3337
      %v3461 = vpop.f32.mrb[0].mxu0
      %v3462 = vadd.f32 0.0, %v3461
      %v3463 = vpop.f32.mrb[0].mxu0
      %v3464 = vpop.f32.mrb[0].mxu0
      %v3465 = vadd.f32 0.0, %v3464
      %v3466 = vpop.f32.mrb[0].mxu0
      %3467 = vdwg.mxu0
      %v3468 = vadd.f32 %v3317, %v3438
      %v3469 = vadd.f32 %v3318, %v3441
      %v3470 = vadd.f32 %v3319, %v3446
      %v3471 = vadd.f32 %v3320, %v3449
      %v3472 = vadd.f32 %v3321, %v3454
      %v3473 = vadd.f32 %v3322, %v3457
      %v3474 = vadd.f32 %v3323, %v3462
      %v3475 = vadd.f32 %v3324, %v3465
      %v3476 = vld [vmem:[%s3325 + $0x1] sm:$0xff]
      %v3477 = vld [vmem:[%s3325 + $0x11] sm:$0xff]
      %v3478 = vld [vmem:[%s3325 + $0x21] sm:$0xff]
      %v3479 = vld [vmem:[%s3325 + $0x31] sm:$0xff]
      %v3480 = vld [vmem:[%s3325 + $0x41] sm:$0xff]
      %v3481 = vld [vmem:[%s3325 + $0x51] sm:$0xff]
      %v3482 = vld [vmem:[%s3325 + $0x61] sm:$0xff]
      %v3483 = vld [vmem:[%s3325 + $0x71] sm:$0xff]
      %v3484 = vpack.c.bf16 %v3477, %v3476
      %v3485 = vpack.c.bf16 %v3479, %v3478
      %v3486 = vpack.c.bf16 %v3481, %v3480
      %v3487 = vpack.c.bf16 %v3483, %v3482
      %s3488 = scalar_lea.vmem %s2, 1344
      %v3489 = vld [vmem:[%s3488] sm:$0xf]
      %v3490 = vld [vmem:[%s3488 + $0x4] sm:$0xf]
      %v3491 = vld [vmem:[%s3488 + $0x8] sm:$0xf]
      %v3492 = vld [vmem:[%s3488 + $0xc] sm:$0xf]
      %v3493 = vld [vmem:[%s3488 + $0x10] sm:$0xf]
      %v3494 = vld [vmem:[%s3488 + $0x14] sm:$0xf]
      %v3495 = vld [vmem:[%s3488 + $0x18] sm:$0xf]
      %v3496 = vld [vmem:[%s3488 + $0x1c] sm:$0xf]
      %v3497 = vld [vmem:[%s3488 + $0x20] sm:$0xf]
      %v3498 = vld [vmem:[%s3488 + $0x24] sm:$0xf]
      %v3499 = vld [vmem:[%s3488 + $0x28] sm:$0xf]
      %v3500 = vld [vmem:[%s3488 + $0x2c] sm:$0xf]
      %v3501 = vld [vmem:[%s3488 + $0x30] sm:$0xf]
      %v3502 = vld [vmem:[%s3488 + $0x34] sm:$0xf]
      %v3503 = vld [vmem:[%s3488 + $0x38] sm:$0xf]
      %v3504 = vld [vmem:[%s3488 + $0x3c] sm:$0xf]
      %v3521 = vunpack.c.l.b16 %v3489
      %v3522 = vunpack.c.l.b16 %v3490
      %v3523 = vunpack.c.l.b16 %v3491
      %v3524 = vunpack.c.l.b16 %v3492
      %v3525 = vunpack.c.l.b16 %v3493
      %v3526 = vunpack.c.l.b16 %v3494
      %v3527 = vunpack.c.l.b16 %v3495
      %v3528 = vunpack.c.l.b16 %v3496
      %v3529 = vunpack.c.l.b16 %v3497
      %v3530 = vunpack.c.l.b16 %v3498
      %v3531 = vunpack.c.l.b16 %v3499
      %v3532 = vunpack.c.l.b16 %v3500
      %v3533 = vunpack.c.l.b16 %v3501
      %v3534 = vunpack.c.l.b16 %v3502
      %v3535 = vunpack.c.l.b16 %v3503
      %v3536 = vunpack.c.l.b16 %v3504
      %v3537 = vpack.c.b16 %v3522, %v3521
      %v3538 = vpack.c.b16 %v3524, %v3523
      %v3539 = vpack.c.b16 %v3526, %v3525
      %v3540 = vpack.c.b16 %v3528, %v3527
      %v3541 = vpack.c.b16 %v3530, %v3529
      %v3542 = vpack.c.b16 %v3532, %v3531
      %v3543 = vpack.c.b16 %v3534, %v3533
      %v3544 = vpack.c.b16 %v3536, %v3535
      %3553 = vmatprep.subr.bf16.mxu0 0
      %3554 = vmatpush1.bf16.msra.mxu0 %v3537
      %3555 = vmatprep.subr.bf16.mxu0 0
      %3556 = vmatpush1.bf16.msra.mxu0 %v3538
      %3557 = vmatprep.subr.bf16.mxu0 0
      %3558 = vmatpush1.bf16.msra.mxu0 %v3539
      %3559 = vmatprep.subr.bf16.mxu0 0
      %3560 = vmatpush1.bf16.msra.mxu0 %v3540
      %3561 = vmatprep.subr.bf16.mxu0 0
      %3562 = vmatpush1.bf16.msra.mxu0 %v3541
      %3563 = vmatprep.subr.bf16.mxu0 0
      %3564 = vmatpush1.bf16.msra.mxu0 %v3542
      %3565 = vmatprep.subr.bf16.mxu0 0
      %3566 = vmatpush1.bf16.msra.mxu0 %v3543
      %3567 = vmatprep.subr.bf16.mxu0 0
      %3568 = vmatpush1.bf16.msra.mxu0 %v3544
      %3569 = vmatprep.subr.bf16.mxu0 0
      %3570 = vmatpush1.bf16.msra.mxu0 0
      %3571 = vmatprep.subr.bf16.mxu0 0
      %3572 = vmatpush1.bf16.msra.mxu0 0
      %3573 = vmatprep.subr.bf16.mxu0 0
      %3574 = vmatpush1.bf16.msra.mxu0 0
      %3575 = vmatprep.subr.bf16.mxu0 0
      %3576 = vmatpush1.bf16.msra.mxu0 0
      %3577 = vmatprep.subr.bf16.mxu0 0
      %3578 = vmatpush1.bf16.msra.mxu0 0
      %3579 = vmatprep.subr.bf16.mxu0 0
      %3580 = vmatpush1.bf16.msra.mxu0 0
      %3581 = vmatprep.subr.bf16.mxu0 0
      %3582 = vmatpush1.bf16.msra.mxu0 0
      %3583 = vmatprep.subr.bf16.mxu0 0
      %3584 = vmatpush1.bf16.msra.mxu0 0
      %3585 = vmatprep.mubr.bf16.mxu0 0
      %3586 = vmatmul.mubr.bf16.gmra.mrb[0].mxu0 %v3484
      %v3587 = vpop.f32.mrb[0].mxu0
      %v3588 = vadd.f32 0.0, %v3587
      %v3589 = vpop.f32.mrb[0].mxu0
      %v3590 = vpop.f32.mrb[0].mxu0
      %v3591 = vadd.f32 0.0, %v3590
      %v3592 = vpop.f32.mrb[0].mxu0
      %3593 = vmatprep.mubr.bf16.mxu0 0
      %3594 = vmatmul.mubr.bf16.gmra.mrb[0].mxu0 %v3485
      %v3595 = vpop.f32.mrb[0].mxu0
      %v3596 = vadd.f32 0.0, %v3595
      %v3597 = vpop.f32.mrb[0].mxu0
      %v3598 = vpop.f32.mrb[0].mxu0
      %v3599 = vadd.f32 0.0, %v3598
      %v3600 = vpop.f32.mrb[0].mxu0
      %3601 = vmatprep.mubr.bf16.mxu0 0
      %3602 = vmatmul.mubr.bf16.gmra.mrb[0].mxu0 %v3486
      %v3603 = vpop.f32.mrb[0].mxu0
      %v3604 = vadd.f32 0.0, %v3603
      %v3605 = vpop.f32.mrb[0].mxu0
      %v3606 = vpop.f32.mrb[0].mxu0
      %v3607 = vadd.f32 0.0, %v3606
      %v3608 = vpop.f32.mrb[0].mxu0
      %3609 = vmatprep.mubr.bf16.mxu0 0
      %3610 = vmatmul.mubr.bf16.gmra.mrb[0].mxu0 %v3487
      %v3611 = vpop.f32.mrb[0].mxu0
      %v3612 = vadd.f32 0.0, %v3611
      %v3613 = vpop.f32.mrb[0].mxu0
      %v3614 = vpop.f32.mrb[0].mxu0
      %v3615 = vadd.f32 0.0, %v3614
      %v3616 = vpop.f32.mrb[0].mxu0
      %3617 = vdwg.mxu0
      %v3618 = vadd.f32 %v3468, %v3588
      %v3619 = vadd.f32 %v3469, %v3591
      %v3620 = vadd.f32 %v3470, %v3596
      %v3621 = vadd.f32 %v3471, %v3599
      %v3622 = vadd.f32 %v3472, %v3604
      %v3623 = vadd.f32 %v3473, %v3607
      %v3624 = vadd.f32 %v3474, %v3612
      %v3625 = vadd.f32 %v3475, %v3615
      %v3626 = vld [vmem:[%s3325 + $0x2] sm:$0xff]
      %v3627 = vld [vmem:[%s3325 + $0x12] sm:$0xff]
      %v3628 = vld [vmem:[%s3325 + $0x22] sm:$0xff]
      %v3629 = vld [vmem:[%s3325 + $0x32] sm:$0xff]
      %v3630 = vld [vmem:[%s3325 + $0x42] sm:$0xff]
      %v3631 = vld [vmem:[%s3325 + $0x52] sm:$0xff]
      %v3632 = vld [vmem:[%s3325 + $0x62] sm:$0xff]
      %v3633 = vld [vmem:[%s3325 + $0x72] sm:$0xff]
      %v3634 = vpack.c.bf16 %v3627, %v3626
      %v3635 = vpack.c.bf16 %v3629, %v3628
      %v3636 = vpack.c.bf16 %v3631, %v3630
      %v3637 = vpack.c.bf16 %v3633, %v3632
      %s3638 = scalar_lea.vmem %s2, 1408
      %v3639 = vld [vmem:[%s3638] sm:$0xf]
      %v3640 = vld [vmem:[%s3638 + $0x4] sm:$0xf]
      %v3641 = vld [vmem:[%s3638 + $0x8] sm:$0xf]
      %v3642 = vld [vmem:[%s3638 + $0xc] sm:$0xf]
      %v3643 = vld [vmem:[%s3638 + $0x10] sm:$0xf]
      %v3644 = vld [vmem:[%s3638 + $0x14] sm:$0xf]
      %v3645 = vld [vmem:[%s3638 + $0x18] sm:$0xf]
      %v3646 = vld [vmem:[%s3638 + $0x1c] sm:$0xf]
      %v3647 = vld [vmem:[%s3638 + $0x20] sm:$0xf]
      %v3648 = vld [vmem:[%s3638 + $0x24] sm:$0xf]
      %v3649 = vld [vmem:[%s3638 + $0x28] sm:$0xf]
      %v3650 = vld [vmem:[%s3638 + $0x2c] sm:$0xf]
      %v3651 = vld [vmem:[%s3638 + $0x30] sm:$0xf]
      %v3652 = vld [vmem:[%s3638 + $0x34] sm:$0xf]
      %v3653 = vld [vmem:[%s3638 + $0x38] sm:$0xf]
      %v3654 = vld [vmem:[%s3638 + $0x3c] sm:$0xf]
      %v3671 = vunpack.c.l.b16 %v3639
      %v3672 = vunpack.c.l.b16 %v3640
      %v3673 = vunpack.c.l.b16 %v3641
      %v3674 = vunpack.c.l.b16 %v3642
      %v3675 = vunpack.c.l.b16 %v3643
      %v3676 = vunpack.c.l.b16 %v3644
      %v3677 = vunpack.c.l.b16 %v3645
      %v3678 = vunpack.c.l.b16 %v3646
      %v3679 = vunpack.c.l.b16 %v3647
      %v3680 = vunpack.c.l.b16 %v3648
      %v3681 = vunpack.c.l.b16 %v3649
      %v3682 = vunpack.c.l.b16 %v3650
      %v3683 = vunpack.c.l.b16 %v3651
      %v3684 = vunpack.c.l.b16 %v3652
      %v3685 = vunpack.c.l.b16 %v3653
      %v3686 = vunpack.c.l.b16 %v3654
      %v3687 = vpack.c.b16 %v3672, %v3671
      %v3688 = vpack.c.b16 %v3674, %v3673
      %v3689 = vpack.c.b16 %v3676, %v3675
      %v3690 = vpack.c.b16 %v3678, %v3677
      %v3691 = vpack.c.b16 %v3680, %v3679
      %v3692 = vpack.c.b16 %v3682, %v3681
      %v3693 = vpack.c.b16 %v3684, %v3683
      %v3694 = vpack.c.b16 %v3686, %v3685
      %3703 = vmatprep.subr.bf16.mxu0 0
      %3704 = vmatpush1.bf16.msra.mxu0 %v3687
      %3705 = vmatprep.subr.bf16.mxu0 0
      %3706 = vmatpush1.bf16.msra.mxu0 %v3688
      %3707 = vmatprep.subr.bf16.mxu0 0
      %3708 = vmatpush1.bf16.msra.mxu0 %v3689
      %3709 = vmatprep.subr.bf16.mxu0 0
      %3710 = vmatpush1.bf16.msra.mxu0 %v3690
      %3711 = vmatprep.subr.bf16.mxu0 0
      %3712 = vmatpush1.bf16.msra.mxu0 %v3691
      %3713 = vmatprep.subr.bf16.mxu0 0
      %3714 = vmatpush1.bf16.msra.mxu0 %v3692
      %3715 = vmatprep.subr.bf16.mxu0 0
      %3716 = vmatpush1.bf16.msra.mxu0 %v3693
      %3717 = vmatprep.subr.bf16.mxu0 0
      %3718 = vmatpush1.bf16.msra.mxu0 %v3694
      %3719 = vmatprep.subr.bf16.mxu0 0
      %3720 = vmatpush1.bf16.msra.mxu0 0
      %3721 = vmatprep.subr.bf16.mxu0 0
      %3722 = vmatpush1.bf16.msra.mxu0 0
      %3723 = vmatprep.subr.bf16.mxu0 0
      %3724 = vmatpush1.bf16.msra.mxu0 0
      %3725 = vmatprep.subr.bf16.mxu0 0
      %3726 = vmatpush1.bf16.msra.mxu0 0
      %3727 = vmatprep.subr.bf16.mxu0 0
      %3728 = vmatpush1.bf16.msra.mxu0 0
      %3729 = vmatprep.subr.bf16.mxu0 0
      %3730 = vmatpush1.bf16.msra.mxu0 0
      %3731 = vmatprep.subr.bf16.mxu0 0
      %3732 = vmatpush1.bf16.msra.mxu0 0
      %3733 = vmatprep.subr.bf16.mxu0 0
      %3734 = vmatpush1.bf16.msra.mxu0 0
      %3735 = vmatprep.mubr.bf16.mxu0 0
      %3736 = vmatmul.mubr.bf16.gmra.mrb[0].mxu0 %v3634
      %v3737 = vpop.f32.mrb[0].mxu0
      %v3738 = vadd.f32 0.0, %v3737
      %v3739 = vpop.f32.mrb[0].mxu0
      %v3740 = vpop.f32.mrb[0].mxu0
      %v3741 = vadd.f32 0.0, %v3740
      %v3742 = vpop.f32.mrb[0].mxu0
      %3743 = vmatprep.mubr.bf16.mxu0 0
      %3744 = vmatmul.mubr.bf16.gmra.mrb[0].mxu0 %v3635
      %v3745 = vpop.f32.mrb[0].mxu0
      %v3746 = vadd.f32 0.0, %v3745
      %v3747 = vpop.f32.mrb[0].mxu0
      %v3748 = vpop.f32.mrb[0].mxu0
      %v3749 = vadd.f32 0.0, %v3748
      %v3750 = vpop.f32.mrb[0].mxu0
      %3751 = vmatprep.mubr.bf16.mxu0 0
      %3752 = vmatmul.mubr.bf16.gmra.mrb[0].mxu0 %v3636
      %v3753 = vpop.f32.mrb[0].mxu0
      %v3754 = vadd.f32 0.0, %v3753
      %v3755 = vpop.f32.mrb[0].mxu0
      %v3756 = vpop.f32.mrb[0].mxu0
      %v3757 = vadd.f32 0.0, %v3756
      %v3758 = vpop.f32.mrb[0].mxu0
      %3759 = vmatprep.mubr.bf16.mxu0 0
      %3760 = vmatmul.mubr.bf16.gmra.mrb[0].mxu0 %v3637
      %v3761 = vpop.f32.mrb[0].mxu0
      %v3762 = vadd.f32 0.0, %v3761
      %v3763 = vpop.f32.mrb[0].mxu0
      %v3764 = vpop.f32.mrb[0].mxu0
      %v3765 = vadd.f32 0.0, %v3764
      %v3766 = vpop.f32.mrb[0].mxu0
      %3767 = vdwg.mxu0
      %v3768 = vadd.f32 %v3618, %v3738
      %v3769 = vadd.f32 %v3619, %v3741
      %v3770 = vadd.f32 %v3620, %v3746
      %v3771 = vadd.f32 %v3621, %v3749
      %v3772 = vadd.f32 %v3622, %v3754
      %v3773 = vadd.f32 %v3623, %v3757
      %v3774 = vadd.f32 %v3624, %v3762
      %v3775 = vadd.f32 %v3625, %v3765
      %v3776 = vld [vmem:[%s3325 + $0x3] sm:$0xff]
      %v3777 = vld [vmem:[%s3325 + $0x13] sm:$0xff]
      %v3778 = vld [vmem:[%s3325 + $0x23] sm:$0xff]
      %v3779 = vld [vmem:[%s3325 + $0x33] sm:$0xff]
      %v3780 = vld [vmem:[%s3325 + $0x43] sm:$0xff]
      %v3781 = vld [vmem:[%s3325 + $0x53] sm:$0xff]
      %v3782 = vld [vmem:[%s3325 + $0x63] sm:$0xff]
      %v3783 = vld [vmem:[%s3325 + $0x73] sm:$0xff]
      %v3784 = vpack.c.bf16 %v3777, %v3776
      %v3785 = vpack.c.bf16 %v3779, %v3778
      %v3786 = vpack.c.bf16 %v3781, %v3780
      %v3787 = vpack.c.bf16 %v3783, %v3782
      %s3788 = scalar_lea.vmem %s2, 1472
      %v3789 = vld [vmem:[%s3788] sm:$0xf]
      %v3790 = vld [vmem:[%s3788 + $0x4] sm:$0xf]
      %v3791 = vld [vmem:[%s3788 + $0x8] sm:$0xf]
      %v3792 = vld [vmem:[%s3788 + $0xc] sm:$0xf]
      %v3793 = vld [vmem:[%s3788 + $0x10] sm:$0xf]
      %v3794 = vld [vmem:[%s3788 + $0x14] sm:$0xf]
      %v3795 = vld [vmem:[%s3788 + $0x18] sm:$0xf]
      %v3796 = vld [vmem:[%s3788 + $0x1c] sm:$0xf]
      %v3797 = vld [vmem:[%s3788 + $0x20] sm:$0xf]
      %v3798 = vld [vmem:[%s3788 + $0x24] sm:$0xf]
      %v3799 = vld [vmem:[%s3788 + $0x28] sm:$0xf]
      %v3800 = vld [vmem:[%s3788 + $0x2c] sm:$0xf]
      %v3801 = vld [vmem:[%s3788 + $0x30] sm:$0xf]
      %v3802 = vld [vmem:[%s3788 + $0x34] sm:$0xf]
      %v3803 = vld [vmem:[%s3788 + $0x38] sm:$0xf]
      %v3804 = vld [vmem:[%s3788 + $0x3c] sm:$0xf]
      %v3821 = vunpack.c.l.b16 %v3789
      %v3822 = vunpack.c.l.b16 %v3790
      %v3823 = vunpack.c.l.b16 %v3791
      %v3824 = vunpack.c.l.b16 %v3792
      %v3825 = vunpack.c.l.b16 %v3793
      %v3826 = vunpack.c.l.b16 %v3794
      %v3827 = vunpack.c.l.b16 %v3795
      %v3828 = vunpack.c.l.b16 %v3796
      %v3829 = vunpack.c.l.b16 %v3797
      %v3830 = vunpack.c.l.b16 %v3798
      %v3831 = vunpack.c.l.b16 %v3799
      %v3832 = vunpack.c.l.b16 %v3800
      %v3833 = vunpack.c.l.b16 %v3801
      %v3834 = vunpack.c.l.b16 %v3802
      %v3835 = vunpack.c.l.b16 %v3803
      %v3836 = vunpack.c.l.b16 %v3804
      %v3837 = vpack.c.b16 %v3822, %v3821
      %v3838 = vpack.c.b16 %v3824, %v3823
      %v3839 = vpack.c.b16 %v3826, %v3825
      %v3840 = vpack.c.b16 %v3828, %v3827
      %v3841 = vpack.c.b16 %v3830, %v3829
      %v3842 = vpack.c.b16 %v3832, %v3831
      %v3843 = vpack.c.b16 %v3834, %v3833
      %v3844 = vpack.c.b16 %v3836, %v3835
      %3853 = vmatprep.subr.bf16.mxu0 0
      %3854 = vmatpush1.bf16.msra.mxu0 %v3837
      %3855 = vmatprep.subr.bf16.mxu0 0
      %3856 = vmatpush1.bf16.msra.mxu0 %v3838
      %3857 = vmatprep.subr.bf16.mxu0 0
      %3858 = vmatpush1.bf16.msra.mxu0 %v3839
      %3859 = vmatprep.subr.bf16.mxu0 0
      %3860 = vmatpush1.bf16.msra.mxu0 %v3840
      %3861 = vmatprep.subr.bf16.mxu0 0
      %3862 = vmatpush1.bf16.msra.mxu0 %v3841
      %3863 = vmatprep.subr.bf16.mxu0 0
      %3864 = vmatpush1.bf16.msra.mxu0 %v3842
      %3865 = vmatprep.subr.bf16.mxu0 0
      %3866 = vmatpush1.bf16.msra.mxu0 %v3843
      %3867 = vmatprep.subr.bf16.mxu0 0
      %3868 = vmatpush1.bf16.msra.mxu0 %v3844
      %3869 = vmatprep.subr.bf16.mxu0 0
      %3870 = vmatpush1.bf16.msra.mxu0 0
      %3871 = vmatprep.subr.bf16.mxu0 0
      %3872 = vmatpush1.bf16.msra.mxu0 0
      %3873 = vmatprep.subr.bf16.mxu0 0
      %3874 = vmatpush1.bf16.msra.mxu0 0
      %3875 = vmatprep.subr.bf16.mxu0 0
      %3876 = vmatpush1.bf16.msra.mxu0 0
      %3877 = vmatprep.subr.bf16.mxu0 0
      %3878 = vmatpush1.bf16.msra.mxu0 0
      %3879 = vmatprep.subr.bf16.mxu0 0
      %3880 = vmatpush1.bf16.msra.mxu0 0
      %3881 = vmatprep.subr.bf16.mxu0 0
      %3882 = vmatpush1.bf16.msra.mxu0 0
      %3883 = vmatprep.subr.bf16.mxu0 0
      %3884 = vmatpush1.bf16.msra.mxu0 0
      %3885 = vmatprep.mubr.bf16.mxu0 0
      %3886 = vmatmul.mubr.bf16.gmra.mrb[0].mxu0 %v3784
      %v3887 = vpop.f32.mrb[0].mxu0
      %v3888 = vadd.f32 0.0, %v3887
      %v3889 = vpop.f32.mrb[0].mxu0
      %v3890 = vpop.f32.mrb[0].mxu0
      %v3891 = vadd.f32 0.0, %v3890
      %v3892 = vpop.f32.mrb[0].mxu0
      %3893 = vmatprep.mubr.bf16.mxu0 0
      %3894 = vmatmul.mubr.bf16.gmra.mrb[0].mxu0 %v3785
      %v3895 = vpop.f32.mrb[0].mxu0
      %v3896 = vadd.f32 0.0, %v3895
      %v3897 = vpop.f32.mrb[0].mxu0
      %v3898 = vpop.f32.mrb[0].mxu0
      %v3899 = vadd.f32 0.0, %v3898
      %v3900 = vpop.f32.mrb[0].mxu0
      %3901 = vmatprep.mubr.bf16.mxu0 0
      %3902 = vmatmul.mubr.bf16.gmra.mrb[0].mxu0 %v3786
      %v3903 = vpop.f32.mrb[0].mxu0
      %v3904 = vadd.f32 0.0, %v3903
      %v3905 = vpop.f32.mrb[0].mxu0
      %v3906 = vpop.f32.mrb[0].mxu0
      %v3907 = vadd.f32 0.0, %v3906
      %v3908 = vpop.f32.mrb[0].mxu0
      %3909 = vmatprep.mubr.bf16.mxu0 0
      %3910 = vmatmul.mubr.bf16.gmra.mrb[0].mxu0 %v3787
      %v3911 = vpop.f32.mrb[0].mxu0
      %v3912 = vadd.f32 0.0, %v3911
      %v3913 = vpop.f32.mrb[0].mxu0
      %v3914 = vpop.f32.mrb[0].mxu0
      %v3915 = vadd.f32 0.0, %v3914
      %v3916 = vpop.f32.mrb[0].mxu0
      %3917 = vdwg.mxu0
      %v3918 = vadd.f32 %v3768, %v3888
      %v3919 = vadd.f32 %v3769, %v3891
      %v3920 = vadd.f32 %v3770, %v3896
      %v3921 = vadd.f32 %v3771, %v3899
      %v3922 = vadd.f32 %v3772, %v3904
      %v3923 = vadd.f32 %v3773, %v3907
      %v3924 = vadd.f32 %v3774, %v3912
      %v3925 = vadd.f32 %v3775, %v3915
      %v3926 = vld [vmem:[%s3325 + $0x4] sm:$0xff]
      %v3927 = vld [vmem:[%s3325 + $0x14] sm:$0xff]
      %v3928 = vld [vmem:[%s3325 + $0x24] sm:$0xff]
      %v3929 = vld [vmem:[%s3325 + $0x34] sm:$0xff]
      %v3930 = vld [vmem:[%s3325 + $0x44] sm:$0xff]
      %v3931 = vld [vmem:[%s3325 + $0x54] sm:$0xff]
      %v3932 = vld [vmem:[%s3325 + $0x64] sm:$0xff]
      %v3933 = vld [vmem:[%s3325 + $0x74] sm:$0xff]
      %v3934 = vpack.c.bf16 %v3927, %v3926
      %v3935 = vpack.c.bf16 %v3929, %v3928
      %v3936 = vpack.c.bf16 %v3931, %v3930
      %v3937 = vpack.c.bf16 %v3933, %v3932
      %s3938 = scalar_lea.vmem %s2, 1536
      %v3939 = vld [vmem:[%s3938] sm:$0xf]
      %v3940 = vld [vmem:[%s3938 + $0x4] sm:$0xf]
      %v3941 = vld [vmem:[%s3938 + $0x8] sm:$0xf]
      %v3942 = vld [vmem:[%s3938 + $0xc] sm:$0xf]
      %v3943 = vld [vmem:[%s3938 + $0x10] sm:$0xf]
      %v3944 = vld [vmem:[%s3938 + $0x14] sm:$0xf]
      %v3945 = vld [vmem:[%s3938 + $0x18] sm:$0xf]
      %v3946 = vld [vmem:[%s3938 + $0x1c] sm:$0xf]
      %v3947 = vld [vmem:[%s3938 + $0x20] sm:$0xf]
      %v3948 = vld [vmem:[%s3938 + $0x24] sm:$0xf]
      %v3949 = vld [vmem:[%s3938 + $0x28] sm:$0xf]
      %v3950 = vld [vmem:[%s3938 + $0x2c] sm:$0xf]
      %v3951 = vld [vmem:[%s3938 + $0x30] sm:$0xf]
      %v3952 = vld [vmem:[%s3938 + $0x34] sm:$0xf]
      %v3953 = vld [vmem:[%s3938 + $0x38] sm:$0xf]
      %v3954 = vld [vmem:[%s3938 + $0x3c] sm:$0xf]
      %v3971 = vunpack.c.l.b16 %v3939
      %v3972 = vunpack.c.l.b16 %v3940
      %v3973 = vunpack.c.l.b16 %v3941
      %v3974 = vunpack.c.l.b16 %v3942
      %v3975 = vunpack.c.l.b16 %v3943
      %v3976 = vunpack.c.l.b16 %v3944
      %v3977 = vunpack.c.l.b16 %v3945
      %v3978 = vunpack.c.l.b16 %v3946
      %v3979 = vunpack.c.l.b16 %v3947
      %v3980 = vunpack.c.l.b16 %v3948
      %v3981 = vunpack.c.l.b16 %v3949
      %v3982 = vunpack.c.l.b16 %v3950
      %v3983 = vunpack.c.l.b16 %v3951
      %v3984 = vunpack.c.l.b16 %v3952
      %v3985 = vunpack.c.l.b16 %v3953
      %v3986 = vunpack.c.l.b16 %v3954
      %v3987 = vpack.c.b16 %v3972, %v3971
      %v3988 = vpack.c.b16 %v3974, %v3973
      %v3989 = vpack.c.b16 %v3976, %v3975
      %v3990 = vpack.c.b16 %v3978, %v3977
      %v3991 = vpack.c.b16 %v3980, %v3979
      %v3992 = vpack.c.b16 %v3982, %v3981
      %v3993 = vpack.c.b16 %v3984, %v3983
      %v3994 = vpack.c.b16 %v3986, %v3985
      %4003 = vmatprep.subr.bf16.mxu0 0
      %4004 = vmatpush1.bf16.msra.mxu0 %v3987
      %4005 = vmatprep.subr.bf16.mxu0 0
      %4006 = vmatpush1.bf16.msra.mxu0 %v3988
      %4007 = vmatprep.subr.bf16.mxu0 0
      %4008 = vmatpush1.bf16.msra.mxu0 %v3989
      %4009 = vmatprep.subr.bf16.mxu0 0
      %4010 = vmatpush1.bf16.msra.mxu0 %v3990
      %4011 = vmatprep.subr.bf16.mxu0 0
      %4012 = vmatpush1.bf16.msra.mxu0 %v3991
      %4013 = vmatprep.subr.bf16.mxu0 0
      %4014 = vmatpush1.bf16.msra.mxu0 %v3992
      %4015 = vmatprep.subr.bf16.mxu0 0
      %4016 = vmatpush1.bf16.msra.mxu0 %v3993
      %4017 = vmatprep.subr.bf16.mxu0 0
      %4018 = vmatpush1.bf16.msra.mxu0 %v3994
      %4019 = vmatprep.subr.bf16.mxu0 0
      %4020 = vmatpush1.bf16.msra.mxu0 0
      %4021 = vmatprep.subr.bf16.mxu0 0
      %4022 = vmatpush1.bf16.msra.mxu0 0
      %4023 = vmatprep.subr.bf16.mxu0 0
      %4024 = vmatpush1.bf16.msra.mxu0 0
      %4025 = vmatprep.subr.bf16.mxu0 0
      %4026 = vmatpush1.bf16.msra.mxu0 0
      %4027 = vmatprep.subr.bf16.mxu0 0
      %4028 = vmatpush1.bf16.msra.mxu0 0
      %4029 = vmatprep.subr.bf16.mxu0 0
      %4030 = vmatpush1.bf16.msra.mxu0 0
      %4031 = vmatprep.subr.bf16.mxu0 0
      %4032 = vmatpush1.bf16.msra.mxu0 0
      %4033 = vmatprep.subr.bf16.mxu0 0
      %4034 = vmatpush1.bf16.msra.mxu0 0
      %4035 = vmatprep.mubr.bf16.mxu0 0
      %4036 = vmatmul.mubr.bf16.gmra.mrb[0].mxu0 %v3934
      %v4037 = vpop.f32.mrb[0].mxu0
      %v4038 = vadd.f32 0.0, %v4037
      %v4039 = vpop.f32.mrb[0].mxu0
      %v4040 = vpop.f32.mrb[0].mxu0
      %v4041 = vadd.f32 0.0, %v4040
      %v4042 = vpop.f32.mrb[0].mxu0
      %4043 = vmatprep.mubr.bf16.mxu0 0
      %4044 = vmatmul.mubr.bf16.gmra.mrb[0].mxu0 %v3935
      %v4045 = vpop.f32.mrb[0].mxu0
      %v4046 = vadd.f32 0.0, %v4045
      %v4047 = vpop.f32.mrb[0].mxu0
      %v4048 = vpop.f32.mrb[0].mxu0
      %v4049 = vadd.f32 0.0, %v4048
      %v4050 = vpop.f32.mrb[0].mxu0
      %4051 = vmatprep.mubr.bf16.mxu0 0
      %4052 = vmatmul.mubr.bf16.gmra.mrb[0].mxu0 %v3936
      %v4053 = vpop.f32.mrb[0].mxu0
      %v4054 = vadd.f32 0.0, %v4053
      %v4055 = vpop.f32.mrb[0].mxu0
      %v4056 = vpop.f32.mrb[0].mxu0
      %v4057 = vadd.f32 0.0, %v4056
      %v4058 = vpop.f32.mrb[0].mxu0
      %4059 = vmatprep.mubr.bf16.mxu0 0
      %4060 = vmatmul.mubr.bf16.gmra.mrb[0].mxu0 %v3937
      %v4061 = vpop.f32.mrb[0].mxu0
      %v4062 = vadd.f32 0.0, %v4061
      %v4063 = vpop.f32.mrb[0].mxu0
      %v4064 = vpop.f32.mrb[0].mxu0
      %v4065 = vadd.f32 0.0, %v4064
      %v4066 = vpop.f32.mrb[0].mxu0
      %4067 = vdwg.mxu0
      %v4068 = vadd.f32 %v3918, %v4038
      %v4069 = vadd.f32 %v3919, %v4041
      %v4070 = vadd.f32 %v3920, %v4046
      %v4071 = vadd.f32 %v3921, %v4049
      %v4072 = vadd.f32 %v3922, %v4054
      %v4073 = vadd.f32 %v3923, %v4057
      %v4074 = vadd.f32 %v3924, %v4062
      %v4075 = vadd.f32 %v3925, %v4065
      %v4076 = vld [vmem:[%s3] sm:$0x1]
      %v4078 = vlaneseq
      %v4079 = vshrl.u32 %v4078, 7
      %v4080 = vsub.s32 0, %v4079
      %v4081 = vrot.slane %v4076, %v4080
      %v4083 = vadd.f32 %v4068, %v4081
      %v4084 = vadd.f32 %v4069, %v4081
      %v4085 = vadd.f32 %v4070, %v4081
      %v4086 = vadd.f32 %v4071, %v4081
      %v4087 = vadd.f32 %v4072, %v4081
      %v4088 = vadd.f32 %v4073, %v4081
      %v4089 = vadd.f32 %v4074, %v4081
      %v4090 = vadd.f32 %v4075, %v4081
      %v4091 = vmax.f32 %v4083, 0.0
      %v4092 = vmax.f32 %v4084, 0.0
      %v4093 = vmax.f32 %v4085, 0.0
      %v4094 = vmax.f32 %v4086, 0.0
      %v4095 = vmax.f32 %v4087, 0.0
      %v4096 = vmax.f32 %v4088, 0.0
      %v4097 = vmax.f32 %v4089, 0.0
      %v4098 = vmax.f32 %v4090, 0.0
      %v4099 = vmax.f32 %v4091, %v4092
      %v4100 = vmax.f32 %v4093, %v4094
      %v4101 = vmax.f32 %v4095, %v4096
      %v4102 = vmax.f32 %v4097, %v4098
      %v4103 = vpack.c.bf16 %v4099, %v4099
      %v4104 = vpack.c.bf16 %v4100, %v4100
      %v4105 = vpack.c.bf16 %v4101, %v4101
      %v4106 = vpack.c.bf16 %v4102, %v4102
      %4107 = vst [vmem:[%s217] sm:$0xf] %v4103
      %4108 = vst [vmem:[%s217 + $0x4] sm:$0xf] %v4104
      %4109 = vst [vmem:[%s217 + $0x8] sm:$0xf] %v4105
      %4110 = vst [vmem:[%s217 + $0xc] sm:$0xf] %v4106
      %p4111 = scmp.lt.s32.totalorder %s15, 1
      %s4112 = scalar_select %p4111, %s15, 1
      %s4113 = smul.addr %s4112, 4
      %s4114 = smul.addr %s4113, 4
      %s4115 = scalar_lea.vmem %s4, %s4114
      // Predicated region
      $region37: #{net_forward.4} parent=35 // pred_check
        %p4116 = pneg %p127
      $region38: #{net_forward.4} parent=35 // pred_check_branch
        %4118 = sbr.rel (%p4116) target = $region40
      $region39: #{net_forward.4} parent=35 // pred_region
        _
      $region40: #{net_forward.4} parent=35 // pred_fallthru
        _
    $region36: #{net_forward.4} parent=5 // pred_fallthru
      _
    %p4119 = scmp.le.s32.totalorder 2, %s10
    // Predicated region
    $region41: #{net_forward.4} parent=5 // pred_check
      %p4120 = pneg %p4119
    $region42: #{net_forward.4} parent=5 // pred_check_branch
      %4122 = sbr.rel (%p4120) target = $region44
    $region43: #{net_forward.4} parent=5 // pred_region
      %s4123 = ssub.s32 %s10, 2
      // Predicated region
      $region45: #{net_forward.4} parent=43 // pred_check
        %p4124 = pneg %p133
      $region46: #{net_forward.4} parent=43 // pred_check_branch
        %4126 = sbr.rel (%p4124) target = $region48
      $region47: #{net_forward.4} parent=43 // pred_region
        %p4127 = scmp.lt.s32.totalorder %s16, 1
        %s4128 = scalar_select %p4127, %s16, 1
        %s4129 = smul.addr %s4128, 4
        %s4130 = smul.addr %s4129, 4
        %s4131 = scalar_lea.vmem %s4, %s4130
      $region48: #{net_forward.4} parent=43 // pred_fallthru
        _
    $region44: #{net_forward.4} parent=5 // pred_fallthru
      _
  $region6: #{net_forward.4} parent=0 // loop_footer
    %s14 = sadd.s32 1, %s10
  $region7: #{net_forward.4} parent=0 // loop_footer_branch
    %9 = sbr.rel target = $region3
  $region8: #{net_forward.4} parent=0 // loop_exit
    _

// kernel: net_forward.5
$region0: #{net_forward.5}
  #allocation0 [shape = 'u32[]', space=smem, size = 0x4, offset = 0x4, fixed_abs, tag = 'smem constant byte address 0x4 - core index']
  #allocation1 [shape = 'u32[144,128]{1,0:T(1,128)}', space=vmem, size = 0x12000, scoped, tag = 'internal scratch']
  %s0 = inlined_call_operand.vmem [shape: bf16[2,2048], index: 0, kind: input, shape index: {}]
  %s1 = inlined_call_operand.vmem [shape: bf16[2,2048], index: 1, kind: input, shape index: {}]
  %s2 = inlined_call_operand.vmem [shape: bf16[2048,512], index: 2, kind: input, shape index: {}]
  %s3 = inlined_call_operand.vmem [shape: f32[1,512], index: 3, kind: input, shape index: {}]
  %s4 = inlined_call_operand.vmem [shape: bf16[512,128], index: 4, kind: input, shape index: {}]
  %s5 = inlined_call_operand.vmem [shape: f32[1,128], index: 5, kind: input, shape index: {}]
  %s6 = inlined_call_operand.hbm [shape: f32[2,128], index: 6, kind: output, shape index: {}]
  %s7 = sld [smem:[#allocation0]]
  $region34: #{net_forward.5} parent=0
    _
  %s9 = ssub.s32 1, %s7
  %s10 = scalar_select 0, %s9, %s7
  $region1: #{net_forward.5} parent=0
    #allocation2 [shape = 'u8[1024]{0}', space=vmem, size = 0x400, scoped, tag = 'output window, operand 0, single buffered']
    #allocation3 [shape = 's32[1]{0}', space=sflag, size = 0x4, scoped, tag = 'scoped memory for net_forward.5']
    %11 = vsyncpa [#allocation3], 0
    // Predicated region
    $region2: #{net_forward.5} parent=1 // pred_check
      _
    $region3: #{net_forward.5} parent=1 // pred_check_branch
      %13 = sbr.rel (0) target = $region5
    $region4: #{net_forward.5} parent=1 // pred_region
      _
    $region5: #{net_forward.5} parent=1 // pred_fallthru
      _
    // Predicated region
    $region6: #{net_forward.5} parent=1 // pred_check
      _
    $region7: #{net_forward.5} parent=1 // pred_check_branch
      %15 = sbr.rel (0) target = $region9
    $region8: #{net_forward.5} parent=1 // pred_region
      _
    $region9: #{net_forward.5} parent=1 // pred_fallthru
      _
    // Predicated region
    $region10: #{net_forward.5} parent=1 // pred_check
      _
    $region11: #{net_forward.5} parent=1 // pred_check_branch
      %17 = sbr.rel (0) target = $region13
    $region12: #{net_forward.5} parent=1 // pred_region
      _
    $region13: #{net_forward.5} parent=1 // pred_fallthru
      _
    // Predicated region
    $region14: #{net_forward.5} parent=1 // pred_check
      _
    $region15: #{net_forward.5} parent=1 // pred_check_branch
      %19 = sbr.rel (0) target = $region17
    $region16: #{net_forward.5} parent=1 // pred_region
      _
    $region17: #{net_forward.5} parent=1 // pred_fallthru
      _
    // Predicated region
    $region18: #{net_forward.5} parent=1 // pred_check
      _
    $region19: #{net_forward.5} parent=1 // pred_check_branch
      %21 = sbr.rel (0) target = $region21
    $region20: #{net_forward.5} parent=1 // pred_region
      _
    $region21: #{net_forward.5} parent=1 // pred_fallthru
      _
    // Predicated region
    $region22: #{net_forward.5} parent=1 // pred_check
      _
    $region23: #{net_forward.5} parent=1 // pred_check_branch
      %23 = sbr.rel (0) target = $region25
    $region24: #{net_forward.5} parent=1 // pred_region
      _
    $region25: #{net_forward.5} parent=1 // pred_fallthru
      _
    %v25 = vld [vmem:[%s0] sm:$0xff]
    %v26 = vld [vmem:[%s0 + $0x8] sm:$0xff]
    %v27 = vld [vmem:[%s1] sm:$0xff]
    %v28 = vld [vmem:[%s1 + $0x8] sm:$0xff]
    %v29 = vmax.bf16 %v25, %v27
    %v30 = vmax.bf16 %v26, %v28
    %v31 = vld [vmem:[%s2] sm:$0xff]
    %v32 = vld [vmem:[%s2 + $0x8] sm:$0xff]
    %v33 = vld [vmem:[%s2 + $0x10] sm:$0xff]
    %v34 = vld [vmem:[%s2 + $0x18] sm:$0xff]
    %v35 = vld [vmem:[%s2 + $0x20] sm:$0xff]
    %v36 = vld [vmem:[%s2 + $0x28] sm:$0xff]
    %v37 = vld [vmem:[%s2 + $0x30] sm:$0xff]
    %v38 = vld [vmem:[%s2 + $0x38] sm:$0xff]
    %v39 = vld [vmem:[%s2 + $0x40] sm:$0xff]
    %v40 = vld [vmem:[%s2 + $0x48] sm:$0xff]
    %v41 = vld [vmem:[%s2 + $0x50] sm:$0xff]
    %v42 = vld [vmem:[%s2 + $0x58] sm:$0xff]
    %v43 = vld [vmem:[%s2 + $0x60] sm:$0xff]
    %v44 = vld [vmem:[%s2 + $0x68] sm:$0xff]
    %v45 = vld [vmem:[%s2 + $0x70] sm:$0xff]
    %v46 = vld [vmem:[%s2 + $0x78] sm:$0xff]
    %v47 = vld [vmem:[%s2 + $0x80] sm:$0xff]
    %v48 = vld [vmem:[%s2 + $0x88] sm:$0xff]
    %v49 = vld [vmem:[%s2 + $0x90] sm:$0xff]
    %v50 = vld [vmem:[%s2 + $0x98] sm:$0xff]
    %v51 = vld [vmem:[%s2 + $0xa0] sm:$0xff]
    %v52 = vld [vmem:[%s2 + $0xa8] sm:$0xff]
    %v53 = vld [vmem:[%s2 + $0xb0] sm:$0xff]
    %v54 = vld [vmem:[%s2 + $0xb8] sm:$0xff]
    %v55 = vld [vmem:[%s2 + $0xc0] sm:$0xff]
    %v56 = vld [vmem:[%s2 + $0xc8] sm:$0xff]
    %v57 = vld [vmem:[%s2 + $0xd0] sm:$0xff]
    %v58 = vld [vmem:[%s2 + $0xd8] sm:$0xff]
    %v59 = vld [vmem:[%s2 + $0xe0] sm:$0xff]
    %v60 = vld [vmem:[%s2 + $0xe8] sm:$0xff]
    %v61 = vld [vmem:[%s2 + $0xf0] sm:$0xff]
    %v62 = vld [vmem:[%s2 + $0xf8] sm:$0xff]
    %v63 = vld [vmem:[%s2 + $0x100] sm:$0xff]
    %v64 = vld [vmem:[%s2 + $0x108] sm:$0xff]
    %v65 = vld [vmem:[%s2 + $0x110] sm:$0xff]
    %v66 = vld [vmem:[%s2 + $0x118] sm:$0xff]
    %v67 = vld [vmem:[%s2 + $0x120] sm:$0xff]
    %v68 = vld [vmem:[%s2 + $0x128] sm:$0xff]
    %v69 = vld [vmem:[%s2 + $0x130] sm:$0xff]
    %v70 = vld [vmem:[%s2 + $0x138] sm:$0xff]
    %v71 = vld [vmem:[%s2 + $0x140] sm:$0xff]
    %v72 = vld [vmem:[%s2 + $0x148] sm:$0xff]
    %v73 = vld [vmem:[%s2 + $0x150] sm:$0xff]
    %v74 = vld [vmem:[%s2 + $0x158] sm:$0xff]
    %v75 = vld [vmem:[%s2 + $0x160] sm:$0xff]
    %v76 = vld [vmem:[%s2 + $0x168] sm:$0xff]
    %v77 = vld [vmem:[%s2 + $0x170] sm:$0xff]
    %v78 = vld [vmem:[%s2 + $0x178] sm:$0xff]
    %v79 = vld [vmem:[%s2 + $0x180] sm:$0xff]
    %v80 = vld [vmem:[%s2 + $0x188] sm:$0xff]
    %v81 = vld [vmem:[%s2 + $0x190] sm:$0xff]
    %v82 = vld [vmem:[%s2 + $0x198] sm:$0xff]
    %v83 = vld [vmem:[%s2 + $0x1a0] sm:$0xff]
    %v84 = vld [vmem:[%s2 + $0x1a8] sm:$0xff]
    %v85 = vld [vmem:[%s2 + $0x1b0] sm:$0xff]
    %v86 = vld [vmem:[%s2 + $0x1b8] sm:$0xff]
    %v87 = vld [vmem:[%s2 + $0x1c0] sm:$0xff]
    %v88 = vld [vmem:[%s2 + $0x1c8] sm:$0xff]
    %v89 = vld [vmem:[%s2 + $0x1d0] sm:$0xff]
    %v90 = vld [vmem:[%s2 + $0x1d8] sm:$0xff]
    %v91 = vld [vmem:[%s2 + $0x1e0] sm:$0xff]
    %v92 = vld [vmem:[%s2 + $0x1e8] sm:$0xff]
    %v93 = vld [vmem:[%s2 + $0x1f0] sm:$0xff]
    %v94 = vld [vmem:[%s2 + $0x1f8] sm:$0xff]
    %v95 = vld [vmem:[%s2 + $0x200] sm:$0xff]
    %v96 = vld [vmem:[%s2 + $0x208] sm:$0xff]
    %v97 = vld [vmem:[%s2 + $0x210] sm:$0xff]
    %v98 = vld [vmem:[%s2 + $0x218] sm:$0xff]
    %v99 = vld [vmem:[%s2 + $0x220] sm:$0xff]
    %v100 = vld [vmem:[%s2 + $0x228] sm:$0xff]
    %v101 = vld [vmem:[%s2 + $0x230] sm:$0xff]
    %v102 = vld [vmem:[%s2 + $0x238] sm:$0xff]
    %v103 = vld [vmem:[%s2 + $0x240] sm:$0xff]
    %v104 = vld [vmem:[%s2 + $0x248] sm:$0xff]
    %v105 = vld [vmem:[%s2 + $0x250] sm:$0xff]
    %v106 = vld [vmem:[%s2 + $0x258] sm:$0xff]
    %v107 = vld [vmem:[%s2 + $0x260] sm:$0xff]
    %v108 = vld [vmem:[%s2 + $0x268] sm:$0xff]
    %v109 = vld [vmem:[%s2 + $0x270] sm:$0xff]
    %v110 = vld [vmem:[%s2 + $0x278] sm:$0xff]
    %v111 = vld [vmem:[%s2 + $0x280] sm:$0xff]
    %v112 = vld [vmem:[%s2 + $0x288] sm:$0xff]
    %v113 = vld [vmem:[%s2 + $0x290] sm:$0xff]
    %v114 = vld [vmem:[%s2 + $0x298] sm:$0xff]
    %v115 = vld [vmem:[%s2 + $0x2a0] sm:$0xff]
    %v116 = vld [vmem:[%s2 + $0x2a8] sm:$0xff]
    %v117 = vld [vmem:[%s2 + $0x2b0] sm:$0xff]
    %v118 = vld [vmem:[%s2 + $0x2b8] sm:$0xff]
    %v119 = vld [vmem:[%s2 + $0x2c0] sm:$0xff]
    %v120 = vld [vmem:[%s2 + $0x2c8] sm:$0xff]
    %v121 = vld [vmem:[%s2 + $0x2d0] sm:$0xff]
    %v122 = vld [vmem:[%s2 + $0x2d8] sm:$0xff]
    %v123 = vld [vmem:[%s2 + $0x2e0] sm:$0xff]
    %v124 = vld [vmem:[%s2 + $0x2e8] sm:$0xff]
    %v125 = vld [vmem:[%s2 + $0x2f0] sm:$0xff]
    %v126 = vld [vmem:[%s2 + $0x2f8] sm:$0xff]
    %v127 = vld [vmem:[%s2 + $0x300] sm:$0xff]
    %v128 = vld [vmem:[%s2 + $0x308] sm:$0xff]
    %v129 = vld [vmem:[%s2 + $0x310] sm:$0xff]
    %v130 = vld [vmem:[%s2 + $0x318] sm:$0xff]
    %v131 = vld [vmem:[%s2 + $0x320] sm:$0xff]
    %v132 = vld [vmem:[%s2 + $0x328] sm:$0xff]
    %v133 = vld [vmem:[%s2 + $0x330] sm:$0xff]
    %v134 = vld [vmem:[%s2 + $0x338] sm:$0xff]
    %v135 = vld [vmem:[%s2 + $0x340] sm:$0xff]
    %v136 = vld [vmem:[%s2 + $0x348] sm:$0xff]
    %v137 = vld [vmem:[%s2 + $0x350] sm:$0xff]
    %v138 = vld [vmem:[%s2 + $0x358] sm:$0xff]
    %v139 = vld [vmem:[%s2 + $0x360] sm:$0xff]
    %v140 = vld [vmem:[%s2 + $0x368] sm:$0xff]
    %v141 = vld [vmem:[%s2 + $0x370] sm:$0xff]
    %v142 = vld [vmem:[%s2 + $0x378] sm:$0xff]
    %v143 = vld [vmem:[%s2 + $0x380] sm:$0xff]
    %v144 = vld [vmem:[%s2 + $0x388] sm:$0xff]
    %v145 = vld [vmem:[%s2 + $0x390] sm:$0xff]
    %v146 = vld [vmem:[%s2 + $0x398] sm:$0xff]
    %v147 = vld [vmem:[%s2 + $0x3a0] sm:$0xff]
    %v148 = vld [vmem:[%s2 + $0x3a8] sm:$0xff]
    %v149 = vld [vmem:[%s2 + $0x3b0] sm:$0xff]
    %v150 = vld [vmem:[%s2 + $0x3b8] sm:$0xff]
    %v151 = vld [vmem:[%s2 + $0x3c0] sm:$0xff]
    %v152 = vld [vmem:[%s2 + $0x3c8] sm:$0xff]
    %v153 = vld [vmem:[%s2 + $0x3d0] sm:$0xff]
    %v154 = vld [vmem:[%s2 + $0x3d8] sm:$0xff]
    %v155 = vld [vmem:[%s2 + $0x3e0] sm:$0xff]
    %v156 = vld [vmem:[%s2 + $0x3e8] sm:$0xff]
    %v157 = vld [vmem:[%s2 + $0x3f0] sm:$0xff]
    %v158 = vld [vmem:[%s2 + $0x3f8] sm:$0xff]
    %v159 = vld [vmem:[%s2 + $0x400] sm:$0xff]
    %v160 = vld [vmem:[%s2 + $0x408] sm:$0xff]
    %v161 = vld [vmem:[%s2 + $0x410] sm:$0xff]
    %v162 = vld [vmem:[%s2 + $0x418] sm:$0xff]
    %v163 = vld [vmem:[%s2 + $0x420] sm:$0xff]
    %v164 = vld [vmem:[%s2 + $0x428] sm:$0xff]
    %v165 = vld [vmem:[%s2 + $0x430] sm:$0xff]
    %v166 = vld [vmem:[%s2 + $0x438] sm:$0xff]
    %v167 = vld [vmem:[%s2 + $0x440] sm:$0xff]
    %v168 = vld [vmem:[%s2 + $0x448] sm:$0xff]
    %v169 = vld [vmem:[%s2 + $0x450] sm:$0xff]
    %v170 = vld [vmem:[%s2 + $0x458] sm:$0xff]
    %v171 = vld [vmem:[%s2 + $0x460] sm:$0xff]
    %v172 = vld [vmem:[%s2 + $0x468] sm:$0xff]
    %v173 = vld [vmem:[%s2 + $0x470] sm:$0xff]
    %v174 = vld [vmem:[%s2 + $0x478] sm:$0xff]
    %v175 = vld [vmem:[%s2 + $0x480] sm:$0xff]
    %v176 = vld [vmem:[%s2 + $0x488] sm:$0xff]
    %v177 = vld [vmem:[%s2 + $0x490] sm:$0xff]
    %v178 = vld [vmem:[%s2 + $0x498] sm:$0xff]
    %v179 = vld [vmem:[%s2 + $0x4a0] sm:$0xff]
    %v180 = vld [vmem:[%s2 + $0x4a8] sm:$0xff]
    %v181 = vld [vmem:[%s2 + $0x4b0] sm:$0xff]
    %v182 = vld [vmem:[%s2 + $0x4b8] sm:$0xff]
    %v183 = vld [vmem:[%s2 + $0x4c0] sm:$0xff]
    %v184 = vld [vmem:[%s2 + $0x4c8] sm:$0xff]
    %v185 = vld [vmem:[%s2 + $0x4d0] sm:$0xff]
    %v186 = vld [vmem:[%s2 + $0x4d8] sm:$0xff]
    %v187 = vld [vmem:[%s2 + $0x4e0] sm:$0xff]
    %v188 = vld [vmem:[%s2 + $0x4e8] sm:$0xff]
    %v189 = vld [vmem:[%s2 + $0x4f0] sm:$0xff]
    %v190 = vld [vmem:[%s2 + $0x4f8] sm:$0xff]
    %v191 = vld [vmem:[%s2 + $0x500] sm:$0xff]
    %v192 = vld [vmem:[%s2 + $0x508] sm:$0xff]
    %v193 = vld [vmem:[%s2 + $0x510] sm:$0xff]
    %v194 = vld [vmem:[%s2 + $0x518] sm:$0xff]
    %v195 = vld [vmem:[%s2 + $0x520] sm:$0xff]
    %v196 = vld [vmem:[%s2 + $0x528] sm:$0xff]
    %v197 = vld [vmem:[%s2 + $0x530] sm:$0xff]
    %v198 = vld [vmem:[%s2 + $0x538] sm:$0xff]
    %v199 = vld [vmem:[%s2 + $0x540] sm:$0xff]
    %v200 = vld [vmem:[%s2 + $0x548] sm:$0xff]
    %v201 = vld [vmem:[%s2 + $0x550] sm:$0xff]
    %v202 = vld [vmem:[%s2 + $0x558] sm:$0xff]
    %v203 = vld [vmem:[%s2 + $0x560] sm:$0xff]
    %v204 = vld [vmem:[%s2 + $0x568] sm:$0xff]
    %v205 = vld [vmem:[%s2 + $0x570] sm:$0xff]
    %v206 = vld [vmem:[%s2 + $0x578] sm:$0xff]
    %v207 = vld [vmem:[%s2 + $0x580] sm:$0xff]
    %v208 = vld [vmem:[%s2 + $0x588] sm:$0xff]
    %v209 = vld [vmem:[%s2 + $0x590] sm:$0xff]
    %v210 = vld [vmem:[%s2 + $0x598] sm:$0xff]
    %v211 = vld [vmem:[%s2 + $0x5a0] sm:$0xff]
    %v212 = vld [vmem:[%s2 + $0x5a8] sm:$0xff]
    %v213 = vld [vmem:[%s2 + $0x5b0] sm:$0xff]
    %v214 = vld [vmem:[%s2 + $0x5b8] sm:$0xff]
    %v215 = vld [vmem:[%s2 + $0x5c0] sm:$0xff]
    %v216 = vld [vmem:[%s2 + $0x5c8] sm:$0xff]
    %v217 = vld [vmem:[%s2 + $0x5d0] sm:$0xff]
    %v218 = vld [vmem:[%s2 + $0x5d8] sm:$0xff]
    %v219 = vld [vmem:[%s2 + $0x5e0] sm:$0xff]
    %v220 = vld [vmem:[%s2 + $0x5e8] sm:$0xff]
    %v221 = vld [vmem:[%s2 + $0x5f0] sm:$0xff]
    %v222 = vld [vmem:[%s2 + $0x5f8] sm:$0xff]
    %v223 = vld [vmem:[%s2 + $0x600] sm:$0xff]
    %v224 = vld [vmem:[%s2 + $0x608] sm:$0xff]
    %v225 = vld [vmem:[%s2 + $0x610] sm:$0xff]
    %v226 = vld [vmem:[%s2 + $0x618] sm:$0xff]
    %v227 = vld [vmem:[%s2 + $0x620] sm:$0xff]
    %v228 = vld [vmem:[%s2 + $0x628] sm:$0xff]
    %v229 = vld [vmem:[%s2 + $0x630] sm:$0xff]
    %v230 = vld [vmem:[%s2 + $0x638] sm:$0xff]
    %v231 = vld [vmem:[%s2 + $0x640] sm:$0xff]
    %v232 = vld [vmem:[%s2 + $0x648] sm:$0xff]
    %v233 = vld [vmem:[%s2 + $0x650] sm:$0xff]
    %v234 = vld [vmem:[%s2 + $0x658] sm:$0xff]
    %v235 = vld [vmem:[%s2 + $0x660] sm:$0xff]
    %v236 = vld [vmem:[%s2 + $0x668] sm:$0xff]
    %v237 = vld [vmem:[%s2 + $0x670] sm:$0xff]
    %v238 = vld [vmem:[%s2 + $0x678] sm:$0xff]
    %v239 = vld [vmem:[%s2 + $0x680] sm:$0xff]
    %v240 = vld [vmem:[%s2 + $0x688] sm:$0xff]
    %v241 = vld [vmem:[%s2 + $0x690] sm:$0xff]
    %v242 = vld [vmem:[%s2 + $0x698] sm:$0xff]
    %v243 = vld [vmem:[%s2 + $0x6a0] sm:$0xff]
    %v244 = vld [vmem:[%s2 + $0x6a8] sm:$0xff]
    %v245 = vld [vmem:[%s2 + $0x6b0] sm:$0xff]
    %v246 = vld [vmem:[%s2 + $0x6b8] sm:$0xff]
    %v247 = vld [vmem:[%s2 + $0x6c0] sm:$0xff]
    %v248 = vld [vmem:[%s2 + $0x6c8] sm:$0xff]
    %v249 = vld [vmem:[%s2 + $0x6d0] sm:$0xff]
    %v250 = vld [vmem:[%s2 + $0x6d8] sm:$0xff]
    %v251 = vld [vmem:[%s2 + $0x6e0] sm:$0xff]
    %v252 = vld [vmem:[%s2 + $0x6e8] sm:$0xff]
    %v253 = vld [vmem:[%s2 + $0x6f0] sm:$0xff]
    %v254 = vld [vmem:[%s2 + $0x6f8] sm:$0xff]
    %v255 = vld [vmem:[%s2 + $0x700] sm:$0xff]
    %v256 = vld [vmem:[%s2 + $0x708] sm:$0xff]
    %v257 = vld [vmem:[%s2 + $0x710] sm:$0xff]
    %v258 = vld [vmem:[%s2 + $0x718] sm:$0xff]
    %v259 = vld [vmem:[%s2 + $0x720] sm:$0xff]
    %v260 = vld [vmem:[%s2 + $0x728] sm:$0xff]
    %v261 = vld [vmem:[%s2 + $0x730] sm:$0xff]
    %v262 = vld [vmem:[%s2 + $0x738] sm:$0xff]
    %v263 = vld [vmem:[%s2 + $0x740] sm:$0xff]
    %v264 = vld [vmem:[%s2 + $0x748] sm:$0xff]
    %v265 = vld [vmem:[%s2 + $0x750] sm:$0xff]
    %v266 = vld [vmem:[%s2 + $0x758] sm:$0xff]
    %v267 = vld [vmem:[%s2 + $0x760] sm:$0xff]
    %v268 = vld [vmem:[%s2 + $0x768] sm:$0xff]
    %v269 = vld [vmem:[%s2 + $0x770] sm:$0xff]
    %v270 = vld [vmem:[%s2 + $0x778] sm:$0xff]
    %v271 = vld [vmem:[%s2 + $0x780] sm:$0xff]
    %v272 = vld [vmem:[%s2 + $0x788] sm:$0xff]
    %v273 = vld [vmem:[%s2 + $0x790] sm:$0xff]
    %v274 = vld [vmem:[%s2 + $0x798] sm:$0xff]
    %v275 = vld [vmem:[%s2 + $0x7a0] sm:$0xff]
    %v276 = vld [vmem:[%s2 + $0x7a8] sm:$0xff]
    %v277 = vld [vmem:[%s2 + $0x7b0] sm:$0xff]
    %v278 = vld [vmem:[%s2 + $0x7b8] sm:$0xff]
    %v279 = vld [vmem:[%s2 + $0x7c0] sm:$0xff]
    %v280 = vld [vmem:[%s2 + $0x7c8] sm:$0xff]
    %v281 = vld [vmem:[%s2 + $0x7d0] sm:$0xff]
    %v282 = vld [vmem:[%s2 + $0x7d8] sm:$0xff]
    %v283 = vld [vmem:[%s2 + $0x7e0] sm:$0xff]
    %v284 = vld [vmem:[%s2 + $0x7e8] sm:$0xff]
    %v285 = vld [vmem:[%s2 + $0x7f0] sm:$0xff]
    %v286 = vld [vmem:[%s2 + $0x7f8] sm:$0xff]
    %v287 = vld [vmem:[%s2 + $0x800] sm:$0xff]
    %v288 = vld [vmem:[%s2 + $0x808] sm:$0xff]
    %v289 = vld [vmem:[%s2 + $0x810] sm:$0xff]
    %v290 = vld [vmem:[%s2 + $0x818] sm:$0xff]
    %v291 = vld [vmem:[%s2 + $0x820] sm:$0xff]
    %v292 = vld [vmem:[%s2 + $0x828] sm:$0xff]
    %v293 = vld [vmem:[%s2 + $0x830] sm:$0xff]
    %v294 = vld [vmem:[%s2 + $0x838] sm:$0xff]
    %v295 = vld [vmem:[%s2 + $0x840] sm:$0xff]
    %v296 = vld [vmem:[%s2 + $0x848] sm:$0xff]
    %v297 = vld [vmem:[%s2 + $0x850] sm:$0xff]
    %v298 = vld [vmem:[%s2 + $0x858] sm:$0xff]
    %v299 = vld [vmem:[%s2 + $0x860] sm:$0xff]
    %v300 = vld [vmem:[%s2 + $0x868] sm:$0xff]
    %v301 = vld [vmem:[%s2 + $0x870] sm:$0xff]
    %v302 = vld [vmem:[%s2 + $0x878] sm:$0xff]
    %v303 = vld [vmem:[%s2 + $0x880] sm:$0xff]
    %v304 = vld [vmem:[%s2 + $0x888] sm:$0xff]
    %v305 = vld [vmem:[%s2 + $0x890] sm:$0xff]
    %v306 = vld [vmem:[%s2 + $0x898] sm:$0xff]
    %v307 = vld [vmem:[%s2 + $0x8a0] sm:$0xff]
    %v308 = vld [vmem:[%s2 + $0x8a8] sm:$0xff]
    %v309 = vld [vmem:[%s2 + $0x8b0] sm:$0xff]
    %v310 = vld [vmem:[%s2 + $0x8b8] sm:$0xff]
    %v311 = vld [vmem:[%s2 + $0x8c0] sm:$0xff]
    %v312 = vld [vmem:[%s2 + $0x8c8] sm:$0xff]
    %v313 = vld [vmem:[%s2 + $0x8d0] sm:$0xff]
    %v314 = vld [vmem:[%s2 + $0x8d8] sm:$0xff]
    %v315 = vld [vmem:[%s2 + $0x8e0] sm:$0xff]
    %v316 = vld [vmem:[%s2 + $0x8e8] sm:$0xff]
    %v317 = vld [vmem:[%s2 + $0x8f0] sm:$0xff]
    %v318 = vld [vmem:[%s2 + $0x8f8] sm:$0xff]
    %v319 = vld [vmem:[%s2 + $0x900] sm:$0xff]
    %v320 = vld [vmem:[%s2 + $0x908] sm:$0xff]
    %v321 = vld [vmem:[%s2 + $0x910] sm:$0xff]
    %v322 = vld [vmem:[%s2 + $0x918] sm:$0xff]
    %v323 = vld [vmem:[%s2 + $0x920] sm:$0xff]
    %v324 = vld [vmem:[%s2 + $0x928] sm:$0xff]
    %v325 = vld [vmem:[%s2 + $0x930] sm:$0xff]
    %v326 = vld [vmem:[%s2 + $0x938] sm:$0xff]
    %v327 = vld [vmem:[%s2 + $0x940] sm:$0xff]
    %v328 = vld [vmem:[%s2 + $0x948] sm:$0xff]
    %v329 = vld [vmem:[%s2 + $0x950] sm:$0xff]
    %v330 = vld [vmem:[%s2 + $0x958] sm:$0xff]
    %v331 = vld [vmem:[%s2 + $0x960] sm:$0xff]
    %v332 = vld [vmem:[%s2 + $0x968] sm:$0xff]
    %v333 = vld [vmem:[%s2 + $0x970] sm:$0xff]
    %v334 = vld [vmem:[%s2 + $0x978] sm:$0xff]
    %v335 = vld [vmem:[%s2 + $0x980] sm:$0xff]
    %v336 = vld [vmem:[%s2 + $0x988] sm:$0xff]
    %v337 = vld [vmem:[%s2 + $0x990] sm:$0xff]
    %v338 = vld [vmem:[%s2 + $0x998] sm:$0xff]
    %v339 = vld [vmem:[%s2 + $0x9a0] sm:$0xff]
    %v340 = vld [vmem:[%s2 + $0x9a8] sm:$0xff]
    %v341 = vld [vmem:[%s2 + $0x9b0] sm:$0xff]
    %v342 = vld [vmem:[%s2 + $0x9b8] sm:$0xff]
    %v343 = vld [vmem:[%s2 + $0x9c0] sm:$0xff]
    %v344 = vld [vmem:[%s2 + $0x9c8] sm:$0xff]
    %v345 = vld [vmem:[%s2 + $0x9d0] sm:$0xff]
    %v346 = vld [vmem:[%s2 + $0x9d8] sm:$0xff]
    %v347 = vld [vmem:[%s2 + $0x9e0] sm:$0xff]
    %v348 = vld [vmem:[%s2 + $0x9e8] sm:$0xff]
    %v349 = vld [vmem:[%s2 + $0x9f0] sm:$0xff]
    %v350 = vld [vmem:[%s2 + $0x9f8] sm:$0xff]
    %v351 = vld [vmem:[%s2 + $0xa00] sm:$0xff]
    %v352 = vld [vmem:[%s2 + $0xa08] sm:$0xff]
    %v353 = vld [vmem:[%s2 + $0xa10] sm:$0xff]
    %v354 = vld [vmem:[%s2 + $0xa18] sm:$0xff]
    %v355 = vld [vmem:[%s2 + $0xa20] sm:$0xff]
    %v356 = vld [vmem:[%s2 + $0xa28] sm:$0xff]
    %v357 = vld [vmem:[%s2 + $0xa30] sm:$0xff]
    %v358 = vld [vmem:[%s2 + $0xa38] sm:$0xff]
    %v359 = vld [vmem:[%s2 + $0xa40] sm:$0xff]
    %v360 = vld [vmem:[%s2 + $0xa48] sm:$0xff]
    %v361 = vld [vmem:[%s2 + $0xa50] sm:$0xff]
    %v362 = vld [vmem:[%s2 + $0xa58] sm:$0xff]
    %v363 = vld [vmem:[%s2 + $0xa60] sm:$0xff]
    %v364 = vld [vmem:[%s2 + $0xa68] sm:$0xff]
    %v365 = vld [vmem:[%s2 + $0xa70] sm:$0xff]
    %v366 = vld [vmem:[%s2 + $0xa78] sm:$0xff]
    %v367 = vld [vmem:[%s2 + $0xa80] sm:$0xff]
    %v368 = vld [vmem:[%s2 + $0xa88] sm:$0xff]
    %v369 = vld [vmem:[%s2 + $0xa90] sm:$0xff]
    %v370 = vld [vmem:[%s2 + $0xa98] sm:$0xff]
    %v371 = vld [vmem:[%s2 + $0xaa0] sm:$0xff]
    %v372 = vld [vmem:[%s2 + $0xaa8] sm:$0xff]
    %v373 = vld [vmem:[%s2 + $0xab0] sm:$0xff]
    %v374 = vld [vmem:[%s2 + $0xab8] sm:$0xff]
    %v375 = vld [vmem:[%s2 + $0xac0] sm:$0xff]
    %v376 = vld [vmem:[%s2 + $0xac8] sm:$0xff]
    %v377 = vld [vmem:[%s2 + $0xad0] sm:$0xff]
    %v378 = vld [vmem:[%s2 + $0xad8] sm:$0xff]
    %v379 = vld [vmem:[%s2 + $0xae0] sm:$0xff]
    %v380 = vld [vmem:[%s2 + $0xae8] sm:$0xff]
    %v381 = vld [vmem:[%s2 + $0xaf0] sm:$0xff]
    %v382 = vld [vmem:[%s2 + $0xaf8] sm:$0xff]
    %v383 = vld [vmem:[%s2 + $0xb00] sm:$0xff]
    %v384 = vld [vmem:[%s2 + $0xb08] sm:$0xff]
    %v385 = vld [vmem:[%s2 + $0xb10] sm:$0xff]
    %v386 = vld [vmem:[%s2 + $0xb18] sm:$0xff]
    %v387 = vld [vmem:[%s2 + $0xb20] sm:$0xff]
    %v388 = vld [vmem:[%s2 + $0xb28] sm:$0xff]
    %v389 = vld [vmem:[%s2 + $0xb30] sm:$0xff]
    %v390 = vld [vmem:[%s2 + $0xb38] sm:$0xff]
    %v391 = vld [vmem:[%s2 + $0xb40] sm:$0xff]
    %v392 = vld [vmem:[%s2 + $0xb48] sm:$0xff]
    %v393 = vld [vmem:[%s2 + $0xb50] sm:$0xff]
    %v394 = vld [vmem:[%s2 + $0xb58] sm:$0xff]
    %v395 = vld [vmem:[%s2 + $0xb60] sm:$0xff]
    %v396 = vld [vmem:[%s2 + $0xb68] sm:$0xff]
    %v397 = vld [vmem:[%s2 + $0xb70] sm:$0xff]
    %v398 = vld [vmem:[%s2 + $0xb78] sm:$0xff]
    %v399 = vld [vmem:[%s2 + $0xb80] sm:$0xff]
    %v400 = vld [vmem:[%s2 + $0xb88] sm:$0xff]
    %v401 = vld [vmem:[%s2 + $0xb90] sm:$0xff]
    %v402 = vld [vmem:[%s2 + $0xb98] sm:$0xff]
    %v403 = vld [vmem:[%s2 + $0xba0] sm:$0xff]
    %v404 = vld [vmem:[%s2 + $0xba8] sm:$0xff]
    %v405 = vld [vmem:[%s2 + $0xbb0] sm:$0xff]
    %v406 = vld [vmem:[%s2 + $0xbb8] sm:$0xff]
    %v407 = vld [vmem:[%s2 + $0xbc0] sm:$0xff]
    %v408 = vld [vmem:[%s2 + $0xbc8] sm:$0xff]
    %v409 = vld [vmem:[%s2 + $0xbd0] sm:$0xff]
    %v410 = vld [vmem:[%s2 + $0xbd8] sm:$0xff]
    %v411 = vld [vmem:[%s2 + $0xbe0] sm:$0xff]
    %v412 = vld [vmem:[%s2 + $0xbe8] sm:$0xff]
    %v413 = vld [vmem:[%s2 + $0xbf0] sm:$0xff]
    %v414 = vld [vmem:[%s2 + $0xbf8] sm:$0xff]
    %v415 = vld [vmem:[%s2 + $0xc00] sm:$0xff]
    %v416 = vld [vmem:[%s2 + $0xc08] sm:$0xff]
    %v417 = vld [vmem:[%s2 + $0xc10] sm:$0xff]
    %v418 = vld [vmem:[%s2 + $0xc18] sm:$0xff]
    %v419 = vld [vmem:[%s2 + $0xc20] sm:$0xff]
    %v420 = vld [vmem:[%s2 + $0xc28] sm:$0xff]
    %v421 = vld [vmem:[%s2 + $0xc30] sm:$0xff]
    %v422 = vld [vmem:[%s2 + $0xc38] sm:$0xff]
    %v423 = vld [vmem:[%s2 + $0xc40] sm:$0xff]
    %v424 = vld [vmem:[%s2 + $0xc48] sm:$0xff]
    %v425 = vld [vmem:[%s2 + $0xc50] sm:$0xff]
    %v426 = vld [vmem:[%s2 + $0xc58] sm:$0xff]
    %v427 = vld [vmem:[%s2 + $0xc60] sm:$0xff]
    %v428 = vld [vmem:[%s2 + $0xc68] sm:$0xff]
    %v429 = vld [vmem:[%s2 + $0xc70] sm:$0xff]
    %v430 = vld [vmem:[%s2 + $0xc78] sm:$0xff]
    %v431 = vld [vmem:[%s2 + $0xc80] sm:$0xff]
    %v432 = vld [vmem:[%s2 + $0xc88] sm:$0xff]
    %v433 = vld [vmem:[%s2 + $0xc90] sm:$0xff]
    %v434 = vld [vmem:[%s2 + $0xc98] sm:$0xff]
    %v435 = vld [vmem:[%s2 + $0xca0] sm:$0xff]
    %v436 = vld [vmem:[%s2 + $0xca8] sm:$0xff]
    %v437 = vld [vmem:[%s2 + $0xcb0] sm:$0xff]
    %v438 = vld [vmem:[%s2 + $0xcb8] sm:$0xff]
    %v439 = vld [vmem:[%s2 + $0xcc0] sm:$0xff]
    %v440 = vld [vmem:[%s2 + $0xcc8] sm:$0xff]
    %v441 = vld [vmem:[%s2 + $0xcd0] sm:$0xff]
    %v442 = vld [vmem:[%s2 + $0xcd8] sm:$0xff]
    %v443 = vld [vmem:[%s2 + $0xce0] sm:$0xff]
    %v444 = vld [vmem:[%s2 + $0xce8] sm:$0xff]
    %v445 = vld [vmem:[%s2 + $0xcf0] sm:$0xff]
    %v446 = vld [vmem:[%s2 + $0xcf8] sm:$0xff]
    %v447 = vld [vmem:[%s2 + $0xd00] sm:$0xff]
    %v448 = vld [vmem:[%s2 + $0xd08] sm:$0xff]
    %v449 = vld [vmem:[%s2 + $0xd10] sm:$0xff]
    %v450 = vld [vmem:[%s2 + $0xd18] sm:$0xff]
    %v451 = vld [vmem:[%s2 + $0xd20] sm:$0xff]
    %v452 = vld [vmem:[%s2 + $0xd28] sm:$0xff]
    %v453 = vld [vmem:[%s2 + $0xd30] sm:$0xff]
    %v454 = vld [vmem:[%s2 + $0xd38] sm:$0xff]
    %v455 = vld [vmem:[%s2 + $0xd40] sm:$0xff]
    %v456 = vld [vmem:[%s2 + $0xd48] sm:$0xff]
    %v457 = vld [vmem:[%s2 + $0xd50] sm:$0xff]
    %v458 = vld [vmem:[%s2 + $0xd58] sm:$0xff]
    %v459 = vld [vmem:[%s2 + $0xd60] sm:$0xff]
    %v460 = vld [vmem:[%s2 + $0xd68] sm:$0xff]
    %v461 = vld [vmem:[%s2 + $0xd70] sm:$0xff]
    %v462 = vld [vmem:[%s2 + $0xd78] sm:$0xff]
    %v463 = vld [vmem:[%s2 + $0xd80] sm:$0xff]
    %v464 = vld [vmem:[%s2 + $0xd88] sm:$0xff]
    %v465 = vld [vmem:[%s2 + $0xd90] sm:$0xff]
    %v466 = vld [vmem:[%s2 + $0xd98] sm:$0xff]
    %v467 = vld [vmem:[%s2 + $0xda0] sm:$0xff]
    %v468 = vld [vmem:[%s2 + $0xda8] sm:$0xff]
    %v469 = vld [vmem:[%s2 + $0xdb0] sm:$0xff]
    %v470 = vld [vmem:[%s2 + $0xdb8] sm:$0xff]
    %v471 = vld [vmem:[%s2 + $0xdc0] sm:$0xff]
    %v472 = vld [vmem:[%s2 + $0xdc8] sm:$0xff]
    %v473 = vld [vmem:[%s2 + $0xdd0] sm:$0xff]
    %v474 = vld [vmem:[%s2 + $0xdd8] sm:$0xff]
    %v475 = vld [vmem:[%s2 + $0xde0] sm:$0xff]
    %v476 = vld [vmem:[%s2 + $0xde8] sm:$0xff]
    %v477 = vld [vmem:[%s2 + $0xdf0] sm:$0xff]
    %v478 = vld [vmem:[%s2 + $0xdf8] sm:$0xff]
    %v479 = vld [vmem:[%s2 + $0xe00] sm:$0xff]
    %v480 = vld [vmem:[%s2 + $0xe08] sm:$0xff]
    %v481 = vld [vmem:[%s2 + $0xe10] sm:$0xff]
    %v482 = vld [vmem:[%s2 + $0xe18] sm:$0xff]
    %v483 = vld [vmem:[%s2 + $0xe20] sm:$0xff]
    %v484 = vld [vmem:[%s2 + $0xe28] sm:$0xff]
    %v485 = vld [vmem:[%s2 + $0xe30] sm:$0xff]
    %v486 = vld [vmem:[%s2 + $0xe38] sm:$0xff]
    %v487 = vld [vmem:[%s2 + $0xe40] sm:$0xff]
    %v488 = vld [vmem:[%s2 + $0xe48] sm:$0xff]
    %v489 = vld [vmem:[%s2 + $0xe50] sm:$0xff]
    %v490 = vld [vmem:[%s2 + $0xe58] sm:$0xff]
    %v491 = vld [vmem:[%s2 + $0xe60] sm:$0xff]
    %v492 = vld [vmem:[%s2 + $0xe68] sm:$0xff]
    %v493 = vld [vmem:[%s2 + $0xe70] sm:$0xff]
    %v494 = vld [vmem:[%s2 + $0xe78] sm:$0xff]
    %v495 = vld [vmem:[%s2 + $0xe80] sm:$0xff]
    %v496 = vld [vmem:[%s2 + $0xe88] sm:$0xff]
    %v497 = vld [vmem:[%s2 + $0xe90] sm:$0xff]
    %v498 = vld [vmem:[%s2 + $0xe98] sm:$0xff]
    %v499 = vld [vmem:[%s2 + $0xea0] sm:$0xff]
    %v500 = vld [vmem:[%s2 + $0xea8] sm:$0xff]
    %v501 = vld [vmem:[%s2 + $0xeb0] sm:$0xff]
    %v502 = vld [vmem:[%s2 + $0xeb8] sm:$0xff]
    %v503 = vld [vmem:[%s2 + $0xec0] sm:$0xff]
    %v504 = vld [vmem:[%s2 + $0xec8] sm:$0xff]
    %v505 = vld [vmem:[%s2 + $0xed0] sm:$0xff]
    %v506 = vld [vmem:[%s2 + $0xed8] sm:$0xff]
    %v507 = vld [vmem:[%s2 + $0xee0] sm:$0xff]
    %v508 = vld [vmem:[%s2 + $0xee8] sm:$0xff]
    %v509 = vld [vmem:[%s2 + $0xef0] sm:$0xff]
    %v510 = vld [vmem:[%s2 + $0xef8] sm:$0xff]
    %v511 = vld [vmem:[%s2 + $0xf00] sm:$0xff]
    %v512 = vld [vmem:[%s2 + $0xf08] sm:$0xff]
    %v513 = vld [vmem:[%s2 + $0xf10] sm:$0xff]
    %v514 = vld [vmem:[%s2 + $0xf18] sm:$0xff]
    %v515 = vld [vmem:[%s2 + $0xf20] sm:$0xff]
    %v516 = vld [vmem:[%s2 + $0xf28] sm:$0xff]
    %v517 = vld [vmem:[%s2 + $0xf30] sm:$0xff]
    %v518 = vld [vmem:[%s2 + $0xf38] sm:$0xff]
    %v519 = vld [vmem:[%s2 + $0xf40] sm:$0xff]
    %v520 = vld [vmem:[%s2 + $0xf48] sm:$0xff]
    %v521 = vld [vmem:[%s2 + $0xf50] sm:$0xff]
    %v522 = vld [vmem:[%s2 + $0xf58] sm:$0xff]
    %v523 = vld [vmem:[%s2 + $0xf60] sm:$0xff]
    %v524 = vld [vmem:[%s2 + $0xf68] sm:$0xff]
    %v525 = vld [vmem:[%s2 + $0xf70] sm:$0xff]
    %v526 = vld [vmem:[%s2 + $0xf78] sm:$0xff]
    %v527 = vld [vmem:[%s2 + $0xf80] sm:$0xff]
    %v528 = vld [vmem:[%s2 + $0xf88] sm:$0xff]
    %v529 = vld [vmem:[%s2 + $0xf90] sm:$0xff]
    %v530 = vld [vmem:[%s2 + $0xf98] sm:$0xff]
    %v531 = vld [vmem:[%s2 + $0xfa0] sm:$0xff]
    %v532 = vld [vmem:[%s2 + $0xfa8] sm:$0xff]
    %v533 = vld [vmem:[%s2 + $0xfb0] sm:$0xff]
    %v534 = vld [vmem:[%s2 + $0xfb8] sm:$0xff]
    %v535 = vld [vmem:[%s2 + $0xfc0] sm:$0xff]
    %v536 = vld [vmem:[%s2 + $0xfc8] sm:$0xff]
    %v537 = vld [vmem:[%s2 + $0xfd0] sm:$0xff]
    %v538 = vld [vmem:[%s2 + $0xfd8] sm:$0xff]
    %v539 = vld [vmem:[%s2 + $0xfe0] sm:$0xff]
    %v540 = vld [vmem:[%s2 + $0xfe8] sm:$0xff]
    %v541 = vld [vmem:[%s2 + $0xff0] sm:$0xff]
    %v542 = vld [vmem:[%s2 + $0xff8] sm:$0xff]
    %v543 = vld [vmem:[%s3] sm:$0xf]
    %v545 = vlaneseq
    %v546 = vshrl.u32 %v545, 7
    %v547 = vsub.s32 0, %v546
    %v548 = vrot.slane %v543, %v547
    %v549 = vlaneseq
    %v550 = vshrl.u32 %v549, 7
    %v551 = vsub.s32 1, %v550
    %v552 = vrot.slane %v543, %v551
    %v553 = vlaneseq
    %v554 = vshrl.u32 %v553, 7
    %v555 = vsub.s32 2, %v554
    %v556 = vrot.slane %v543, %v555
    %v557 = vlaneseq
    %v558 = vshrl.u32 %v557, 7
    %v559 = vsub.s32 3, %v558
    %v560 = vrot.slane %v543, %v559
    %v567 = vcombine.high %v29, %v29
    %v569 = vunpack.c.l.s4 1966171168
    %v570 = vunpack.c.0.s8 %v569
    %v571 = vlaneseq
    %v572 = vshrl.u32 %v571, 7
    %v573 = vsub.s32 %v570, %v572
    %v574 = vrot.slane %v29, %v573
    %v576 = vunpack.c.l.s4 1966171168
    %v577 = vunpack.c.0.s8 %v576
    %v578 = vlaneseq
    %v579 = vshrl.u32 %v578, 7
    %v580 = vsub.s32 %v577, %v579
    %v581 = vrot.slane %v567, %v580
    %v582 = vcombine.high %v574, %v574
    %v583 = vcombine.high %v581, %v581
    %v585 = vunpack.c.l.s4 1966171168
    %v586 = vunpack.c.0.s8 %v585
    %v587 = vlaneseq
    %v588 = vshrl.u32 %v587, 7
    %v589 = vsub.s32 %v586, %v588
    %v590 = vrot.slane %v574, %v589
    %v592 = vunpack.c.l.s4 1966171168
    %v593 = vunpack.c.0.s8 %v592
    %v594 = vlaneseq
    %v595 = vshrl.u32 %v594, 7
    %v596 = vsub.s32 %v593, %v595
    %v597 = vrot.slane %v581, %v596
    %v599 = vunpack.c.l.s4 1966171168
    %v600 = vunpack.c.0.s8 %v599
    %v601 = vlaneseq
    %v602 = vshrl.u32 %v601, 7
    %v603 = vsub.s32 %v600, %v602
    %v604 = vrot.slane %v582, %v603
    %v606 = vunpack.c.l.s4 1966171168
    %v607 = vunpack.c.0.s8 %v606
    %v608 = vlaneseq
    %v609 = vshrl.u32 %v608, 7
    %v610 = vsub.s32 %v607, %v609
    %v611 = vrot.slane %v583, %v610
    %v612 = vcombine.high %v590, %v590
    %v613 = vcombine.high %v597, %v597
    %v614 = vcombine.high %v604, %v604
    %v615 = vcombine.high %v611, %v611
    %v616 = vcombine.high %v30, %v30
    %v618 = vunpack.c.l.s4 1966171168
    %v619 = vunpack.c.0.s8 %v618
    %v620 = vlaneseq
    %v621 = vshrl.u32 %v620, 7
    %v622 = vsub.s32 %v619, %v621
    %v623 = vrot.slane %v30, %v622
    %v625 = vunpack.c.l.s4 1966171168
    %v626 = vunpack.c.0.s8 %v625
    %v627 = vlaneseq
    %v628 = vshrl.u32 %v627, 7
    %v629 = vsub.s32 %v626, %v628
    %v630 = vrot.slane %v616, %v629
    %v631 = vcombine.high %v623, %v623
    %v632 = vcombine.high %v630, %v630
    %v634 = vunpack.c.l.s4 1966171168
    %v635 = vunpack.c.0.s8 %v634
    %v636 = vlaneseq
    %v637 = vshrl.u32 %v636, 7
    %v638 = vsub.s32 %v635, %v637
    %v639 = vrot.slane %v623, %v638
    %v641 = vunpack.c.l.s4 1966171168
    %v642 = vunpack.c.0.s8 %v641
    %v643 = vlaneseq
    %v644 = vshrl.u32 %v643, 7
    %v645 = vsub.s32 %v642, %v644
    %v646 = vrot.slane %v630, %v645
    %v648 = vunpack.c.l.s4 1966171168
    %v649 = vunpack.c.0.s8 %v648
    %v650 = vlaneseq
    %v651 = vshrl.u32 %v650, 7
    %v652 = vsub.s32 %v649, %v651
    %v653 = vrot.slane %v631, %v652
    %v655 = vunpack.c.l.s4 1966171168
    %v656 = vunpack.c.0.s8 %v655
    %v657 = vlaneseq
    %v658 = vshrl.u32 %v657, 7
    %v659 = vsub.s32 %v656, %v658
    %v660 = vrot.slane %v632, %v659
    %v661 = vcombine.high %v639, %v639
    %v662 = vcombine.high %v646, %v646
    %v663 = vcombine.high %v653, %v653
    %v664 = vcombine.high %v660, %v660
    %v1193 = vunpack.c.l.b16 %v31
    %v1194 = vunpack.c.h.b16 %v31
    %v1195 = vunpack.c.l.b16 %v32
    %v1196 = vunpack.c.h.b16 %v32
    %v1197 = vunpack.c.l.b16 %v33
    %v1198 = vunpack.c.h.b16 %v33
    %v1199 = vunpack.c.l.b16 %v34
    %v1200 = vunpack.c.h.b16 %v34
    %v1201 = vunpack.c.l.b16 %v35
    %v1202 = vunpack.c.h.b16 %v35
    %v1203 = vunpack.c.l.b16 %v36
    %v1204 = vunpack.c.h.b16 %v36
    %v1205 = vunpack.c.l.b16 %v37
    %v1206 = vunpack.c.h.b16 %v37
    %v1207 = vunpack.c.l.b16 %v38
    %v1208 = vunpack.c.h.b16 %v38
    %v1209 = vunpack.c.l.b16 %v39
    %v1210 = vunpack.c.h.b16 %v39
    %v1211 = vunpack.c.l.b16 %v40
    %v1212 = vunpack.c.h.b16 %v40
    %v1213 = vunpack.c.l.b16 %v41
    %v1214 = vunpack.c.h.b16 %v41
    %v1215 = vunpack.c.l.b16 %v42
    %v1216 = vunpack.c.h.b16 %v42
    %v1217 = vunpack.c.l.b16 %v43
    %v1218 = vunpack.c.h.b16 %v43
    %v1219 = vunpack.c.l.b16 %v44
    %v1220 = vunpack.c.h.b16 %v44
    %v1221 = vunpack.c.l.b16 %v45
    %v1222 = vunpack.c.h.b16 %v45
    %v1223 = vunpack.c.l.b16 %v46
    %v1224 = vunpack.c.h.b16 %v46
    %v1225 = vunpack.c.l.b16 %v47
    %v1226 = vunpack.c.h.b16 %v47
    %v1227 = vunpack.c.l.b16 %v48
    %v1228 = vunpack.c.h.b16 %v48
    %v1229 = vunpack.c.l.b16 %v49
    %v1230 = vunpack.c.h.b16 %v49
    %v1231 = vunpack.c.l.b16 %v50
    %v1232 = vunpack.c.h.b16 %v50
    %v1233 = vunpack.c.l.b16 %v51
    %v1234 = vunpack.c.h.b16 %v51
    %v1235 = vunpack.c.l.b16 %v52
    %v1236 = vunpack.c.h.b16 %v52
    %v1237 = vunpack.c.l.b16 %v53
    %v1238 = vunpack.c.h.b16 %v53
    %v1239 = vunpack.c.l.b16 %v54
    %v1240 = vunpack.c.h.b16 %v54
    %v1241 = vunpack.c.l.b16 %v55
    %v1242 = vunpack.c.h.b16 %v55
    %v1243 = vunpack.c.l.b16 %v56
    %v1244 = vunpack.c.h.b16 %v56
    %v1245 = vunpack.c.l.b16 %v57
    %v1246 = vunpack.c.h.b16 %v57
    %v1247 = vunpack.c.l.b16 %v58
    %v1248 = vunpack.c.h.b16 %v58
    %v1249 = vunpack.c.l.b16 %v59
    %v1250 = vunpack.c.h.b16 %v59
    %v1251 = vunpack.c.l.b16 %v60
    %v1252 = vunpack.c.h.b16 %v60
    %v1253 = vunpack.c.l.b16 %v61
    %v1254 = vunpack.c.h.b16 %v61
    %v1255 = vunpack.c.l.b16 %v62
    %v1256 = vunpack.c.h.b16 %v62
    %v1257 = vunpack.c.l.b16 %v63
    %v1258 = vunpack.c.h.b16 %v63
    %v1259 = vunpack.c.l.b16 %v64
    %v1260 = vunpack.c.h.b16 %v64
    %v1261 = vunpack.c.l.b16 %v65
    %v1262 = vunpack.c.h.b16 %v65
    %v1263 = vunpack.c.l.b16 %v66
    %v1264 = vunpack.c.h.b16 %v66
    %v1265 = vunpack.c.l.b16 %v67
    %v1266 = vunpack.c.h.b16 %v67
    %v1267 = vunpack.c.l.b16 %v68
    %v1268 = vunpack.c.h.b16 %v68
    %v1269 = vunpack.c.l.b16 %v69
    %v1270 = vunpack.c.h.b16 %v69
    %v1271 = vunpack.c.l.b16 %v70
    %v1272 = vunpack.c.h.b16 %v70
    %v1273 = vunpack.c.l.b16 %v71
    %v1274 = vunpack.c.h.b16 %v71
    %v1275 = vunpack.c.l.b16 %v72
    %v1276 = vunpack.c.h.b16 %v72
    %v1277 = vunpack.c.l.b16 %v73
    %v1278 = vunpack.c.h.b16 %v73
    %v1279 = vunpack.c.l.b16 %v74
    %v1280 = vunpack.c.h.b16 %v74
    %v1281 = vunpack.c.l.b16 %v75
    %v1282 = vunpack.c.h.b16 %v75
    %v1283 = vunpack.c.l.b16 %v76
    %v1284 = vunpack.c.h.b16 %v76
    %v1285 = vunpack.c.l.b16 %v77
    %v1286 = vunpack.c.h.b16 %v77
    %v1287 = vunpack.c.l.b16 %v78
    %v1288 = vunpack.c.h.b16 %v78
    %v1289 = vunpack.c.l.b16 %v79
    %v1290 = vunpack.c.h.b16 %v79
    %v1291 = vunpack.c.l.b16 %v80
    %v1292 = vunpack.c.h.b16 %v80
    %v1293 = vunpack.c.l.b16 %v81
    %v1294 = vunpack.c.h.b16 %v81
    %v1295 = vunpack.c.l.b16 %v82
    %v1296 = vunpack.c.h.b16 %v82
    %v1297 = vunpack.c.l.b16 %v83
    %v1298 = vunpack.c.h.b16 %v83
    %v1299 = vunpack.c.l.b16 %v84
    %v1300 = vunpack.c.h.b16 %v84
    %v1301 = vunpack.c.l.b16 %v85
    %v1302 = vunpack.c.h.b16 %v85
    %v1303 = vunpack.c.l.b16 %v86
    %v1304 = vunpack.c.h.b16 %v86
    %v1305 = vunpack.c.l.b16 %v87
    %v1306 = vunpack.c.h.b16 %v87
    %v1307 = vunpack.c.l.b16 %v88
    %v1308 = vunpack.c.h.b16 %v88
    %v1309 = vunpack.c.l.b16 %v89
    %v1310 = vunpack.c.h.b16 %v89
    %v1311 = vunpack.c.l.b16 %v90
    %v1312 = vunpack.c.h.b16 %v90
    %v1313 = vunpack.c.l.b16 %v91
    %v1314 = vunpack.c.h.b16 %v91
    %v1315 = vunpack.c.l.b16 %v92
    %v1316 = vunpack.c.h.b16 %v92
    %v1317 = vunpack.c.l.b16 %v93
    %v1318 = vunpack.c.h.b16 %v93
    %v1319 = vunpack.c.l.b16 %v94
    %v1320 = vunpack.c.h.b16 %v94
    %v1321 = vunpack.c.l.b16 %v95
    %v1322 = vunpack.c.h.b16 %v95
    %v1323 = vunpack.c.l.b16 %v96
    %v1324 = vunpack.c.h.b16 %v96
    %v1325 = vunpack.c.l.b16 %v97
    %v1326 = vunpack.c.h.b16 %v97
    %v1327 = vunpack.c.l.b16 %v98
    %v1328 = vunpack.c.h.b16 %v98
    %v1329 = vunpack.c.l.b16 %v99
    %v1330 = vunpack.c.h.b16 %v99
    %v1331 = vunpack.c.l.b16 %v100
    %v1332 = vunpack.c.h.b16 %v100
    %v1333 = vunpack.c.l.b16 %v101
    %v1334 = vunpack.c.h.b16 %v101
    %v1335 = vunpack.c.l.b16 %v102
    %v1336 = vunpack.c.h.b16 %v102
    %v1337 = vunpack.c.l.b16 %v103
    %v1338 = vunpack.c.h.b16 %v103
    %v1339 = vunpack.c.l.b16 %v104
    %v1340 = vunpack.c.h.b16 %v104
    %v1341 = vunpack.c.l.b16 %v105
    %v1342 = vunpack.c.h.b16 %v105
    %v1343 = vunpack.c.l.b16 %v106
    %v1344 = vunpack.c.h.b16 %v106
    %v1345 = vunpack.c.l.b16 %v107
    %v1346 = vunpack.c.h.b16 %v107
    %v1347 = vunpack.c.l.b16 %v108
    %v1348 = vunpack.c.h.b16 %v108
    %v1349 = vunpack.c.l.b16 %v109
    %v1350 = vunpack.c.h.b16 %v109
    %v1351 = vunpack.c.l.b16 %v110
    %v1352 = vunpack.c.h.b16 %v110
    %v1353 = vunpack.c.l.b16 %v111
    %v1354 = vunpack.c.h.b16 %v111
    %v1355 = vunpack.c.l.b16 %v112
    %v1356 = vunpack.c.h.b16 %v112
    %v1357 = vunpack.c.l.b16 %v113
    %v1358 = vunpack.c.h.b16 %v113
    %v1359 = vunpack.c.l.b16 %v114
    %v1360 = vunpack.c.h.b16 %v114
    %v1361 = vunpack.c.l.b16 %v115
    %v1362 = vunpack.c.h.b16 %v115
    %v1363 = vunpack.c.l.b16 %v116
    %v1364 = vunpack.c.h.b16 %v116
    %v1365 = vunpack.c.l.b16 %v117
    %v1366 = vunpack.c.h.b16 %v117
    %v1367 = vunpack.c.l.b16 %v118
    %v1368 = vunpack.c.h.b16 %v118
    %v1369 = vunpack.c.l.b16 %v119
    %v1370 = vunpack.c.h.b16 %v119
    %v1371 = vunpack.c.l.b16 %v120
    %v1372 = vunpack.c.h.b16 %v120
    %v1373 = vunpack.c.l.b16 %v121
    %v1374 = vunpack.c.h.b16 %v121
    %v1375 = vunpack.c.l.b16 %v122
    %v1376 = vunpack.c.h.b16 %v122
    %v1377 = vunpack.c.l.b16 %v123
    %v1378 = vunpack.c.h.b16 %v123
    %v1379 = vunpack.c.l.b16 %v124
    %v1380 = vunpack.c.h.b16 %v124
    %v1381 = vunpack.c.l.b16 %v125
    %v1382 = vunpack.c.h.b16 %v125
    %v1383 = vunpack.c.l.b16 %v126
    %v1384 = vunpack.c.h.b16 %v126
    %v1385 = vunpack.c.l.b16 %v127
    %v1386 = vunpack.c.h.b16 %v127
    %v1387 = vunpack.c.l.b16 %v128
    %v1388 = vunpack.c.h.b16 %v128
    %v1389 = vunpack.c.l.b16 %v129
    %v1390 = vunpack.c.h.b16 %v129
    %v1391 = vunpack.c.l.b16 %v130
    %v1392 = vunpack.c.h.b16 %v130
    %v1393 = vunpack.c.l.b16 %v131
    %v1394 = vunpack.c.h.b16 %v131
    %v1395 = vunpack.c.l.b16 %v132
    %v1396 = vunpack.c.h.b16 %v132
    %v1397 = vunpack.c.l.b16 %v133
    %v1398 = vunpack.c.h.b16 %v133
    %v1399 = vunpack.c.l.b16 %v134
    %v1400 = vunpack.c.h.b16 %v134
    %v1401 = vunpack.c.l.b16 %v135
    %v1402 = vunpack.c.h.b16 %v135
    %v1403 = vunpack.c.l.b16 %v136
    %v1404 = vunpack.c.h.b16 %v136
    %v1405 = vunpack.c.l.b16 %v137
    %v1406 = vunpack.c.h.b16 %v137
    %v1407 = vunpack.c.l.b16 %v138
    %v1408 = vunpack.c.h.b16 %v138
    %v1409 = vunpack.c.l.b16 %v139
    %v1410 = vunpack.c.h.b16 %v139
    %v1411 = vunpack.c.l.b16 %v140
    %v1412 = vunpack.c.h.b16 %v140
    %v1413 = vunpack.c.l.b16 %v141
    %v1414 = vunpack.c.h.b16 %v141
    %v1415 = vunpack.c.l.b16 %v142
    %v1416 = vunpack.c.h.b16 %v142
    %v1417 = vunpack.c.l.b16 %v143
    %v1418 = vunpack.c.h.b16 %v143
    %v1419 = vunpack.c.l.b16 %v144
    %v1420 = vunpack.c.h.b16 %v144
    %v1421 = vunpack.c.l.b16 %v145
    %v1422 = vunpack.c.h.b16 %v145
    %v1423 = vunpack.c.l.b16 %v146
    %v1424 = vunpack.c.h.b16 %v146
    %v1425 = vunpack.c.l.b16 %v147
    %v1426 = vunpack.c.h.b16 %v147
    %v1427 = vunpack.c.l.b16 %v148
    %v1428 = vunpack.c.h.b16 %v148
    %v1429 = vunpack.c.l.b16 %v149
    %v1430 = vunpack.c.h.b16 %v149
    %v1431 = vunpack.c.l.b16 %v150
    %v1432 = vunpack.c.h.b16 %v150
    %v1433 = vunpack.c.l.b16 %v151
    %v1434 = vunpack.c.h.b16 %v151
    %v1435 = vunpack.c.l.b16 %v152
    %v1436 = vunpack.c.h.b16 %v152
    %v1437 = vunpack.c.l.b16 %v153
    %v1438 = vunpack.c.h.b16 %v153
    %v1439 = vunpack.c.l.b16 %v154
    %v1440 = vunpack.c.h.b16 %v154
    %v1441 = vunpack.c.l.b16 %v155
    %v1442 = vunpack.c.h.b16 %v155
    %v1443 = vunpack.c.l.b16 %v156
    %v1444 = vunpack.c.h.b16 %v156
    %v1445 = vunpack.c.l.b16 %v157
    %v1446 = vunpack.c.h.b16 %v157
    %v1447 = vunpack.c.l.b16 %v158
    %v1448 = vunpack.c.h.b16 %v158
    %v1449 = vunpack.c.l.b16 %v159
    %v1450 = vunpack.c.h.b16 %v159
    %v1451 = vunpack.c.l.b16 %v160
    %v1452 = vunpack.c.h.b16 %v160
    %v1453 = vunpack.c.l.b16 %v161
    %v1454 = vunpack.c.h.b16 %v161
    %v1455 = vunpack.c.l.b16 %v162
    %v1456 = vunpack.c.h.b16 %v162
    %v1457 = vunpack.c.l.b16 %v163
    %v1458 = vunpack.c.h.b16 %v163
    %v1459 = vunpack.c.l.b16 %v164
    %v1460 = vunpack.c.h.b16 %v164
    %v1461 = vunpack.c.l.b16 %v165
    %v1462 = vunpack.c.h.b16 %v165
    %v1463 = vunpack.c.l.b16 %v166
    %v1464 = vunpack.c.h.b16 %v166
    %v1465 = vunpack.c.l.b16 %v167
    %v1466 = vunpack.c.h.b16 %v167
    %v1467 = vunpack.c.l.b16 %v168
    %v1468 = vunpack.c.h.b16 %v168
    %v1469 = vunpack.c.l.b16 %v169
    %v1470 = vunpack.c.h.b16 %v169
    %v1471 = vunpack.c.l.b16 %v170
    %v1472 = vunpack.c.h.b16 %v170
    %v1473 = vunpack.c.l.b16 %v171
    %v1474 = vunpack.c.h.b16 %v171
    %v1475 = vunpack.c.l.b16 %v172
    %v1476 = vunpack.c.h.b16 %v172
    %v1477 = vunpack.c.l.b16 %v173
    %v1478 = vunpack.c.h.b16 %v173
    %v1479 = vunpack.c.l.b16 %v174
    %v1480 = vunpack.c.h.b16 %v174
    %v1481 = vunpack.c.l.b16 %v175
    %v1482 = vunpack.c.h.b16 %v175
    %v1483 = vunpack.c.l.b16 %v176
    %v1484 = vunpack.c.h.b16 %v176
    %v1485 = vunpack.c.l.b16 %v177
    %v1486 = vunpack.c.h.b16 %v177
    %v1487 = vunpack.c.l.b16 %v178
    %v1488 = vunpack.c.h.b16 %v178
    %v1489 = vunpack.c.l.b16 %v179
    %v1490 = vunpack.c.h.b16 %v179
    %v1491 = vunpack.c.l.b16 %v180
    %v1492 = vunpack.c.h.b16 %v180
    %v1493 = vunpack.c.l.b16 %v181
    %v1494 = vunpack.c.h.b16 %v181
    %v1495 = vunpack.c.l.b16 %v182
    %v1496 = vunpack.c.h.b16 %v182
    %v1497 = vunpack.c.l.b16 %v183
    %v1498 = vunpack.c.h.b16 %v183
    %v1499 = vunpack.c.l.b16 %v184
    %v1500 = vunpack.c.h.b16 %v184
    %v1501 = vunpack.c.l.b16 %v185
    %v1502 = vunpack.c.h.b16 %v185
    %v1503 = vunpack.c.l.b16 %v186
    %v1504 = vunpack.c.h.b16 %v186
    %v1505 = vunpack.c.l.b16 %v187
    %v1506 = vunpack.c.h.b16 %v187
    %v1507 = vunpack.c.l.b16 %v188
    %v1508 = vunpack.c.h.b16 %v188
    %v1509 = vunpack.c.l.b16 %v189
    %v1510 = vunpack.c.h.b16 %v189
    %v1511 = vunpack.c.l.b16 %v190
    %v1512 = vunpack.c.h.b16 %v190
    %v1513 = vunpack.c.l.b16 %v191
    %v1514 = vunpack.c.h.b16 %v191
    %v1515 = vunpack.c.l.b16 %v192
    %v1516 = vunpack.c.h.b16 %v192
    %v1517 = vunpack.c.l.b16 %v193
    %v1518 = vunpack.c.h.b16 %v193
    %v1519 = vunpack.c.l.b16 %v194
    %v1520 = vunpack.c.h.b16 %v194
    %v1521 = vunpack.c.l.b16 %v195
    %v1522 = vunpack.c.h.b16 %v195
    %v1523 = vunpack.c.l.b16 %v196
    %v1524 = vunpack.c.h.b16 %v196
    %v1525 = vunpack.c.l.b16 %v197
    %v1526 = vunpack.c.h.b16 %v197
    %v1527 = vunpack.c.l.b16 %v198
    %v1528 = vunpack.c.h.b16 %v198
    %v1529 = vunpack.c.l.b16 %v199
    %v1530 = vunpack.c.h.b16 %v199
    %v1531 = vunpack.c.l.b16 %v200
    %v1532 = vunpack.c.h.b16 %v200
    %v1533 = vunpack.c.l.b16 %v201
    %v1534 = vunpack.c.h.b16 %v201
    %v1535 = vunpack.c.l.b16 %v202
    %v1536 = vunpack.c.h.b16 %v202
    %v1537 = vunpack.c.l.b16 %v203
    %v1538 = vunpack.c.h.b16 %v203
    %v1539 = vunpack.c.l.b16 %v204
    %v1540 = vunpack.c.h.b16 %v204
    %v1541 = vunpack.c.l.b16 %v205
    %v1542 = vunpack.c.h.b16 %v205
    %v1543 = vunpack.c.l.b16 %v206
    %v1544 = vunpack.c.h.b16 %v206
    %v1545 = vunpack.c.l.b16 %v207
    %v1546 = vunpack.c.h.b16 %v207
    %v1547 = vunpack.c.l.b16 %v208
    %v1548 = vunpack.c.h.b16 %v208
    %v1549 = vunpack.c.l.b16 %v209
    %v1550 = vunpack.c.h.b16 %v209
    %v1551 = vunpack.c.l.b16 %v210
    %v1552 = vunpack.c.h.b16 %v210
    %v1553 = vunpack.c.l.b16 %v211
    %v1554 = vunpack.c.h.b16 %v211
    %v1555 = vunpack.c.l.b16 %v212
    %v1556 = vunpack.c.h.b16 %v212
    %v1557 = vunpack.c.l.b16 %v213
    %v1558 = vunpack.c.h.b16 %v213
    %v1559 = vunpack.c.l.b16 %v214
    %v1560 = vunpack.c.h.b16 %v214
    %v1561 = vunpack.c.l.b16 %v215
    %v1562 = vunpack.c.h.b16 %v215
    %v1563 = vunpack.c.l.b16 %v216
    %v1564 = vunpack.c.h.b16 %v216
    %v1565 = vunpack.c.l.b16 %v217
    %v1566 = vunpack.c.h.b16 %v217
    %v1567 = vunpack.c.l.b16 %v218
    %v1568 = vunpack.c.h.b16 %v218
    %v1569 = vunpack.c.l.b16 %v219
    %v1570 = vunpack.c.h.b16 %v219
    %v1571 = vunpack.c.l.b16 %v220
    %v1572 = vunpack.c.h.b16 %v220
    %v1573 = vunpack.c.l.b16 %v221
    %v1574 = vunpack.c.h.b16 %v221
    %v1575 = vunpack.c.l.b16 %v222
    %v1576 = vunpack.c.h.b16 %v222
    %v1577 = vunpack.c.l.b16 %v223
    %v1578 = vunpack.c.h.b16 %v223
    %v1579 = vunpack.c.l.b16 %v224
    %v1580 = vunpack.c.h.b16 %v224
    %v1581 = vunpack.c.l.b16 %v225
    %v1582 = vunpack.c.h.b16 %v225
    %v1583 = vunpack.c.l.b16 %v226
    %v1584 = vunpack.c.h.b16 %v226
    %v1585 = vunpack.c.l.b16 %v227
    %v1586 = vunpack.c.h.b16 %v227
    %v1587 = vunpack.c.l.b16 %v228
    %v1588 = vunpack.c.h.b16 %v228
    %v1589 = vunpack.c.l.b16 %v229
    %v1590 = vunpack.c.h.b16 %v229
    %v1591 = vunpack.c.l.b16 %v230
    %v1592 = vunpack.c.h.b16 %v230
    %v1593 = vunpack.c.l.b16 %v231
    %v1594 = vunpack.c.h.b16 %v231
    %v1595 = vunpack.c.l.b16 %v232
    %v1596 = vunpack.c.h.b16 %v232
    %v1597 = vunpack.c.l.b16 %v233
    %v1598 = vunpack.c.h.b16 %v233
    %v1599 = vunpack.c.l.b16 %v234
    %v1600 = vunpack.c.h.b16 %v234
    %v1601 = vunpack.c.l.b16 %v235
    %v1602 = vunpack.c.h.b16 %v235
    %v1603 = vunpack.c.l.b16 %v236
    %v1604 = vunpack.c.h.b16 %v236
    %v1605 = vunpack.c.l.b16 %v237
    %v1606 = vunpack.c.h.b16 %v237
    %v1607 = vunpack.c.l.b16 %v238
    %v1608 = vunpack.c.h.b16 %v238
    %v1609 = vunpack.c.l.b16 %v239
    %v1610 = vunpack.c.h.b16 %v239
    %v1611 = vunpack.c.l.b16 %v240
    %v1612 = vunpack.c.h.b16 %v240
    %v1613 = vunpack.c.l.b16 %v241
    %v1614 = vunpack.c.h.b16 %v241
    %v1615 = vunpack.c.l.b16 %v242
    %v1616 = vunpack.c.h.b16 %v242
    %v1617 = vunpack.c.l.b16 %v243
    %v1618 = vunpack.c.h.b16 %v243
    %v1619 = vunpack.c.l.b16 %v244
    %v1620 = vunpack.c.h.b16 %v244
    %v1621 = vunpack.c.l.b16 %v245
    %v1622 = vunpack.c.h.b16 %v245
    %v1623 = vunpack.c.l.b16 %v246
    %v1624 = vunpack.c.h.b16 %v246
    %v1625 = vunpack.c.l.b16 %v247
    %v1626 = vunpack.c.h.b16 %v247
    %v1627 = vunpack.c.l.b16 %v248
    %v1628 = vunpack.c.h.b16 %v248
    %v1629 = vunpack.c.l.b16 %v249
    %v1630 = vunpack.c.h.b16 %v249
    %v1631 = vunpack.c.l.b16 %v250
    %v1632 = vunpack.c.h.b16 %v250
    %v1633 = vunpack.c.l.b16 %v251
    %v1634 = vunpack.c.h.b16 %v251
    %v1635 = vunpack.c.l.b16 %v252
    %v1636 = vunpack.c.h.b16 %v252
    %v1637 = vunpack.c.l.b16 %v253
    %v1638 = vunpack.c.h.b16 %v253
    %v1639 = vunpack.c.l.b16 %v254
    %v1640 = vunpack.c.h.b16 %v254
    %v1641 = vunpack.c.l.b16 %v255
    %v1642 = vunpack.c.h.b16 %v255
    %v1643 = vunpack.c.l.b16 %v256
    %v1644 = vunpack.c.h.b16 %v256
    %v1645 = vunpack.c.l.b16 %v257
    %v1646 = vunpack.c.h.b16 %v257
    %v1647 = vunpack.c.l.b16 %v258
    %v1648 = vunpack.c.h.b16 %v258
    %v1649 = vunpack.c.l.b16 %v259
    %v1650 = vunpack.c.h.b16 %v259
    %v1651 = vunpack.c.l.b16 %v260
    %v1652 = vunpack.c.h.b16 %v260
    %v1653 = vunpack.c.l.b16 %v261
    %v1654 = vunpack.c.h.b16 %v261
    %v1655 = vunpack.c.l.b16 %v262
    %v1656 = vunpack.c.h.b16 %v262
    %v1657 = vunpack.c.l.b16 %v263
    %v1658 = vunpack.c.h.b16 %v263
    %v1659 = vunpack.c.l.b16 %v264
    %v1660 = vunpack.c.h.b16 %v264
    %v1661 = vunpack.c.l.b16 %v265
    %v1662 = vunpack.c.h.b16 %v265
    %v1663 = vunpack.c.l.b16 %v266
    %v1664 = vunpack.c.h.b16 %v266
    %v1665 = vunpack.c.l.b16 %v267
    %v1666 = vunpack.c.h.b16 %v267
    %v1667 = vunpack.c.l.b16 %v268
    %v1668 = vunpack.c.h.b16 %v268
    %v1669 = vunpack.c.l.b16 %v269
    %v1670 = vunpack.c.h.b16 %v269
    %v1671 = vunpack.c.l.b16 %v270
    %v1672 = vunpack.c.h.b16 %v270
    %v1673 = vunpack.c.l.b16 %v271
    %v1674 = vunpack.c.h.b16 %v271
    %v1675 = vunpack.c.l.b16 %v272
    %v1676 = vunpack.c.h.b16 %v272
    %v1677 = vunpack.c.l.b16 %v273
    %v1678 = vunpack.c.h.b16 %v273
    %v1679 = vunpack.c.l.b16 %v274
    %v1680 = vunpack.c.h.b16 %v274
    %v1681 = vunpack.c.l.b16 %v275
    %v1682 = vunpack.c.h.b16 %v275
    %v1683 = vunpack.c.l.b16 %v276
    %v1684 = vunpack.c.h.b16 %v276
    %v1685 = vunpack.c.l.b16 %v277
    %v1686 = vunpack.c.h.b16 %v277
    %v1687 = vunpack.c.l.b16 %v278
    %v1688 = vunpack.c.h.b16 %v278
    %v1689 = vunpack.c.l.b16 %v279
    %v1690 = vunpack.c.h.b16 %v279
    %v1691 = vunpack.c.l.b16 %v280
    %v1692 = vunpack.c.h.b16 %v280
    %v1693 = vunpack.c.l.b16 %v281
    %v1694 = vunpack.c.h.b16 %v281
    %v1695 = vunpack.c.l.b16 %v282
    %v1696 = vunpack.c.h.b16 %v282
    %v1697 = vunpack.c.l.b16 %v283
    %v1698 = vunpack.c.h.b16 %v283
    %v1699 = vunpack.c.l.b16 %v284
    %v1700 = vunpack.c.h.b16 %v284
    %v1701 = vunpack.c.l.b16 %v285
    %v1702 = vunpack.c.h.b16 %v285
    %v1703 = vunpack.c.l.b16 %v286
    %v1704 = vunpack.c.h.b16 %v286
    %v1705 = vunpack.c.l.b16 %v287
    %v1706 = vunpack.c.h.b16 %v287
    %v1707 = vunpack.c.l.b16 %v288
    %v1708 = vunpack.c.h.b16 %v288
    %v1709 = vunpack.c.l.b16 %v289
    %v1710 = vunpack.c.h.b16 %v289
    %v1711 = vunpack.c.l.b16 %v290
    %v1712 = vunpack.c.h.b16 %v290
    %v1713 = vunpack.c.l.b16 %v291
    %v1714 = vunpack.c.h.b16 %v291
    %v1715 = vunpack.c.l.b16 %v292
    %v1716 = vunpack.c.h.b16 %v292
    %v1717 = vunpack.c.l.b16 %v293
    %v1718 = vunpack.c.h.b16 %v293
    %v1719 = vunpack.c.l.b16 %v294
    %v1720 = vunpack.c.h.b16 %v294
    %v1721 = vunpack.c.l.b16 %v295
    %v1722 = vunpack.c.h.b16 %v295
    %v1723 = vunpack.c.l.b16 %v296
    %v1724 = vunpack.c.h.b16 %v296
    %v1725 = vunpack.c.l.b16 %v297
    %v1726 = vunpack.c.h.b16 %v297
    %v1727 = vunpack.c.l.b16 %v298
    %v1728 = vunpack.c.h.b16 %v298
    %v1729 = vunpack.c.l.b16 %v299
    %v1730 = vunpack.c.h.b16 %v299
    %v1731 = vunpack.c.l.b16 %v300
    %v1732 = vunpack.c.h.b16 %v300
    %v1733 = vunpack.c.l.b16 %v301
    %v1734 = vunpack.c.h.b16 %v301
    %v1735 = vunpack.c.l.b16 %v302
    %v1736 = vunpack.c.h.b16 %v302
    %v1737 = vunpack.c.l.b16 %v303
    %v1738 = vunpack.c.h.b16 %v303
    %v1739 = vunpack.c.l.b16 %v304
    %v1740 = vunpack.c.h.b16 %v304
    %v1741 = vunpack.c.l.b16 %v305
    %v1742 = vunpack.c.h.b16 %v305
    %v1743 = vunpack.c.l.b16 %v306
    %v1744 = vunpack.c.h.b16 %v306
    %v1745 = vunpack.c.l.b16 %v307
    %v1746 = vunpack.c.h.b16 %v307
    %v1747 = vunpack.c.l.b16 %v308
    %v1748 = vunpack.c.h.b16 %v308
    %v1749 = vunpack.c.l.b16 %v309
    %v1750 = vunpack.c.h.b16 %v309
    %v1751 = vunpack.c.l.b16 %v310
    %v1752 = vunpack.c.h.b16 %v310
    %v1753 = vunpack.c.l.b16 %v311
    %v1754 = vunpack.c.h.b16 %v311
    %v1755 = vunpack.c.l.b16 %v312
    %v1756 = vunpack.c.h.b16 %v312
    %v1757 = vunpack.c.l.b16 %v313
    %v1758 = vunpack.c.h.b16 %v313
    %v1759 = vunpack.c.l.b16 %v314
    %v1760 = vunpack.c.h.b16 %v314
    %v1761 = vunpack.c.l.b16 %v315
    %v1762 = vunpack.c.h.b16 %v315
    %v1763 = vunpack.c.l.b16 %v316
    %v1764 = vunpack.c.h.b16 %v316
    %v1765 = vunpack.c.l.b16 %v317
    %v1766 = vunpack.c.h.b16 %v317
    %v1767 = vunpack.c.l.b16 %v318
    %v1768 = vunpack.c.h.b16 %v318
    %v1769 = vunpack.c.l.b16 %v319
    %v1770 = vunpack.c.h.b16 %v319
    %v1771 = vunpack.c.l.b16 %v320
    %v1772 = vunpack.c.h.b16 %v320
    %v1773 = vunpack.c.l.b16 %v321
    %v1774 = vunpack.c.h.b16 %v321
    %v1775 = vunpack.c.l.b16 %v322
    %v1776 = vunpack.c.h.b16 %v322
    %v1777 = vunpack.c.l.b16 %v323
    %v1778 = vunpack.c.h.b16 %v323
    %v1779 = vunpack.c.l.b16 %v324
    %v1780 = vunpack.c.h.b16 %v324
    %v1781 = vunpack.c.l.b16 %v325
    %v1782 = vunpack.c.h.b16 %v325
    %v1783 = vunpack.c.l.b16 %v326
    %v1784 = vunpack.c.h.b16 %v326
    %v1785 = vunpack.c.l.b16 %v327
    %v1786 = vunpack.c.h.b16 %v327
    %v1787 = vunpack.c.l.b16 %v328
    %v1788 = vunpack.c.h.b16 %v328
    %v1789 = vunpack.c.l.b16 %v329
    %v1790 = vunpack.c.h.b16 %v329
    %v1791 = vunpack.c.l.b16 %v330
    %v1792 = vunpack.c.h.b16 %v330
    %v1793 = vunpack.c.l.b16 %v331
    %v1794 = vunpack.c.h.b16 %v331
    %v1795 = vunpack.c.l.b16 %v332
    %v1796 = vunpack.c.h.b16 %v332
    %v1797 = vunpack.c.l.b16 %v333
    %v1798 = vunpack.c.h.b16 %v333
    %v1799 = vunpack.c.l.b16 %v334
    %v1800 = vunpack.c.h.b16 %v334
    %v1801 = vunpack.c.l.b16 %v335
    %v1802 = vunpack.c.h.b16 %v335
    %v1803 = vunpack.c.l.b16 %v336
    %v1804 = vunpack.c.h.b16 %v336
    %v1805 = vunpack.c.l.b16 %v337
    %v1806 = vunpack.c.h.b16 %v337
    %v1807 = vunpack.c.l.b16 %v338
    %v1808 = vunpack.c.h.b16 %v338
    %v1809 = vunpack.c.l.b16 %v339
    %v1810 = vunpack.c.h.b16 %v339
    %v1811 = vunpack.c.l.b16 %v340
    %v1812 = vunpack.c.h.b16 %v340
    %v1813 = vunpack.c.l.b16 %v341
    %v1814 = vunpack.c.h.b16 %v341
    %v1815 = vunpack.c.l.b16 %v342
    %v1816 = vunpack.c.h.b16 %v342
    %v1817 = vunpack.c.l.b16 %v343
    %v1818 = vunpack.c.h.b16 %v343
    %v1819 = vunpack.c.l.b16 %v344
    %v1820 = vunpack.c.h.b16 %v344
    %v1821 = vunpack.c.l.b16 %v345
    %v1822 = vunpack.c.h.b16 %v345
    %v1823 = vunpack.c.l.b16 %v346
    %v1824 = vunpack.c.h.b16 %v346
    %v1825 = vunpack.c.l.b16 %v347
    %v1826 = vunpack.c.h.b16 %v347
    %v1827 = vunpack.c.l.b16 %v348
    %v1828 = vunpack.c.h.b16 %v348
    %v1829 = vunpack.c.l.b16 %v349
    %v1830 = vunpack.c.h.b16 %v349
    %v1831 = vunpack.c.l.b16 %v350
    %v1832 = vunpack.c.h.b16 %v350
    %v1833 = vunpack.c.l.b16 %v351
    %v1834 = vunpack.c.h.b16 %v351
    %v1835 = vunpack.c.l.b16 %v352
    %v1836 = vunpack.c.h.b16 %v352
    %v1837 = vunpack.c.l.b16 %v353
    %v1838 = vunpack.c.h.b16 %v353
    %v1839 = vunpack.c.l.b16 %v354
    %v1840 = vunpack.c.h.b16 %v354
    %v1841 = vunpack.c.l.b16 %v355
    %v1842 = vunpack.c.h.b16 %v355
    %v1843 = vunpack.c.l.b16 %v356
    %v1844 = vunpack.c.h.b16 %v356
    %v1845 = vunpack.c.l.b16 %v357
    %v1846 = vunpack.c.h.b16 %v357
    %v1847 = vunpack.c.l.b16 %v358
    %v1848 = vunpack.c.h.b16 %v358
    %v1849 = vunpack.c.l.b16 %v359
    %v1850 = vunpack.c.h.b16 %v359
    %v1851 = vunpack.c.l.b16 %v360
    %v1852 = vunpack.c.h.b16 %v360
    %v1853 = vunpack.c.l.b16 %v361
    %v1854 = vunpack.c.h.b16 %v361
    %v1855 = vunpack.c.l.b16 %v362
    %v1856 = vunpack.c.h.b16 %v362
    %v1857 = vunpack.c.l.b16 %v363
    %v1858 = vunpack.c.h.b16 %v363
    %v1859 = vunpack.c.l.b16 %v364
    %v1860 = vunpack.c.h.b16 %v364
    %v1861 = vunpack.c.l.b16 %v365
    %v1862 = vunpack.c.h.b16 %v365
    %v1863 = vunpack.c.l.b16 %v366
    %v1864 = vunpack.c.h.b16 %v366
    %v1865 = vunpack.c.l.b16 %v367
    %v1866 = vunpack.c.h.b16 %v367
    %v1867 = vunpack.c.l.b16 %v368
    %v1868 = vunpack.c.h.b16 %v368
    %v1869 = vunpack.c.l.b16 %v369
    %v1870 = vunpack.c.h.b16 %v369
    %v1871 = vunpack.c.l.b16 %v370
    %v1872 = vunpack.c.h.b16 %v370
    %v1873 = vunpack.c.l.b16 %v371
    %v1874 = vunpack.c.h.b16 %v371
    %v1875 = vunpack.c.l.b16 %v372
    %v1876 = vunpack.c.h.b16 %v372
    %v1877 = vunpack.c.l.b16 %v373
    %v1878 = vunpack.c.h.b16 %v373
    %v1879 = vunpack.c.l.b16 %v374
    %v1880 = vunpack.c.h.b16 %v374
    %v1881 = vunpack.c.l.b16 %v375
    %v1882 = vunpack.c.h.b16 %v375
    %v1883 = vunpack.c.l.b16 %v376
    %v1884 = vunpack.c.h.b16 %v376
    %v1885 = vunpack.c.l.b16 %v377
    %v1886 = vunpack.c.h.b16 %v377
    %v1887 = vunpack.c.l.b16 %v378
    %v1888 = vunpack.c.h.b16 %v378
    %v1889 = vunpack.c.l.b16 %v379
    %v1890 = vunpack.c.h.b16 %v379
    %v1891 = vunpack.c.l.b16 %v380
    %v1892 = vunpack.c.h.b16 %v380
    %v1893 = vunpack.c.l.b16 %v381
    %v1894 = vunpack.c.h.b16 %v381
    %v1895 = vunpack.c.l.b16 %v382
    %v1896 = vunpack.c.h.b16 %v382
    %v1897 = vunpack.c.l.b16 %v383
    %v1898 = vunpack.c.h.b16 %v383
    %v1899 = vunpack.c.l.b16 %v384
    %v1900 = vunpack.c.h.b16 %v384
    %v1901 = vunpack.c.l.b16 %v385
    %v1902 = vunpack.c.h.b16 %v385
    %v1903 = vunpack.c.l.b16 %v386
    %v1904 = vunpack.c.h.b16 %v386
    %v1905 = vunpack.c.l.b16 %v387
    %v1906 = vunpack.c.h.b16 %v387
    %v1907 = vunpack.c.l.b16 %v388
    %v1908 = vunpack.c.h.b16 %v388
    %v1909 = vunpack.c.l.b16 %v389
    %v1910 = vunpack.c.h.b16 %v389
    %v1911 = vunpack.c.l.b16 %v390
    %v1912 = vunpack.c.h.b16 %v390
    %v1913 = vunpack.c.l.b16 %v391
    %v1914 = vunpack.c.h.b16 %v391
    %v1915 = vunpack.c.l.b16 %v392
    %v1916 = vunpack.c.h.b16 %v392
    %v1917 = vunpack.c.l.b16 %v393
    %v1918 = vunpack.c.h.b16 %v393
    %v1919 = vunpack.c.l.b16 %v394
    %v1920 = vunpack.c.h.b16 %v394
    %v1921 = vunpack.c.l.b16 %v395
    %v1922 = vunpack.c.h.b16 %v395
    %v1923 = vunpack.c.l.b16 %v396
    %v1924 = vunpack.c.h.b16 %v396
    %v1925 = vunpack.c.l.b16 %v397
    %v1926 = vunpack.c.h.b16 %v397
    %v1927 = vunpack.c.l.b16 %v398
    %v1928 = vunpack.c.h.b16 %v398
    %v1929 = vunpack.c.l.b16 %v399
    %v1930 = vunpack.c.h.b16 %v399
    %v1931 = vunpack.c.l.b16 %v400
    %v1932 = vunpack.c.h.b16 %v400
    %v1933 = vunpack.c.l.b16 %v401
    %v1934 = vunpack.c.h.b16 %v401
    %v1935 = vunpack.c.l.b16 %v402
    %v1936 = vunpack.c.h.b16 %v402
    %v1937 = vunpack.c.l.b16 %v403
    %v1938 = vunpack.c.h.b16 %v403
    %v1939 = vunpack.c.l.b16 %v404
    %v1940 = vunpack.c.h.b16 %v404
    %v1941 = vunpack.c.l.b16 %v405
    %v1942 = vunpack.c.h.b16 %v405
    %v1943 = vunpack.c.l.b16 %v406
    %v1944 = vunpack.c.h.b16 %v406
    %v1945 = vunpack.c.l.b16 %v407
    %v1946 = vunpack.c.h.b16 %v407
    %v1947 = vunpack.c.l.b16 %v408
    %v1948 = vunpack.c.h.b16 %v408
    %v1949 = vunpack.c.l.b16 %v409
    %v1950 = vunpack.c.h.b16 %v409
    %v1951 = vunpack.c.l.b16 %v410
    %v1952 = vunpack.c.h.b16 %v410
    %v1953 = vunpack.c.l.b16 %v411
    %v1954 = vunpack.c.h.b16 %v411
    %v1955 = vunpack.c.l.b16 %v412
    %v1956 = vunpack.c.h.b16 %v412
    %v1957 = vunpack.c.l.b16 %v413
    %v1958 = vunpack.c.h.b16 %v413
    %v1959 = vunpack.c.l.b16 %v414
    %v1960 = vunpack.c.h.b16 %v414
    %v1961 = vunpack.c.l.b16 %v415
    %v1962 = vunpack.c.h.b16 %v415
    %v1963 = vunpack.c.l.b16 %v416
    %v1964 = vunpack.c.h.b16 %v416
    %v1965 = vunpack.c.l.b16 %v417
    %v1966 = vunpack.c.h.b16 %v417
    %v1967 = vunpack.c.l.b16 %v418
    %v1968 = vunpack.c.h.b16 %v418
    %v1969 = vunpack.c.l.b16 %v419
    %v1970 = vunpack.c.h.b16 %v419
    %v1971 = vunpack.c.l.b16 %v420
    %v1972 = vunpack.c.h.b16 %v420
    %v1973 = vunpack.c.l.b16 %v421
    %v1974 = vunpack.c.h.b16 %v421
    %v1975 = vunpack.c.l.b16 %v422
    %v1976 = vunpack.c.h.b16 %v422
    %v1977 = vunpack.c.l.b16 %v423
    %v1978 = vunpack.c.h.b16 %v423
    %v1979 = vunpack.c.l.b16 %v424
    %v1980 = vunpack.c.h.b16 %v424
    %v1981 = vunpack.c.l.b16 %v425
    %v1982 = vunpack.c.h.b16 %v425
    %v1983 = vunpack.c.l.b16 %v426
    %v1984 = vunpack.c.h.b16 %v426
    %v1985 = vunpack.c.l.b16 %v427
    %v1986 = vunpack.c.h.b16 %v427
    %v1987 = vunpack.c.l.b16 %v428
    %v1988 = vunpack.c.h.b16 %v428
    %v1989 = vunpack.c.l.b16 %v429
    %v1990 = vunpack.c.h.b16 %v429
    %v1991 = vunpack.c.l.b16 %v430
    %v1992 = vunpack.c.h.b16 %v430
    %v1993 = vunpack.c.l.b16 %v431
    %v1994 = vunpack.c.h.b16 %v431
    %v1995 = vunpack.c.l.b16 %v432
    %v1996 = vunpack.c.h.b16 %v432
    %v1997 = vunpack.c.l.b16 %v433
    %v1998 = vunpack.c.h.b16 %v433
    %v1999 = vunpack.c.l.b16 %v434
    %v2000 = vunpack.c.h.b16 %v434
    %v2001 = vunpack.c.l.b16 %v435
    %v2002 = vunpack.c.h.b16 %v435
    %v2003 = vunpack.c.l.b16 %v436
    %v2004 = vunpack.c.h.b16 %v436
    %v2005 = vunpack.c.l.b16 %v437
    %v2006 = vunpack.c.h.b16 %v437
    %v2007 = vunpack.c.l.b16 %v438
    %v2008 = vunpack.c.h.b16 %v438
    %v2009 = vunpack.c.l.b16 %v439
    %v2010 = vunpack.c.h.b16 %v439
    %v2011 = vunpack.c.l.b16 %v440
    %v2012 = vunpack.c.h.b16 %v440
    %v2013 = vunpack.c.l.b16 %v441
    %v2014 = vunpack.c.h.b16 %v441
    %v2015 = vunpack.c.l.b16 %v442
    %v2016 = vunpack.c.h.b16 %v442
    %v2017 = vunpack.c.l.b16 %v443
    %v2018 = vunpack.c.h.b16 %v443
    %v2019 = vunpack.c.l.b16 %v444
    %v2020 = vunpack.c.h.b16 %v444
    %v2021 = vunpack.c.l.b16 %v445
    %v2022 = vunpack.c.h.b16 %v445
    %v2023 = vunpack.c.l.b16 %v446
    %v2024 = vunpack.c.h.b16 %v446
    %v2025 = vunpack.c.l.b16 %v447
    %v2026 = vunpack.c.h.b16 %v447
    %v2027 = vunpack.c.l.b16 %v448
    %v2028 = vunpack.c.h.b16 %v448
    %v2029 = vunpack.c.l.b16 %v449
    %v2030 = vunpack.c.h.b16 %v449
    %v2031 = vunpack.c.l.b16 %v450
    %v2032 = vunpack.c.h.b16 %v450
    %v2033 = vunpack.c.l.b16 %v451
    %v2034 = vunpack.c.h.b16 %v451
    %v2035 = vunpack.c.l.b16 %v452
    %v2036 = vunpack.c.h.b16 %v452
    %v2037 = vunpack.c.l.b16 %v453
    %v2038 = vunpack.c.h.b16 %v453
    %v2039 = vunpack.c.l.b16 %v454
    %v2040 = vunpack.c.h.b16 %v454
    %v2041 = vunpack.c.l.b16 %v455
    %v2042 = vunpack.c.h.b16 %v455
    %v2043 = vunpack.c.l.b16 %v456
    %v2044 = vunpack.c.h.b16 %v456
    %v2045 = vunpack.c.l.b16 %v457
    %v2046 = vunpack.c.h.b16 %v457
    %v2047 = vunpack.c.l.b16 %v458
    %v2048 = vunpack.c.h.b16 %v458
    %v2049 = vunpack.c.l.b16 %v459
    %v2050 = vunpack.c.h.b16 %v459
    %v2051 = vunpack.c.l.b16 %v460
    %v2052 = vunpack.c.h.b16 %v460
    %v2053 = vunpack.c.l.b16 %v461
    %v2054 = vunpack.c.h.b16 %v461
    %v2055 = vunpack.c.l.b16 %v462
    %v2056 = vunpack.c.h.b16 %v462
    %v2057 = vunpack.c.l.b16 %v463
    %v2058 = vunpack.c.h.b16 %v463
    %v2059 = vunpack.c.l.b16 %v464
    %v2060 = vunpack.c.h.b16 %v464
    %v2061 = vunpack.c.l.b16 %v465
    %v2062 = vunpack.c.h.b16 %v465
    %v2063 = vunpack.c.l.b16 %v466
    %v2064 = vunpack.c.h.b16 %v466
    %v2065 = vunpack.c.l.b16 %v467
    %v2066 = vunpack.c.h.b16 %v467
    %v2067 = vunpack.c.l.b16 %v468
    %v2068 = vunpack.c.h.b16 %v468
    %v2069 = vunpack.c.l.b16 %v469
    %v2070 = vunpack.c.h.b16 %v469
    %v2071 = vunpack.c.l.b16 %v470
    %v2072 = vunpack.c.h.b16 %v470
    %v2073 = vunpack.c.l.b16 %v471
    %v2074 = vunpack.c.h.b16 %v471
    %v2075 = vunpack.c.l.b16 %v472
    %v2076 = vunpack.c.h.b16 %v472
    %v2077 = vunpack.c.l.b16 %v473
    %v2078 = vunpack.c.h.b16 %v473
    %v2079 = vunpack.c.l.b16 %v474
    %v2080 = vunpack.c.h.b16 %v474
    %v2081 = vunpack.c.l.b16 %v475
    %v2082 = vunpack.c.h.b16 %v475
    %v2083 = vunpack.c.l.b16 %v476
    %v2084 = vunpack.c.h.b16 %v476
    %v2085 = vunpack.c.l.b16 %v477
    %v2086 = vunpack.c.h.b16 %v477
    %v2087 = vunpack.c.l.b16 %v478
    %v2088 = vunpack.c.h.b16 %v478
    %v2089 = vunpack.c.l.b16 %v479
    %v2090 = vunpack.c.h.b16 %v479
    %v2091 = vunpack.c.l.b16 %v480
    %v2092 = vunpack.c.h.b16 %v480
    %v2093 = vunpack.c.l.b16 %v481
    %v2094 = vunpack.c.h.b16 %v481
    %v2095 = vunpack.c.l.b16 %v482
    %v2096 = vunpack.c.h.b16 %v482
    %v2097 = vunpack.c.l.b16 %v483
    %v2098 = vunpack.c.h.b16 %v483
    %v2099 = vunpack.c.l.b16 %v484
    %v2100 = vunpack.c.h.b16 %v484
    %v2101 = vunpack.c.l.b16 %v485
    %v2102 = vunpack.c.h.b16 %v485
    %v2103 = vunpack.c.l.b16 %v486
    %v2104 = vunpack.c.h.b16 %v486
    %v2105 = vunpack.c.l.b16 %v487
    %v2106 = vunpack.c.h.b16 %v487
    %v2107 = vunpack.c.l.b16 %v488
    %v2108 = vunpack.c.h.b16 %v488
    %v2109 = vunpack.c.l.b16 %v489
    %v2110 = vunpack.c.h.b16 %v489
    %v2111 = vunpack.c.l.b16 %v490
    %v2112 = vunpack.c.h.b16 %v490
    %v2113 = vunpack.c.l.b16 %v491
    %v2114 = vunpack.c.h.b16 %v491
    %v2115 = vunpack.c.l.b16 %v492
    %v2116 = vunpack.c.h.b16 %v492
    %v2117 = vunpack.c.l.b16 %v493
    %v2118 = vunpack.c.h.b16 %v493
    %v2119 = vunpack.c.l.b16 %v494
    %v2120 = vunpack.c.h.b16 %v494
    %v2121 = vunpack.c.l.b16 %v495
    %v2122 = vunpack.c.h.b16 %v495
    %v2123 = vunpack.c.l.b16 %v496
    %v2124 = vunpack.c.h.b16 %v496
    %v2125 = vunpack.c.l.b16 %v497
    %v2126 = vunpack.c.h.b16 %v497
    %v2127 = vunpack.c.l.b16 %v498
    %v2128 = vunpack.c.h.b16 %v498
    %v2129 = vunpack.c.l.b16 %v499
    %v2130 = vunpack.c.h.b16 %v499
    %v2131 = vunpack.c.l.b16 %v500
    %v2132 = vunpack.c.h.b16 %v500
    %v2133 = vunpack.c.l.b16 %v501
    %v2134 = vunpack.c.h.b16 %v501
    %v2135 = vunpack.c.l.b16 %v502
    %v2136 = vunpack.c.h.b16 %v502
    %v2137 = vunpack.c.l.b16 %v503
    %v2138 = vunpack.c.h.b16 %v503
    %v2139 = vunpack.c.l.b16 %v504
    %v2140 = vunpack.c.h.b16 %v504
    %v2141 = vunpack.c.l.b16 %v505
    %v2142 = vunpack.c.h.b16 %v505
    %v2143 = vunpack.c.l.b16 %v506
    %v2144 = vunpack.c.h.b16 %v506
    %v2145 = vunpack.c.l.b16 %v507
    %v2146 = vunpack.c.h.b16 %v507
    %v2147 = vunpack.c.l.b16 %v508
    %v2148 = vunpack.c.h.b16 %v508
    %v2149 = vunpack.c.l.b16 %v509
    %v2150 = vunpack.c.h.b16 %v509
    %v2151 = vunpack.c.l.b16 %v510
    %v2152 = vunpack.c.h.b16 %v510
    %v2153 = vunpack.c.l.b16 %v511
    %v2154 = vunpack.c.h.b16 %v511
    %v2155 = vunpack.c.l.b16 %v512
    %v2156 = vunpack.c.h.b16 %v512
    %v2157 = vunpack.c.l.b16 %v513
    %v2158 = vunpack.c.h.b16 %v513
    %v2159 = vunpack.c.l.b16 %v514
    %v2160 = vunpack.c.h.b16 %v514
    %v2161 = vunpack.c.l.b16 %v515
    %v2162 = vunpack.c.h.b16 %v515
    %v2163 = vunpack.c.l.b16 %v516
    %v2164 = vunpack.c.h.b16 %v516
    %v2165 = vunpack.c.l.b16 %v517
    %v2166 = vunpack.c.h.b16 %v517
    %v2167 = vunpack.c.l.b16 %v518
    %v2168 = vunpack.c.h.b16 %v518
    %v2169 = vunpack.c.l.b16 %v519
    %v2170 = vunpack.c.h.b16 %v519
    %v2171 = vunpack.c.l.b16 %v520
    %v2172 = vunpack.c.h.b16 %v520
    %v2173 = vunpack.c.l.b16 %v521
    %v2174 = vunpack.c.h.b16 %v521
    %v2175 = vunpack.c.l.b16 %v522
    %v2176 = vunpack.c.h.b16 %v522
    %v2177 = vunpack.c.l.b16 %v523
    %v2178 = vunpack.c.h.b16 %v523
    %v2179 = vunpack.c.l.b16 %v524
    %v2180 = vunpack.c.h.b16 %v524
    %v2181 = vunpack.c.l.b16 %v525
    %v2182 = vunpack.c.h.b16 %v525
    %v2183 = vunpack.c.l.b16 %v526
    %v2184 = vunpack.c.h.b16 %v526
    %v2185 = vunpack.c.l.b16 %v527
    %v2186 = vunpack.c.h.b16 %v527
    %v2187 = vunpack.c.l.b16 %v528
    %v2188 = vunpack.c.h.b16 %v528
    %v2189 = vunpack.c.l.b16 %v529
    %v2190 = vunpack.c.h.b16 %v529
    %v2191 = vunpack.c.l.b16 %v530
    %v2192 = vunpack.c.h.b16 %v530
    %v2193 = vunpack.c.l.b16 %v531
    %v2194 = vunpack.c.h.b16 %v531
    %v2195 = vunpack.c.l.b16 %v532
    %v2196 = vunpack.c.h.b16 %v532
    %v2197 = vunpack.c.l.b16 %v533
    %v2198 = vunpack.c.h.b16 %v533
    %v2199 = vunpack.c.l.b16 %v534
    %v2200 = vunpack.c.h.b16 %v534
    %v2201 = vunpack.c.l.b16 %v535
    %v2202 = vunpack.c.h.b16 %v535
    %v2203 = vunpack.c.l.b16 %v536
    %v2204 = vunpack.c.h.b16 %v536
    %v2205 = vunpack.c.l.b16 %v537
    %v2206 = vunpack.c.h.b16 %v537
    %v2207 = vunpack.c.l.b16 %v538
    %v2208 = vunpack.c.h.b16 %v538
    %v2209 = vunpack.c.l.b16 %v539
    %v2210 = vunpack.c.h.b16 %v539
    %v2211 = vunpack.c.l.b16 %v540
    %v2212 = vunpack.c.h.b16 %v540
    %v2213 = vunpack.c.l.b16 %v541
    %v2214 = vunpack.c.h.b16 %v541
    %v2215 = vunpack.c.l.b16 %v542
    %v2216 = vunpack.c.h.b16 %v542
    %v2217 = vpack.c.b16 %v1197, %v1193
    %v2218 = vpack.c.b16 %v1198, %v1194
    %v2219 = vpack.c.b16 %v1199, %v1195
    %v2220 = vpack.c.b16 %v1200, %v1196
    %v2221 = vpack.c.b16 %v1205, %v1201
    %v2222 = vpack.c.b16 %v1206, %v1202
    %v2223 = vpack.c.b16 %v1207, %v1203
    %v2224 = vpack.c.b16 %v1208, %v1204
    %v2225 = vpack.c.b16 %v1213, %v1209
    %v2226 = vpack.c.b16 %v1214, %v1210
    %v2227 = vpack.c.b16 %v1215, %v1211
    %v2228 = vpack.c.b16 %v1216, %v1212
    %v2229 = vpack.c.b16 %v1221, %v1217
    %v2230 = vpack.c.b16 %v1222, %v1218
    %v2231 = vpack.c.b16 %v1223, %v1219
    %v2232 = vpack.c.b16 %v1224, %v1220
    %v2233 = vpack.c.b16 %v1229, %v1225
    %v2234 = vpack.c.b16 %v1230, %v1226
    %v2235 = vpack.c.b16 %v1231, %v1227
    %v2236 = vpack.c.b16 %v1232, %v1228
    %v2237 = vpack.c.b16 %v1237, %v1233
    %v2238 = vpack.c.b16 %v1238, %v1234
    %v2239 = vpack.c.b16 %v1239, %v1235
    %v2240 = vpack.c.b16 %v1240, %v1236
    %v2241 = vpack.c.b16 %v1245, %v1241
    %v2242 = vpack.c.b16 %v1246, %v1242
    %v2243 = vpack.c.b16 %v1247, %v1243
    %v2244 = vpack.c.b16 %v1248, %v1244
    %v2245 = vpack.c.b16 %v1253, %v1249
    %v2246 = vpack.c.b16 %v1254, %v1250
    %v2247 = vpack.c.b16 %v1255, %v1251
    %v2248 = vpack.c.b16 %v1256, %v1252
    %v2249 = vpack.c.b16 %v1261, %v1257
    %v2250 = vpack.c.b16 %v1262, %v1258
    %v2251 = vpack.c.b16 %v1263, %v1259
    %v2252 = vpack.c.b16 %v1264, %v1260
    %v2253 = vpack.c.b16 %v1269, %v1265
    %v2254 = vpack.c.b16 %v1270, %v1266
    %v2255 = vpack.c.b16 %v1271, %v1267
    %v2256 = vpack.c.b16 %v1272, %v1268
    %v2257 = vpack.c.b16 %v1277, %v1273
    %v2258 = vpack.c.b16 %v1278, %v1274
    %v2259 = vpack.c.b16 %v1279, %v1275
    %v2260 = vpack.c.b16 %v1280, %v1276
    %v2261 = vpack.c.b16 %v1285, %v1281
    %v2262 = vpack.c.b16 %v1286, %v1282
    %v2263 = vpack.c.b16 %v1287, %v1283
    %v2264 = vpack.c.b16 %v1288, %v1284
    %v2265 = vpack.c.b16 %v1293, %v1289
    %v2266 = vpack.c.b16 %v1294, %v1290
    %v2267 = vpack.c.b16 %v1295, %v1291
    %v2268 = vpack.c.b16 %v1296, %v1292
    %v2269 = vpack.c.b16 %v1301, %v1297
    %v2270 = vpack.c.b16 %v1302, %v1298
    %v2271 = vpack.c.b16 %v1303, %v1299
    %v2272 = vpack.c.b16 %v1304, %v1300
    %v2273 = vpack.c.b16 %v1309, %v1305
    %v2274 = vpack.c.b16 %v1310, %v1306
    %v2275 = vpack.c.b16 %v1311, %v1307
    %v2276 = vpack.c.b16 %v1312, %v1308
    %v2277 = vpack.c.b16 %v1317, %v1313
    %v2278 = vpack.c.b16 %v1318, %v1314
    %v2279 = vpack.c.b16 %v1319, %v1315
    %v2280 = vpack.c.b16 %v1320, %v1316
    %v2281 = vpack.c.b16 %v1325, %v1321
    %v2282 = vpack.c.b16 %v1326, %v1322
    %v2283 = vpack.c.b16 %v1327, %v1323
    %v2284 = vpack.c.b16 %v1328, %v1324
    %v2285 = vpack.c.b16 %v1333, %v1329
    %v2286 = vpack.c.b16 %v1334, %v1330
    %v2287 = vpack.c.b16 %v1335, %v1331
    %v2288 = vpack.c.b16 %v1336, %v1332
    %v2289 = vpack.c.b16 %v1341, %v1337
    %v2290 = vpack.c.b16 %v1342, %v1338
    %v2291 = vpack.c.b16 %v1343, %v1339
    %v2292 = vpack.c.b16 %v1344, %v1340
    %v2293 = vpack.c.b16 %v1349, %v1345
    %v2294 = vpack.c.b16 %v1350, %v1346
    %v2295 = vpack.c.b16 %v1351, %v1347
    %v2296 = vpack.c.b16 %v1352, %v1348
    %v2297 = vpack.c.b16 %v1357, %v1353
    %v2298 = vpack.c.b16 %v1358, %v1354
    %v2299 = vpack.c.b16 %v1359, %v1355
    %v2300 = vpack.c.b16 %v1360, %v1356
    %v2301 = vpack.c.b16 %v1365, %v1361
    %v2302 = vpack.c.b16 %v1366, %v1362
    %v2303 = vpack.c.b16 %v1367, %v1363
    %v2304 = vpack.c.b16 %v1368, %v1364
    %v2305 = vpack.c.b16 %v1373, %v1369
    %v2306 = vpack.c.b16 %v1374, %v1370
    %v2307 = vpack.c.b16 %v1375, %v1371
    %v2308 = vpack.c.b16 %v1376, %v1372
    %v2309 = vpack.c.b16 %v1381, %v1377
    %v2310 = vpack.c.b16 %v1382, %v1378
    %v2311 = vpack.c.b16 %v1383, %v1379
    %v2312 = vpack.c.b16 %v1384, %v1380
    %v2313 = vpack.c.b16 %v1389, %v1385
    %v2314 = vpack.c.b16 %v1390, %v1386
    %v2315 = vpack.c.b16 %v1391, %v1387
    %v2316 = vpack.c.b16 %v1392, %v1388
    %v2317 = vpack.c.b16 %v1397, %v1393
    %v2318 = vpack.c.b16 %v1398, %v1394
    %v2319 = vpack.c.b16 %v1399, %v1395
    %v2320 = vpack.c.b16 %v1400, %v1396
    %v2321 = vpack.c.b16 %v1405, %v1401
    %v2322 = vpack.c.b16 %v1406, %v1402
    %v2323 = vpack.c.b16 %v1407, %v1403
    %v2324 = vpack.c.b16 %v1408, %v1404
    %v2325 = vpack.c.b16 %v1413, %v1409
    %v2326 = vpack.c.b16 %v1414, %v1410
    %v2327 = vpack.c.b16 %v1415, %v1411
    %v2328 = vpack.c.b16 %v1416, %v1412
    %v2329 = vpack.c.b16 %v1421, %v1417
    %v2330 = vpack.c.b16 %v1422, %v1418
    %v2331 = vpack.c.b16 %v1423, %v1419
    %v2332 = vpack.c.b16 %v1424, %v1420
    %v2333 = vpack.c.b16 %v1429, %v1425
    %v2334 = vpack.c.b16 %v1430, %v1426
    %v2335 = vpack.c.b16 %v1431, %v1427
    %v2336 = vpack.c.b16 %v1432, %v1428
    %v2337 = vpack.c.b16 %v1437, %v1433
    %v2338 = vpack.c.b16 %v1438, %v1434
    %v2339 = vpack.c.b16 %v1439, %v1435
    %v2340 = vpack.c.b16 %v1440, %v1436
    %v2341 = vpack.c.b16 %v1445, %v1441
    %v2342 = vpack.c.b16 %v1446, %v1442
    %v2343 = vpack.c.b16 %v1447, %v1443
    %v2344 = vpack.c.b16 %v1448, %v1444
    %v2345 = vpack.c.b16 %v1453, %v1449
    %v2346 = vpack.c.b16 %v1454, %v1450
    %v2347 = vpack.c.b16 %v1455, %v1451
    %v2348 = vpack.c.b16 %v1456, %v1452
    %v2349 = vpack.c.b16 %v1461, %v1457
    %v2350 = vpack.c.b16 %v1462, %v1458
    %v2351 = vpack.c.b16 %v1463, %v1459
    %v2352 = vpack.c.b16 %v1464, %v1460
    %v2353 = vpack.c.b16 %v1469, %v1465
    %v2354 = vpack.c.b16 %v1470, %v1466
    %v2355 = vpack.c.b16 %v1471, %v1467
    %v2356 = vpack.c.b16 %v1472, %v1468
    %v2357 = vpack.c.b16 %v1477, %v1473
    %v2358 = vpack.c.b16 %v1478, %v1474
    %v2359 = vpack.c.b16 %v1479, %v1475
    %v2360 = vpack.c.b16 %v1480, %v1476
    %v2361 = vpack.c.b16 %v1485, %v1481
    %v2362 = vpack.c.b16 %v1486, %v1482
    %v2363 = vpack.c.b16 %v1487, %v1483
    %v2364 = vpack.c.b16 %v1488, %v1484
    %v2365 = vpack.c.b16 %v1493, %v1489
    %v2366 = vpack.c.b16 %v1494, %v1490
    %v2367 = vpack.c.b16 %v1495, %v1491
    %v2368 = vpack.c.b16 %v1496, %v1492
    %v2369 = vpack.c.b16 %v1501, %v1497
    %v2370 = vpack.c.b16 %v1502, %v1498
    %v2371 = vpack.c.b16 %v1503, %v1499
    %v2372 = vpack.c.b16 %v1504, %v1500
    %v2373 = vpack.c.b16 %v1509, %v1505
    %v2374 = vpack.c.b16 %v1510, %v1506
    %v2375 = vpack.c.b16 %v1511, %v1507
    %v2376 = vpack.c.b16 %v1512, %v1508
    %v2377 = vpack.c.b16 %v1517, %v1513
    %v2378 = vpack.c.b16 %v1518, %v1514
    %v2379 = vpack.c.b16 %v1519, %v1515
    %v2380 = vpack.c.b16 %v1520, %v1516
    %v2381 = vpack.c.b16 %v1525, %v1521
    %v2382 = vpack.c.b16 %v1526, %v1522
    %v2383 = vpack.c.b16 %v1527, %v1523
    %v2384 = vpack.c.b16 %v1528, %v1524
    %v2385 = vpack.c.b16 %v1533, %v1529
    %v2386 = vpack.c.b16 %v1534, %v1530
    %v2387 = vpack.c.b16 %v1535, %v1531
    %v2388 = vpack.c.b16 %v1536, %v1532
    %v2389 = vpack.c.b16 %v1541, %v1537
    %v2390 = vpack.c.b16 %v1542, %v1538
    %v2391 = vpack.c.b16 %v1543, %v1539
    %v2392 = vpack.c.b16 %v1544, %v1540
    %v2393 = vpack.c.b16 %v1549, %v1545
    %v2394 = vpack.c.b16 %v1550, %v1546
    %v2395 = vpack.c.b16 %v1551, %v1547
    %v2396 = vpack.c.b16 %v1552, %v1548
    %v2397 = vpack.c.b16 %v1557, %v1553
    %v2398 = vpack.c.b16 %v1558, %v1554
    %v2399 = vpack.c.b16 %v1559, %v1555
    %v2400 = vpack.c.b16 %v1560, %v1556
    %v2401 = vpack.c.b16 %v1565, %v1561
    %v2402 = vpack.c.b16 %v1566, %v1562
    %v2403 = vpack.c.b16 %v1567, %v1563
    %v2404 = vpack.c.b16 %v1568, %v1564
    %v2405 = vpack.c.b16 %v1573, %v1569
    %v2406 = vpack.c.b16 %v1574, %v1570
    %v2407 = vpack.c.b16 %v1575, %v1571
    %v2408 = vpack.c.b16 %v1576, %v1572
    %v2409 = vpack.c.b16 %v1581, %v1577
    %v2410 = vpack.c.b16 %v1582, %v1578
    %v2411 = vpack.c.b16 %v1583, %v1579
    %v2412 = vpack.c.b16 %v1584, %v1580
    %v2413 = vpack.c.b16 %v1589, %v1585
    %v2414 = vpack.c.b16 %v1590, %v1586
    %v2415 = vpack.c.b16 %v1591, %v1587
    %v2416 = vpack.c.b16 %v1592, %v1588
    %v2417 = vpack.c.b16 %v1597, %v1593
    %v2418 = vpack.c.b16 %v1598, %v1594
    %v2419 = vpack.c.b16 %v1599, %v1595
    %v2420 = vpack.c.b16 %v1600, %v1596
    %v2421 = vpack.c.b16 %v1605, %v1601
    %v2422 = vpack.c.b16 %v1606, %v1602
    %v2423 = vpack.c.b16 %v1607, %v1603
    %v2424 = vpack.c.b16 %v1608, %v1604
    %v2425 = vpack.c.b16 %v1613, %v1609
    %v2426 = vpack.c.b16 %v1614, %v1610
    %v2427 = vpack.c.b16 %v1615, %v1611
    %v2428 = vpack.c.b16 %v1616, %v1612
    %v2429 = vpack.c.b16 %v1621, %v1617
    %v2430 = vpack.c.b16 %v1622, %v1618
    %v2431 = vpack.c.b16 %v1623, %v1619
    %v2432 = vpack.c.b16 %v1624, %v1620
    %v2433 = vpack.c.b16 %v1629, %v1625
    %v2434 = vpack.c.b16 %v1630, %v1626
    %v2435 = vpack.c.b16 %v1631, %v1627
    %v2436 = vpack.c.b16 %v1632, %v1628
    %v2437 = vpack.c.b16 %v1637, %v1633
    %v2438 = vpack.c.b16 %v1638, %v1634
    %v2439 = vpack.c.b16 %v1639, %v1635
    %v2440 = vpack.c.b16 %v1640, %v1636
    %v2441 = vpack.c.b16 %v1645, %v1641
    %v2442 = vpack.c.b16 %v1646, %v1642
    %v2443 = vpack.c.b16 %v1647, %v1643
    %v2444 = vpack.c.b16 %v1648, %v1644
    %v2445 = vpack.c.b16 %v1653, %v1649
    %v2446 = vpack.c.b16 %v1654, %v1650
    %v2447 = vpack.c.b16 %v1655, %v1651
    %v2448 = vpack.c.b16 %v1656, %v1652
    %v2449 = vpack.c.b16 %v1661, %v1657
    %v2450 = vpack.c.b16 %v1662, %v1658
    %v2451 = vpack.c.b16 %v1663, %v1659
    %v2452 = vpack.c.b16 %v1664, %v1660
    %v2453 = vpack.c.b16 %v1669, %v1665
    %v2454 = vpack.c.b16 %v1670, %v1666
    %v2455 = vpack.c.b16 %v1671, %v1667
    %v2456 = vpack.c.b16 %v1672, %v1668
    %v2457 = vpack.c.b16 %v1677, %v1673
    %v2458 = vpack.c.b16 %v1678, %v1674
    %v2459 = vpack.c.b16 %v1679, %v1675
    %v2460 = vpack.c.b16 %v1680, %v1676
    %v2461 = vpack.c.b16 %v1685, %v1681
    %v2462 = vpack.c.b16 %v1686, %v1682
    %v2463 = vpack.c.b16 %v1687, %v1683
    %v2464 = vpack.c.b16 %v1688, %v1684
    %v2465 = vpack.c.b16 %v1693, %v1689
    %v2466 = vpack.c.b16 %v1694, %v1690
    %v2467 = vpack.c.b16 %v1695, %v1691
    %v2468 = vpack.c.b16 %v1696, %v1692
    %v2469 = vpack.c.b16 %v1701, %v1697
    %v2470 = vpack.c.b16 %v1702, %v1698
    %v2471 = vpack.c.b16 %v1703, %v1699
    %v2472 = vpack.c.b16 %v1704, %v1700
    %v2473 = vpack.c.b16 %v1709, %v1705
    %v2474 = vpack.c.b16 %v1710, %v1706
    %v2475 = vpack.c.b16 %v1711, %v1707
    %v2476 = vpack.c.b16 %v1712, %v1708
    %v2477 = vpack.c.b16 %v1717, %v1713
    %v2478 = vpack.c.b16 %v1718, %v1714
    %v2479 = vpack.c.b16 %v1719, %v1715
    %v2480 = vpack.c.b16 %v1720, %v1716
    %v2481 = vpack.c.b16 %v1725, %v1721
    %v2482 = vpack.c.b16 %v1726, %v1722
    %v2483 = vpack.c.b16 %v1727, %v1723
    %v2484 = vpack.c.b16 %v1728, %v1724
    %v2485 = vpack.c.b16 %v1733, %v1729
    %v2486 = vpack.c.b16 %v1734, %v1730
    %v2487 = vpack.c.b16 %v1735, %v1731
    %v2488 = vpack.c.b16 %v1736, %v1732
    %v2489 = vpack.c.b16 %v1741, %v1737
    %v2490 = vpack.c.b16 %v1742, %v1738
    %v2491 = vpack.c.b16 %v1743, %v1739
    %v2492 = vpack.c.b16 %v1744, %v1740
    %v2493 = vpack.c.b16 %v1749, %v1745
    %v2494 = vpack.c.b16 %v1750, %v1746
    %v2495 = vpack.c.b16 %v1751, %v1747
    %v2496 = vpack.c.b16 %v1752, %v1748
    %v2497 = vpack.c.b16 %v1757, %v1753
    %v2498 = vpack.c.b16 %v1758, %v1754
    %v2499 = vpack.c.b16 %v1759, %v1755
    %v2500 = vpack.c.b16 %v1760, %v1756
    %v2501 = vpack.c.b16 %v1765, %v1761
    %v2502 = vpack.c.b16 %v1766, %v1762
    %v2503 = vpack.c.b16 %v1767, %v1763
    %v2504 = vpack.c.b16 %v1768, %v1764
    %v2505 = vpack.c.b16 %v1773, %v1769
    %v2506 = vpack.c.b16 %v1774, %v1770
    %v2507 = vpack.c.b16 %v1775, %v1771
    %v2508 = vpack.c.b16 %v1776, %v1772
    %v2509 = vpack.c.b16 %v1781, %v1777
    %v2510 = vpack.c.b16 %v1782, %v1778
    %v2511 = vpack.c.b16 %v1783, %v1779
    %v2512 = vpack.c.b16 %v1784, %v1780
    %v2513 = vpack.c.b16 %v1789, %v1785
    %v2514 = vpack.c.b16 %v1790, %v1786
    %v2515 = vpack.c.b16 %v1791, %v1787
    %v2516 = vpack.c.b16 %v1792, %v1788
    %v2517 = vpack.c.b16 %v1797, %v1793
    %v2518 = vpack.c.b16 %v1798, %v1794
    %v2519 = vpack.c.b16 %v1799, %v1795
    %v2520 = vpack.c.b16 %v1800, %v1796
    %v2521 = vpack.c.b16 %v1805, %v1801
    %v2522 = vpack.c.b16 %v1806, %v1802
    %v2523 = vpack.c.b16 %v1807, %v1803
    %v2524 = vpack.c.b16 %v1808, %v1804
    %v2525 = vpack.c.b16 %v1813, %v1809
    %v2526 = vpack.c.b16 %v1814, %v1810
    %v2527 = vpack.c.b16 %v1815, %v1811
    %v2528 = vpack.c.b16 %v1816, %v1812
    %v2529 = vpack.c.b16 %v1821, %v1817
    %v2530 = vpack.c.b16 %v1822, %v1818
    %v2531 = vpack.c.b16 %v1823, %v1819
    %v2532 = vpack.c.b16 %v1824, %v1820
    %v2533 = vpack.c.b16 %v1829, %v1825
    %v2534 = vpack.c.b16 %v1830, %v1826
    %v2535 = vpack.c.b16 %v1831, %v1827
    %v2536 = vpack.c.b16 %v1832, %v1828
    %v2537 = vpack.c.b16 %v1837, %v1833
    %v2538 = vpack.c.b16 %v1838, %v1834
    %v2539 = vpack.c.b16 %v1839, %v1835
    %v2540 = vpack.c.b16 %v1840, %v1836
    %v2541 = vpack.c.b16 %v1845, %v1841
    %v2542 = vpack.c.b16 %v1846, %v1842
    %v2543 = vpack.c.b16 %v1847, %v1843
    %v2544 = vpack.c.b16 %v1848, %v1844
    %v2545 = vpack.c.b16 %v1853, %v1849
    %v2546 = vpack.c.b16 %v1854, %v1850
    %v2547 = vpack.c.b16 %v1855, %v1851
    %v2548 = vpack.c.b16 %v1856, %v1852
    %v2549 = vpack.c.b16 %v1861, %v1857
    %v2550 = vpack.c.b16 %v1862, %v1858
    %v2551 = vpack.c.b16 %v1863, %v1859
    %v2552 = vpack.c.b16 %v1864, %v1860
    %v2553 = vpack.c.b16 %v1869, %v1865
    %v2554 = vpack.c.b16 %v1870, %v1866
    %v2555 = vpack.c.b16 %v1871, %v1867
    %v2556 = vpack.c.b16 %v1872, %v1868
    %v2557 = vpack.c.b16 %v1877, %v1873
    %v2558 = vpack.c.b16 %v1878, %v1874
    %v2559 = vpack.c.b16 %v1879, %v1875
    %v2560 = vpack.c.b16 %v1880, %v1876
    %v2561 = vpack.c.b16 %v1885, %v1881
    %v2562 = vpack.c.b16 %v1886, %v1882
    %v2563 = vpack.c.b16 %v1887, %v1883
    %v2564 = vpack.c.b16 %v1888, %v1884
    %v2565 = vpack.c.b16 %v1893, %v1889
    %v2566 = vpack.c.b16 %v1894, %v1890
    %v2567 = vpack.c.b16 %v1895, %v1891
    %v2568 = vpack.c.b16 %v1896, %v1892
    %v2569 = vpack.c.b16 %v1901, %v1897
    %v2570 = vpack.c.b16 %v1902, %v1898
    %v2571 = vpack.c.b16 %v1903, %v1899
    %v2572 = vpack.c.b16 %v1904, %v1900
    %v2573 = vpack.c.b16 %v1909, %v1905
    %v2574 = vpack.c.b16 %v1910, %v1906
    %v2575 = vpack.c.b16 %v1911, %v1907
    %v2576 = vpack.c.b16 %v1912, %v1908
    %v2577 = vpack.c.b16 %v1917, %v1913
    %v2578 = vpack.c.b16 %v1918, %v1914
    %v2579 = vpack.c.b16 %v1919, %v1915
    %v2580 = vpack.c.b16 %v1920, %v1916
    %v2581 = vpack.c.b16 %v1925, %v1921
    %v2582 = vpack.c.b16 %v1926, %v1922
    %v2583 = vpack.c.b16 %v1927, %v1923
    %v2584 = vpack.c.b16 %v1928, %v1924
    %v2585 = vpack.c.b16 %v1933, %v1929
    %v2586 = vpack.c.b16 %v1934, %v1930
    %v2587 = vpack.c.b16 %v1935, %v1931
    %v2588 = vpack.c.b16 %v1936, %v1932
    %v2589 = vpack.c.b16 %v1941, %v1937
    %v2590 = vpack.c.b16 %v1942, %v1938
    %v2591 = vpack.c.b16 %v1943, %v1939
    %v2592 = vpack.c.b16 %v1944, %v1940
    %v2593 = vpack.c.b16 %v1949, %v1945
    %v2594 = vpack.c.b16 %v1950, %v1946
    %v2595 = vpack.c.b16 %v1951, %v1947
    %v2596 = vpack.c.b16 %v1952, %v1948
    %v2597 = vpack.c.b16 %v1957, %v1953
    %v2598 = vpack.c.b16 %v1958, %v1954
    %v2599 = vpack.c.b16 %v1959, %v1955
    %v2600 = vpack.c.b16 %v1960, %v1956
    %v2601 = vpack.c.b16 %v1965, %v1961
    %v2602 = vpack.c.b16 %v1966, %v1962
    %v2603 = vpack.c.b16 %v1967, %v1963
    %v2604 = vpack.c.b16 %v1968, %v1964
    %v2605 = vpack.c.b16 %v1973, %v1969
    %v2606 = vpack.c.b16 %v1974, %v1970
    %v2607 = vpack.c.b16 %v1975, %v1971
    %v2608 = vpack.c.b16 %v1976, %v1972
    %v2609 = vpack.c.b16 %v1981, %v1977
    %v2610 = vpack.c.b16 %v1982, %v1978
    %v2611 = vpack.c.b16 %v1983, %v1979
    %v2612 = vpack.c.b16 %v1984, %v1980
    %v2613 = vpack.c.b16 %v1989, %v1985
    %v2614 = vpack.c.b16 %v1990, %v1986
    %v2615 = vpack.c.b16 %v1991, %v1987
    %v2616 = vpack.c.b16 %v1992, %v1988
    %v2617 = vpack.c.b16 %v1997, %v1993
    %v2618 = vpack.c.b16 %v1998, %v1994
    %v2619 = vpack.c.b16 %v1999, %v1995
    %v2620 = vpack.c.b16 %v2000, %v1996
    %v2621 = vpack.c.b16 %v2005, %v2001
    %v2622 = vpack.c.b16 %v2006, %v2002
    %v2623 = vpack.c.b16 %v2007, %v2003
    %v2624 = vpack.c.b16 %v2008, %v2004
    %v2625 = vpack.c.b16 %v2013, %v2009
    %v2626 = vpack.c.b16 %v2014, %v2010
    %v2627 = vpack.c.b16 %v2015, %v2011
    %v2628 = vpack.c.b16 %v2016, %v2012
    %v2629 = vpack.c.b16 %v2021, %v2017
    %v2630 = vpack.c.b16 %v2022, %v2018
    %v2631 = vpack.c.b16 %v2023, %v2019
    %v2632 = vpack.c.b16 %v2024, %v2020
    %v2633 = vpack.c.b16 %v2029, %v2025
    %v2634 = vpack.c.b16 %v2030, %v2026
    %v2635 = vpack.c.b16 %v2031, %v2027
    %v2636 = vpack.c.b16 %v2032, %v2028
    %v2637 = vpack.c.b16 %v2037, %v2033
    %v2638 = vpack.c.b16 %v2038, %v2034
    %v2639 = vpack.c.b16 %v2039, %v2035
    %v2640 = vpack.c.b16 %v2040, %v2036
    %v2641 = vpack.c.b16 %v2045, %v2041
    %v2642 = vpack.c.b16 %v2046, %v2042
    %v2643 = vpack.c.b16 %v2047, %v2043
    %v2644 = vpack.c.b16 %v2048, %v2044
    %v2645 = vpack.c.b16 %v2053, %v2049
    %v2646 = vpack.c.b16 %v2054, %v2050
    %v2647 = vpack.c.b16 %v2055, %v2051
    %v2648 = vpack.c.b16 %v2056, %v2052
    %v2649 = vpack.c.b16 %v2061, %v2057
    %v2650 = vpack.c.b16 %v2062, %v2058
    %v2651 = vpack.c.b16 %v2063, %v2059
    %v2652 = vpack.c.b16 %v2064, %v2060
    %v2653 = vpack.c.b16 %v2069, %v2065
    %v2654 = vpack.c.b16 %v2070, %v2066
    %v2655 = vpack.c.b16 %v2071, %v2067
    %v2656 = vpack.c.b16 %v2072, %v2068
    %v2657 = vpack.c.b16 %v2077, %v2073
    %v2658 = vpack.c.b16 %v2078, %v2074
    %v2659 = vpack.c.b16 %v2079, %v2075
    %v2660 = vpack.c.b16 %v2080, %v2076
    %v2661 = vpack.c.b16 %v2085, %v2081
    %v2662 = vpack.c.b16 %v2086, %v2082
    %v2663 = vpack.c.b16 %v2087, %v2083
    %v2664 = vpack.c.b16 %v2088, %v2084
    %v2665 = vpack.c.b16 %v2093, %v2089
    %v2666 = vpack.c.b16 %v2094, %v2090
    %v2667 = vpack.c.b16 %v2095, %v2091
    %v2668 = vpack.c.b16 %v2096, %v2092
    %v2669 = vpack.c.b16 %v2101, %v2097
    %v2670 = vpack.c.b16 %v2102, %v2098
    %v2671 = vpack.c.b16 %v2103, %v2099
    %v2672 = vpack.c.b16 %v2104, %v2100
    %v2673 = vpack.c.b16 %v2109, %v2105
    %v2674 = vpack.c.b16 %v2110, %v2106
    %v2675 = vpack.c.b16 %v2111, %v2107
    %v2676 = vpack.c.b16 %v2112, %v2108
    %v2677 = vpack.c.b16 %v2117, %v2113
    %v2678 = vpack.c.b16 %v2118, %v2114
    %v2679 = vpack.c.b16 %v2119, %v2115
    %v2680 = vpack.c.b16 %v2120, %v2116
    %v2681 = vpack.c.b16 %v2125, %v2121
    %v2682 = vpack.c.b16 %v2126, %v2122
    %v2683 = vpack.c.b16 %v2127, %v2123
    %v2684 = vpack.c.b16 %v2128, %v2124
    %v2685 = vpack.c.b16 %v2133, %v2129
    %v2686 = vpack.c.b16 %v2134, %v2130
    %v2687 = vpack.c.b16 %v2135, %v2131
    %v2688 = vpack.c.b16 %v2136, %v2132
    %v2689 = vpack.c.b16 %v2141, %v2137
    %v2690 = vpack.c.b16 %v2142, %v2138
    %v2691 = vpack.c.b16 %v2143, %v2139
    %v2692 = vpack.c.b16 %v2144, %v2140
    %v2693 = vpack.c.b16 %v2149, %v2145
    %v2694 = vpack.c.b16 %v2150, %v2146
    %v2695 = vpack.c.b16 %v2151, %v2147
    %v2696 = vpack.c.b16 %v2152, %v2148
    %v2697 = vpack.c.b16 %v2157, %v2153
    %v2698 = vpack.c.b16 %v2158, %v2154
    %v2699 = vpack.c.b16 %v2159, %v2155
    %v2700 = vpack.c.b16 %v2160, %v2156
    %v2701 = vpack.c.b16 %v2165, %v2161
    %v2702 = vpack.c.b16 %v2166, %v2162
    %v2703 = vpack.c.b16 %v2167, %v2163
    %v2704 = vpack.c.b16 %v2168, %v2164
    %v2705 = vpack.c.b16 %v2173, %v2169
    %v2706 = vpack.c.b16 %v2174, %v2170
    %v2707 = vpack.c.b16 %v2175, %v2171
    %v2708 = vpack.c.b16 %v2176, %v2172
    %v2709 = vpack.c.b16 %v2181, %v2177
    %v2710 = vpack.c.b16 %v2182, %v2178
    %v2711 = vpack.c.b16 %v2183, %v2179
    %v2712 = vpack.c.b16 %v2184, %v2180
    %v2713 = vpack.c.b16 %v2189, %v2185
    %v2714 = vpack.c.b16 %v2190, %v2186
    %v2715 = vpack.c.b16 %v2191, %v2187
    %v2716 = vpack.c.b16 %v2192, %v2188
    %v2717 = vpack.c.b16 %v2197, %v2193
    %v2718 = vpack.c.b16 %v2198, %v2194
    %v2719 = vpack.c.b16 %v2199, %v2195
    %v2720 = vpack.c.b16 %v2200, %v2196
    %v2721 = vpack.c.b16 %v2205, %v2201
    %v2722 = vpack.c.b16 %v2206, %v2202
    %v2723 = vpack.c.b16 %v2207, %v2203
    %v2724 = vpack.c.b16 %v2208, %v2204
    %v2725 = vpack.c.b16 %v2213, %v2209
    %v2726 = vpack.c.b16 %v2214, %v2210
    %v2727 = vpack.c.b16 %v2215, %v2211
    %v2728 = vpack.c.b16 %v2216, %v2212
    %3241 = vmatprep.subr.bf16.mxu0 %v2218
    %3242 = vmatpush1.bf16.msra.mxu0 %v2217
    %3243 = vmatprep.subr.bf16.mxu0 %v2222
    %3244 = vmatpush1.bf16.msra.mxu0 %v2221
    %3245 = vmatprep.subr.bf16.mxu0 %v2226
    %3246 = vmatpush1.bf16.msra.mxu0 %v2225
    %3247 = vmatprep.subr.bf16.mxu0 %v2230
    %3248 = vmatpush1.bf16.msra.mxu0 %v2229
    %3249 = vmatprep.subr.bf16.mxu0 %v2234
    %3250 = vmatpush1.bf16.msra.mxu0 %v2233
    %3251 = vmatprep.subr.bf16.mxu0 %v2238
    %3252 = vmatpush1.bf16.msra.mxu0 %v2237
    %3253 = vmatprep.subr.bf16.mxu0 %v2242
    %3254 = vmatpush1.bf16.msra.mxu0 %v2241
    %3255 = vmatprep.subr.bf16.mxu0 %v2246
    %3256 = vmatpush1.bf16.msra.mxu0 %v2245
    %3257 = vmatprep.subr.bf16.mxu0 %v2250
    %3258 = vmatpush1.bf16.msra.mxu0 %v2249
    %3259 = vmatprep.subr.bf16.mxu0 %v2254
    %3260 = vmatpush1.bf16.msra.mxu0 %v2253
    %3261 = vmatprep.subr.bf16.mxu0 %v2258
    %3262 = vmatpush1.bf16.msra.mxu0 %v2257
    %3263 = vmatprep.subr.bf16.mxu0 %v2262
    %3264 = vmatpush1.bf16.msra.mxu0 %v2261
    %3265 = vmatprep.subr.bf16.mxu0 %v2266
    %3266 = vmatpush1.bf16.msra.mxu0 %v2265
    %3267 = vmatprep.subr.bf16.mxu0 %v2270
    %3268 = vmatpush1.bf16.msra.mxu0 %v2269
    %3269 = vmatprep.subr.bf16.mxu0 %v2274
    %3270 = vmatpush1.bf16.msra.mxu0 %v2273
    %3271 = vmatprep.subr.bf16.mxu0 %v2278
    %3272 = vmatpush1.bf16.msra.mxu0 %v2277
    %3273 = vmatprep.mubr.bf16.mxu0 %v604
    %3274 = vmatmul.mubr.bf16.gmra.mrb[0].mxu0 %v590
    %v3275 = vpop.f32.mrb[0].mxu0
    %v3276 = vadd.f32 %v548, %v3275
    %v3277 = vpop.f32.mrb[0].mxu0
    %v3278 = vadd.f32 %v552, %v3277
    %v3279 = vpop.f32.mrb[0].mxu0
    %v3280 = vpop.f32.mrb[0].mxu0
    %3281 = vdwg.mxu0
    %3282 = vmatprep.subr.bf16.mxu0 %v2282
    %3283 = vmatpush1.bf16.msra.mxu0 %v2281
    %3284 = vmatprep.subr.bf16.mxu0 %v2286
    %3285 = vmatpush1.bf16.msra.mxu0 %v2285
    %3286 = vmatprep.subr.bf16.mxu0 %v2290
    %3287 = vmatpush1.bf16.msra.mxu0 %v2289
    %3288 = vmatprep.subr.bf16.mxu0 %v2294
    %3289 = vmatpush1.bf16.msra.mxu0 %v2293
    %3290 = vmatprep.subr.bf16.mxu0 %v2298
    %3291 = vmatpush1.bf16.msra.mxu0 %v2297
    %3292 = vmatprep.subr.bf16.mxu0 %v2302
    %3293 = vmatpush1.bf16.msra.mxu0 %v2301
    %3294 = vmatprep.subr.bf16.mxu0 %v2306
    %3295 = vmatpush1.bf16.msra.mxu0 %v2305
    %3296 = vmatprep.subr.bf16.mxu0 %v2310
    %3297 = vmatpush1.bf16.msra.mxu0 %v2309
    %3298 = vmatprep.subr.bf16.mxu0 %v2314
    %3299 = vmatpush1.bf16.msra.mxu0 %v2313
    %3300 = vmatprep.subr.bf16.mxu0 %v2318
    %3301 = vmatpush1.bf16.msra.mxu0 %v2317
    %3302 = vmatprep.subr.bf16.mxu0 %v2322
    %3303 = vmatpush1.bf16.msra.mxu0 %v2321
    %3304 = vmatprep.subr.bf16.mxu0 %v2326
    %3305 = vmatpush1.bf16.msra.mxu0 %v2325
    %3306 = vmatprep.subr.bf16.mxu0 %v2330
    %3307 = vmatpush1.bf16.msra.mxu0 %v2329
    %3308 = vmatprep.subr.bf16.mxu0 %v2334
    %3309 = vmatpush1.bf16.msra.mxu0 %v2333
    %3310 = vmatprep.subr.bf16.mxu0 %v2338
    %3311 = vmatpush1.bf16.msra.mxu0 %v2337
    %3312 = vmatprep.subr.bf16.mxu0 %v2342
    %3313 = vmatpush1.bf16.msra.mxu0 %v2341
    %3314 = vmatprep.mubr.bf16.mxu0 %v614
    %3315 = vmatmul.mubr.bf16.gmra.mrb[0].mxu0 %v612
    %v3316 = vpop.f32.mrb[0].mxu0
    %v3317 = vadd.f32 %v3276, %v3316
    %v3318 = vpop.f32.mrb[0].mxu0
    %v3319 = vadd.f32 %v3278, %v3318
    %v3320 = vpop.f32.mrb[0].mxu0
    %v3321 = vpop.f32.mrb[0].mxu0
    %3322 = vdwg.mxu0
    %3323 = vmatprep.subr.bf16.mxu0 %v2346
    %3324 = vmatpush1.bf16.msra.mxu0 %v2345
    %3325 = vmatprep.subr.bf16.mxu0 %v2350
    %3326 = vmatpush1.bf16.msra.mxu0 %v2349
    %3327 = vmatprep.subr.bf16.mxu0 %v2354
    %3328 = vmatpush1.bf16.msra.mxu0 %v2353
    %3329 = vmatprep.subr.bf16.mxu0 %v2358
    %3330 = vmatpush1.bf16.msra.mxu0 %v2357
    %3331 = vmatprep.subr.bf16.mxu0 %v2362
    %3332 = vmatpush1.bf16.msra.mxu0 %v2361
    %3333 = vmatprep.subr.bf16.mxu0 %v2366
    %3334 = vmatpush1.bf16.msra.mxu0 %v2365
    %3335 = vmatprep.subr.bf16.mxu0 %v2370
    %3336 = vmatpush1.bf16.msra.mxu0 %v2369
    %3337 = vmatprep.subr.bf16.mxu0 %v2374
    %3338 = vmatpush1.bf16.msra.mxu0 %v2373
    %3339 = vmatprep.subr.bf16.mxu0 %v2378
    %3340 = vmatpush1.bf16.msra.mxu0 %v2377
    %3341 = vmatprep.subr.bf16.mxu0 %v2382
    %3342 = vmatpush1.bf16.msra.mxu0 %v2381
    %3343 = vmatprep.subr.bf16.mxu0 %v2386
    %3344 = vmatpush1.bf16.msra.mxu0 %v2385
    %3345 = vmatprep.subr.bf16.mxu0 %v2390
    %3346 = vmatpush1.bf16.msra.mxu0 %v2389
    %3347 = vmatprep.subr.bf16.mxu0 %v2394
    %3348 = vmatpush1.bf16.msra.mxu0 %v2393
    %3349 = vmatprep.subr.bf16.mxu0 %v2398
    %3350 = vmatpush1.bf16.msra.mxu0 %v2397
    %3351 = vmatprep.subr.bf16.mxu0 %v2402
    %3352 = vmatpush1.bf16.msra.mxu0 %v2401
    %3353 = vmatprep.subr.bf16.mxu0 %v2406
    %3354 = vmatpush1.bf16.msra.mxu0 %v2405
    %3355 = vmatprep.mubr.bf16.mxu0 %v611
    %3356 = vmatmul.mubr.bf16.gmra.mrb[0].mxu0 %v597
    %v3357 = vpop.f32.mrb[0].mxu0
    %v3358 = vadd.f32 %v3317, %v3357
    %v3359 = vpop.f32.mrb[0].mxu0
    %v3360 = vadd.f32 %v3319, %v3359
    %v3361 = vpop.f32.mrb[0].mxu0
    %v3362 = vpop.f32.mrb[0].mxu0
    %3363 = vdwg.mxu0
    %3364 = vmatprep.subr.bf16.mxu0 %v2410
    %3365 = vmatpush1.bf16.msra.mxu0 %v2409
    %3366 = vmatprep.subr.bf16.mxu0 %v2414
    %3367 = vmatpush1.bf16.msra.mxu0 %v2413
    %3368 = vmatprep.subr.bf16.mxu0 %v2418
    %3369 = vmatpush1.bf16.msra.mxu0 %v2417
    %3370 = vmatprep.subr.bf16.mxu0 %v2422
    %3371 = vmatpush1.bf16.msra.mxu0 %v2421
    %3372 = vmatprep.subr.bf16.mxu0 %v2426
    %3373 = vmatpush1.bf16.msra.mxu0 %v2425
    %3374 = vmatprep.subr.bf16.mxu0 %v2430
    %3375 = vmatpush1.bf16.msra.mxu0 %v2429
    %3376 = vmatprep.subr.bf16.mxu0 %v2434
    %3377 = vmatpush1.bf16.msra.mxu0 %v2433
    %3378 = vmatprep.subr.bf16.mxu0 %v2438
    %3379 = vmatpush1.bf16.msra.mxu0 %v2437
    %3380 = vmatprep.subr.bf16.mxu0 %v2442
    %3381 = vmatpush1.bf16.msra.mxu0 %v2441
    %3382 = vmatprep.subr.bf16.mxu0 %v2446
    %3383 = vmatpush1.bf16.msra.mxu0 %v2445
    %3384 = vmatprep.subr.bf16.mxu0 %v2450
    %3385 = vmatpush1.bf16.msra.mxu0 %v2449
    %3386 = vmatprep.subr.bf16.mxu0 %v2454
    %3387 = vmatpush1.bf16.msra.mxu0 %v2453
    %3388 = vmatprep.subr.bf16.mxu0 %v2458
    %3389 = vmatpush1.bf16.msra.mxu0 %v2457
    %3390 = vmatprep.subr.bf16.mxu0 %v2462
    %3391 = vmatpush1.bf16.msra.mxu0 %v2461
    %3392 = vmatprep.subr.bf16.mxu0 %v2466
    %3393 = vmatpush1.bf16.msra.mxu0 %v2465
    %3394 = vmatprep.subr.bf16.mxu0 %v2470
    %3395 = vmatpush1.bf16.msra.mxu0 %v2469
    %3396 = vmatprep.mubr.bf16.mxu0 %v615
    %3397 = vmatmul.mubr.bf16.gmra.mrb[0].mxu0 %v613
    %v3398 = vpop.f32.mrb[0].mxu0
    %v3399 = vadd.f32 %v3358, %v3398
    %v3400 = vpop.f32.mrb[0].mxu0
    %v3401 = vadd.f32 %v3360, %v3400
    %v3402 = vpop.f32.mrb[0].mxu0
    %v3403 = vpop.f32.mrb[0].mxu0
    %3404 = vdwg.mxu0
    %3405 = vmatprep.subr.bf16.mxu0 %v2474
    %3406 = vmatpush1.bf16.msra.mxu0 %v2473
    %3407 = vmatprep.subr.bf16.mxu0 %v2478
    %3408 = vmatpush1.bf16.msra.mxu0 %v2477
    %3409 = vmatprep.subr.bf16.mxu0 %v2482
    %3410 = vmatpush1.bf16.msra.mxu0 %v2481
    %3411 = vmatprep.subr.bf16.mxu0 %v2486
    %3412 = vmatpush1.bf16.msra.mxu0 %v2485
    %3413 = vmatprep.subr.bf16.mxu0 %v2490
    %3414 = vmatpush1.bf16.msra.mxu0 %v2489
    %3415 = vmatprep.subr.bf16.mxu0 %v2494
    %3416 = vmatpush1.bf16.msra.mxu0 %v2493
    %3417 = vmatprep.subr.bf16.mxu0 %v2498
    %3418 = vmatpush1.bf16.msra.mxu0 %v2497
    %3419 = vmatprep.subr.bf16.mxu0 %v2502
    %3420 = vmatpush1.bf16.msra.mxu0 %v2501
    %3421 = vmatprep.subr.bf16.mxu0 %v2506
    %3422 = vmatpush1.bf16.msra.mxu0 %v2505
    %3423 = vmatprep.subr.bf16.mxu0 %v2510
    %3424 = vmatpush1.bf16.msra.mxu0 %v2509
    %3425 = vmatprep.subr.bf16.mxu0 %v2514
    %3426 = vmatpush1.bf16.msra.mxu0 %v2513
    %3427 = vmatprep.subr.bf16.mxu0 %v2518
    %3428 = vmatpush1.bf16.msra.mxu0 %v2517
    %3429 = vmatprep.subr.bf16.mxu0 %v2522
    %3430 = vmatpush1.bf16.msra.mxu0 %v2521
    %3431 = vmatprep.subr.bf16.mxu0 %v2526
    %3432 = vmatpush1.bf16.msra.mxu0 %v2525
    %3433 = vmatprep.subr.bf16.mxu0 %v2530
    %3434 = vmatpush1.bf16.msra.mxu0 %v2529
    %3435 = vmatprep.subr.bf16.mxu0 %v2534
    %3436 = vmatpush1.bf16.msra.mxu0 %v2533
    %3437 = vmatprep.mubr.bf16.mxu0 %v653
    %3438 = vmatmul.mubr.bf16.gmra.mrb[0].mxu0 %v639
    %v3439 = vpop.f32.mrb[0].mxu0
    %v3440 = vadd.f32 %v3399, %v3439
    %v3441 = vpop.f32.mrb[0].mxu0
    %v3442 = vadd.f32 %v3401, %v3441
    %v3443 = vpop.f32.mrb[0].mxu0
    %v3444 = vpop.f32.mrb[0].mxu0
    %3445 = vdwg.mxu0
    %3446 = vmatprep.subr.bf16.mxu0 %v2538
    %3447 = vmatpush1.bf16.msra.mxu0 %v2537
    %3448 = vmatprep.subr.bf16.mxu0 %v2542
    %3449 = vmatpush1.bf16.msra.mxu0 %v2541
    %3450 = vmatprep.subr.bf16.mxu0 %v2546
    %3451 = vmatpush1.bf16.msra.mxu0 %v2545
    %3452 = vmatprep.subr.bf16.mxu0 %v2550
    %3453 = vmatpush1.bf16.msra.mxu0 %v2549
    %3454 = vmatprep.subr.bf16.mxu0 %v2554
    %3455 = vmatpush1.bf16.msra.mxu0 %v2553
    %3456 = vmatprep.subr.bf16.mxu0 %v2558
    %3457 = vmatpush1.bf16.msra.mxu0 %v2557
    %3458 = vmatprep.subr.bf16.mxu0 %v2562
    %3459 = vmatpush1.bf16.msra.mxu0 %v2561
    %3460 = vmatprep.subr.bf16.mxu0 %v2566
    %3461 = vmatpush1.bf16.msra.mxu0 %v2565
    %3462 = vmatprep.subr.bf16.mxu0 %v2570
    %3463 = vmatpush1.bf16.msra.mxu0 %v2569
    %3464 = vmatprep.subr.bf16.mxu0 %v2574
    %3465 = vmatpush1.bf16.msra.mxu0 %v2573
    %3466 = vmatprep.subr.bf16.mxu0 %v2578
    %3467 = vmatpush1.bf16.msra.mxu0 %v2577
    %3468 = vmatprep.subr.bf16.mxu0 %v2582
    %3469 = vmatpush1.bf16.msra.mxu0 %v2581
    %3470 = vmatprep.subr.bf16.mxu0 %v2586
    %3471 = vmatpush1.bf16.msra.mxu0 %v2585
    %3472 = vmatprep.subr.bf16.mxu0 %v2590
    %3473 = vmatpush1.bf16.msra.mxu0 %v2589
    %3474 = vmatprep.subr.bf16.mxu0 %v2594
    %3475 = vmatpush1.bf16.msra.mxu0 %v2593
    %3476 = vmatprep.subr.bf16.mxu0 %v2598
    %3477 = vmatpush1.bf16.msra.mxu0 %v2597
    %3478 = vmatprep.mubr.bf16.mxu0 %v663
    %3479 = vmatmul.mubr.bf16.gmra.mrb[0].mxu0 %v661
    %v3480 = vpop.f32.mrb[0].mxu0
    %v3481 = vadd.f32 %v3440, %v3480
    %v3482 = vpop.f32.mrb[0].mxu0
    %v3483 = vadd.f32 %v3442, %v3482
    %v3484 = vpop.f32.mrb[0].mxu0
    %v3485 = vpop.f32.mrb[0].mxu0
    %3486 = vdwg.mxu0
    %3487 = vmatprep.subr.bf16.mxu0 %v2602
    %3488 = vmatpush1.bf16.msra.mxu0 %v2601
    %3489 = vmatprep.subr.bf16.mxu0 %v2606
    %3490 = vmatpush1.bf16.msra.mxu0 %v2605
    %3491 = vmatprep.subr.bf16.mxu0 %v2610
    %3492 = vmatpush1.bf16.msra.mxu0 %v2609
    %3493 = vmatprep.subr.bf16.mxu0 %v2614
    %3494 = vmatpush1.bf16.msra.mxu0 %v2613
    %3495 = vmatprep.subr.bf16.mxu0 %v2618
    %3496 = vmatpush1.bf16.msra.mxu0 %v2617
    %3497 = vmatprep.subr.bf16.mxu0 %v2622
    %3498 = vmatpush1.bf16.msra.mxu0 %v2621
    %3499 = vmatprep.subr.bf16.mxu0 %v2626
    %3500 = vmatpush1.bf16.msra.mxu0 %v2625
    %3501 = vmatprep.subr.bf16.mxu0 %v2630
    %3502 = vmatpush1.bf16.msra.mxu0 %v2629
    %3503 = vmatprep.subr.bf16.mxu0 %v2634
    %3504 = vmatpush1.bf16.msra.mxu0 %v2633
    %3505 = vmatprep.subr.bf16.mxu0 %v2638
    %3506 = vmatpush1.bf16.msra.mxu0 %v2637
    %3507 = vmatprep.subr.bf16.mxu0 %v2642
    %3508 = vmatpush1.bf16.msra.mxu0 %v2641
    %3509 = vmatprep.subr.bf16.mxu0 %v2646
    %3510 = vmatpush1.bf16.msra.mxu0 %v2645
    %3511 = vmatprep.subr.bf16.mxu0 %v2650
    %3512 = vmatpush1.bf16.msra.mxu0 %v2649
    %3513 = vmatprep.subr.bf16.mxu0 %v2654
    %3514 = vmatpush1.bf16.msra.mxu0 %v2653
    %3515 = vmatprep.subr.bf16.mxu0 %v2658
    %3516 = vmatpush1.bf16.msra.mxu0 %v2657
    %3517 = vmatprep.subr.bf16.mxu0 %v2662
    %3518 = vmatpush1.bf16.msra.mxu0 %v2661
    %3519 = vmatprep.mubr.bf16.mxu0 %v660
    %3520 = vmatmul.mubr.bf16.gmra.mrb[0].mxu0 %v646
    %v3521 = vpop.f32.mrb[0].mxu0
    %v3522 = vadd.f32 %v3481, %v3521
    %v3523 = vpop.f32.mrb[0].mxu0
    %v3524 = vadd.f32 %v3483, %v3523
    %v3525 = vpop.f32.mrb[0].mxu0
    %v3526 = vpop.f32.mrb[0].mxu0
    %3527 = vdwg.mxu0
    %3528 = vmatprep.subr.bf16.mxu0 %v2666
    %3529 = vmatpush1.bf16.msra.mxu0 %v2665
    %3530 = vmatprep.subr.bf16.mxu0 %v2670
    %3531 = vmatpush1.bf16.msra.mxu0 %v2669
    %3532 = vmatprep.subr.bf16.mxu0 %v2674
    %3533 = vmatpush1.bf16.msra.mxu0 %v2673
    %3534 = vmatprep.subr.bf16.mxu0 %v2678
    %3535 = vmatpush1.bf16.msra.mxu0 %v2677
    %3536 = vmatprep.subr.bf16.mxu0 %v2682
    %3537 = vmatpush1.bf16.msra.mxu0 %v2681
    %3538 = vmatprep.subr.bf16.mxu0 %v2686
    %3539 = vmatpush1.bf16.msra.mxu0 %v2685
    %3540 = vmatprep.subr.bf16.mxu0 %v2690
    %3541 = vmatpush1.bf16.msra.mxu0 %v2689
    %3542 = vmatprep.subr.bf16.mxu0 %v2694
    %3543 = vmatpush1.bf16.msra.mxu0 %v2693
    %3544 = vmatprep.subr.bf16.mxu0 %v2698
    %3545 = vmatpush1.bf16.msra.mxu0 %v2697
    %3546 = vmatprep.subr.bf16.mxu0 %v2702
    %3547 = vmatpush1.bf16.msra.mxu0 %v2701
    %3548 = vmatprep.subr.bf16.mxu0 %v2706
    %3549 = vmatpush1.bf16.msra.mxu0 %v2705
    %3550 = vmatprep.subr.bf16.mxu0 %v2710
    %3551 = vmatpush1.bf16.msra.mxu0 %v2709
    %3552 = vmatprep.subr.bf16.mxu0 %v2714
    %3553 = vmatpush1.bf16.msra.mxu0 %v2713
    %3554 = vmatprep.subr.bf16.mxu0 %v2718
    %3555 = vmatpush1.bf16.msra.mxu0 %v2717
    %3556 = vmatprep.subr.bf16.mxu0 %v2722
    %3557 = vmatpush1.bf16.msra.mxu0 %v2721
    %3558 = vmatprep.subr.bf16.mxu0 %v2726
    %3559 = vmatpush1.bf16.msra.mxu0 %v2725
    %3560 = vmatprep.mubr.bf16.mxu0 %v664
    %3561 = vmatmul.mubr.bf16.gmra.mrb[0].mxu0 %v662
    %v3562 = vpop.f32.mrb[0].mxu0
    %v3563 = vadd.f32 %v3522, %v3562
    %v3564 = vpop.f32.mrb[0].mxu0
    %v3565 = vadd.f32 %v3524, %v3564
    %v3566 = vpop.f32.mrb[0].mxu0
    %v3567 = vpop.f32.mrb[0].mxu0
    %3568 = vdwg.mxu0
    %3569 = vmatprep.subr.bf16.mxu0 %v2220
    %3570 = vmatpush1.bf16.msra.mxu0 %v2219
    %3571 = vmatprep.subr.bf16.mxu0 %v2224
    %3572 = vmatpush1.bf16.msra.mxu0 %v2223
    %3573 = vmatprep.subr.bf16.mxu0 %v2228
    %3574 = vmatpush1.bf16.msra.mxu0 %v2227
    %3575 = vmatprep.subr.bf16.mxu0 %v2232
    %3576 = vmatpush1.bf16.msra.mxu0 %v2231
    %3577 = vmatprep.subr.bf16.mxu0 %v2236
    %3578 = vmatpush1.bf16.msra.mxu0 %v2235
    %3579 = vmatprep.subr.bf16.mxu0 %v2240
    %3580 = vmatpush1.bf16.msra.mxu0 %v2239
    %3581 = vmatprep.subr.bf16.mxu0 %v2244
    %3582 = vmatpush1.bf16.msra.mxu0 %v2243
    %3583 = vmatprep.subr.bf16.mxu0 %v2248
    %3584 = vmatpush1.bf16.msra.mxu0 %v2247
    %3585 = vmatprep.subr.bf16.mxu0 %v2252
    %3586 = vmatpush1.bf16.msra.mxu0 %v2251
    %3587 = vmatprep.subr.bf16.mxu0 %v2256
    %3588 = vmatpush1.bf16.msra.mxu0 %v2255
    %3589 = vmatprep.subr.bf16.mxu0 %v2260
    %3590 = vmatpush1.bf16.msra.mxu0 %v2259
    %3591 = vmatprep.subr.bf16.mxu0 %v2264
    %3592 = vmatpush1.bf16.msra.mxu0 %v2263
    %3593 = vmatprep.subr.bf16.mxu0 %v2268
    %3594 = vmatpush1.bf16.msra.mxu0 %v2267
    %3595 = vmatprep.subr.bf16.mxu0 %v2272
    %3596 = vmatpush1.bf16.msra.mxu0 %v2271
    %3597 = vmatprep.subr.bf16.mxu0 %v2276
    %3598 = vmatpush1.bf16.msra.mxu0 %v2275
    %3599 = vmatprep.subr.bf16.mxu0 %v2280
    %3600 = vmatpush1.bf16.msra.mxu0 %v2279
    %3601 = vmatprep.mubr.bf16.mxu0 %v604
    %3602 = vmatmul.mubr.bf16.gmra.mrb[0].mxu0 %v590
    %v3603 = vpop.f32.mrb[0].mxu0
    %v3604 = vadd.f32 %v556, %v3603
    %v3605 = vpop.f32.mrb[0].mxu0
    %v3606 = vadd.f32 %v560, %v3605
    %v3607 = vpop.f32.mrb[0].mxu0
    %v3608 = vpop.f32.mrb[0].mxu0
    %3609 = vdwg.mxu0
    %3610 = vmatprep.subr.bf16.mxu0 %v2284
    %3611 = vmatpush1.bf16.msra.mxu0 %v2283
    %3612 = vmatprep.subr.bf16.mxu0 %v2288
    %3613 = vmatpush1.bf16.msra.mxu0 %v2287
    %3614 = vmatprep.subr.bf16.mxu0 %v2292
    %3615 = vmatpush1.bf16.msra.mxu0 %v2291
    %3616 = vmatprep.subr.bf16.mxu0 %v2296
    %3617 = vmatpush1.bf16.msra.mxu0 %v2295
    %3618 = vmatprep.subr.bf16.mxu0 %v2300
    %3619 = vmatpush1.bf16.msra.mxu0 %v2299
    %3620 = vmatprep.subr.bf16.mxu0 %v2304
    %3621 = vmatpush1.bf16.msra.mxu0 %v2303
    %3622 = vmatprep.subr.bf16.mxu0 %v2308
    %3623 = vmatpush1.bf16.msra.mxu0 %v2307
    %3624 = vmatprep.subr.bf16.mxu0 %v2312
    %3625 = vmatpush1.bf16.msra.mxu0 %v2311
    %3626 = vmatprep.subr.bf16.mxu0 %v2316
    %3627 = vmatpush1.bf16.msra.mxu0 %v2315
    %3628 = vmatprep.subr.bf16.mxu0 %v2320
    %3629 = vmatpush1.bf16.msra.mxu0 %v2319
    %3630 = vmatprep.subr.bf16.mxu0 %v2324
    %3631 = vmatpush1.bf16.msra.mxu0 %v2323
    %3632 = vmatprep.subr.bf16.mxu0 %v2328
    %3633 = vmatpush1.bf16.msra.mxu0 %v2327
    %3634 = vmatprep.subr.bf16.mxu0 %v2332
    %3635 = vmatpush1.bf16.msra.mxu0 %v2331
    %3636 = vmatprep.subr.bf16.mxu0 %v2336
    %3637 = vmatpush1.bf16.msra.mxu0 %v2335
    %3638 = vmatprep.subr.bf16.mxu0 %v2340
    %3639 = vmatpush1.bf16.msra.mxu0 %v2339
    %3640 = vmatprep.subr.bf16.mxu0 %v2344
    %3641 = vmatpush1.bf16.msra.mxu0 %v2343
    %3642 = vmatprep.mubr.bf16.mxu0 %v614
    %3643 = vmatmul.mubr.bf16.gmra.mrb[0].mxu0 %v612
    %v3644 = vpop.f32.mrb[0].mxu0
    %v3645 = vadd.f32 %v3604, %v3644
    %v3646 = vpop.f32.mrb[0].mxu0
    %v3647 = vadd.f32 %v3606, %v3646
    %v3648 = vpop.f32.mrb[0].mxu0
    %v3649 = vpop.f32.mrb[0].mxu0
    %3650 = vdwg.mxu0
    %3651 = vmatprep.subr.bf16.mxu0 %v2348
    %3652 = vmatpush1.bf16.msra.mxu0 %v2347
    %3653 = vmatprep.subr.bf16.mxu0 %v2352
    %3654 = vmatpush1.bf16.msra.mxu0 %v2351
    %3655 = vmatprep.subr.bf16.mxu0 %v2356
    %3656 = vmatpush1.bf16.msra.mxu0 %v2355
    %3657 = vmatprep.subr.bf16.mxu0 %v2360
    %3658 = vmatpush1.bf16.msra.mxu0 %v2359
    %3659 = vmatprep.subr.bf16.mxu0 %v2364
    %3660 = vmatpush1.bf16.msra.mxu0 %v2363
    %3661 = vmatprep.subr.bf16.mxu0 %v2368
    %3662 = vmatpush1.bf16.msra.mxu0 %v2367
    %3663 = vmatprep.subr.bf16.mxu0 %v2372
    %3664 = vmatpush1.bf16.msra.mxu0 %v2371
    %3665 = vmatprep.subr.bf16.mxu0 %v2376
    %3666 = vmatpush1.bf16.msra.mxu0 %v2375
    %3667 = vmatprep.subr.bf16.mxu0 %v2380
    %3668 = vmatpush1.bf16.msra.mxu0 %v2379
    %3669 = vmatprep.subr.bf16.mxu0 %v2384
    %3670 = vmatpush1.bf16.msra.mxu0 %v2383
    %3671 = vmatprep.subr.bf16.mxu0 %v2388
    %3672 = vmatpush1.bf16.msra.mxu0 %v2387
    %3673 = vmatprep.subr.bf16.mxu0 %v2392
    %3674 = vmatpush1.bf16.msra.mxu0 %v2391
    %3675 = vmatprep.subr.bf16.mxu0 %v2396
    %3676 = vmatpush1.bf16.msra.mxu0 %v2395
    %3677 = vmatprep.subr.bf16.mxu0 %v2400
    %3678 = vmatpush1.bf16.msra.mxu0 %v2399
    %3679 = vmatprep.subr.bf16.mxu0 %v2404
    %3680 = vmatpush1.bf16.msra.mxu0 %v2403
    %3681 = vmatprep.subr.bf16.mxu0 %v2408
    %3682 = vmatpush1.bf16.msra.mxu0 %v2407
    %3683 = vmatprep.mubr.bf16.mxu0 %v611
    %3684 = vmatmul.mubr.bf16.gmra.mrb[0].mxu0 %v597
    %v3685 = vpop.f32.mrb[0].mxu0
    %v3686 = vadd.f32 %v3645, %v3685
    %v3687 = vpop.f32.mrb[0].mxu0
    %v3688 = vadd.f32 %v3647, %v3687
    %v3689 = vpop.f32.mrb[0].mxu0
    %v3690 = vpop.f32.mrb[0].mxu0
    %3691 = vdwg.mxu0
    %3692 = vmatprep.subr.bf16.mxu0 %v2412
    %3693 = vmatpush1.bf16.msra.mxu0 %v2411
    %3694 = vmatprep.subr.bf16.mxu0 %v2416
    %3695 = vmatpush1.bf16.msra.mxu0 %v2415
    %3696 = vmatprep.subr.bf16.mxu0 %v2420
    %3697 = vmatpush1.bf16.msra.mxu0 %v2419
    %3698 = vmatprep.subr.bf16.mxu0 %v2424
    %3699 = vmatpush1.bf16.msra.mxu0 %v2423
    %3700 = vmatprep.subr.bf16.mxu0 %v2428
    %3701 = vmatpush1.bf16.msra.mxu0 %v2427
    %3702 = vmatprep.subr.bf16.mxu0 %v2432
    %3703 = vmatpush1.bf16.msra.mxu0 %v2431
    %3704 = vmatprep.subr.bf16.mxu0 %v2436
    %3705 = vmatpush1.bf16.msra.mxu0 %v2435
    %3706 = vmatprep.subr.bf16.mxu0 %v2440
    %3707 = vmatpush1.bf16.msra.mxu0 %v2439
    %3708 = vmatprep.subr.bf16.mxu0 %v2444
    %3709 = vmatpush1.bf16.msra.mxu0 %v2443
    %3710 = vmatprep.subr.bf16.mxu0 %v2448
    %3711 = vmatpush1.bf16.msra.mxu0 %v2447
    %3712 = vmatprep.subr.bf16.mxu0 %v2452
    %3713 = vmatpush1.bf16.msra.mxu0 %v2451
    %3714 = vmatprep.subr.bf16.mxu0 %v2456
    %3715 = vmatpush1.bf16.msra.mxu0 %v2455
    %3716 = vmatprep.subr.bf16.mxu0 %v2460
    %3717 = vmatpush1.bf16.msra.mxu0 %v2459
    %3718 = vmatprep.subr.bf16.mxu0 %v2464
    %3719 = vmatpush1.bf16.msra.mxu0 %v2463
    %3720 = vmatprep.subr.bf16.mxu0 %v2468
    %3721 = vmatpush1.bf16.msra.mxu0 %v2467
    %3722 = vmatprep.subr.bf16.mxu0 %v2472
    %3723 = vmatpush1.bf16.msra.mxu0 %v2471
    %3724 = vmatprep.mubr.bf16.mxu0 %v615
    %3725 = vmatmul.mubr.bf16.gmra.mrb[0].mxu0 %v613
    %v3726 = vpop.f32.mrb[0].mxu0
    %v3727 = vadd.f32 %v3686, %v3726
    %v3728 = vpop.f32.mrb[0].mxu0
    %v3729 = vadd.f32 %v3688, %v3728
    %v3730 = vpop.f32.mrb[0].mxu0
    %v3731 = vpop.f32.mrb[0].mxu0
    %3732 = vdwg.mxu0
    %3733 = vmatprep.subr.bf16.mxu0 %v2476
    %3734 = vmatpush1.bf16.msra.mxu0 %v2475
    %3735 = vmatprep.subr.bf16.mxu0 %v2480
    %3736 = vmatpush1.bf16.msra.mxu0 %v2479
    %3737 = vmatprep.subr.bf16.mxu0 %v2484
    %3738 = vmatpush1.bf16.msra.mxu0 %v2483
    %3739 = vmatprep.subr.bf16.mxu0 %v2488
    %3740 = vmatpush1.bf16.msra.mxu0 %v2487
    %3741 = vmatprep.subr.bf16.mxu0 %v2492
    %3742 = vmatpush1.bf16.msra.mxu0 %v2491
    %3743 = vmatprep.subr.bf16.mxu0 %v2496
    %3744 = vmatpush1.bf16.msra.mxu0 %v2495
    %3745 = vmatprep.subr.bf16.mxu0 %v2500
    %3746 = vmatpush1.bf16.msra.mxu0 %v2499
    %3747 = vmatprep.subr.bf16.mxu0 %v2504
    %3748 = vmatpush1.bf16.msra.mxu0 %v2503
    %3749 = vmatprep.subr.bf16.mxu0 %v2508
    %3750 = vmatpush1.bf16.msra.mxu0 %v2507
    %3751 = vmatprep.subr.bf16.mxu0 %v2512
    %3752 = vmatpush1.bf16.msra.mxu0 %v2511
    %3753 = vmatprep.subr.bf16.mxu0 %v2516
    %3754 = vmatpush1.bf16.msra.mxu0 %v2515
    %3755 = vmatprep.subr.bf16.mxu0 %v2520
    %3756 = vmatpush1.bf16.msra.mxu0 %v2519
    %3757 = vmatprep.subr.bf16.mxu0 %v2524
    %3758 = vmatpush1.bf16.msra.mxu0 %v2523
    %3759 = vmatprep.subr.bf16.mxu0 %v2528
    %3760 = vmatpush1.bf16.msra.mxu0 %v2527
    %3761 = vmatprep.subr.bf16.mxu0 %v2532
    %3762 = vmatpush1.bf16.msra.mxu0 %v2531
    %3763 = vmatprep.subr.bf16.mxu0 %v2536
    %3764 = vmatpush1.bf16.msra.mxu0 %v2535
    %3765 = vmatprep.mubr.bf16.mxu0 %v653
    %3766 = vmatmul.mubr.bf16.gmra.mrb[0].mxu0 %v639
    %v3767 = vpop.f32.mrb[0].mxu0
    %v3768 = vadd.f32 %v3727, %v3767
    %v3769 = vpop.f32.mrb[0].mxu0
    %v3770 = vadd.f32 %v3729, %v3769
    %v3771 = vpop.f32.mrb[0].mxu0
    %v3772 = vpop.f32.mrb[0].mxu0
    %3773 = vdwg.mxu0
    %3774 = vmatprep.subr.bf16.mxu0 %v2540
    %3775 = vmatpush1.bf16.msra.mxu0 %v2539
    %3776 = vmatprep.subr.bf16.mxu0 %v2544
    %3777 = vmatpush1.bf16.msra.mxu0 %v2543
    %3778 = vmatprep.subr.bf16.mxu0 %v2548
    %3779 = vmatpush1.bf16.msra.mxu0 %v2547
    %3780 = vmatprep.subr.bf16.mxu0 %v2552
    %3781 = vmatpush1.bf16.msra.mxu0 %v2551
    %3782 = vmatprep.subr.bf16.mxu0 %v2556
    %3783 = vmatpush1.bf16.msra.mxu0 %v2555
    %3784 = vmatprep.subr.bf16.mxu0 %v2560
    %3785 = vmatpush1.bf16.msra.mxu0 %v2559
    %3786 = vmatprep.subr.bf16.mxu0 %v2564
    %3787 = vmatpush1.bf16.msra.mxu0 %v2563
    %3788 = vmatprep.subr.bf16.mxu0 %v2568
    %3789 = vmatpush1.bf16.msra.mxu0 %v2567
    %3790 = vmatprep.subr.bf16.mxu0 %v2572
    %3791 = vmatpush1.bf16.msra.mxu0 %v2571
    %3792 = vmatprep.subr.bf16.mxu0 %v2576
    %3793 = vmatpush1.bf16.msra.mxu0 %v2575
    %3794 = vmatprep.subr.bf16.mxu0 %v2580
    %3795 = vmatpush1.bf16.msra.mxu0 %v2579
    %3796 = vmatprep.subr.bf16.mxu0 %v2584
    %3797 = vmatpush1.bf16.msra.mxu0 %v2583
    %3798 = vmatprep.subr.bf16.mxu0 %v2588
    %3799 = vmatpush1.bf16.msra.mxu0 %v2587
    %3800 = vmatprep.subr.bf16.mxu0 %v2592
    %3801 = vmatpush1.bf16.msra.mxu0 %v2591
    %3802 = vmatprep.subr.bf16.mxu0 %v2596
    %3803 = vmatpush1.bf16.msra.mxu0 %v2595
    %3804 = vmatprep.subr.bf16.mxu0 %v2600
    %3805 = vmatpush1.bf16.msra.mxu0 %v2599
    %3806 = vmatprep.mubr.bf16.mxu0 %v663
    %3807 = vmatmul.mubr.bf16.gmra.mrb[0].mxu0 %v661
    %v3808 = vpop.f32.mrb[0].mxu0
    %v3809 = vadd.f32 %v3768, %v3808
    %v3810 = vpop.f32.mrb[0].mxu0
    %v3811 = vadd.f32 %v3770, %v3810
    %v3812 = vpop.f32.mrb[0].mxu0
    %v3813 = vpop.f32.mrb[0].mxu0
    %3814 = vdwg.mxu0
    %3815 = vmatprep.subr.bf16.mxu0 %v2604
    %3816 = vmatpush1.bf16.msra.mxu0 %v2603
    %3817 = vmatprep.subr.bf16.mxu0 %v2608
    %3818 = vmatpush1.bf16.msra.mxu0 %v2607
    %3819 = vmatprep.subr.bf16.mxu0 %v2612
    %3820 = vmatpush1.bf16.msra.mxu0 %v2611
    %3821 = vmatprep.subr.bf16.mxu0 %v2616
    %3822 = vmatpush1.bf16.msra.mxu0 %v2615
    %3823 = vmatprep.subr.bf16.mxu0 %v2620
    %3824 = vmatpush1.bf16.msra.mxu0 %v2619
    %3825 = vmatprep.subr.bf16.mxu0 %v2624
    %3826 = vmatpush1.bf16.msra.mxu0 %v2623
    %3827 = vmatprep.subr.bf16.mxu0 %v2628
    %3828 = vmatpush1.bf16.msra.mxu0 %v2627
    %3829 = vmatprep.subr.bf16.mxu0 %v2632
    %3830 = vmatpush1.bf16.msra.mxu0 %v2631
    %3831 = vmatprep.subr.bf16.mxu0 %v2636
    %3832 = vmatpush1.bf16.msra.mxu0 %v2635
    %3833 = vmatprep.subr.bf16.mxu0 %v2640
    %3834 = vmatpush1.bf16.msra.mxu0 %v2639
    %3835 = vmatprep.subr.bf16.mxu0 %v2644
    %3836 = vmatpush1.bf16.msra.mxu0 %v2643
    %3837 = vmatprep.subr.bf16.mxu0 %v2648
    %3838 = vmatpush1.bf16.msra.mxu0 %v2647
    %3839 = vmatprep.subr.bf16.mxu0 %v2652
    %3840 = vmatpush1.bf16.msra.mxu0 %v2651
    %3841 = vmatprep.subr.bf16.mxu0 %v2656
    %3842 = vmatpush1.bf16.msra.mxu0 %v2655
    %3843 = vmatprep.subr.bf16.mxu0 %v2660
    %3844 = vmatpush1.bf16.msra.mxu0 %v2659
    %3845 = vmatprep.subr.bf16.mxu0 %v2664
    %3846 = vmatpush1.bf16.msra.mxu0 %v2663
    %3847 = vmatprep.mubr.bf16.mxu0 %v660
    %3848 = vmatmul.mubr.bf16.gmra.mrb[0].mxu0 %v646
    %v3849 = vpop.f32.mrb[0].mxu0
    %v3850 = vadd.f32 %v3809, %v3849
    %v3851 = vpop.f32.mrb[0].mxu0
    %v3852 = vadd.f32 %v3811, %v3851
    %v3853 = vpop.f32.mrb[0].mxu0
    %v3854 = vpop.f32.mrb[0].mxu0
    %3855 = vdwg.mxu0
    %3856 = vmatprep.subr.bf16.mxu0 %v2668
    %3857 = vmatpush1.bf16.msra.mxu0 %v2667
    %3858 = vmatprep.subr.bf16.mxu0 %v2672
    %3859 = vmatpush1.bf16.msra.mxu0 %v2671
    %3860 = vmatprep.subr.bf16.mxu0 %v2676
    %3861 = vmatpush1.bf16.msra.mxu0 %v2675
    %3862 = vmatprep.subr.bf16.mxu0 %v2680
    %3863 = vmatpush1.bf16.msra.mxu0 %v2679
    %3864 = vmatprep.subr.bf16.mxu0 %v2684
    %3865 = vmatpush1.bf16.msra.mxu0 %v2683
    %3866 = vmatprep.subr.bf16.mxu0 %v2688
    %3867 = vmatpush1.bf16.msra.mxu0 %v2687
    %3868 = vmatprep.subr.bf16.mxu0 %v2692
    %3869 = vmatpush1.bf16.msra.mxu0 %v2691
    %3870 = vmatprep.subr.bf16.mxu0 %v2696
    %3871 = vmatpush1.bf16.msra.mxu0 %v2695
    %3872 = vmatprep.subr.bf16.mxu0 %v2700
    %3873 = vmatpush1.bf16.msra.mxu0 %v2699
    %3874 = vmatprep.subr.bf16.mxu0 %v2704
    %3875 = vmatpush1.bf16.msra.mxu0 %v2703
    %3876 = vmatprep.subr.bf16.mxu0 %v2708
    %3877 = vmatpush1.bf16.msra.mxu0 %v2707
    %3878 = vmatprep.subr.bf16.mxu0 %v2712
    %3879 = vmatpush1.bf16.msra.mxu0 %v2711
    %3880 = vmatprep.subr.bf16.mxu0 %v2716
    %3881 = vmatpush1.bf16.msra.mxu0 %v2715
    %3882 = vmatprep.subr.bf16.mxu0 %v2720
    %3883 = vmatpush1.bf16.msra.mxu0 %v2719
    %3884 = vmatprep.subr.bf16.mxu0 %v2724
    %3885 = vmatpush1.bf16.msra.mxu0 %v2723
    %3886 = vmatprep.subr.bf16.mxu0 %v2728
    %3887 = vmatpush1.bf16.msra.mxu0 %v2727
    %3888 = vmatprep.mubr.bf16.mxu0 %v664
    %3889 = vmatmul.mubr.bf16.gmra.mrb[0].mxu0 %v662
    %v3890 = vpop.f32.mrb[0].mxu0
    %v3891 = vadd.f32 %v3850, %v3890
    %v3892 = vpop.f32.mrb[0].mxu0
    %v3893 = vadd.f32 %v3852, %v3892
    %v3894 = vpop.f32.mrb[0].mxu0
    %v3895 = vpop.f32.mrb[0].mxu0
    %3896 = vdwg.mxu0
    %v3897 = vmax.f32 %v3563, 0.0
    %v3898 = vmax.f32 %v3565, 0.0
    %v3899 = vmax.f32 %v3891, 0.0
    %v3900 = vmax.f32 %v3893, 0.0
    %v3901 = vpack.c.bf16 %v3897, %v3897
    %v3902 = vpack.c.bf16 %v3898, %v3898
    %v3903 = vpack.c.bf16 %v3899, %v3899
    %v3904 = vpack.c.bf16 %v3900, %v3900
    %v3905 = vld [vmem:[%s4] sm:$0xf]
    %v3906 = vld [vmem:[%s4 + $0x4] sm:$0xf]
    %v3907 = vld [vmem:[%s4 + $0x8] sm:$0xf]
    %v3908 = vld [vmem:[%s4 + $0xc] sm:$0xf]
    %v3909 = vld [vmem:[%s4 + $0x10] sm:$0xf]
    %v3910 = vld [vmem:[%s4 + $0x14] sm:$0xf]
    %v3911 = vld [vmem:[%s4 + $0x18] sm:$0xf]
    %v3912 = vld [vmem:[%s4 + $0x1c] sm:$0xf]
    %v3913 = vld [vmem:[%s4 + $0x20] sm:$0xf]
    %v3914 = vld [vmem:[%s4 + $0x24] sm:$0xf]
    %v3915 = vld [vmem:[%s4 + $0x28] sm:$0xf]
    %v3916 = vld [vmem:[%s4 + $0x2c] sm:$0xf]
    %v3917 = vld [vmem:[%s4 + $0x30] sm:$0xf]
    %v3918 = vld [vmem:[%s4 + $0x34] sm:$0xf]
    %v3919 = vld [vmem:[%s4 + $0x38] sm:$0xf]
    %v3920 = vld [vmem:[%s4 + $0x3c] sm:$0xf]
    %v3921 = vld [vmem:[%s4 + $0x40] sm:$0xf]
    %v3922 = vld [vmem:[%s4 + $0x44] sm:$0xf]
    %v3923 = vld [vmem:[%s4 + $0x48] sm:$0xf]
    %v3924 = vld [vmem:[%s4 + $0x4c] sm:$0xf]
    %v3925 = vld [vmem:[%s4 + $0x50] sm:$0xf]
    %v3926 = vld [vmem:[%s4 + $0x54] sm:$0xf]
    %v3927 = vld [vmem:[%s4 + $0x58] sm:$0xf]
    %v3928 = vld [vmem:[%s4 + $0x5c] sm:$0xf]
    %v3929 = vld [vmem:[%s4 + $0x60] sm:$0xf]
    %v3930 = vld [vmem:[%s4 + $0x64] sm:$0xf]
    %v3931 = vld [vmem:[%s4 + $0x68] sm:$0xf]
    %v3932 = vld [vmem:[%s4 + $0x6c] sm:$0xf]
    %v3933 = vld [vmem:[%s4 + $0x70] sm:$0xf]
    %v3934 = vld [vmem:[%s4 + $0x74] sm:$0xf]
    %v3935 = vld [vmem:[%s4 + $0x78] sm:$0xf]
    %v3936 = vld [vmem:[%s4 + $0x7c] sm:$0xf]
    %v3937 = vld [vmem:[%s4 + $0x80] sm:$0xf]
    %v3938 = vld [vmem:[%s4 + $0x84] sm:$0xf]
    %v3939 = vld [vmem:[%s4 + $0x88] sm:$0xf]
    %v3940 = vld [vmem:[%s4 + $0x8c] sm:$0xf]
    %v3941 = vld [vmem:[%s4 + $0x90] sm:$0xf]
    %v3942 = vld [vmem:[%s4 + $0x94] sm:$0xf]
    %v3943 = vld [vmem:[%s4 + $0x98] sm:$0xf]
    %v3944 = vld [vmem:[%s4 + $0x9c] sm:$0xf]
    %v3945 = vld [vmem:[%s4 + $0xa0] sm:$0xf]
    %v3946 = vld [vmem:[%s4 + $0xa4] sm:$0xf]
    %v3947 = vld [vmem:[%s4 + $0xa8] sm:$0xf]
    %v3948 = vld [vmem:[%s4 + $0xac] sm:$0xf]
    %v3949 = vld [vmem:[%s4 + $0xb0] sm:$0xf]
    %v3950 = vld [vmem:[%s4 + $0xb4] sm:$0xf]
    %v3951 = vld [vmem:[%s4 + $0xb8] sm:$0xf]
    %v3952 = vld [vmem:[%s4 + $0xbc] sm:$0xf]
    %v3953 = vld [vmem:[%s4 + $0xc0] sm:$0xf]
    %v3954 = vld [vmem:[%s4 + $0xc4] sm:$0xf]
    %v3955 = vld [vmem:[%s4 + $0xc8] sm:$0xf]
    %v3956 = vld [vmem:[%s4 + $0xcc] sm:$0xf]
    %v3957 = vld [vmem:[%s4 + $0xd0] sm:$0xf]
    %v3958 = vld [vmem:[%s4 + $0xd4] sm:$0xf]
    %v3959 = vld [vmem:[%s4 + $0xd8] sm:$0xf]
    %v3960 = vld [vmem:[%s4 + $0xdc] sm:$0xf]
    %v3961 = vld [vmem:[%s4 + $0xe0] sm:$0xf]
    %v3962 = vld [vmem:[%s4 + $0xe4] sm:$0xf]
    %v3963 = vld [vmem:[%s4 + $0xe8] sm:$0xf]
    %v3964 = vld [vmem:[%s4 + $0xec] sm:$0xf]
    %v3965 = vld [vmem:[%s4 + $0xf0] sm:$0xf]
    %v3966 = vld [vmem:[%s4 + $0xf4] sm:$0xf]
    %v3967 = vld [vmem:[%s4 + $0xf8] sm:$0xf]
    %v3968 = vld [vmem:[%s4 + $0xfc] sm:$0xf]
    %v3969 = vld [vmem:[%s5] sm:$0x1]
    %v3971 = vlaneseq
    %v3972 = vshrl.u32 %v3971, 7
    %v3973 = vsub.s32 0, %v3972
    %v3974 = vrot.slane %v3969, %v3973
    %v4040 = vunpack.c.l.b16 %v3905
    %v4041 = vunpack.c.l.b16 %v3906
    %v4042 = vunpack.c.l.b16 %v3907
    %v4043 = vunpack.c.l.b16 %v3908
    %v4044 = vunpack.c.l.b16 %v3909
    %v4045 = vunpack.c.l.b16 %v3910
    %v4046 = vunpack.c.l.b16 %v3911
    %v4047 = vunpack.c.l.b16 %v3912
    %v4048 = vunpack.c.l.b16 %v3913
    %v4049 = vunpack.c.l.b16 %v3914
    %v4050 = vunpack.c.l.b16 %v3915
    %v4051 = vunpack.c.l.b16 %v3916
    %v4052 = vunpack.c.l.b16 %v3917
    %v4053 = vunpack.c.l.b16 %v3918
    %v4054 = vunpack.c.l.b16 %v3919
    %v4055 = vunpack.c.l.b16 %v3920
    %v4056 = vunpack.c.l.b16 %v3921
    %v4057 = vunpack.c.l.b16 %v3922
    %v4058 = vunpack.c.l.b16 %v3923
    %v4059 = vunpack.c.l.b16 %v3924
    %v4060 = vunpack.c.l.b16 %v3925
    %v4061 = vunpack.c.l.b16 %v3926
    %v4062 = vunpack.c.l.b16 %v3927
    %v4063 = vunpack.c.l.b16 %v3928
    %v4064 = vunpack.c.l.b16 %v3929
    %v4065 = vunpack.c.l.b16 %v3930
    %v4066 = vunpack.c.l.b16 %v3931
    %v4067 = vunpack.c.l.b16 %v3932
    %v4068 = vunpack.c.l.b16 %v3933
    %v4069 = vunpack.c.l.b16 %v3934
    %v4070 = vunpack.c.l.b16 %v3935
    %v4071 = vunpack.c.l.b16 %v3936
    %v4072 = vunpack.c.l.b16 %v3937
    %v4073 = vunpack.c.l.b16 %v3938
    %v4074 = vunpack.c.l.b16 %v3939
    %v4075 = vunpack.c.l.b16 %v3940
    %v4076 = vunpack.c.l.b16 %v3941
    %v4077 = vunpack.c.l.b16 %v3942
    %v4078 = vunpack.c.l.b16 %v3943
    %v4079 = vunpack.c.l.b16 %v3944
    %v4080 = vunpack.c.l.b16 %v3945
    %v4081 = vunpack.c.l.b16 %v3946
    %v4082 = vunpack.c.l.b16 %v3947
    %v4083 = vunpack.c.l.b16 %v3948
    %v4084 = vunpack.c.l.b16 %v3949
    %v4085 = vunpack.c.l.b16 %v3950
    %v4086 = vunpack.c.l.b16 %v3951
    %v4087 = vunpack.c.l.b16 %v3952
    %v4088 = vunpack.c.l.b16 %v3953
    %v4089 = vunpack.c.l.b16 %v3954
    %v4090 = vunpack.c.l.b16 %v3955
    %v4091 = vunpack.c.l.b16 %v3956
    %v4092 = vunpack.c.l.b16 %v3957
    %v4093 = vunpack.c.l.b16 %v3958
    %v4094 = vunpack.c.l.b16 %v3959
    %v4095 = vunpack.c.l.b16 %v3960
    %v4096 = vunpack.c.l.b16 %v3961
    %v4097 = vunpack.c.l.b16 %v3962
    %v4098 = vunpack.c.l.b16 %v3963
    %v4099 = vunpack.c.l.b16 %v3964
    %v4100 = vunpack.c.l.b16 %v3965
    %v4101 = vunpack.c.l.b16 %v3966
    %v4102 = vunpack.c.l.b16 %v3967
    %v4103 = vunpack.c.l.b16 %v3968
    %v4104 = vpack.c.b16 %v4041, %v4040
    %v4105 = vpack.c.b16 %v4043, %v4042
    %v4106 = vpack.c.b16 %v4045, %v4044
    %v4107 = vpack.c.b16 %v4047, %v4046
    %v4108 = vpack.c.b16 %v4049, %v4048
    %v4109 = vpack.c.b16 %v4051, %v4050
    %v4110 = vpack.c.b16 %v4053, %v4052
    %v4111 = vpack.c.b16 %v4055, %v4054
    %v4112 = vpack.c.b16 %v4057, %v4056
    %v4113 = vpack.c.b16 %v4059, %v4058
    %v4114 = vpack.c.b16 %v4061, %v4060
    %v4115 = vpack.c.b16 %v4063, %v4062
    %v4116 = vpack.c.b16 %v4065, %v4064
    %v4117 = vpack.c.b16 %v4067, %v4066
    %v4118 = vpack.c.b16 %v4069, %v4068
    %v4119 = vpack.c.b16 %v4071, %v4070
    %v4120 = vpack.c.b16 %v4073, %v4072
    %v4121 = vpack.c.b16 %v4075, %v4074
    %v4122 = vpack.c.b16 %v4077, %v4076
    %v4123 = vpack.c.b16 %v4079, %v4078
    %v4124 = vpack.c.b16 %v4081, %v4080
    %v4125 = vpack.c.b16 %v4083, %v4082
    %v4126 = vpack.c.b16 %v4085, %v4084
    %v4127 = vpack.c.b16 %v4087, %v4086
    %v4128 = vpack.c.b16 %v4089, %v4088
    %v4129 = vpack.c.b16 %v4091, %v4090
    %v4130 = vpack.c.b16 %v4093, %v4092
    %v4131 = vpack.c.b16 %v4095, %v4094
    %v4132 = vpack.c.b16 %v4097, %v4096
    %v4133 = vpack.c.b16 %v4099, %v4098
    %v4134 = vpack.c.b16 %v4101, %v4100
    %v4135 = vpack.c.b16 %v4103, %v4102
    %4168 = vmatprep.subr.bf16.mxu0 0
    %4169 = vmatpush1.bf16.msra.mxu0 %v4104
    %4170 = vmatprep.subr.bf16.mxu0 0
    %4171 = vmatpush1.bf16.msra.mxu0 %v4105
    %4172 = vmatprep.subr.bf16.mxu0 0
    %4173 = vmatpush1.bf16.msra.mxu0 %v4106
    %4174 = vmatprep.subr.bf16.mxu0 0
    %4175 = vmatpush1.bf16.msra.mxu0 %v4107
    %4176 = vmatprep.subr.bf16.mxu0 0
    %4177 = vmatpush1.bf16.msra.mxu0 %v4108
    %4178 = vmatprep.subr.bf16.mxu0 0
    %4179 = vmatpush1.bf16.msra.mxu0 %v4109
    %4180 = vmatprep.subr.bf16.mxu0 0
    %4181 = vmatpush1.bf16.msra.mxu0 %v4110
    %4182 = vmatprep.subr.bf16.mxu0 0
    %4183 = vmatpush1.bf16.msra.mxu0 %v4111
    %4184 = vmatprep.subr.bf16.mxu0 0
    %4185 = vmatpush1.bf16.msra.mxu0 %v4112
    %4186 = vmatprep.subr.bf16.mxu0 0
    %4187 = vmatpush1.bf16.msra.mxu0 %v4113
    %4188 = vmatprep.subr.bf16.mxu0 0
    %4189 = vmatpush1.bf16.msra.mxu0 %v4114
    %4190 = vmatprep.subr.bf16.mxu0 0
    %4191 = vmatpush1.bf16.msra.mxu0 %v4115
    %4192 = vmatprep.subr.bf16.mxu0 0
    %4193 = vmatpush1.bf16.msra.mxu0 %v4116
    %4194 = vmatprep.subr.bf16.mxu0 0
    %4195 = vmatpush1.bf16.msra.mxu0 %v4117
    %4196 = vmatprep.subr.bf16.mxu0 0
    %4197 = vmatpush1.bf16.msra.mxu0 %v4118
    %4198 = vmatprep.subr.bf16.mxu0 0
    %4199 = vmatpush1.bf16.msra.mxu0 %v4119
    %4200 = vmatprep.mubr.bf16.mxu0 %v3902
    %4201 = vmatmul.mubr.bf16.gmra.mrb[0].mxu0 %v3901
    %v4202 = vpop.f32.mrb[0].mxu0
    %v4203 = vadd.f32 %v3974, %v4202
    %v4204 = vpop.f32.mrb[0].mxu0
    %v4205 = vpop.f32.mrb[0].mxu0
    %v4206 = vpop.f32.mrb[0].mxu0
    %4207 = vdwg.mxu0
    %4208 = vmatprep.subr.bf16.mxu0 0
    %4209 = vmatpush1.bf16.msra.mxu0 %v4120
    %4210 = vmatprep.subr.bf16.mxu0 0
    %4211 = vmatpush1.bf16.msra.mxu0 %v4121
    %4212 = vmatprep.subr.bf16.mxu0 0
    %4213 = vmatpush1.bf16.msra.mxu0 %v4122
    %4214 = vmatprep.subr.bf16.mxu0 0
    %4215 = vmatpush1.bf16.msra.mxu0 %v4123
    %4216 = vmatprep.subr.bf16.mxu0 0
    %4217 = vmatpush1.bf16.msra.mxu0 %v4124
    %4218 = vmatprep.subr.bf16.mxu0 0
    %4219 = vmatpush1.bf16.msra.mxu0 %v4125
    %4220 = vmatprep.subr.bf16.mxu0 0
    %4221 = vmatpush1.bf16.msra.mxu0 %v4126
    %4222 = vmatprep.subr.bf16.mxu0 0
    %4223 = vmatpush1.bf16.msra.mxu0 %v4127
    %4224 = vmatprep.subr.bf16.mxu0 0
    %4225 = vmatpush1.bf16.msra.mxu0 %v4128
    %4226 = vmatprep.subr.bf16.mxu0 0
    %4227 = vmatpush1.bf16.msra.mxu0 %v4129
    %4228 = vmatprep.subr.bf16.mxu0 0
    %4229 = vmatpush1.bf16.msra.mxu0 %v4130
    %4230 = vmatprep.subr.bf16.mxu0 0
    %4231 = vmatpush1.bf16.msra.mxu0 %v4131
    %4232 = vmatprep.subr.bf16.mxu0 0
    %4233 = vmatpush1.bf16.msra.mxu0 %v4132
    %4234 = vmatprep.subr.bf16.mxu0 0
    %4235 = vmatpush1.bf16.msra.mxu0 %v4133
    %4236 = vmatprep.subr.bf16.mxu0 0
    %4237 = vmatpush1.bf16.msra.mxu0 %v4134
    %4238 = vmatprep.subr.bf16.mxu0 0
    %4239 = vmatpush1.bf16.msra.mxu0 %v4135
    %4240 = vmatprep.mubr.bf16.mxu0 %v3904
    %4241 = vmatmul.mubr.bf16.gmra.mrb[0].mxu0 %v3903
    %v4242 = vpop.f32.mrb[0].mxu0
    %v4243 = vadd.f32 %v4203, %v4242
    %v4244 = vpop.f32.mrb[0].mxu0
    %v4245 = vpop.f32.mrb[0].mxu0
    %v4246 = vpop.f32.mrb[0].mxu0
    %4247 = vdwg.mxu0
    %vm4248 = vcmask 1041408
    %v4249 = vsel %vm4248, %v4243, -inf
    %4250 = vmax.xlane.f32.xlu0 %v4249
    %v4251 = vpop.xlane.xlu0 %4250
    %v4252 = vsub.f32 %v4243, %v4251
    %v4253 = vmul.f32 %v4252, 1.442695
    %v4254 = vpow.pop %v4253
    %v4255 = vsel %vm4248, %v4254, 0.0
    %4256 = vadd.xlane.f32.xlu0 %v4255
    %v4257 = vpop.xlane.xlu0 %4256
    %v4258 = vlog2.pop %v4257
    %v4259 = vmul.f32 %v4258, 0.6931472
    %v4260 = vsub.f32 %v4252, %v4259
    %4261 = vst [vmem:[#allocation2] sm:$0x3] %v4260
    // Predicated region
    $region26: #{net_forward.5} parent=1 // pred_check
      _
    $region27: #{net_forward.5} parent=1 // pred_check_branch
      %4263 = sbr.rel (0) target = $region29
    $region28: #{net_forward.5} parent=1 // pred_region
      %s4265 = ssub.s32 32, 32
      %4266 = vsyncadd [#allocation3], %s4265
      %s4268 = sshll.u32 [#allocation2], 4
      %s4269 = int_to_ptr.vmem [resolvable:$true] %s4268
      %4271 = dma.vmem_to_hbm [thread:$0]  %s4269, 32, %s6, [#allocation3]
    $region29: #{net_forward.5} parent=1 // pred_fallthru
      _
    // Predicated region
    $region30: #{net_forward.5} parent=1 // pred_check
      _
    $region31: #{net_forward.5} parent=1 // pred_check_branch
      %4273 = sbr.rel (0) target = $region33
    $region32: #{net_forward.5} parent=1 // pred_region
      %4274 = dma.done [#allocation3], 32
    $region33: #{net_forward.5} parent=1 // pred_fallthru
      _
    %4275 = vsyncpa [#allocation3], 1

</llo_original>
